<compile_context>
chip_gen: v7x
topology: tpu7x:2x2x1
jax: 0.10.0
libtpu: 0.0.40
codegen_flags: <defaults>
</compile_context>

<pallas_src>
import numpy as np
import jax
import jax.numpy as jnp
from jax.experimental import pallas as pl
from jax.experimental.pallas import tpu as pltpu

BN_EPS = 1e-5
LEAKY_SLOPE = 0.01
CPAD = 128            # lane padding for every channel / latent dimension


# ----------------------------------------------------------------------------
# Fused encoder kernel (conv body + BN + LeakyReLU + heads + KL + reparam)
# ----------------------------------------------------------------------------
def _make_encoder_kernel(num_conv_layers):
    """Builds the fused encoder kernel for a fixed number of conv layers."""

    def _conv_bn_lrelu(act, t_ref, w_ref, gb_ref):
        # act:   [M_in, 128] f32  lane-padded activations of the previous layer
        # t_ref: [M_out, 9] int32 gather table (input row per tap, -1 = zero pad)
        # w_ref: [9, 128, 128] bf16 conv weights; gb_ref: [2, 128] f32 (gamma;beta)
        m_in = act.shape[0]
        m_out = t_ref.shape[0]
        n_tap = t_ref.shape[1]
        act_bf = act.astype(jnp.bfloat16)
        col = jax.lax.broadcasted_iota(jnp.int32, (m_out, m_in), 1)   # hoisted
        acc = None
        for t in range(n_tap):                                  # statically unrolled
            tgt = t_ref[:, t:t + 1]                              # [M_out, 1] int32
            sel = jnp.where(col == tgt, 1.0, 0.0).astype(jnp.bfloat16)
            rows = jnp.dot(sel, act_bf, preferred_element_type=jnp.float32)
            contrib = jnp.dot(rows.astype(jnp.bfloat16), w_ref[t],
                              preferred_element_type=jnp.float32)
            acc = contrib if acc is None else acc + contrib
        # Training-mode BatchNorm over batch*spatial rows (biased variance).
        mean = jnp.mean(acc, axis=0, keepdims=True)
        var = jnp.mean(acc * acc, axis=0, keepdims=True) - mean * mean
        scale = gb_ref[0:1, :] * jax.lax.rsqrt(var + BN_EPS)
        shift = gb_ref[1:2, :] - mean * scale
        y = acc * scale + shift
        return jnp.where(y >= 0.0, y, LEAKY_SLOPE * y)          # LeakyReLU(0.01)

    def kernel(*refs):
        n_in = 1 + 3 * num_conv_layers + 4
        x_ref = refs[0]
        conv_refs = refs[1:1 + 3 * num_conv_layers]
        th_ref, wh_ref, bh_ref, eps_ref = refs[1 + 3 * num_conv_layers:n_in]
        z_ref, mu_ref, lv_ref, kl_ref = refs[n_in:]

        act = x_ref[...]                                        # [N*H*W, 128] f32
        for i in range(num_conv_layers):
            t_ref, w_ref, gb_ref = conv_refs[3 * i:3 * i + 3]
            act = _conv_bn_lrelu(act, t_ref, w_ref, gb_ref)

        # Fused fc_mu / fc_var: for each spatial position gather the [N, C]
        # slab and accumulate against its [C, 2*128] weight slice.
        m_in = act.shape[0]
        n_b = th_ref.shape[0]
        act_bf = act.astype(jnp.bfloat16)
        col = jax.lax.broadcasted_iota(jnp.int32, (n_b, m_in), 1)
        head = None
        for s in range(th_ref.shape[1]):
            tgt = th_ref[:, s:s + 1]
            sel = jnp.where(col == tgt, 1.0, 0.0).astype(jnp.bfloat16)
            rows = jnp.dot(sel, act_bf, preferred_element_type=jnp.float32)
            contrib = jnp.dot(rows.astype(jnp.bfloat16), wh_ref[s],
                              preferred_element_type=jnp.float32)
            head = contrib if head is None else head + contrib
        head = head + bh_ref[...]                               # [N, 256] f32

        mu = head[:, :CPAD]        # lanes >= latent_dim are exactly 0
        lv = head[:, CPAD:]
        elv = jnp.exp(lv)          # reused for KL term and std
        z_ref[...] = eps_ref[...] * jnp.sqrt(elv) + mu
        mu_ref[...] = mu
        lv_ref[...] = lv
        kl_ref[...] = 1.0 + lv - mu * mu - elv   # padded lanes contribute 0

    return kernel


def encoder_pallas(x_rows, conv_args, head_tbl, w_head, b_head, eps_pad):
    num_layers = len(conv_args)
    args = [x_rows]
    for tbl, w, gb in conv_args:
        args.extend([tbl, w, gb])
    args.extend([head_tbl, w_head, b_head, eps_pad])
    n = eps_pad.shape[0]
    out_shape = tuple(jax.ShapeDtypeStruct((n, CPAD), jnp.float32) for _ in range(4))
    return pl.pallas_call(
        _make_encoder_kernel(num_layers),
        out_shape=out_shape,
        in_specs=[pl.BlockSpec(memory_space=pltpu.MemorySpace.VMEM)] * len(args),
        out_specs=tuple(pl.BlockSpec(memory_space=pltpu.MemorySpace.VMEM)
                        for _ in range(4)),
        compiler_params=pltpu.CompilerParams(vmem_limit_bytes=32 * 1024 * 1024),
    )(*args)


# ----------------------------------------------------------------------------
# Parameter init + packing into the kernel's lane-dense layout
# ----------------------------------------------------------------------------
def init_encoder_params(key, in_channels, hidden_dims, latent_dim, spatial):
    """Natural-shape parameters mirroring the PyTorch Encoder (fresh init)."""
    params = {"conv": []}
    c_in = in_channels
    for h in hidden_dims:
        key, kw = jax.random.split(key)
        # Conv weight in (kh, kw, cin, cout) layout. The conv bias is omitted on
        # purpose: it is exactly cancelled by the train-mode BatchNorm's mean
        # subtraction, so the forward pass is unchanged.
        w = jax.random.normal(kw, (3, 3, c_in, h), jnp.float32) / jnp.sqrt(9.0 * c_in)
        params["conv"].append({
            "w": w,
            "gamma": jnp.ones((h,), jnp.float32),   # BatchNorm2d affine defaults
            "beta": jnp.zeros((h,), jnp.float32),
        })
        c_in = h
    s_out = spatial // (2 ** len(hidden_dims))
    d = hidden_dims[-1] * s_out * s_out
    key, k1, k2, k3, k4 = jax.random.split(key, 5)
    params["w_mu"] = jax.random.normal(k1, (d, latent_dim), jnp.float32) / jnp.sqrt(d)
    params["b_mu"] = jax.random.normal(k2, (latent_dim,), jnp.float32) * 0.01
    params["w_var"] = jax.random.normal(k3, (d, latent_dim), jnp.float32) / jnp.sqrt(d)
    params["b_var"] = jax.random.normal(k4, (latent_dim,), jnp.float32) * 0.01
    return params


def _conv_tap_table(batch, hi, wi):
    """int32 [batch*ho*wo, 9]: input row per (output row, tap); -1 = zero padding."""
    ho, wo = hi // 2, wi // 2
    tbl = np.full((batch * ho * wo, 9), -1, np.int32)
    for n in range(batch):
        for oy in range(ho):
            for ox in range(wo):
                mo = (n * ho + oy) * wo + ox
                for kh in range(3):
                    for kw in range(3):
                        iy, ix = 2 * oy + kh - 1, 2 * ox + kw - 1
                        if 0 <= iy < hi and 0 <= ix < wi:
                            tbl[mo, 3 * kh + kw] = (n * hi + iy) * wi + ix
    return jnp.asarray(tbl)


def pack_encoder_params(params, batch, in_channels, spatial, latent_dim):
    """Pads / permutes natural-shape parameters into the kernel layout."""
    conv_args = []
    c_in, s = in_channels, spatial
    for layer in params["conv"]:
        c_out = layer["w"].shape[3]
        w = jnp.zeros((9, CPAD, CPAD), jnp.float32)
        w = w.at[:, :c_in, :c_out].set(layer["w"].reshape(9, c_in, c_out))
        gb = jnp.zeros((2, CPAD), jnp.float32)
        gb = gb.at[0, :c_out].set(layer["gamma"]).at[1, :c_out].set(layer["beta"])
        conv_args.append((_conv_tap_table(batch, s, s), w.astype(jnp.bfloat16), gb))
        c_in, s = c_out, s // 2

    # Head: fc_mu and fc_var fused; rows permuted from torch's NCHW-flatten
    # order (d = c*S*S + h*S + w) into the kernel's (spatial, channel) order.
    n_sp = s * s
    head_tbl = jnp.asarray(
        np.arange(batch, dtype=np.int32)[:, None] * n_sp
        + np.arange(n_sp, dtype=np.int32)[None, :])
    wm = params["w_mu"].reshape(c_in, n_sp, latent_dim)
    wv = params["w_var"].reshape(c_in, n_sp, latent_dim)
    w_head = jnp.zeros((n_sp, CPAD, 2 * CPAD), jnp.float32)
    w_head = w_head.at[:, :c_in, :latent_dim].set(jnp.transpose(wm, (1, 0, 2)))
    w_head = w_head.at[:, :c_in, CPAD:CPAD + latent_dim].set(jnp.transpose(wv, (1, 0, 2)))
    b_head = jnp.zeros((1, 2 * CPAD), jnp.float32)
    b_head = b_head.at[0, :latent_dim].set(params["b_mu"])
    b_head = b_head.at[0, CPAD:CPAD + latent_dim].set(params["b_var"])
    return conv_args, head_tbl, w_head.astype(jnp.bfloat16), b_head


# ----------------------------------------------------------------------------
# Forward wrapper (mirrors Encoder.forward: z, plus mu / log_var / kld_loss)
# ----------------------------------------------------------------------------
def encoder_forward(x_nchw, conv_args, head_tbl, w_head, b_head, eps, latent_dim):
    n, c, h, w = x_nchw.shape
    assert c <= CPAD
    x_rows = jnp.transpose(x_nchw, (0, 2, 3, 1)).reshape(n * h * w, c)
    x_rows = jnp.pad(x_rows, ((0, 0), (0, CPAD - c))).astype(jnp.float32)
    eps_pad = jnp.pad(eps, ((0, 0), (0, CPAD - eps.shape[1])))
    z_p, mu_p, lv_p, kl_terms = encoder_pallas(
        x_rows, conv_args, head_tbl, w_head, b_head, eps_pad)
    z = z_p[:, :latent_dim]
    mu = mu_p[:, :latent_dim]
    log_var = lv_p[:, :latent_dim]
    kld = -0.5 * jnp.sum(kl_terms) / n      # sum over latent dim, mean over batch
    return z, mu, log_var, kld


if __name__ == "__main__":
    # Small, forward-consistent shapes: input (C,H,W) = (4,16,16), batch=2,
    # hidden_dims=[8,16,32] -> conv output 32x2x2 -> conv_out_dim=128, latent=16.
    batch = 2
    in_channels, H, W = 4, 16, 16
    hidden_dims = [8, 16, 32]
    latent_dim = 16

    key = jax.random.PRNGKey(0)
    key, kx, keps, kp = jax.random.split(key, 4)
    x = jax.random.normal(kx, (batch, in_channels, H, W), jnp.float32)
    eps = jax.random.normal(keps, (batch, latent_dim), jnp.float32)  # randn_like(std)

    params = init_encoder_params(kp, in_channels, hidden_dims, latent_dim, H)
    conv_args, head_tbl, w_head, b_head = pack_encoder_params(
        params, batch, in_channels, H, latent_dim)

    z, mu, log_var, kld = encoder_forward(
        x, conv_args, head_tbl, w_head, b_head, eps, latent_dim)
    jax.block_until_ready((z, mu, log_var, kld))

    assert z.shape == (batch, latent_dim)
    assert mu.shape == (batch, latent_dim)
    assert log_var.shape == (batch, latent_dim)
    assert kld.shape == ()
    assert bool(jnp.all(jnp.isfinite(z))) and bool(jnp.isfinite(kld))
    print("KERNEL_OK")
</pallas_src>

<mosaic_0001>
module attributes {stable_mosaic.version = 11 : i64} {
  func.func @kernel(%arg0: memref<512x128xf32, #tpu.memory_space<vmem>>, %arg1: memref<128x9xi32, #tpu.memory_space<vmem>>, %arg2: memref<9x128x128xbf16, #tpu.memory_space<vmem>>, %arg3: memref<2x128xf32, #tpu.memory_space<vmem>>, %arg4: memref<32x9xi32, #tpu.memory_space<vmem>>, %arg5: memref<9x128x128xbf16, #tpu.memory_space<vmem>>, %arg6: memref<2x128xf32, #tpu.memory_space<vmem>>, %arg7: memref<8x9xi32, #tpu.memory_space<vmem>>, %arg8: memref<9x128x128xbf16, #tpu.memory_space<vmem>>, %arg9: memref<2x128xf32, #tpu.memory_space<vmem>>, %arg10: memref<2x4xi32, #tpu.memory_space<vmem>>, %arg11: memref<4x128x256xbf16, #tpu.memory_space<vmem>>, %arg12: memref<1x256xf32, #tpu.memory_space<vmem>>, %arg13: memref<2x128xf32, #tpu.memory_space<vmem>>, %arg14: memref<2x128xf32, #tpu.memory_space<vmem>>, %arg15: memref<2x128xf32, #tpu.memory_space<vmem>>, %arg16: memref<2x128xf32, #tpu.memory_space<vmem>>, %arg17: memref<2x128xf32, #tpu.memory_space<vmem>>) attributes {dimension_semantics = [], scalar_prefetch = 0 : i64, scratch_operands = 0 : i64, tpu.core_type = #tpu.core_type<tc>} {
    %c0 = arith.constant 0 : index
    %c0_0 = arith.constant 0 : index
    %0 = vector.load %arg0[%c0, %c0_0] : memref<512x128xf32, #tpu.memory_space<vmem>>, vector<512x128xf32>
    %1 = arith.truncf %0 : vector<512x128xf32> to vector<512x128xbf16>
    %2 = tpu.iota {dimensions = array<i32: 1>} : vector<128x512xi32>
    %c0_1 = arith.constant 0 : index
    %c0_2 = arith.constant 0 : index
    %3 = vector.load %arg1[%c0_1, %c0_2] : memref<128x9xi32, #tpu.memory_space<vmem>>, vector<128x1xi32>
    %4 = vector.broadcast %3 : vector<128x1xi32> to vector<128x512xi32>
    %5 = arith.cmpi eq, %2, %4 : vector<128x512xi32>
    %cst = arith.constant 1.000000e+00 : f32
    %cst_3 = arith.constant 0.000000e+00 : f32
    %6 = vector.broadcast %cst : f32 to vector<128x512xf32>
    %7 = vector.broadcast %cst_3 : f32 to vector<128x512xf32>
    %8 = arith.select %5, %6, %7 : vector<128x512xi1>, vector<128x512xf32>
    %9 = arith.truncf %8 : vector<128x512xf32> to vector<128x512xbf16>
    %cst_4 = arith.constant dense<0.000000e+00> : vector<128x128xf32>
    %10 = tpu.matmul %9, %1, %cst_4 {dimension_numbers = #tpu.dot_dimension_numbers<[1], [0], [0], [1], [0, 0, 1, 1], [], []>} : vector<128x512xbf16>, vector<512x128xbf16>, vector<128x128xf32> -> vector<128x128xf32>
    %11 = arith.truncf %10 : vector<128x128xf32> to vector<128x128xbf16>
    %c0_5 = arith.constant 0 : index
    %c0_6 = arith.constant 0 : index
    %c0_7 = arith.constant 0 : index
    %12 = vector.load %arg2[%c0_5, %c0_6, %c0_7] : memref<9x128x128xbf16, #tpu.memory_space<vmem>>, vector<1x128x128xbf16>
    %13 = vector.shape_cast %12 : vector<1x128x128xbf16> to vector<128x128xbf16>
    %cst_8 = arith.constant dense<0.000000e+00> : vector<128x128xf32>
    %14 = tpu.matmul %11, %13, %cst_8 {dimension_numbers = #tpu.dot_dimension_numbers<[1], [0], [0], [1], [0, 0, 1, 1], [], []>} : vector<128x128xbf16>, vector<128x128xbf16>, vector<128x128xf32> -> vector<128x128xf32>
    %c0_9 = arith.constant 0 : index
    %c1 = arith.constant 1 : index
    %15 = vector.load %arg1[%c0_9, %c1] : memref<128x9xi32, #tpu.memory_space<vmem>>, vector<128x1xi32>
    %16 = vector.broadcast %15 : vector<128x1xi32> to vector<128x512xi32>
    %17 = arith.cmpi eq, %2, %16 : vector<128x512xi32>
    %cst_10 = arith.constant 1.000000e+00 : f32
    %cst_11 = arith.constant 0.000000e+00 : f32
    %18 = vector.broadcast %cst_10 : f32 to vector<128x512xf32>
    %19 = vector.broadcast %cst_11 : f32 to vector<128x512xf32>
    %20 = arith.select %17, %18, %19 : vector<128x512xi1>, vector<128x512xf32>
    %21 = arith.truncf %20 : vector<128x512xf32> to vector<128x512xbf16>
    %cst_12 = arith.constant dense<0.000000e+00> : vector<128x128xf32>
    %22 = tpu.matmul %21, %1, %cst_12 {dimension_numbers = #tpu.dot_dimension_numbers<[1], [0], [0], [1], [0, 0, 1, 1], [], []>} : vector<128x512xbf16>, vector<512x128xbf16>, vector<128x128xf32> -> vector<128x128xf32>
    %23 = arith.truncf %22 : vector<128x128xf32> to vector<128x128xbf16>
    %c1_13 = arith.constant 1 : index
    %c0_14 = arith.constant 0 : index
    %c0_15 = arith.constant 0 : index
    %24 = vector.load %arg2[%c1_13, %c0_14, %c0_15] : memref<9x128x128xbf16, #tpu.memory_space<vmem>>, vector<1x128x128xbf16>
    %25 = vector.shape_cast %24 : vector<1x128x128xbf16> to vector<128x128xbf16>
    %cst_16 = arith.constant dense<0.000000e+00> : vector<128x128xf32>
    %26 = tpu.matmul %23, %25, %cst_16 {dimension_numbers = #tpu.dot_dimension_numbers<[1], [0], [0], [1], [0, 0, 1, 1], [], []>} : vector<128x128xbf16>, vector<128x128xbf16>, vector<128x128xf32> -> vector<128x128xf32>
    %27 = arith.addf %14, %26 : vector<128x128xf32>
    %c0_17 = arith.constant 0 : index
    %c2 = arith.constant 2 : index
    %28 = vector.load %arg1[%c0_17, %c2] : memref<128x9xi32, #tpu.memory_space<vmem>>, vector<128x1xi32>
    %29 = vector.broadcast %28 : vector<128x1xi32> to vector<128x512xi32>
    %30 = arith.cmpi eq, %2, %29 : vector<128x512xi32>
    %cst_18 = arith.constant 1.000000e+00 : f32
    %cst_19 = arith.constant 0.000000e+00 : f32
    %31 = vector.broadcast %cst_18 : f32 to vector<128x512xf32>
    %32 = vector.broadcast %cst_19 : f32 to vector<128x512xf32>
    %33 = arith.select %30, %31, %32 : vector<128x512xi1>, vector<128x512xf32>
    %34 = arith.truncf %33 : vector<128x512xf32> to vector<128x512xbf16>
    %cst_20 = arith.constant dense<0.000000e+00> : vector<128x128xf32>
    %35 = tpu.matmul %34, %1, %cst_20 {dimension_numbers = #tpu.dot_dimension_numbers<[1], [0], [0], [1], [0, 0, 1, 1], [], []>} : vector<128x512xbf16>, vector<512x128xbf16>, vector<128x128xf32> -> vector<128x128xf32>
    %36 = arith.truncf %35 : vector<128x128xf32> to vector<128x128xbf16>
    %c2_21 = arith.constant 2 : index
    %c0_22 = arith.constant 0 : index
    %c0_23 = arith.constant 0 : index
    %37 = vector.load %arg2[%c2_21, %c0_22, %c0_23] : memref<9x128x128xbf16, #tpu.memory_space<vmem>>, vector<1x128x128xbf16>
    %38 = vector.shape_cast %37 : vector<1x128x128xbf16> to vector<128x128xbf16>
    %cst_24 = arith.constant dense<0.000000e+00> : vector<128x128xf32>
    %39 = tpu.matmul %36, %38, %cst_24 {dimension_numbers = #tpu.dot_dimension_numbers<[1], [0], [0], [1], [0, 0, 1, 1], [], []>} : vector<128x128xbf16>, vector<128x128xbf16>, vector<128x128xf32> -> vector<128x128xf32>
    %40 = arith.addf %27, %39 : vector<128x128xf32>
    %c0_25 = arith.constant 0 : index
    %c3 = arith.constant 3 : index
    %41 = vector.load %arg1[%c0_25, %c3] : memref<128x9xi32, #tpu.memory_space<vmem>>, vector<128x1xi32>
    %42 = vector.broadcast %41 : vector<128x1xi32> to vector<128x512xi32>
    %43 = arith.cmpi eq, %2, %42 : vector<128x512xi32>
    %cst_26 = arith.constant 1.000000e+00 : f32
    %cst_27 = arith.constant 0.000000e+00 : f32
    %44 = vector.broadcast %cst_26 : f32 to vector<128x512xf32>
    %45 = vector.broadcast %cst_27 : f32 to vector<128x512xf32>
    %46 = arith.select %43, %44, %45 : vector<128x512xi1>, vector<128x512xf32>
    %47 = arith.truncf %46 : vector<128x512xf32> to vector<128x512xbf16>
    %cst_28 = arith.constant dense<0.000000e+00> : vector<128x128xf32>
    %48 = tpu.matmul %47, %1, %cst_28 {dimension_numbers = #tpu.dot_dimension_numbers<[1], [0], [0], [1], [0, 0, 1, 1], [], []>} : vector<128x512xbf16>, vector<512x128xbf16>, vector<128x128xf32> -> vector<128x128xf32>
    %49 = arith.truncf %48 : vector<128x128xf32> to vector<128x128xbf16>
    %c3_29 = arith.constant 3 : index
    %c0_30 = arith.constant 0 : index
    %c0_31 = arith.constant 0 : index
    %50 = vector.load %arg2[%c3_29, %c0_30, %c0_31] : memref<9x128x128xbf16, #tpu.memory_space<vmem>>, vector<1x128x128xbf16>
    %51 = vector.shape_cast %50 : vector<1x128x128xbf16> to vector<128x128xbf16>
    %cst_32 = arith.constant dense<0.000000e+00> : vector<128x128xf32>
    %52 = tpu.matmul %49, %51, %cst_32 {dimension_numbers = #tpu.dot_dimension_numbers<[1], [0], [0], [1], [0, 0, 1, 1], [], []>} : vector<128x128xbf16>, vector<128x128xbf16>, vector<128x128xf32> -> vector<128x128xf32>
    %53 = arith.addf %40, %52 : vector<128x128xf32>
    %c0_33 = arith.constant 0 : index
    %c4 = arith.constant 4 : index
    %54 = vector.load %arg1[%c0_33, %c4] : memref<128x9xi32, #tpu.memory_space<vmem>>, vector<128x1xi32>
    %55 = vector.broadcast %54 : vector<128x1xi32> to vector<128x512xi32>
    %56 = arith.cmpi eq, %2, %55 : vector<128x512xi32>
    %cst_34 = arith.constant 1.000000e+00 : f32
    %cst_35 = arith.constant 0.000000e+00 : f32
    %57 = vector.broadcast %cst_34 : f32 to vector<128x512xf32>
    %58 = vector.broadcast %cst_35 : f32 to vector<128x512xf32>
    %59 = arith.select %56, %57, %58 : vector<128x512xi1>, vector<128x512xf32>
    %60 = arith.truncf %59 : vector<128x512xf32> to vector<128x512xbf16>
    %cst_36 = arith.constant dense<0.000000e+00> : vector<128x128xf32>
    %61 = tpu.matmul %60, %1, %cst_36 {dimension_numbers = #tpu.dot_dimension_numbers<[1], [0], [0], [1], [0, 0, 1, 1], [], []>} : vector<128x512xbf16>, vector<512x128xbf16>, vector<128x128xf32> -> vector<128x128xf32>
    %62 = arith.truncf %61 : vector<128x128xf32> to vector<128x128xbf16>
    %c4_37 = arith.constant 4 : index
    %c0_38 = arith.constant 0 : index
    %c0_39 = arith.constant 0 : index
    %63 = vector.load %arg2[%c4_37, %c0_38, %c0_39] : memref<9x128x128xbf16, #tpu.memory_space<vmem>>, vector<1x128x128xbf16>
    %64 = vector.shape_cast %63 : vector<1x128x128xbf16> to vector<128x128xbf16>
    %cst_40 = arith.constant dense<0.000000e+00> : vector<128x128xf32>
    %65 = tpu.matmul %62, %64, %cst_40 {dimension_numbers = #tpu.dot_dimension_numbers<[1], [0], [0], [1], [0, 0, 1, 1], [], []>} : vector<128x128xbf16>, vector<128x128xbf16>, vector<128x128xf32> -> vector<128x128xf32>
    %66 = arith.addf %53, %65 : vector<128x128xf32>
    %c0_41 = arith.constant 0 : index
    %c5 = arith.constant 5 : index
    %67 = vector.load %arg1[%c0_41, %c5] : memref<128x9xi32, #tpu.memory_space<vmem>>, vector<128x1xi32>
    %68 = vector.broadcast %67 : vector<128x1xi32> to vector<128x512xi32>
    %69 = arith.cmpi eq, %2, %68 : vector<128x512xi32>
    %cst_42 = arith.constant 1.000000e+00 : f32
    %cst_43 = arith.constant 0.000000e+00 : f32
    %70 = vector.broadcast %cst_42 : f32 to vector<128x512xf32>
    %71 = vector.broadcast %cst_43 : f32 to vector<128x512xf32>
    %72 = arith.select %69, %70, %71 : vector<128x512xi1>, vector<128x512xf32>
    %73 = arith.truncf %72 : vector<128x512xf32> to vector<128x512xbf16>
    %cst_44 = arith.constant dense<0.000000e+00> : vector<128x128xf32>
    %74 = tpu.matmul %73, %1, %cst_44 {dimension_numbers = #tpu.dot_dimension_numbers<[1], [0], [0], [1], [0, 0, 1, 1], [], []>} : vector<128x512xbf16>, vector<512x128xbf16>, vector<128x128xf32> -> vector<128x128xf32>
    %75 = arith.truncf %74 : vector<128x128xf32> to vector<128x128xbf16>
    %c5_45 = arith.constant 5 : index
    %c0_46 = arith.constant 0 : index
    %c0_47 = arith.constant 0 : index
    %76 = vector.load %arg2[%c5_45, %c0_46, %c0_47] : memref<9x128x128xbf16, #tpu.memory_space<vmem>>, vector<1x128x128xbf16>
    %77 = vector.shape_cast %76 : vector<1x128x128xbf16> to vector<128x128xbf16>
    %cst_48 = arith.constant dense<0.000000e+00> : vector<128x128xf32>
    %78 = tpu.matmul %75, %77, %cst_48 {dimension_numbers = #tpu.dot_dimension_numbers<[1], [0], [0], [1], [0, 0, 1, 1], [], []>} : vector<128x128xbf16>, vector<128x128xbf16>, vector<128x128xf32> -> vector<128x128xf32>
    %79 = arith.addf %66, %78 : vector<128x128xf32>
    %c0_49 = arith.constant 0 : index
    %c6 = arith.constant 6 : index
    %80 = vector.load %arg1[%c0_49, %c6] : memref<128x9xi32, #tpu.memory_space<vmem>>, vector<128x1xi32>
    %81 = vector.broadcast %80 : vector<128x1xi32> to vector<128x512xi32>
    %82 = arith.cmpi eq, %2, %81 : vector<128x512xi32>
    %cst_50 = arith.constant 1.000000e+00 : f32
    %cst_51 = arith.constant 0.000000e+00 : f32
    %83 = vector.broadcast %cst_50 : f32 to vector<128x512xf32>
    %84 = vector.broadcast %cst_51 : f32 to vector<128x512xf32>
    %85 = arith.select %82, %83, %84 : vector<128x512xi1>, vector<128x512xf32>
    %86 = arith.truncf %85 : vector<128x512xf32> to vector<128x512xbf16>
    %cst_52 = arith.constant dense<0.000000e+00> : vector<128x128xf32>
    %87 = tpu.matmul %86, %1, %cst_52 {dimension_numbers = #tpu.dot_dimension_numbers<[1], [0], [0], [1], [0, 0, 1, 1], [], []>} : vector<128x512xbf16>, vector<512x128xbf16>, vector<128x128xf32> -> vector<128x128xf32>
    %88 = arith.truncf %87 : vector<128x128xf32> to vector<128x128xbf16>
    %c6_53 = arith.constant 6 : index
    %c0_54 = arith.constant 0 : index
    %c0_55 = arith.constant 0 : index
    %89 = vector.load %arg2[%c6_53, %c0_54, %c0_55] : memref<9x128x128xbf16, #tpu.memory_space<vmem>>, vector<1x128x128xbf16>
    %90 = vector.shape_cast %89 : vector<1x128x128xbf16> to vector<128x128xbf16>
    %cst_56 = arith.constant dense<0.000000e+00> : vector<128x128xf32>
    %91 = tpu.matmul %88, %90, %cst_56 {dimension_numbers = #tpu.dot_dimension_numbers<[1], [0], [0], [1], [0, 0, 1, 1], [], []>} : vector<128x128xbf16>, vector<128x128xbf16>, vector<128x128xf32> -> vector<128x128xf32>
    %92 = arith.addf %79, %91 : vector<128x128xf32>
    %c0_57 = arith.constant 0 : index
    %c7 = arith.constant 7 : index
    %93 = vector.load %arg1[%c0_57, %c7] : memref<128x9xi32, #tpu.memory_space<vmem>>, vector<128x1xi32>
    %94 = vector.broadcast %93 : vector<128x1xi32> to vector<128x512xi32>
    %95 = arith.cmpi eq, %2, %94 : vector<128x512xi32>
    %cst_58 = arith.constant 1.000000e+00 : f32
    %cst_59 = arith.constant 0.000000e+00 : f32
    %96 = vector.broadcast %cst_58 : f32 to vector<128x512xf32>
    %97 = vector.broadcast %cst_59 : f32 to vector<128x512xf32>
    %98 = arith.select %95, %96, %97 : vector<128x512xi1>, vector<128x512xf32>
    %99 = arith.truncf %98 : vector<128x512xf32> to vector<128x512xbf16>
    %cst_60 = arith.constant dense<0.000000e+00> : vector<128x128xf32>
    %100 = tpu.matmul %99, %1, %cst_60 {dimension_numbers = #tpu.dot_dimension_numbers<[1], [0], [0], [1], [0, 0, 1, 1], [], []>} : vector<128x512xbf16>, vector<512x128xbf16>, vector<128x128xf32> -> vector<128x128xf32>
    %101 = arith.truncf %100 : vector<128x128xf32> to vector<128x128xbf16>
    %c7_61 = arith.constant 7 : index
    %c0_62 = arith.constant 0 : index
    %c0_63 = arith.constant 0 : index
    %102 = vector.load %arg2[%c7_61, %c0_62, %c0_63] : memref<9x128x128xbf16, #tpu.memory_space<vmem>>, vector<1x128x128xbf16>
    %103 = vector.shape_cast %102 : vector<1x128x128xbf16> to vector<128x128xbf16>
    %cst_64 = arith.constant dense<0.000000e+00> : vector<128x128xf32>
    %104 = tpu.matmul %101, %103, %cst_64 {dimension_numbers = #tpu.dot_dimension_numbers<[1], [0], [0], [1], [0, 0, 1, 1], [], []>} : vector<128x128xbf16>, vector<128x128xbf16>, vector<128x128xf32> -> vector<128x128xf32>
    %105 = arith.addf %92, %104 : vector<128x128xf32>
    %c0_65 = arith.constant 0 : index
    %c8 = arith.constant 8 : index
    %106 = vector.load %arg1[%c0_65, %c8] : memref<128x9xi32, #tpu.memory_space<vmem>>, vector<128x1xi32>
    %107 = vector.broadcast %106 : vector<128x1xi32> to vector<128x512xi32>
    %108 = arith.cmpi eq, %2, %107 : vector<128x512xi32>
    %cst_66 = arith.constant 1.000000e+00 : f32
    %cst_67 = arith.constant 0.000000e+00 : f32
    %109 = vector.broadcast %cst_66 : f32 to vector<128x512xf32>
    %110 = vector.broadcast %cst_67 : f32 to vector<128x512xf32>
    %111 = arith.select %108, %109, %110 : vector<128x512xi1>, vector<128x512xf32>
    %112 = arith.truncf %111 : vector<128x512xf32> to vector<128x512xbf16>
    %cst_68 = arith.constant dense<0.000000e+00> : vector<128x128xf32>
    %113 = tpu.matmul %112, %1, %cst_68 {dimension_numbers = #tpu.dot_dimension_numbers<[1], [0], [0], [1], [0, 0, 1, 1], [], []>} : vector<128x512xbf16>, vector<512x128xbf16>, vector<128x128xf32> -> vector<128x128xf32>
    %114 = arith.truncf %113 : vector<128x128xf32> to vector<128x128xbf16>
    %c8_69 = arith.constant 8 : index
    %c0_70 = arith.constant 0 : index
    %c0_71 = arith.constant 0 : index
    %115 = vector.load %arg2[%c8_69, %c0_70, %c0_71] : memref<9x128x128xbf16, #tpu.memory_space<vmem>>, vector<1x128x128xbf16>
    %116 = vector.shape_cast %115 : vector<1x128x128xbf16> to vector<128x128xbf16>
    %cst_72 = arith.constant dense<0.000000e+00> : vector<128x128xf32>
    %117 = tpu.matmul %114, %116, %cst_72 {dimension_numbers = #tpu.dot_dimension_numbers<[1], [0], [0], [1], [0, 0, 1, 1], [], []>} : vector<128x128xbf16>, vector<128x128xbf16>, vector<128x128xf32> -> vector<128x128xf32>
    %118 = arith.addf %105, %117 : vector<128x128xf32>
    %cst_73 = arith.constant dense<0.000000e+00> : vector<128xf32>
    %119 = vector.multi_reduction <add>, %118, %cst_73 [0] : vector<128x128xf32> to vector<128xf32>
    %120 = vector.shape_cast %119 : vector<128xf32> to vector<1x128xf32>
    %cst_74 = arith.constant 1.280000e+02 : f32
    %121 = vector.broadcast %cst_74 : f32 to vector<1x128xf32>
    %122 = arith.divf %120, %121 : vector<1x128xf32>
    %123 = arith.mulf %118, %118 : vector<128x128xf32>
    %cst_75 = arith.constant dense<0.000000e+00> : vector<128xf32>
    %124 = vector.multi_reduction <add>, %123, %cst_75 [0] : vector<128x128xf32> to vector<128xf32>
    %125 = vector.shape_cast %124 : vector<128xf32> to vector<1x128xf32>
    %cst_76 = arith.constant 1.280000e+02 : f32
    %126 = vector.broadcast %cst_76 : f32 to vector<1x128xf32>
    %127 = arith.divf %125, %126 : vector<1x128xf32>
    %128 = arith.mulf %122, %122 : vector<1x128xf32>
    %129 = arith.subf %127, %128 : vector<1x128xf32>
    %c0_77 = arith.constant 0 : index
    %c0_78 = arith.constant 0 : index
    %130 = vector.load %arg3[%c0_77, %c0_78] : memref<2x128xf32, #tpu.memory_space<vmem>>, vector<1x128xf32>
    %cst_79 = arith.constant 9.99999974E-6 : f32
    %131 = vector.broadcast %cst_79 : f32 to vector<1x128xf32>
    %132 = arith.addf %129, %131 : vector<1x128xf32>
    %133 = math.rsqrt %132 : vector<1x128xf32>
    %134 = arith.mulf %130, %133 : vector<1x128xf32>
    %c1_80 = arith.constant 1 : index
    %c0_81 = arith.constant 0 : index
    %135 = vector.load %arg3[%c1_80, %c0_81] : memref<2x128xf32, #tpu.memory_space<vmem>>, vector<1x128xf32>
    %136 = arith.mulf %122, %134 : vector<1x128xf32>
    %137 = arith.subf %135, %136 : vector<1x128xf32>
    %138 = vector.broadcast %134 : vector<1x128xf32> to vector<128x128xf32>
    %139 = arith.mulf %118, %138 : vector<128x128xf32>
    %140 = vector.broadcast %137 : vector<1x128xf32> to vector<128x128xf32>
    %141 = arith.addf %139, %140 : vector<128x128xf32>
    %cst_82 = arith.constant 0.000000e+00 : f32
    %142 = vector.broadcast %cst_82 : f32 to vector<128x128xf32>
    %143 = arith.cmpf oge, %141, %142 : vector<128x128xf32>
    %cst_83 = arith.constant 0.00999999977 : f32
    %144 = vector.broadcast %cst_83 : f32 to vector<128x128xf32>
    %145 = arith.mulf %144, %141 : vector<128x128xf32>
    %146 = arith.select %143, %141, %145 : vector<128x128xi1>, vector<128x128xf32>
    %147 = arith.truncf %146 : vector<128x128xf32> to vector<128x128xbf16>
    %148 = tpu.iota {dimensions = array<i32: 1>} : vector<32x128xi32>
    %c0_84 = arith.constant 0 : index
    %c0_85 = arith.constant 0 : index
    %149 = vector.load %arg4[%c0_84, %c0_85] : memref<32x9xi32, #tpu.memory_space<vmem>>, vector<32x1xi32>
    %150 = vector.broadcast %149 : vector<32x1xi32> to vector<32x128xi32>
    %151 = arith.cmpi eq, %148, %150 : vector<32x128xi32>
    %cst_86 = arith.constant 1.000000e+00 : f32
    %cst_87 = arith.constant 0.000000e+00 : f32
    %152 = vector.broadcast %cst_86 : f32 to vector<32x128xf32>
    %153 = vector.broadcast %cst_87 : f32 to vector<32x128xf32>
    %154 = arith.select %151, %152, %153 : vector<32x128xi1>, vector<32x128xf32>
    %155 = arith.truncf %154 : vector<32x128xf32> to vector<32x128xbf16>
    %cst_88 = arith.constant dense<0.000000e+00> : vector<32x128xf32>
    %156 = tpu.matmul %155, %147, %cst_88 {dimension_numbers = #tpu.dot_dimension_numbers<[1], [0], [0], [1], [0, 0, 1, 1], [], []>} : vector<32x128xbf16>, vector<128x128xbf16>, vector<32x128xf32> -> vector<32x128xf32>
    %157 = arith.truncf %156 : vector<32x128xf32> to vector<32x128xbf16>
    %c0_89 = arith.constant 0 : index
    %c0_90 = arith.constant 0 : index
    %c0_91 = arith.constant 0 : index
    %158 = vector.load %arg5[%c0_89, %c0_90, %c0_91] : memref<9x128x128xbf16, #tpu.memory_space<vmem>>, vector<1x128x128xbf16>
    %159 = vector.shape_cast %158 : vector<1x128x128xbf16> to vector<128x128xbf16>
    %cst_92 = arith.constant dense<0.000000e+00> : vector<32x128xf32>
    %160 = tpu.matmul %157, %159, %cst_92 {dimension_numbers = #tpu.dot_dimension_numbers<[1], [0], [0], [1], [0, 0, 1, 1], [], []>} : vector<32x128xbf16>, vector<128x128xbf16>, vector<32x128xf32> -> vector<32x128xf32>
    %c0_93 = arith.constant 0 : index
    %c1_94 = arith.constant 1 : index
    %161 = vector.load %arg4[%c0_93, %c1_94] : memref<32x9xi32, #tpu.memory_space<vmem>>, vector<32x1xi32>
    %162 = vector.broadcast %161 : vector<32x1xi32> to vector<32x128xi32>
    %163 = arith.cmpi eq, %148, %162 : vector<32x128xi32>
    %cst_95 = arith.constant 1.000000e+00 : f32
    %cst_96 = arith.constant 0.000000e+00 : f32
    %164 = vector.broadcast %cst_95 : f32 to vector<32x128xf32>
    %165 = vector.broadcast %cst_96 : f32 to vector<32x128xf32>
    %166 = arith.select %163, %164, %165 : vector<32x128xi1>, vector<32x128xf32>
    %167 = arith.truncf %166 : vector<32x128xf32> to vector<32x128xbf16>
    %cst_97 = arith.constant dense<0.000000e+00> : vector<32x128xf32>
    %168 = tpu.matmul %167, %147, %cst_97 {dimension_numbers = #tpu.dot_dimension_numbers<[1], [0], [0], [1], [0, 0, 1, 1], [], []>} : vector<32x128xbf16>, vector<128x128xbf16>, vector<32x128xf32> -> vector<32x128xf32>
    %169 = arith.truncf %168 : vector<32x128xf32> to vector<32x128xbf16>
    %c1_98 = arith.constant 1 : index
    %c0_99 = arith.constant 0 : index
    %c0_100 = arith.constant 0 : index
    %170 = vector.load %arg5[%c1_98, %c0_99, %c0_100] : memref<9x128x128xbf16, #tpu.memory_space<vmem>>, vector<1x128x128xbf16>
    %171 = vector.shape_cast %170 : vector<1x128x128xbf16> to vector<128x128xbf16>
    %cst_101 = arith.constant dense<0.000000e+00> : vector<32x128xf32>
    %172 = tpu.matmul %169, %171, %cst_101 {dimension_numbers = #tpu.dot_dimension_numbers<[1], [0], [0], [1], [0, 0, 1, 1], [], []>} : vector<32x128xbf16>, vector<128x128xbf16>, vector<32x128xf32> -> vector<32x128xf32>
    %173 = arith.addf %160, %172 : vector<32x128xf32>
    %c0_102 = arith.constant 0 : index
    %c2_103 = arith.constant 2 : index
    %174 = vector.load %arg4[%c0_102, %c2_103] : memref<32x9xi32, #tpu.memory_space<vmem>>, vector<32x1xi32>
    %175 = vector.broadcast %174 : vector<32x1xi32> to vector<32x128xi32>
    %176 = arith.cmpi eq, %148, %175 : vector<32x128xi32>
    %cst_104 = arith.constant 1.000000e+00 : f32
    %cst_105 = arith.constant 0.000000e+00 : f32
    %177 = vector.broadcast %cst_104 : f32 to vector<32x128xf32>
    %178 = vector.broadcast %cst_105 : f32 to vector<32x128xf32>
    %179 = arith.select %176, %177, %178 : vector<32x128xi1>, vector<32x128xf32>
    %180 = arith.truncf %179 : vector<32x128xf32> to vector<32x128xbf16>
    %cst_106 = arith.constant dense<0.000000e+00> : vector<32x128xf32>
    %181 = tpu.matmul %180, %147, %cst_106 {dimension_numbers = #tpu.dot_dimension_numbers<[1], [0], [0], [1], [0, 0, 1, 1], [], []>} : vector<32x128xbf16>, vector<128x128xbf16>, vector<32x128xf32> -> vector<32x128xf32>
    %182 = arith.truncf %181 : vector<32x128xf32> to vector<32x128xbf16>
    %c2_107 = arith.constant 2 : index
    %c0_108 = arith.constant 0 : index
    %c0_109 = arith.constant 0 : index
    %183 = vector.load %arg5[%c2_107, %c0_108, %c0_109] : memref<9x128x128xbf16, #tpu.memory_space<vmem>>, vector<1x128x128xbf16>
    %184 = vector.shape_cast %183 : vector<1x128x128xbf16> to vector<128x128xbf16>
    %cst_110 = arith.constant dense<0.000000e+00> : vector<32x128xf32>
    %185 = tpu.matmul %182, %184, %cst_110 {dimension_numbers = #tpu.dot_dimension_numbers<[1], [0], [0], [1], [0, 0, 1, 1], [], []>} : vector<32x128xbf16>, vector<128x128xbf16>, vector<32x128xf32> -> vector<32x128xf32>
    %186 = arith.addf %173, %185 : vector<32x128xf32>
    %c0_111 = arith.constant 0 : index
    %c3_112 = arith.constant 3 : index
    %187 = vector.load %arg4[%c0_111, %c3_112] : memref<32x9xi32, #tpu.memory_space<vmem>>, vector<32x1xi32>
    %188 = vector.broadcast %187 : vector<32x1xi32> to vector<32x128xi32>
    %189 = arith.cmpi eq, %148, %188 : vector<32x128xi32>
    %cst_113 = arith.constant 1.000000e+00 : f32
    %cst_114 = arith.constant 0.000000e+00 : f32
    %190 = vector.broadcast %cst_113 : f32 to vector<32x128xf32>
    %191 = vector.broadcast %cst_114 : f32 to vector<32x128xf32>
    %192 = arith.select %189, %190, %191 : vector<32x128xi1>, vector<32x128xf32>
    %193 = arith.truncf %192 : vector<32x128xf32> to vector<32x128xbf16>
    %cst_115 = arith.constant dense<0.000000e+00> : vector<32x128xf32>
    %194 = tpu.matmul %193, %147, %cst_115 {dimension_numbers = #tpu.dot_dimension_numbers<[1], [0], [0], [1], [0, 0, 1, 1], [], []>} : vector<32x128xbf16>, vector<128x128xbf16>, vector<32x128xf32> -> vector<32x128xf32>
    %195 = arith.truncf %194 : vector<32x128xf32> to vector<32x128xbf16>
    %c3_116 = arith.constant 3 : index
    %c0_117 = arith.constant 0 : index
    %c0_118 = arith.constant 0 : index
    %196 = vector.load %arg5[%c3_116, %c0_117, %c0_118] : memref<9x128x128xbf16, #tpu.memory_space<vmem>>, vector<1x128x128xbf16>
    %197 = vector.shape_cast %196 : vector<1x128x128xbf16> to vector<128x128xbf16>
    %cst_119 = arith.constant dense<0.000000e+00> : vector<32x128xf32>
    %198 = tpu.matmul %195, %197, %cst_119 {dimension_numbers = #tpu.dot_dimension_numbers<[1], [0], [0], [1], [0, 0, 1, 1], [], []>} : vector<32x128xbf16>, vector<128x128xbf16>, vector<32x128xf32> -> vector<32x128xf32>
    %199 = arith.addf %186, %198 : vector<32x128xf32>
    %c0_120 = arith.constant 0 : index
    %c4_121 = arith.constant 4 : index
    %200 = vector.load %arg4[%c0_120, %c4_121] : memref<32x9xi32, #tpu.memory_space<vmem>>, vector<32x1xi32>
    %201 = vector.broadcast %200 : vector<32x1xi32> to vector<32x128xi32>
    %202 = arith.cmpi eq, %148, %201 : vector<32x128xi32>
    %cst_122 = arith.constant 1.000000e+00 : f32
    %cst_123 = arith.constant 0.000000e+00 : f32
    %203 = vector.broadcast %cst_122 : f32 to vector<32x128xf32>
    %204 = vector.broadcast %cst_123 : f32 to vector<32x128xf32>
    %205 = arith.select %202, %203, %204 : vector<32x128xi1>, vector<32x128xf32>
    %206 = arith.truncf %205 : vector<32x128xf32> to vector<32x128xbf16>
    %cst_124 = arith.constant dense<0.000000e+00> : vector<32x128xf32>
    %207 = tpu.matmul %206, %147, %cst_124 {dimension_numbers = #tpu.dot_dimension_numbers<[1], [0], [0], [1], [0, 0, 1, 1], [], []>} : vector<32x128xbf16>, vector<128x128xbf16>, vector<32x128xf32> -> vector<32x128xf32>
    %208 = arith.truncf %207 : vector<32x128xf32> to vector<32x128xbf16>
    %c4_125 = arith.constant 4 : index
    %c0_126 = arith.constant 0 : index
    %c0_127 = arith.constant 0 : index
    %209 = vector.load %arg5[%c4_125, %c0_126, %c0_127] : memref<9x128x128xbf16, #tpu.memory_space<vmem>>, vector<1x128x128xbf16>
    %210 = vector.shape_cast %209 : vector<1x128x128xbf16> to vector<128x128xbf16>
    %cst_128 = arith.constant dense<0.000000e+00> : vector<32x128xf32>
    %211 = tpu.matmul %208, %210, %cst_128 {dimension_numbers = #tpu.dot_dimension_numbers<[1], [0], [0], [1], [0, 0, 1, 1], [], []>} : vector<32x128xbf16>, vector<128x128xbf16>, vector<32x128xf32> -> vector<32x128xf32>
    %212 = arith.addf %199, %211 : vector<32x128xf32>
    %c0_129 = arith.constant 0 : index
    %c5_130 = arith.constant 5 : index
    %213 = vector.load %arg4[%c0_129, %c5_130] : memref<32x9xi32, #tpu.memory_space<vmem>>, vector<32x1xi32>
    %214 = vector.broadcast %213 : vector<32x1xi32> to vector<32x128xi32>
    %215 = arith.cmpi eq, %148, %214 : vector<32x128xi32>
    %cst_131 = arith.constant 1.000000e+00 : f32
    %cst_132 = arith.constant 0.000000e+00 : f32
    %216 = vector.broadcast %cst_131 : f32 to vector<32x128xf32>
    %217 = vector.broadcast %cst_132 : f32 to vector<32x128xf32>
    %218 = arith.select %215, %216, %217 : vector<32x128xi1>, vector<32x128xf32>
    %219 = arith.truncf %218 : vector<32x128xf32> to vector<32x128xbf16>
    %cst_133 = arith.constant dense<0.000000e+00> : vector<32x128xf32>
    %220 = tpu.matmul %219, %147, %cst_133 {dimension_numbers = #tpu.dot_dimension_numbers<[1], [0], [0], [1], [0, 0, 1, 1], [], []>} : vector<32x128xbf16>, vector<128x128xbf16>, vector<32x128xf32> -> vector<32x128xf32>
    %221 = arith.truncf %220 : vector<32x128xf32> to vector<32x128xbf16>
    %c5_134 = arith.constant 5 : index
    %c0_135 = arith.constant 0 : index
    %c0_136 = arith.constant 0 : index
    %222 = vector.load %arg5[%c5_134, %c0_135, %c0_136] : memref<9x128x128xbf16, #tpu.memory_space<vmem>>, vector<1x128x128xbf16>
    %223 = vector.shape_cast %222 : vector<1x128x128xbf16> to vector<128x128xbf16>
    %cst_137 = arith.constant dense<0.000000e+00> : vector<32x128xf32>
    %224 = tpu.matmul %221, %223, %cst_137 {dimension_numbers = #tpu.dot_dimension_numbers<[1], [0], [0], [1], [0, 0, 1, 1], [], []>} : vector<32x128xbf16>, vector<128x128xbf16>, vector<32x128xf32> -> vector<32x128xf32>
    %225 = arith.addf %212, %224 : vector<32x128xf32>
    %c0_138 = arith.constant 0 : index
    %c6_139 = arith.constant 6 : index
    %226 = vector.load %arg4[%c0_138, %c6_139] : memref<32x9xi32, #tpu.memory_space<vmem>>, vector<32x1xi32>
    %227 = vector.broadcast %226 : vector<32x1xi32> to vector<32x128xi32>
    %228 = arith.cmpi eq, %148, %227 : vector<32x128xi32>
    %cst_140 = arith.constant 1.000000e+00 : f32
    %cst_141 = arith.constant 0.000000e+00 : f32
    %229 = vector.broadcast %cst_140 : f32 to vector<32x128xf32>
    %230 = vector.broadcast %cst_141 : f32 to vector<32x128xf32>
    %231 = arith.select %228, %229, %230 : vector<32x128xi1>, vector<32x128xf32>
    %232 = arith.truncf %231 : vector<32x128xf32> to vector<32x128xbf16>
    %cst_142 = arith.constant dense<0.000000e+00> : vector<32x128xf32>
    %233 = tpu.matmul %232, %147, %cst_142 {dimension_numbers = #tpu.dot_dimension_numbers<[1], [0], [0], [1], [0, 0, 1, 1], [], []>} : vector<32x128xbf16>, vector<128x128xbf16>, vector<32x128xf32> -> vector<32x128xf32>
    %234 = arith.truncf %233 : vector<32x128xf32> to vector<32x128xbf16>
    %c6_143 = arith.constant 6 : index
    %c0_144 = arith.constant 0 : index
    %c0_145 = arith.constant 0 : index
    %235 = vector.load %arg5[%c6_143, %c0_144, %c0_145] : memref<9x128x128xbf16, #tpu.memory_space<vmem>>, vector<1x128x128xbf16>
    %236 = vector.shape_cast %235 : vector<1x128x128xbf16> to vector<128x128xbf16>
    %cst_146 = arith.constant dense<0.000000e+00> : vector<32x128xf32>
    %237 = tpu.matmul %234, %236, %cst_146 {dimension_numbers = #tpu.dot_dimension_numbers<[1], [0], [0], [1], [0, 0, 1, 1], [], []>} : vector<32x128xbf16>, vector<128x128xbf16>, vector<32x128xf32> -> vector<32x128xf32>
    %238 = arith.addf %225, %237 : vector<32x128xf32>
    %c0_147 = arith.constant 0 : index
    %c7_148 = arith.constant 7 : index
    %239 = vector.load %arg4[%c0_147, %c7_148] : memref<32x9xi32, #tpu.memory_space<vmem>>, vector<32x1xi32>
    %240 = vector.broadcast %239 : vector<32x1xi32> to vector<32x128xi32>
    %241 = arith.cmpi eq, %148, %240 : vector<32x128xi32>
    %cst_149 = arith.constant 1.000000e+00 : f32
    %cst_150 = arith.constant 0.000000e+00 : f32
    %242 = vector.broadcast %cst_149 : f32 to vector<32x128xf32>
    %243 = vector.broadcast %cst_150 : f32 to vector<32x128xf32>
    %244 = arith.select %241, %242, %243 : vector<32x128xi1>, vector<32x128xf32>
    %245 = arith.truncf %244 : vector<32x128xf32> to vector<32x128xbf16>
    %cst_151 = arith.constant dense<0.000000e+00> : vector<32x128xf32>
    %246 = tpu.matmul %245, %147, %cst_151 {dimension_numbers = #tpu.dot_dimension_numbers<[1], [0], [0], [1], [0, 0, 1, 1], [], []>} : vector<32x128xbf16>, vector<128x128xbf16>, vector<32x128xf32> -> vector<32x128xf32>
    %247 = arith.truncf %246 : vector<32x128xf32> to vector<32x128xbf16>
    %c7_152 = arith.constant 7 : index
    %c0_153 = arith.constant 0 : index
    %c0_154 = arith.constant 0 : index
    %248 = vector.load %arg5[%c7_152, %c0_153, %c0_154] : memref<9x128x128xbf16, #tpu.memory_space<vmem>>, vector<1x128x128xbf16>
    %249 = vector.shape_cast %248 : vector<1x128x128xbf16> to vector<128x128xbf16>
    %cst_155 = arith.constant dense<0.000000e+00> : vector<32x128xf32>
    %250 = tpu.matmul %247, %249, %cst_155 {dimension_numbers = #tpu.dot_dimension_numbers<[1], [0], [0], [1], [0, 0, 1, 1], [], []>} : vector<32x128xbf16>, vector<128x128xbf16>, vector<32x128xf32> -> vector<32x128xf32>
    %251 = arith.addf %238, %250 : vector<32x128xf32>
    %c0_156 = arith.constant 0 : index
    %c8_157 = arith.constant 8 : index
    %252 = vector.load %arg4[%c0_156, %c8_157] : memref<32x9xi32, #tpu.memory_space<vmem>>, vector<32x1xi32>
    %253 = vector.broadcast %252 : vector<32x1xi32> to vector<32x128xi32>
    %254 = arith.cmpi eq, %148, %253 : vector<32x128xi32>
    %cst_158 = arith.constant 1.000000e+00 : f32
    %cst_159 = arith.constant 0.000000e+00 : f32
    %255 = vector.broadcast %cst_158 : f32 to vector<32x128xf32>
    %256 = vector.broadcast %cst_159 : f32 to vector<32x128xf32>
    %257 = arith.select %254, %255, %256 : vector<32x128xi1>, vector<32x128xf32>
    %258 = arith.truncf %257 : vector<32x128xf32> to vector<32x128xbf16>
    %cst_160 = arith.constant dense<0.000000e+00> : vector<32x128xf32>
    %259 = tpu.matmul %258, %147, %cst_160 {dimension_numbers = #tpu.dot_dimension_numbers<[1], [0], [0], [1], [0, 0, 1, 1], [], []>} : vector<32x128xbf16>, vector<128x128xbf16>, vector<32x128xf32> -> vector<32x128xf32>
    %260 = arith.truncf %259 : vector<32x128xf32> to vector<32x128xbf16>
    %c8_161 = arith.constant 8 : index
    %c0_162 = arith.constant 0 : index
    %c0_163 = arith.constant 0 : index
    %261 = vector.load %arg5[%c8_161, %c0_162, %c0_163] : memref<9x128x128xbf16, #tpu.memory_space<vmem>>, vector<1x128x128xbf16>
    %262 = vector.shape_cast %261 : vector<1x128x128xbf16> to vector<128x128xbf16>
    %cst_164 = arith.constant dense<0.000000e+00> : vector<32x128xf32>
    %263 = tpu.matmul %260, %262, %cst_164 {dimension_numbers = #tpu.dot_dimension_numbers<[1], [0], [0], [1], [0, 0, 1, 1], [], []>} : vector<32x128xbf16>, vector<128x128xbf16>, vector<32x128xf32> -> vector<32x128xf32>
    %264 = arith.addf %251, %263 : vector<32x128xf32>
    %cst_165 = arith.constant dense<0.000000e+00> : vector<128xf32>
    %265 = vector.multi_reduction <add>, %264, %cst_165 [0] : vector<32x128xf32> to vector<128xf32>
    %266 = vector.shape_cast %265 : vector<128xf32> to vector<1x128xf32>
    %cst_166 = arith.constant 3.200000e+01 : f32
    %267 = vector.broadcast %cst_166 : f32 to vector<1x128xf32>
    %268 = arith.divf %266, %267 : vector<1x128xf32>
    %269 = arith.mulf %264, %264 : vector<32x128xf32>
    %cst_167 = arith.constant dense<0.000000e+00> : vector<128xf32>
    %270 = vector.multi_reduction <add>, %269, %cst_167 [0] : vector<32x128xf32> to vector<128xf32>
    %271 = vector.shape_cast %270 : vector<128xf32> to vector<1x128xf32>
    %cst_168 = arith.constant 3.200000e+01 : f32
    %272 = vector.broadcast %cst_168 : f32 to vector<1x128xf32>
    %273 = arith.divf %271, %272 : vector<1x128xf32>
    %274 = arith.mulf %268, %268 : vector<1x128xf32>
    %275 = arith.subf %273, %274 : vector<1x128xf32>
    %c0_169 = arith.constant 0 : index
    %c0_170 = arith.constant 0 : index
    %276 = vector.load %arg6[%c0_169, %c0_170] : memref<2x128xf32, #tpu.memory_space<vmem>>, vector<1x128xf32>
    %cst_171 = arith.constant 9.99999974E-6 : f32
    %277 = vector.broadcast %cst_171 : f32 to vector<1x128xf32>
    %278 = arith.addf %275, %277 : vector<1x128xf32>
    %279 = math.rsqrt %278 : vector<1x128xf32>
    %280 = arith.mulf %276, %279 : vector<1x128xf32>
    %c1_172 = arith.constant 1 : index
    %c0_173 = arith.constant 0 : index
    %281 = vector.load %arg6[%c1_172, %c0_173] : memref<2x128xf32, #tpu.memory_space<vmem>>, vector<1x128xf32>
    %282 = arith.mulf %268, %280 : vector<1x128xf32>
    %283 = arith.subf %281, %282 : vector<1x128xf32>
    %284 = vector.broadcast %280 : vector<1x128xf32> to vector<32x128xf32>
    %285 = arith.mulf %264, %284 : vector<32x128xf32>
    %286 = vector.broadcast %283 : vector<1x128xf32> to vector<32x128xf32>
    %287 = arith.addf %285, %286 : vector<32x128xf32>
    %cst_174 = arith.constant 0.000000e+00 : f32
    %288 = vector.broadcast %cst_174 : f32 to vector<32x128xf32>
    %289 = arith.cmpf oge, %287, %288 : vector<32x128xf32>
    %cst_175 = arith.constant 0.00999999977 : f32
    %290 = vector.broadcast %cst_175 : f32 to vector<32x128xf32>
    %291 = arith.mulf %290, %287 : vector<32x128xf32>
    %292 = arith.select %289, %287, %291 : vector<32x128xi1>, vector<32x128xf32>
    %293 = arith.truncf %292 : vector<32x128xf32> to vector<32x128xbf16>
    %294 = tpu.iota {dimensions = array<i32: 1>} : vector<8x32xi32>
    %c0_176 = arith.constant 0 : index
    %c0_177 = arith.constant 0 : index
    %295 = vector.load %arg7[%c0_176, %c0_177] : memref<8x9xi32, #tpu.memory_space<vmem>>, vector<8x1xi32>
    %296 = vector.broadcast %295 : vector<8x1xi32> to vector<8x32xi32>
    %297 = arith.cmpi eq, %294, %296 : vector<8x32xi32>
    %cst_178 = arith.constant 1.000000e+00 : f32
    %cst_179 = arith.constant 0.000000e+00 : f32
    %298 = vector.broadcast %cst_178 : f32 to vector<8x32xf32>
    %299 = vector.broadcast %cst_179 : f32 to vector<8x32xf32>
    %300 = arith.select %297, %298, %299 : vector<8x32xi1>, vector<8x32xf32>
    %301 = arith.truncf %300 : vector<8x32xf32> to vector<8x32xbf16>
    %cst_180 = arith.constant dense<0.000000e+00> : vector<8x128xf32>
    %302 = tpu.matmul %301, %293, %cst_180 {dimension_numbers = #tpu.dot_dimension_numbers<[1], [0], [0], [1], [0, 0, 1, 1], [], []>} : vector<8x32xbf16>, vector<32x128xbf16>, vector<8x128xf32> -> vector<8x128xf32>
    %303 = arith.truncf %302 : vector<8x128xf32> to vector<8x128xbf16>
    %c0_181 = arith.constant 0 : index
    %c0_182 = arith.constant 0 : index
    %c0_183 = arith.constant 0 : index
    %304 = vector.load %arg8[%c0_181, %c0_182, %c0_183] : memref<9x128x128xbf16, #tpu.memory_space<vmem>>, vector<1x128x128xbf16>
    %305 = vector.shape_cast %304 : vector<1x128x128xbf16> to vector<128x128xbf16>
    %cst_184 = arith.constant dense<0.000000e+00> : vector<8x128xf32>
    %306 = tpu.matmul %303, %305, %cst_184 {dimension_numbers = #tpu.dot_dimension_numbers<[1], [0], [0], [1], [0, 0, 1, 1], [], []>} : vector<8x128xbf16>, vector<128x128xbf16>, vector<8x128xf32> -> vector<8x128xf32>
    %c0_185 = arith.constant 0 : index
    %c1_186 = arith.constant 1 : index
    %307 = vector.load %arg7[%c0_185, %c1_186] : memref<8x9xi32, #tpu.memory_space<vmem>>, vector<8x1xi32>
    %308 = vector.broadcast %307 : vector<8x1xi32> to vector<8x32xi32>
    %309 = arith.cmpi eq, %294, %308 : vector<8x32xi32>
    %cst_187 = arith.constant 1.000000e+00 : f32
    %cst_188 = arith.constant 0.000000e+00 : f32
    %310 = vector.broadcast %cst_187 : f32 to vector<8x32xf32>
    %311 = vector.broadcast %cst_188 : f32 to vector<8x32xf32>
    %312 = arith.select %309, %310, %311 : vector<8x32xi1>, vector<8x32xf32>
    %313 = arith.truncf %312 : vector<8x32xf32> to vector<8x32xbf16>
    %cst_189 = arith.constant dense<0.000000e+00> : vector<8x128xf32>
    %314 = tpu.matmul %313, %293, %cst_189 {dimension_numbers = #tpu.dot_dimension_numbers<[1], [0], [0], [1], [0, 0, 1, 1], [], []>} : vector<8x32xbf16>, vector<32x128xbf16>, vector<8x128xf32> -> vector<8x128xf32>
    %315 = arith.truncf %314 : vector<8x128xf32> to vector<8x128xbf16>
    %c1_190 = arith.constant 1 : index
    %c0_191 = arith.constant 0 : index
    %c0_192 = arith.constant 0 : index
    %316 = vector.load %arg8[%c1_190, %c0_191, %c0_192] : memref<9x128x128xbf16, #tpu.memory_space<vmem>>, vector<1x128x128xbf16>
    %317 = vector.shape_cast %316 : vector<1x128x128xbf16> to vector<128x128xbf16>
    %cst_193 = arith.constant dense<0.000000e+00> : vector<8x128xf32>
    %318 = tpu.matmul %315, %317, %cst_193 {dimension_numbers = #tpu.dot_dimension_numbers<[1], [0], [0], [1], [0, 0, 1, 1], [], []>} : vector<8x128xbf16>, vector<128x128xbf16>, vector<8x128xf32> -> vector<8x128xf32>
    %319 = arith.addf %306, %318 : vector<8x128xf32>
    %c0_194 = arith.constant 0 : index
    %c2_195 = arith.constant 2 : index
    %320 = vector.load %arg7[%c0_194, %c2_195] : memref<8x9xi32, #tpu.memory_space<vmem>>, vector<8x1xi32>
    %321 = vector.broadcast %320 : vector<8x1xi32> to vector<8x32xi32>
    %322 = arith.cmpi eq, %294, %321 : vector<8x32xi32>
    %cst_196 = arith.constant 1.000000e+00 : f32
    %cst_197 = arith.constant 0.000000e+00 : f32
    %323 = vector.broadcast %cst_196 : f32 to vector<8x32xf32>
    %324 = vector.broadcast %cst_197 : f32 to vector<8x32xf32>
    %325 = arith.select %322, %323, %324 : vector<8x32xi1>, vector<8x32xf32>
    %326 = arith.truncf %325 : vector<8x32xf32> to vector<8x32xbf16>
    %cst_198 = arith.constant dense<0.000000e+00> : vector<8x128xf32>
    %327 = tpu.matmul %326, %293, %cst_198 {dimension_numbers = #tpu.dot_dimension_numbers<[1], [0], [0], [1], [0, 0, 1, 1], [], []>} : vector<8x32xbf16>, vector<32x128xbf16>, vector<8x128xf32> -> vector<8x128xf32>
    %328 = arith.truncf %327 : vector<8x128xf32> to vector<8x128xbf16>
    %c2_199 = arith.constant 2 : index
    %c0_200 = arith.constant 0 : index
    %c0_201 = arith.constant 0 : index
    %329 = vector.load %arg8[%c2_199, %c0_200, %c0_201] : memref<9x128x128xbf16, #tpu.memory_space<vmem>>, vector<1x128x128xbf16>
    %330 = vector.shape_cast %329 : vector<1x128x128xbf16> to vector<128x128xbf16>
    %cst_202 = arith.constant dense<0.000000e+00> : vector<8x128xf32>
    %331 = tpu.matmul %328, %330, %cst_202 {dimension_numbers = #tpu.dot_dimension_numbers<[1], [0], [0], [1], [0, 0, 1, 1], [], []>} : vector<8x128xbf16>, vector<128x128xbf16>, vector<8x128xf32> -> vector<8x128xf32>
    %332 = arith.addf %319, %331 : vector<8x128xf32>
    %c0_203 = arith.constant 0 : index
    %c3_204 = arith.constant 3 : index
    %333 = vector.load %arg7[%c0_203, %c3_204] : memref<8x9xi32, #tpu.memory_space<vmem>>, vector<8x1xi32>
    %334 = vector.broadcast %333 : vector<8x1xi32> to vector<8x32xi32>
    %335 = arith.cmpi eq, %294, %334 : vector<8x32xi32>
    %cst_205 = arith.constant 1.000000e+00 : f32
    %cst_206 = arith.constant 0.000000e+00 : f32
    %336 = vector.broadcast %cst_205 : f32 to vector<8x32xf32>
    %337 = vector.broadcast %cst_206 : f32 to vector<8x32xf32>
    %338 = arith.select %335, %336, %337 : vector<8x32xi1>, vector<8x32xf32>
    %339 = arith.truncf %338 : vector<8x32xf32> to vector<8x32xbf16>
    %cst_207 = arith.constant dense<0.000000e+00> : vector<8x128xf32>
    %340 = tpu.matmul %339, %293, %cst_207 {dimension_numbers = #tpu.dot_dimension_numbers<[1], [0], [0], [1], [0, 0, 1, 1], [], []>} : vector<8x32xbf16>, vector<32x128xbf16>, vector<8x128xf32> -> vector<8x128xf32>
    %341 = arith.truncf %340 : vector<8x128xf32> to vector<8x128xbf16>
    %c3_208 = arith.constant 3 : index
    %c0_209 = arith.constant 0 : index
    %c0_210 = arith.constant 0 : index
    %342 = vector.load %arg8[%c3_208, %c0_209, %c0_210] : memref<9x128x128xbf16, #tpu.memory_space<vmem>>, vector<1x128x128xbf16>
    %343 = vector.shape_cast %342 : vector<1x128x128xbf16> to vector<128x128xbf16>
    %cst_211 = arith.constant dense<0.000000e+00> : vector<8x128xf32>
    %344 = tpu.matmul %341, %343, %cst_211 {dimension_numbers = #tpu.dot_dimension_numbers<[1], [0], [0], [1], [0, 0, 1, 1], [], []>} : vector<8x128xbf16>, vector<128x128xbf16>, vector<8x128xf32> -> vector<8x128xf32>
    %345 = arith.addf %332, %344 : vector<8x128xf32>
    %c0_212 = arith.constant 0 : index
    %c4_213 = arith.constant 4 : index
    %346 = vector.load %arg7[%c0_212, %c4_213] : memref<8x9xi32, #tpu.memory_space<vmem>>, vector<8x1xi32>
    %347 = vector.broadcast %346 : vector<8x1xi32> to vector<8x32xi32>
    %348 = arith.cmpi eq, %294, %347 : vector<8x32xi32>
    %cst_214 = arith.constant 1.000000e+00 : f32
    %cst_215 = arith.constant 0.000000e+00 : f32
    %349 = vector.broadcast %cst_214 : f32 to vector<8x32xf32>
    %350 = vector.broadcast %cst_215 : f32 to vector<8x32xf32>
    %351 = arith.select %348, %349, %350 : vector<8x32xi1>, vector<8x32xf32>
    %352 = arith.truncf %351 : vector<8x32xf32> to vector<8x32xbf16>
    %cst_216 = arith.constant dense<0.000000e+00> : vector<8x128xf32>
    %353 = tpu.matmul %352, %293, %cst_216 {dimension_numbers = #tpu.dot_dimension_numbers<[1], [0], [0], [1], [0, 0, 1, 1], [], []>} : vector<8x32xbf16>, vector<32x128xbf16>, vector<8x128xf32> -> vector<8x128xf32>
    %354 = arith.truncf %353 : vector<8x128xf32> to vector<8x128xbf16>
    %c4_217 = arith.constant 4 : index
    %c0_218 = arith.constant 0 : index
    %c0_219 = arith.constant 0 : index
    %355 = vector.load %arg8[%c4_217, %c0_218, %c0_219] : memref<9x128x128xbf16, #tpu.memory_space<vmem>>, vector<1x128x128xbf16>
    %356 = vector.shape_cast %355 : vector<1x128x128xbf16> to vector<128x128xbf16>
    %cst_220 = arith.constant dense<0.000000e+00> : vector<8x128xf32>
    %357 = tpu.matmul %354, %356, %cst_220 {dimension_numbers = #tpu.dot_dimension_numbers<[1], [0], [0], [1], [0, 0, 1, 1], [], []>} : vector<8x128xbf16>, vector<128x128xbf16>, vector<8x128xf32> -> vector<8x128xf32>
    %358 = arith.addf %345, %357 : vector<8x128xf32>
    %c0_221 = arith.constant 0 : index
    %c5_222 = arith.constant 5 : index
    %359 = vector.load %arg7[%c0_221, %c5_222] : memref<8x9xi32, #tpu.memory_space<vmem>>, vector<8x1xi32>
    %360 = vector.broadcast %359 : vector<8x1xi32> to vector<8x32xi32>
    %361 = arith.cmpi eq, %294, %360 : vector<8x32xi32>
    %cst_223 = arith.constant 1.000000e+00 : f32
    %cst_224 = arith.constant 0.000000e+00 : f32
    %362 = vector.broadcast %cst_223 : f32 to vector<8x32xf32>
    %363 = vector.broadcast %cst_224 : f32 to vector<8x32xf32>
    %364 = arith.select %361, %362, %363 : vector<8x32xi1>, vector<8x32xf32>
    %365 = arith.truncf %364 : vector<8x32xf32> to vector<8x32xbf16>
    %cst_225 = arith.constant dense<0.000000e+00> : vector<8x128xf32>
    %366 = tpu.matmul %365, %293, %cst_225 {dimension_numbers = #tpu.dot_dimension_numbers<[1], [0], [0], [1], [0, 0, 1, 1], [], []>} : vector<8x32xbf16>, vector<32x128xbf16>, vector<8x128xf32> -> vector<8x128xf32>
    %367 = arith.truncf %366 : vector<8x128xf32> to vector<8x128xbf16>
    %c5_226 = arith.constant 5 : index
    %c0_227 = arith.constant 0 : index
    %c0_228 = arith.constant 0 : index
    %368 = vector.load %arg8[%c5_226, %c0_227, %c0_228] : memref<9x128x128xbf16, #tpu.memory_space<vmem>>, vector<1x128x128xbf16>
    %369 = vector.shape_cast %368 : vector<1x128x128xbf16> to vector<128x128xbf16>
    %cst_229 = arith.constant dense<0.000000e+00> : vector<8x128xf32>
    %370 = tpu.matmul %367, %369, %cst_229 {dimension_numbers = #tpu.dot_dimension_numbers<[1], [0], [0], [1], [0, 0, 1, 1], [], []>} : vector<8x128xbf16>, vector<128x128xbf16>, vector<8x128xf32> -> vector<8x128xf32>
    %371 = arith.addf %358, %370 : vector<8x128xf32>
    %c0_230 = arith.constant 0 : index
    %c6_231 = arith.constant 6 : index
    %372 = vector.load %arg7[%c0_230, %c6_231] : memref<8x9xi32, #tpu.memory_space<vmem>>, vector<8x1xi32>
    %373 = vector.broadcast %372 : vector<8x1xi32> to vector<8x32xi32>
    %374 = arith.cmpi eq, %294, %373 : vector<8x32xi32>
    %cst_232 = arith.constant 1.000000e+00 : f32
    %cst_233 = arith.constant 0.000000e+00 : f32
    %375 = vector.broadcast %cst_232 : f32 to vector<8x32xf32>
    %376 = vector.broadcast %cst_233 : f32 to vector<8x32xf32>
    %377 = arith.select %374, %375, %376 : vector<8x32xi1>, vector<8x32xf32>
    %378 = arith.truncf %377 : vector<8x32xf32> to vector<8x32xbf16>
    %cst_234 = arith.constant dense<0.000000e+00> : vector<8x128xf32>
    %379 = tpu.matmul %378, %293, %cst_234 {dimension_numbers = #tpu.dot_dimension_numbers<[1], [0], [0], [1], [0, 0, 1, 1], [], []>} : vector<8x32xbf16>, vector<32x128xbf16>, vector<8x128xf32> -> vector<8x128xf32>
    %380 = arith.truncf %379 : vector<8x128xf32> to vector<8x128xbf16>
    %c6_235 = arith.constant 6 : index
    %c0_236 = arith.constant 0 : index
    %c0_237 = arith.constant 0 : index
    %381 = vector.load %arg8[%c6_235, %c0_236, %c0_237] : memref<9x128x128xbf16, #tpu.memory_space<vmem>>, vector<1x128x128xbf16>
    %382 = vector.shape_cast %381 : vector<1x128x128xbf16> to vector<128x128xbf16>
    %cst_238 = arith.constant dense<0.000000e+00> : vector<8x128xf32>
    %383 = tpu.matmul %380, %382, %cst_238 {dimension_numbers = #tpu.dot_dimension_numbers<[1], [0], [0], [1], [0, 0, 1, 1], [], []>} : vector<8x128xbf16>, vector<128x128xbf16>, vector<8x128xf32> -> vector<8x128xf32>
    %384 = arith.addf %371, %383 : vector<8x128xf32>
    %c0_239 = arith.constant 0 : index
    %c7_240 = arith.constant 7 : index
    %385 = vector.load %arg7[%c0_239, %c7_240] : memref<8x9xi32, #tpu.memory_space<vmem>>, vector<8x1xi32>
    %386 = vector.broadcast %385 : vector<8x1xi32> to vector<8x32xi32>
    %387 = arith.cmpi eq, %294, %386 : vector<8x32xi32>
    %cst_241 = arith.constant 1.000000e+00 : f32
    %cst_242 = arith.constant 0.000000e+00 : f32
    %388 = vector.broadcast %cst_241 : f32 to vector<8x32xf32>
    %389 = vector.broadcast %cst_242 : f32 to vector<8x32xf32>
    %390 = arith.select %387, %388, %389 : vector<8x32xi1>, vector<8x32xf32>
    %391 = arith.truncf %390 : vector<8x32xf32> to vector<8x32xbf16>
    %cst_243 = arith.constant dense<0.000000e+00> : vector<8x128xf32>
    %392 = tpu.matmul %391, %293, %cst_243 {dimension_numbers = #tpu.dot_dimension_numbers<[1], [0], [0], [1], [0, 0, 1, 1], [], []>} : vector<8x32xbf16>, vector<32x128xbf16>, vector<8x128xf32> -> vector<8x128xf32>
    %393 = arith.truncf %392 : vector<8x128xf32> to vector<8x128xbf16>
    %c7_244 = arith.constant 7 : index
    %c0_245 = arith.constant 0 : index
    %c0_246 = arith.constant 0 : index
    %394 = vector.load %arg8[%c7_244, %c0_245, %c0_246] : memref<9x128x128xbf16, #tpu.memory_space<vmem>>, vector<1x128x128xbf16>
    %395 = vector.shape_cast %394 : vector<1x128x128xbf16> to vector<128x128xbf16>
    %cst_247 = arith.constant dense<0.000000e+00> : vector<8x128xf32>
    %396 = tpu.matmul %393, %395, %cst_247 {dimension_numbers = #tpu.dot_dimension_numbers<[1], [0], [0], [1], [0, 0, 1, 1], [], []>} : vector<8x128xbf16>, vector<128x128xbf16>, vector<8x128xf32> -> vector<8x128xf32>
    %397 = arith.addf %384, %396 : vector<8x128xf32>
    %c0_248 = arith.constant 0 : index
    %c8_249 = arith.constant 8 : index
    %398 = vector.load %arg7[%c0_248, %c8_249] : memref<8x9xi32, #tpu.memory_space<vmem>>, vector<8x1xi32>
    %399 = vector.broadcast %398 : vector<8x1xi32> to vector<8x32xi32>
    %400 = arith.cmpi eq, %294, %399 : vector<8x32xi32>
    %cst_250 = arith.constant 1.000000e+00 : f32
    %cst_251 = arith.constant 0.000000e+00 : f32
    %401 = vector.broadcast %cst_250 : f32 to vector<8x32xf32>
    %402 = vector.broadcast %cst_251 : f32 to vector<8x32xf32>
    %403 = arith.select %400, %401, %402 : vector<8x32xi1>, vector<8x32xf32>
    %404 = arith.truncf %403 : vector<8x32xf32> to vector<8x32xbf16>
    %cst_252 = arith.constant dense<0.000000e+00> : vector<8x128xf32>
    %405 = tpu.matmul %404, %293, %cst_252 {dimension_numbers = #tpu.dot_dimension_numbers<[1], [0], [0], [1], [0, 0, 1, 1], [], []>} : vector<8x32xbf16>, vector<32x128xbf16>, vector<8x128xf32> -> vector<8x128xf32>
    %406 = arith.truncf %405 : vector<8x128xf32> to vector<8x128xbf16>
    %c8_253 = arith.constant 8 : index
    %c0_254 = arith.constant 0 : index
    %c0_255 = arith.constant 0 : index
    %407 = vector.load %arg8[%c8_253, %c0_254, %c0_255] : memref<9x128x128xbf16, #tpu.memory_space<vmem>>, vector<1x128x128xbf16>
    %408 = vector.shape_cast %407 : vector<1x128x128xbf16> to vector<128x128xbf16>
    %cst_256 = arith.constant dense<0.000000e+00> : vector<8x128xf32>
    %409 = tpu.matmul %406, %408, %cst_256 {dimension_numbers = #tpu.dot_dimension_numbers<[1], [0], [0], [1], [0, 0, 1, 1], [], []>} : vector<8x128xbf16>, vector<128x128xbf16>, vector<8x128xf32> -> vector<8x128xf32>
    %410 = arith.addf %397, %409 : vector<8x128xf32>
    %cst_257 = arith.constant dense<0.000000e+00> : vector<128xf32>
    %411 = vector.multi_reduction <add>, %410, %cst_257 [0] : vector<8x128xf32> to vector<128xf32>
    %412 = vector.shape_cast %411 : vector<128xf32> to vector<1x128xf32>
    %cst_258 = arith.constant 8.000000e+00 : f32
    %413 = vector.broadcast %cst_258 : f32 to vector<1x128xf32>
    %414 = arith.divf %412, %413 : vector<1x128xf32>
    %415 = arith.mulf %410, %410 : vector<8x128xf32>
    %cst_259 = arith.constant dense<0.000000e+00> : vector<128xf32>
    %416 = vector.multi_reduction <add>, %415, %cst_259 [0] : vector<8x128xf32> to vector<128xf32>
    %417 = vector.shape_cast %416 : vector<128xf32> to vector<1x128xf32>
    %cst_260 = arith.constant 8.000000e+00 : f32
    %418 = vector.broadcast %cst_260 : f32 to vector<1x128xf32>
    %419 = arith.divf %417, %418 : vector<1x128xf32>
    %420 = arith.mulf %414, %414 : vector<1x128xf32>
    %421 = arith.subf %419, %420 : vector<1x128xf32>
    %c0_261 = arith.constant 0 : index
    %c0_262 = arith.constant 0 : index
    %422 = vector.load %arg9[%c0_261, %c0_262] : memref<2x128xf32, #tpu.memory_space<vmem>>, vector<1x128xf32>
    %cst_263 = arith.constant 9.99999974E-6 : f32
    %423 = vector.broadcast %cst_263 : f32 to vector<1x128xf32>
    %424 = arith.addf %421, %423 : vector<1x128xf32>
    %425 = math.rsqrt %424 : vector<1x128xf32>
    %426 = arith.mulf %422, %425 : vector<1x128xf32>
    %c1_264 = arith.constant 1 : index
    %c0_265 = arith.constant 0 : index
    %427 = vector.load %arg9[%c1_264, %c0_265] : memref<2x128xf32, #tpu.memory_space<vmem>>, vector<1x128xf32>
    %428 = arith.mulf %414, %426 : vector<1x128xf32>
    %429 = arith.subf %427, %428 : vector<1x128xf32>
    %430 = vector.broadcast %426 : vector<1x128xf32> to vector<8x128xf32>
    %431 = arith.mulf %410, %430 : vector<8x128xf32>
    %432 = vector.broadcast %429 : vector<1x128xf32> to vector<8x128xf32>
    %433 = arith.addf %431, %432 : vector<8x128xf32>
    %cst_266 = arith.constant 0.000000e+00 : f32
    %434 = vector.broadcast %cst_266 : f32 to vector<8x128xf32>
    %435 = arith.cmpf oge, %433, %434 : vector<8x128xf32>
    %cst_267 = arith.constant 0.00999999977 : f32
    %436 = vector.broadcast %cst_267 : f32 to vector<8x128xf32>
    %437 = arith.mulf %436, %433 : vector<8x128xf32>
    %438 = arith.select %435, %433, %437 : vector<8x128xi1>, vector<8x128xf32>
    %439 = arith.truncf %438 : vector<8x128xf32> to vector<8x128xbf16>
    %440 = tpu.iota {dimensions = array<i32: 1>} : vector<2x8xi32>
    %c0_268 = arith.constant 0 : index
    %c0_269 = arith.constant 0 : index
    %441 = vector.load %arg10[%c0_268, %c0_269] : memref<2x4xi32, #tpu.memory_space<vmem>>, vector<2x1xi32>
    %442 = vector.broadcast %441 : vector<2x1xi32> to vector<2x8xi32>
    %443 = arith.cmpi eq, %440, %442 : vector<2x8xi32>
    %cst_270 = arith.constant 1.000000e+00 : f32
    %cst_271 = arith.constant 0.000000e+00 : f32
    %444 = vector.broadcast %cst_270 : f32 to vector<2x8xf32>
    %445 = vector.broadcast %cst_271 : f32 to vector<2x8xf32>
    %446 = arith.select %443, %444, %445 : vector<2x8xi1>, vector<2x8xf32>
    %447 = arith.truncf %446 : vector<2x8xf32> to vector<2x8xbf16>
    %cst_272 = arith.constant dense<0.000000e+00> : vector<2x128xf32>
    %448 = tpu.matmul %447, %439, %cst_272 {dimension_numbers = #tpu.dot_dimension_numbers<[1], [0], [0], [1], [0, 0, 1, 1], [], []>} : vector<2x8xbf16>, vector<8x128xbf16>, vector<2x128xf32> -> vector<2x128xf32>
    %449 = arith.truncf %448 : vector<2x128xf32> to vector<2x128xbf16>
    %c0_273 = arith.constant 0 : index
    %c0_274 = arith.constant 0 : index
    %c0_275 = arith.constant 0 : index
    %450 = vector.load %arg11[%c0_273, %c0_274, %c0_275] : memref<4x128x256xbf16, #tpu.memory_space<vmem>>, vector<1x128x256xbf16>
    %451 = vector.shape_cast %450 : vector<1x128x256xbf16> to vector<128x256xbf16>
    %cst_276 = arith.constant dense<0.000000e+00> : vector<2x256xf32>
    %452 = tpu.matmul %449, %451, %cst_276 {dimension_numbers = #tpu.dot_dimension_numbers<[1], [0], [0], [1], [0, 0, 1, 1], [], []>} : vector<2x128xbf16>, vector<128x256xbf16>, vector<2x256xf32> -> vector<2x256xf32>
    %c0_277 = arith.constant 0 : index
    %c1_278 = arith.constant 1 : index
    %453 = vector.load %arg10[%c0_277, %c1_278] : memref<2x4xi32, #tpu.memory_space<vmem>>, vector<2x1xi32>
    %454 = vector.broadcast %453 : vector<2x1xi32> to vector<2x8xi32>
    %455 = arith.cmpi eq, %440, %454 : vector<2x8xi32>
    %cst_279 = arith.constant 1.000000e+00 : f32
    %cst_280 = arith.constant 0.000000e+00 : f32
    %456 = vector.broadcast %cst_279 : f32 to vector<2x8xf32>
    %457 = vector.broadcast %cst_280 : f32 to vector<2x8xf32>
    %458 = arith.select %455, %456, %457 : vector<2x8xi1>, vector<2x8xf32>
    %459 = arith.truncf %458 : vector<2x8xf32> to vector<2x8xbf16>
    %cst_281 = arith.constant dense<0.000000e+00> : vector<2x128xf32>
    %460 = tpu.matmul %459, %439, %cst_281 {dimension_numbers = #tpu.dot_dimension_numbers<[1], [0], [0], [1], [0, 0, 1, 1], [], []>} : vector<2x8xbf16>, vector<8x128xbf16>, vector<2x128xf32> -> vector<2x128xf32>
    %461 = arith.truncf %460 : vector<2x128xf32> to vector<2x128xbf16>
    %c1_282 = arith.constant 1 : index
    %c0_283 = arith.constant 0 : index
    %c0_284 = arith.constant 0 : index
    %462 = vector.load %arg11[%c1_282, %c0_283, %c0_284] : memref<4x128x256xbf16, #tpu.memory_space<vmem>>, vector<1x128x256xbf16>
    %463 = vector.shape_cast %462 : vector<1x128x256xbf16> to vector<128x256xbf16>
    %cst_285 = arith.constant dense<0.000000e+00> : vector<2x256xf32>
    %464 = tpu.matmul %461, %463, %cst_285 {dimension_numbers = #tpu.dot_dimension_numbers<[1], [0], [0], [1], [0, 0, 1, 1], [], []>} : vector<2x128xbf16>, vector<128x256xbf16>, vector<2x256xf32> -> vector<2x256xf32>
    %465 = arith.addf %452, %464 : vector<2x256xf32>
    %c0_286 = arith.constant 0 : index
    %c2_287 = arith.constant 2 : index
    %466 = vector.load %arg10[%c0_286, %c2_287] : memref<2x4xi32, #tpu.memory_space<vmem>>, vector<2x1xi32>
    %467 = vector.broadcast %466 : vector<2x1xi32> to vector<2x8xi32>
    %468 = arith.cmpi eq, %440, %467 : vector<2x8xi32>
    %cst_288 = arith.constant 1.000000e+00 : f32
    %cst_289 = arith.constant 0.000000e+00 : f32
    %469 = vector.broadcast %cst_288 : f32 to vector<2x8xf32>
    %470 = vector.broadcast %cst_289 : f32 to vector<2x8xf32>
    %471 = arith.select %468, %469, %470 : vector<2x8xi1>, vector<2x8xf32>
    %472 = arith.truncf %471 : vector<2x8xf32> to vector<2x8xbf16>
    %cst_290 = arith.constant dense<0.000000e+00> : vector<2x128xf32>
    %473 = tpu.matmul %472, %439, %cst_290 {dimension_numbers = #tpu.dot_dimension_numbers<[1], [0], [0], [1], [0, 0, 1, 1], [], []>} : vector<2x8xbf16>, vector<8x128xbf16>, vector<2x128xf32> -> vector<2x128xf32>
    %474 = arith.truncf %473 : vector<2x128xf32> to vector<2x128xbf16>
    %c2_291 = arith.constant 2 : index
    %c0_292 = arith.constant 0 : index
    %c0_293 = arith.constant 0 : index
    %475 = vector.load %arg11[%c2_291, %c0_292, %c0_293] : memref<4x128x256xbf16, #tpu.memory_space<vmem>>, vector<1x128x256xbf16>
    %476 = vector.shape_cast %475 : vector<1x128x256xbf16> to vector<128x256xbf16>
    %cst_294 = arith.constant dense<0.000000e+00> : vector<2x256xf32>
    %477 = tpu.matmul %474, %476, %cst_294 {dimension_numbers = #tpu.dot_dimension_numbers<[1], [0], [0], [1], [0, 0, 1, 1], [], []>} : vector<2x128xbf16>, vector<128x256xbf16>, vector<2x256xf32> -> vector<2x256xf32>
    %478 = arith.addf %465, %477 : vector<2x256xf32>
    %c0_295 = arith.constant 0 : index
    %c3_296 = arith.constant 3 : index
    %479 = vector.load %arg10[%c0_295, %c3_296] : memref<2x4xi32, #tpu.memory_space<vmem>>, vector<2x1xi32>
    %480 = vector.broadcast %479 : vector<2x1xi32> to vector<2x8xi32>
    %481 = arith.cmpi eq, %440, %480 : vector<2x8xi32>
    %cst_297 = arith.constant 1.000000e+00 : f32
    %cst_298 = arith.constant 0.000000e+00 : f32
    %482 = vector.broadcast %cst_297 : f32 to vector<2x8xf32>
    %483 = vector.broadcast %cst_298 : f32 to vector<2x8xf32>
    %484 = arith.select %481, %482, %483 : vector<2x8xi1>, vector<2x8xf32>
    %485 = arith.truncf %484 : vector<2x8xf32> to vector<2x8xbf16>
    %cst_299 = arith.constant dense<0.000000e+00> : vector<2x128xf32>
    %486 = tpu.matmul %485, %439, %cst_299 {dimension_numbers = #tpu.dot_dimension_numbers<[1], [0], [0], [1], [0, 0, 1, 1], [], []>} : vector<2x8xbf16>, vector<8x128xbf16>, vector<2x128xf32> -> vector<2x128xf32>
    %487 = arith.truncf %486 : vector<2x128xf32> to vector<2x128xbf16>
    %c3_300 = arith.constant 3 : index
    %c0_301 = arith.constant 0 : index
    %c0_302 = arith.constant 0 : index
    %488 = vector.load %arg11[%c3_300, %c0_301, %c0_302] : memref<4x128x256xbf16, #tpu.memory_space<vmem>>, vector<1x128x256xbf16>
    %489 = vector.shape_cast %488 : vector<1x128x256xbf16> to vector<128x256xbf16>
    %cst_303 = arith.constant dense<0.000000e+00> : vector<2x256xf32>
    %490 = tpu.matmul %487, %489, %cst_303 {dimension_numbers = #tpu.dot_dimension_numbers<[1], [0], [0], [1], [0, 0, 1, 1], [], []>} : vector<2x128xbf16>, vector<128x256xbf16>, vector<2x256xf32> -> vector<2x256xf32>
    %491 = arith.addf %478, %490 : vector<2x256xf32>
    %c0_304 = arith.constant 0 : index
    %c0_305 = arith.constant 0 : index
    %492 = vector.load %arg12[%c0_304, %c0_305] : memref<1x256xf32, #tpu.memory_space<vmem>>, vector<1x256xf32>
    %493 = vector.broadcast %492 : vector<1x256xf32> to vector<2x256xf32>
    %494 = arith.addf %491, %493 : vector<2x256xf32>
    %495 = vector.extract_strided_slice %494 {offsets = [0, 0], sizes = [2, 128], strides = [1, 1]} : vector<2x256xf32> to vector<2x128xf32>
    %496 = vector.extract_strided_slice %494 {offsets = [0, 128], sizes = [2, 128], strides = [1, 1]} : vector<2x256xf32> to vector<2x128xf32>
    %497 = math.exp %496 : vector<2x128xf32>
    %c0_306 = arith.constant 0 : index
    %c0_307 = arith.constant 0 : index
    %498 = vector.load %arg13[%c0_306, %c0_307] : memref<2x128xf32, #tpu.memory_space<vmem>>, vector<2x128xf32>
    %499 = math.sqrt %497 : vector<2x128xf32>
    %500 = arith.mulf %498, %499 : vector<2x128xf32>
    %501 = arith.addf %500, %495 : vector<2x128xf32>
    %c0_308 = arith.constant 0 : index
    %c0_309 = arith.constant 0 : index
    %502 = vector.load %arg14[%c0_308, %c0_309] : memref<2x128xf32, #tpu.memory_space<vmem>>, vector<2x128xf32>
    tpu.vector_store %arg14[%c0_308, %c0_309], %501 {strides = array<i32>} : memref<2x128xf32, #tpu.memory_space<vmem>>, vector<2x128xf32>,
    %c0_310 = arith.constant 0 : index
    %c0_311 = arith.constant 0 : index
    %503 = vector.load %arg15[%c0_310, %c0_311] : memref<2x128xf32, #tpu.memory_space<vmem>>, vector<2x128xf32>
    tpu.vector_store %arg15[%c0_310, %c0_311], %495 {strides = array<i32>} : memref<2x128xf32, #tpu.memory_space<vmem>>, vector<2x128xf32>,
    %c0_312 = arith.constant 0 : index
    %c0_313 = arith.constant 0 : index
    %504 = vector.load %arg16[%c0_312, %c0_313] : memref<2x128xf32, #tpu.memory_space<vmem>>, vector<2x128xf32>
    tpu.vector_store %arg16[%c0_312, %c0_313], %496 {strides = array<i32>} : memref<2x128xf32, #tpu.memory_space<vmem>>, vector<2x128xf32>,
    %cst_314 = arith.constant 1.000000e+00 : f32
    %505 = vector.broadcast %cst_314 : f32 to vector<2x128xf32>
    %506 = arith.addf %505, %496 : vector<2x128xf32>
    %507 = arith.mulf %495, %495 : vector<2x128xf32>
    %508 = arith.subf %506, %507 : vector<2x128xf32>
    %509 = arith.subf %508, %497 : vector<2x128xf32>
    %c0_315 = arith.constant 0 : index
    %c0_316 = arith.constant 0 : index
    %510 = vector.load %arg17[%c0_315, %c0_316] : memref<2x128xf32, #tpu.memory_space<vmem>>, vector<2x128xf32>
    tpu.vector_store %arg17[%c0_315, %c0_316], %509 {strides = array<i32>} : memref<2x128xf32, #tpu.memory_space<vmem>>, vector<2x128xf32>,
    return
  }
}

</mosaic_0001>

<llo_original>
// kernel: tpu_custom_call.1
$region0: #{tpu_custom_call.1}
  #allocation0 [shape = 'u32[]', space=smem, size = 0x4, offset = 0x4, fixed_abs, tag = 'smem constant byte address 0x4 - core index']
  #allocation1 [shape = 'u32[144,128]{1,0:T(1,128)}', space=vmem, size = 0x12000, scoped, tag = 'internal scratch']
  %s0 = inlined_call_operand.hbm [shape: f32[512,128], index: 0, kind: input, shape index: {}]
  %s1 = inlined_call_operand.vmem [shape: s32[128,9], index: 1, kind: input, shape index: {}]
  %s2 = inlined_call_operand.hbm [shape: bf16[9,128,128], index: 2, kind: input, shape index: {}]
  %s3 = inlined_call_operand.vmem [shape: f32[2,128], index: 3, kind: input, shape index: {}]
  %s4 = inlined_call_operand.vmem [shape: s32[32,9], index: 4, kind: input, shape index: {}]
  %s5 = inlined_call_operand.hbm [shape: bf16[9,128,128], index: 5, kind: input, shape index: {}]
  %s6 = inlined_call_operand.vmem [shape: f32[2,128], index: 6, kind: input, shape index: {}]
  %s7 = inlined_call_operand.vmem [shape: s32[8,9], index: 7, kind: input, shape index: {}]
  %s8 = inlined_call_operand.hbm [shape: bf16[9,128,128], index: 8, kind: input, shape index: {}]
  %s9 = inlined_call_operand.vmem [shape: f32[2,128], index: 9, kind: input, shape index: {}]
  %s10 = inlined_call_operand.vmem [shape: s32[2,4], index: 10, kind: input, shape index: {}]
  %s11 = inlined_call_operand.hbm [shape: bf16[4,128,256], index: 11, kind: input, shape index: {}]
  %s12 = inlined_call_operand.vmem [shape: f32[1,256], index: 12, kind: input, shape index: {}]
  %s13 = inlined_call_operand.vmem [shape: f32[2,128], index: 13, kind: input, shape index: {}]
  %s14 = inlined_call_operand.hbm [shape: f32[2,128], index: 14, kind: output, shape index: {0}]
  %s15 = inlined_call_operand.hbm [shape: f32[2,128], index: 15, kind: output, shape index: {1}]
  %s16 = inlined_call_operand.hbm [shape: f32[2,128], index: 16, kind: output, shape index: {2}]
  %s17 = inlined_call_operand.hbm [shape: f32[2,128], index: 17, kind: output, shape index: {3}]
  %18 = xla_tuple %s14, %s15, %s16, %s17
  %s19 = sld [smem:[#allocation0]]
  $region110: #{tpu_custom_call.1} parent=0
    _
  %s21 = ssub.s32 1, %s19
  %s22 = scalar_select 0, %s21, %s19
  $region1: #{tpu_custom_call.1} parent=0
    #allocation2 [shape = 'u8[262144]{0}', space=vmem, size = 0x40000, scoped, tag = 'input window, operand 0, single buffered']
    #allocation3 [shape = 's32[1]{0}', space=sflag, size = 0x4, scoped, tag = 'scoped memory for tpu_custom_call.1']
    #allocation4 [shape = 's32[1]{0}', space=sflag, size = 0x4, scoped, tag = 'scoped memory for tpu_custom_call.1']
    #allocation5 [shape = 'u8[294912]{0}', space=vmem, size = 0x48000, scoped, tag = 'input window, operand 2, single buffered']
    #allocation6 [shape = 's32[1]{0}', space=sflag, size = 0x4, scoped, tag = 'scoped memory for tpu_custom_call.1']
    #allocation7 [shape = 'u8[294912]{0}', space=vmem, size = 0x48000, scoped, tag = 'input window, operand 5, single buffered']
    #allocation8 [shape = 'u8[294912]{0}', space=vmem, size = 0x48000, scoped, tag = 'input window, operand 8, single buffered']
    #allocation9 [shape = 's32[1]{0}', space=sflag, size = 0x4, scoped, tag = 'scoped memory for tpu_custom_call.1']
    #allocation10 [shape = 'u8[262144]{0}', space=vmem, size = 0x40000, scoped, tag = 'input window, operand 11, single buffered']
    #allocation11 [shape = 'u8[1024]{0}', space=vmem, size = 0x400, scoped, tag = 'output window, operand 0, single buffered']
    #allocation12 [shape = 'u8[1024]{0}', space=vmem, size = 0x400, scoped, tag = 'output window, operand 1, single buffered']
    #allocation13 [shape = 's32[1]{0}', space=sflag, size = 0x4, scoped, tag = 'scoped memory for tpu_custom_call.1']
    #allocation14 [shape = 'u8[1024]{0}', space=vmem, size = 0x400, scoped, tag = 'output window, operand 2, single buffered']
    #allocation15 [shape = 'u8[1024]{0}', space=vmem, size = 0x400, scoped, tag = 'output window, operand 3, single buffered']
    #allocation16 [shape = 's32[1]{0}', space=sflag, size = 0x4, scoped, tag = 'scoped memory for tpu_custom_call.1']
    %23 = vsyncpa [#allocation3], 0
    %24 = vsyncpa [#allocation6], 0
    %25 = vsyncpa [#allocation9], 0
    %26 = vsyncpa [#allocation4], 0
    %27 = vsyncpa [#allocation13], 0
    %28 = vsyncpa [#allocation16], 0
    // Predicated region
    $region2: #{tpu_custom_call.1} parent=1 // pred_check
      _
    $region3: #{tpu_custom_call.1} parent=1 // pred_check_branch
      %30 = sbr.rel (0) target = $region5
    $region4: #{tpu_custom_call.1} parent=1 // pred_region
      %s32 = ssub.s32 8192, 8192
      %33 = vsyncadd [#allocation3], %s32
      %s34 = sshll.u32 [#allocation2], 4
      %s35 = int_to_ptr.vmem [resolvable:$true] %s34
      %40 = dma.hbm_to_vmem [thread:$0]  %s0, 8192, %s35, [#allocation3], 128, 128, 8
    $region5: #{tpu_custom_call.1} parent=1 // pred_fallthru
      _
    // Predicated region
    $region6: #{tpu_custom_call.1} parent=1 // pred_check
      _
    $region7: #{tpu_custom_call.1} parent=1 // pred_check_branch
      %42 = sbr.rel (0) target = $region9
    $region8: #{tpu_custom_call.1} parent=1 // pred_region
      _
    $region9: #{tpu_custom_call.1} parent=1 // pred_fallthru
      _
    // Predicated region
    $region10: #{tpu_custom_call.1} parent=1 // pred_check
      _
    $region11: #{tpu_custom_call.1} parent=1 // pred_check_branch
      %44 = sbr.rel (0) target = $region13
    $region12: #{tpu_custom_call.1} parent=1 // pred_region
      %s46 = ssub.s32 9216, 9216
      %47 = vsyncadd [#allocation6], %s46
      %s48 = sshll.u32 [#allocation5], 4
      %s49 = int_to_ptr.vmem [resolvable:$true] %s48
      %54 = dma.hbm_to_vmem [thread:$0]  %s2, 9216, %s49, [#allocation6], 64, 64, 4
    $region13: #{tpu_custom_call.1} parent=1 // pred_fallthru
      _
    // Predicated region
    $region14: #{tpu_custom_call.1} parent=1 // pred_check
      _
    $region15: #{tpu_custom_call.1} parent=1 // pred_check_branch
      %56 = sbr.rel (0) target = $region17
    $region16: #{tpu_custom_call.1} parent=1 // pred_region
      _
    $region17: #{tpu_custom_call.1} parent=1 // pred_fallthru
      _
    // Predicated region
    $region18: #{tpu_custom_call.1} parent=1 // pred_check
      _
    $region19: #{tpu_custom_call.1} parent=1 // pred_check_branch
      %58 = sbr.rel (0) target = $region21
    $region20: #{tpu_custom_call.1} parent=1 // pred_region
      _
    $region21: #{tpu_custom_call.1} parent=1 // pred_fallthru
      _
    // Predicated region
    $region22: #{tpu_custom_call.1} parent=1 // pred_check
      _
    $region23: #{tpu_custom_call.1} parent=1 // pred_check_branch
      %60 = sbr.rel (0) target = $region25
    $region24: #{tpu_custom_call.1} parent=1 // pred_region
      %s62 = ssub.s32 9216, 9216
      %63 = vsyncadd [#allocation6], %s62
      %s64 = sshll.u32 [#allocation7], 4
      %s65 = int_to_ptr.vmem [resolvable:$true] %s64
      %70 = dma.hbm_to_vmem [thread:$0]  %s5, 9216, %s65, [#allocation6], 64, 64, 4
    $region25: #{tpu_custom_call.1} parent=1 // pred_fallthru
      _
    // Predicated region
    $region26: #{tpu_custom_call.1} parent=1 // pred_check
      _
    $region27: #{tpu_custom_call.1} parent=1 // pred_check_branch
      %72 = sbr.rel (0) target = $region29
    $region28: #{tpu_custom_call.1} parent=1 // pred_region
      _
    $region29: #{tpu_custom_call.1} parent=1 // pred_fallthru
      _
    // Predicated region
    $region30: #{tpu_custom_call.1} parent=1 // pred_check
      _
    $region31: #{tpu_custom_call.1} parent=1 // pred_check_branch
      %74 = sbr.rel (0) target = $region33
    $region32: #{tpu_custom_call.1} parent=1 // pred_region
      _
    $region33: #{tpu_custom_call.1} parent=1 // pred_fallthru
      _
    // Predicated region
    $region34: #{tpu_custom_call.1} parent=1 // pred_check
      _
    $region35: #{tpu_custom_call.1} parent=1 // pred_check_branch
      %76 = sbr.rel (0) target = $region37
    $region36: #{tpu_custom_call.1} parent=1 // pred_region
      %s78 = ssub.s32 9216, 9216
      %79 = vsyncadd [#allocation9], %s78
      %s80 = sshll.u32 [#allocation8], 4
      %s81 = int_to_ptr.vmem [resolvable:$true] %s80
      %86 = dma.hbm_to_vmem [thread:$0]  %s8, 9216, %s81, [#allocation9], 64, 64, 4
    $region37: #{tpu_custom_call.1} parent=1 // pred_fallthru
      _
    // Predicated region
    $region38: #{tpu_custom_call.1} parent=1 // pred_check
      _
    $region39: #{tpu_custom_call.1} parent=1 // pred_check_branch
      %88 = sbr.rel (0) target = $region41
    $region40: #{tpu_custom_call.1} parent=1 // pred_region
      _
    $region41: #{tpu_custom_call.1} parent=1 // pred_fallthru
      _
    // Predicated region
    $region42: #{tpu_custom_call.1} parent=1 // pred_check
      _
    $region43: #{tpu_custom_call.1} parent=1 // pred_check_branch
      %90 = sbr.rel (0) target = $region45
    $region44: #{tpu_custom_call.1} parent=1 // pred_region
      _
    $region45: #{tpu_custom_call.1} parent=1 // pred_fallthru
      _
    // Predicated region
    $region46: #{tpu_custom_call.1} parent=1 // pred_check
      _
    $region47: #{tpu_custom_call.1} parent=1 // pred_check_branch
      %92 = sbr.rel (0) target = $region49
    $region48: #{tpu_custom_call.1} parent=1 // pred_region
      %s94 = ssub.s32 8192, 8192
      %95 = vsyncadd [#allocation9], %s94
      %s96 = sshll.u32 [#allocation10], 4
      %s97 = int_to_ptr.vmem [resolvable:$true] %s96
      %102 = dma.hbm_to_vmem [thread:$0]  %s11, 8192, %s97, [#allocation9], 128, 128, 8
    $region49: #{tpu_custom_call.1} parent=1 // pred_fallthru
      _
    // Predicated region
    $region50: #{tpu_custom_call.1} parent=1 // pred_check
      _
    $region51: #{tpu_custom_call.1} parent=1 // pred_check_branch
      %104 = sbr.rel (0) target = $region53
    $region52: #{tpu_custom_call.1} parent=1 // pred_region
      _
    $region53: #{tpu_custom_call.1} parent=1 // pred_fallthru
      _
    // Predicated region
    $region54: #{tpu_custom_call.1} parent=1 // pred_check
      _
    $region55: #{tpu_custom_call.1} parent=1 // pred_check_branch
      %106 = sbr.rel (0) target = $region57
    $region56: #{tpu_custom_call.1} parent=1 // pred_region
      _
    $region57: #{tpu_custom_call.1} parent=1 // pred_fallthru
      _
    // Predicated region
    $region58: #{tpu_custom_call.1} parent=1 // pred_check
      _
    $region59: #{tpu_custom_call.1} parent=1 // pred_check_branch
      %108 = sbr.rel (0) target = $region61
    $region60: #{tpu_custom_call.1} parent=1 // pred_region
      %109 = dma.done [#allocation3], 8192
    $region61: #{tpu_custom_call.1} parent=1 // pred_fallthru
      _
    // Predicated region
    $region62: #{tpu_custom_call.1} parent=1 // pred_check
      _
    $region63: #{tpu_custom_call.1} parent=1 // pred_check_branch
      %111 = sbr.rel (0) target = $region65
    $region64: #{tpu_custom_call.1} parent=1 // pred_region
      %112 = dma.done [#allocation6], 9216
    $region65: #{tpu_custom_call.1} parent=1 // pred_fallthru
      _
    // Predicated region
    $region66: #{tpu_custom_call.1} parent=1 // pred_check
      _
    $region67: #{tpu_custom_call.1} parent=1 // pred_check_branch
      %114 = sbr.rel (0) target = $region69
    $region68: #{tpu_custom_call.1} parent=1 // pred_region
      %115 = dma.done [#allocation6], 9216
    $region69: #{tpu_custom_call.1} parent=1 // pred_fallthru
      _
    // Predicated region
    $region70: #{tpu_custom_call.1} parent=1 // pred_check
      _
    $region71: #{tpu_custom_call.1} parent=1 // pred_check_branch
      %117 = sbr.rel (0) target = $region73
    $region72: #{tpu_custom_call.1} parent=1 // pred_region
      %118 = dma.done [#allocation9], 9216
    $region73: #{tpu_custom_call.1} parent=1 // pred_fallthru
      _
    // Predicated region
    $region74: #{tpu_custom_call.1} parent=1 // pred_check
      _
    $region75: #{tpu_custom_call.1} parent=1 // pred_check_branch
      %120 = sbr.rel (0) target = $region77
    $region76: #{tpu_custom_call.1} parent=1 // pred_region
      %121 = dma.done [#allocation9], 8192
    $region77: #{tpu_custom_call.1} parent=1 // pred_fallthru
      _
    %v123 = vld [vmem:[#allocation2] sm:$0xff]
    %v124 = vld [vmem:[#allocation2 + $0x8] sm:$0xff]
    %v125 = vld [vmem:[#allocation2 + $0x10] sm:$0xff]
    %v126 = vld [vmem:[#allocation2 + $0x18] sm:$0xff]
    %v127 = vld [vmem:[#allocation2 + $0x20] sm:$0xff]
    %v128 = vld [vmem:[#allocation2 + $0x28] sm:$0xff]
    %v129 = vld [vmem:[#allocation2 + $0x30] sm:$0xff]
    %v130 = vld [vmem:[#allocation2 + $0x38] sm:$0xff]
    %v131 = vld [vmem:[#allocation2 + $0x40] sm:$0xff]
    %v132 = vld [vmem:[#allocation2 + $0x48] sm:$0xff]
    %v133 = vld [vmem:[#allocation2 + $0x50] sm:$0xff]
    %v134 = vld [vmem:[#allocation2 + $0x58] sm:$0xff]
    %v135 = vld [vmem:[#allocation2 + $0x60] sm:$0xff]
    %v136 = vld [vmem:[#allocation2 + $0x68] sm:$0xff]
    %v137 = vld [vmem:[#allocation2 + $0x70] sm:$0xff]
    %v138 = vld [vmem:[#allocation2 + $0x78] sm:$0xff]
    %v139 = vld [vmem:[#allocation2 + $0x80] sm:$0xff]
    %v140 = vld [vmem:[#allocation2 + $0x88] sm:$0xff]
    %v141 = vld [vmem:[#allocation2 + $0x90] sm:$0xff]
    %v142 = vld [vmem:[#allocation2 + $0x98] sm:$0xff]
    %v143 = vld [vmem:[#allocation2 + $0xa0] sm:$0xff]
    %v144 = vld [vmem:[#allocation2 + $0xa8] sm:$0xff]
    %v145 = vld [vmem:[#allocation2 + $0xb0] sm:$0xff]
    %v146 = vld [vmem:[#allocation2 + $0xb8] sm:$0xff]
    %v147 = vld [vmem:[#allocation2 + $0xc0] sm:$0xff]
    %v148 = vld [vmem:[#allocation2 + $0xc8] sm:$0xff]
    %v149 = vld [vmem:[#allocation2 + $0xd0] sm:$0xff]
    %v150 = vld [vmem:[#allocation2 + $0xd8] sm:$0xff]
    %v151 = vld [vmem:[#allocation2 + $0xe0] sm:$0xff]
    %v152 = vld [vmem:[#allocation2 + $0xe8] sm:$0xff]
    %v153 = vld [vmem:[#allocation2 + $0xf0] sm:$0xff]
    %v154 = vld [vmem:[#allocation2 + $0xf8] sm:$0xff]
    %v155 = vld [vmem:[#allocation2 + $0x100] sm:$0xff]
    %v156 = vld [vmem:[#allocation2 + $0x108] sm:$0xff]
    %v157 = vld [vmem:[#allocation2 + $0x110] sm:$0xff]
    %v158 = vld [vmem:[#allocation2 + $0x118] sm:$0xff]
    %v159 = vld [vmem:[#allocation2 + $0x120] sm:$0xff]
    %v160 = vld [vmem:[#allocation2 + $0x128] sm:$0xff]
    %v161 = vld [vmem:[#allocation2 + $0x130] sm:$0xff]
    %v162 = vld [vmem:[#allocation2 + $0x138] sm:$0xff]
    %v163 = vld [vmem:[#allocation2 + $0x140] sm:$0xff]
    %v164 = vld [vmem:[#allocation2 + $0x148] sm:$0xff]
    %v165 = vld [vmem:[#allocation2 + $0x150] sm:$0xff]
    %v166 = vld [vmem:[#allocation2 + $0x158] sm:$0xff]
    %v167 = vld [vmem:[#allocation2 + $0x160] sm:$0xff]
    %v168 = vld [vmem:[#allocation2 + $0x168] sm:$0xff]
    %v169 = vld [vmem:[#allocation2 + $0x170] sm:$0xff]
    %v170 = vld [vmem:[#allocation2 + $0x178] sm:$0xff]
    %v171 = vld [vmem:[#allocation2 + $0x180] sm:$0xff]
    %v172 = vld [vmem:[#allocation2 + $0x188] sm:$0xff]
    %v173 = vld [vmem:[#allocation2 + $0x190] sm:$0xff]
    %v174 = vld [vmem:[#allocation2 + $0x198] sm:$0xff]
    %v175 = vld [vmem:[#allocation2 + $0x1a0] sm:$0xff]
    %v176 = vld [vmem:[#allocation2 + $0x1a8] sm:$0xff]
    %v177 = vld [vmem:[#allocation2 + $0x1b0] sm:$0xff]
    %v178 = vld [vmem:[#allocation2 + $0x1b8] sm:$0xff]
    %v179 = vld [vmem:[#allocation2 + $0x1c0] sm:$0xff]
    %v180 = vld [vmem:[#allocation2 + $0x1c8] sm:$0xff]
    %v181 = vld [vmem:[#allocation2 + $0x1d0] sm:$0xff]
    %v182 = vld [vmem:[#allocation2 + $0x1d8] sm:$0xff]
    %v183 = vld [vmem:[#allocation2 + $0x1e0] sm:$0xff]
    %v184 = vld [vmem:[#allocation2 + $0x1e8] sm:$0xff]
    %v185 = vld [vmem:[#allocation2 + $0x1f0] sm:$0xff]
    %v186 = vld [vmem:[#allocation2 + $0x1f8] sm:$0xff]
    %v187 = vpack.c.bf16 %v124, %v123
    %v188 = vpack.c.bf16 %v126, %v125
    %v189 = vpack.c.bf16 %v128, %v127
    %v190 = vpack.c.bf16 %v130, %v129
    %v191 = vpack.c.bf16 %v132, %v131
    %v192 = vpack.c.bf16 %v134, %v133
    %v193 = vpack.c.bf16 %v136, %v135
    %v194 = vpack.c.bf16 %v138, %v137
    %v195 = vpack.c.bf16 %v140, %v139
    %v196 = vpack.c.bf16 %v142, %v141
    %v197 = vpack.c.bf16 %v144, %v143
    %v198 = vpack.c.bf16 %v146, %v145
    %v199 = vpack.c.bf16 %v148, %v147
    %v200 = vpack.c.bf16 %v150, %v149
    %v201 = vpack.c.bf16 %v152, %v151
    %v202 = vpack.c.bf16 %v154, %v153
    %v203 = vpack.c.bf16 %v156, %v155
    %v204 = vpack.c.bf16 %v158, %v157
    %v205 = vpack.c.bf16 %v160, %v159
    %v206 = vpack.c.bf16 %v162, %v161
    %v207 = vpack.c.bf16 %v164, %v163
    %v208 = vpack.c.bf16 %v166, %v165
    %v209 = vpack.c.bf16 %v168, %v167
    %v210 = vpack.c.bf16 %v170, %v169
    %v211 = vpack.c.bf16 %v172, %v171
    %v212 = vpack.c.bf16 %v174, %v173
    %v213 = vpack.c.bf16 %v176, %v175
    %v214 = vpack.c.bf16 %v178, %v177
    %v215 = vpack.c.bf16 %v180, %v179
    %v216 = vpack.c.bf16 %v182, %v181
    %v217 = vpack.c.bf16 %v184, %v183
    %v218 = vpack.c.bf16 %v186, %v185
    %v219 = vlaneseq
    %v220 = vand.u32 %v219, 127
    %v221 = vadd.s32 %v220, 128
    %v222 = vadd.s32 %v220, 256
    %v223 = vadd.s32 %v220, 384
    %v224 = vld [vmem:[%s1] sm:$0xff]
    %v225 = vld [vmem:[%s1 + $0x8] sm:$0xff]
    %v226 = vld [vmem:[%s1 + $0x10] sm:$0xff]
    %v227 = vld [vmem:[%s1 + $0x18] sm:$0xff]
    %v228 = vld [vmem:[%s1 + $0x20] sm:$0xff]
    %v229 = vld [vmem:[%s1 + $0x28] sm:$0xff]
    %v230 = vld [vmem:[%s1 + $0x30] sm:$0xff]
    %v231 = vld [vmem:[%s1 + $0x38] sm:$0xff]
    %v232 = vld [vmem:[%s1 + $0x40] sm:$0xff]
    %v233 = vld [vmem:[%s1 + $0x48] sm:$0xff]
    %v234 = vld [vmem:[%s1 + $0x50] sm:$0xff]
    %v235 = vld [vmem:[%s1 + $0x58] sm:$0xff]
    %v236 = vld [vmem:[%s1 + $0x60] sm:$0xff]
    %v237 = vld [vmem:[%s1 + $0x68] sm:$0xff]
    %v238 = vld [vmem:[%s1 + $0x70] sm:$0xff]
    %v239 = vld [vmem:[%s1 + $0x78] sm:$0xff]
    %240 = vset.pattern.permute.xlu0 0
    %241 = vperm.xlu0 %240, %v224
    %v242 = vpop.permute.xlu0 %241
    %243 = vset.pattern.permute.xlu0 0
    %244 = vperm.xlu0 %243, %v225
    %v245 = vpop.permute.xlu0 %244
    %246 = vset.pattern.permute.xlu0 0
    %247 = vperm.xlu0 %246, %v226
    %v248 = vpop.permute.xlu0 %247
    %249 = vset.pattern.permute.xlu0 0
    %250 = vperm.xlu0 %249, %v227
    %v251 = vpop.permute.xlu0 %250
    %252 = vset.pattern.permute.xlu0 0
    %253 = vperm.xlu0 %252, %v228
    %v254 = vpop.permute.xlu0 %253
    %255 = vset.pattern.permute.xlu0 0
    %256 = vperm.xlu0 %255, %v229
    %v257 = vpop.permute.xlu0 %256
    %258 = vset.pattern.permute.xlu0 0
    %259 = vperm.xlu0 %258, %v230
    %v260 = vpop.permute.xlu0 %259
    %261 = vset.pattern.permute.xlu0 0
    %262 = vperm.xlu0 %261, %v231
    %v263 = vpop.permute.xlu0 %262
    %264 = vset.pattern.permute.xlu0 0
    %265 = vperm.xlu0 %264, %v232
    %v266 = vpop.permute.xlu0 %265
    %267 = vset.pattern.permute.xlu0 0
    %268 = vperm.xlu0 %267, %v233
    %v269 = vpop.permute.xlu0 %268
    %270 = vset.pattern.permute.xlu0 0
    %271 = vperm.xlu0 %270, %v234
    %v272 = vpop.permute.xlu0 %271
    %273 = vset.pattern.permute.xlu0 0
    %274 = vperm.xlu0 %273, %v235
    %v275 = vpop.permute.xlu0 %274
    %276 = vset.pattern.permute.xlu0 0
    %277 = vperm.xlu0 %276, %v236
    %v278 = vpop.permute.xlu0 %277
    %279 = vset.pattern.permute.xlu0 0
    %280 = vperm.xlu0 %279, %v237
    %v281 = vpop.permute.xlu0 %280
    %282 = vset.pattern.permute.xlu0 0
    %283 = vperm.xlu0 %282, %v238
    %v284 = vpop.permute.xlu0 %283
    %285 = vset.pattern.permute.xlu0 0
    %286 = vperm.xlu0 %285, %v239
    %v287 = vpop.permute.xlu0 %286
    %vm288 = vcmp.eq.s32.totalorder %v220, %v242
    %vm289 = vcmp.eq.s32.totalorder %v221, %v242
    %vm290 = vcmp.eq.s32.totalorder %v222, %v242
    %vm291 = vcmp.eq.s32.totalorder %v223, %v242
    %vm292 = vcmp.eq.s32.totalorder %v220, %v245
    %vm293 = vcmp.eq.s32.totalorder %v221, %v245
    %vm294 = vcmp.eq.s32.totalorder %v222, %v245
    %vm295 = vcmp.eq.s32.totalorder %v223, %v245
    %vm296 = vcmp.eq.s32.totalorder %v220, %v248
    %vm297 = vcmp.eq.s32.totalorder %v221, %v248
    %vm298 = vcmp.eq.s32.totalorder %v222, %v248
    %vm299 = vcmp.eq.s32.totalorder %v223, %v248
    %vm300 = vcmp.eq.s32.totalorder %v220, %v251
    %vm301 = vcmp.eq.s32.totalorder %v221, %v251
    %vm302 = vcmp.eq.s32.totalorder %v222, %v251
    %vm303 = vcmp.eq.s32.totalorder %v223, %v251
    %vm304 = vcmp.eq.s32.totalorder %v220, %v254
    %vm305 = vcmp.eq.s32.totalorder %v221, %v254
    %vm306 = vcmp.eq.s32.totalorder %v222, %v254
    %vm307 = vcmp.eq.s32.totalorder %v223, %v254
    %vm308 = vcmp.eq.s32.totalorder %v220, %v257
    %vm309 = vcmp.eq.s32.totalorder %v221, %v257
    %vm310 = vcmp.eq.s32.totalorder %v222, %v257
    %vm311 = vcmp.eq.s32.totalorder %v223, %v257
    %vm312 = vcmp.eq.s32.totalorder %v220, %v260
    %vm313 = vcmp.eq.s32.totalorder %v221, %v260
    %vm314 = vcmp.eq.s32.totalorder %v222, %v260
    %vm315 = vcmp.eq.s32.totalorder %v223, %v260
    %vm316 = vcmp.eq.s32.totalorder %v220, %v263
    %vm317 = vcmp.eq.s32.totalorder %v221, %v263
    %vm318 = vcmp.eq.s32.totalorder %v222, %v263
    %vm319 = vcmp.eq.s32.totalorder %v223, %v263
    %vm320 = vcmp.eq.s32.totalorder %v220, %v266
    %vm321 = vcmp.eq.s32.totalorder %v221, %v266
    %vm322 = vcmp.eq.s32.totalorder %v222, %v266
    %vm323 = vcmp.eq.s32.totalorder %v223, %v266
    %vm324 = vcmp.eq.s32.totalorder %v220, %v269
    %vm325 = vcmp.eq.s32.totalorder %v221, %v269
    %vm326 = vcmp.eq.s32.totalorder %v222, %v269
    %vm327 = vcmp.eq.s32.totalorder %v223, %v269
    %vm328 = vcmp.eq.s32.totalorder %v220, %v272
    %vm329 = vcmp.eq.s32.totalorder %v221, %v272
    %vm330 = vcmp.eq.s32.totalorder %v222, %v272
    %vm331 = vcmp.eq.s32.totalorder %v223, %v272
    %vm332 = vcmp.eq.s32.totalorder %v220, %v275
    %vm333 = vcmp.eq.s32.totalorder %v221, %v275
    %vm334 = vcmp.eq.s32.totalorder %v222, %v275
    %vm335 = vcmp.eq.s32.totalorder %v223, %v275
    %vm336 = vcmp.eq.s32.totalorder %v220, %v278
    %vm337 = vcmp.eq.s32.totalorder %v221, %v278
    %vm338 = vcmp.eq.s32.totalorder %v222, %v278
    %vm339 = vcmp.eq.s32.totalorder %v223, %v278
    %vm340 = vcmp.eq.s32.totalorder %v220, %v281
    %vm341 = vcmp.eq.s32.totalorder %v221, %v281
    %vm342 = vcmp.eq.s32.totalorder %v222, %v281
    %vm343 = vcmp.eq.s32.totalorder %v223, %v281
    %vm344 = vcmp.eq.s32.totalorder %v220, %v284
    %vm345 = vcmp.eq.s32.totalorder %v221, %v284
    %vm346 = vcmp.eq.s32.totalorder %v222, %v284
    %vm347 = vcmp.eq.s32.totalorder %v223, %v284
    %vm348 = vcmp.eq.s32.totalorder %v220, %v287
    %vm349 = vcmp.eq.s32.totalorder %v221, %v287
    %vm350 = vcmp.eq.s32.totalorder %v222, %v287
    %vm351 = vcmp.eq.s32.totalorder %v223, %v287
    %v352 = vsel %vm288, 1.0, 0.0
    %v353 = vsel %vm289, 1.0, 0.0
    %v354 = vsel %vm290, 1.0, 0.0
    %v355 = vsel %vm291, 1.0, 0.0
    %v356 = vsel %vm292, 1.0, 0.0
    %v357 = vsel %vm293, 1.0, 0.0
    %v358 = vsel %vm294, 1.0, 0.0
    %v359 = vsel %vm295, 1.0, 0.0
    %v360 = vsel %vm296, 1.0, 0.0
    %v361 = vsel %vm297, 1.0, 0.0
    %v362 = vsel %vm298, 1.0, 0.0
    %v363 = vsel %vm299, 1.0, 0.0
    %v364 = vsel %vm300, 1.0, 0.0
    %v365 = vsel %vm301, 1.0, 0.0
    %v366 = vsel %vm302, 1.0, 0.0
    %v367 = vsel %vm303, 1.0, 0.0
    %v368 = vsel %vm304, 1.0, 0.0
    %v369 = vsel %vm305, 1.0, 0.0
    %v370 = vsel %vm306, 1.0, 0.0
    %v371 = vsel %vm307, 1.0, 0.0
    %v372 = vsel %vm308, 1.0, 0.0
    %v373 = vsel %vm309, 1.0, 0.0
    %v374 = vsel %vm310, 1.0, 0.0
    %v375 = vsel %vm311, 1.0, 0.0
    %v376 = vsel %vm312, 1.0, 0.0
    %v377 = vsel %vm313, 1.0, 0.0
    %v378 = vsel %vm314, 1.0, 0.0
    %v379 = vsel %vm315, 1.0, 0.0
    %v380 = vsel %vm316, 1.0, 0.0
    %v381 = vsel %vm317, 1.0, 0.0
    %v382 = vsel %vm318, 1.0, 0.0
    %v383 = vsel %vm319, 1.0, 0.0
    %v384 = vsel %vm320, 1.0, 0.0
    %v385 = vsel %vm321, 1.0, 0.0
    %v386 = vsel %vm322, 1.0, 0.0
    %v387 = vsel %vm323, 1.0, 0.0
    %v388 = vsel %vm324, 1.0, 0.0
    %v389 = vsel %vm325, 1.0, 0.0
    %v390 = vsel %vm326, 1.0, 0.0
    %v391 = vsel %vm327, 1.0, 0.0
    %v392 = vsel %vm328, 1.0, 0.0
    %v393 = vsel %vm329, 1.0, 0.0
    %v394 = vsel %vm330, 1.0, 0.0
    %v395 = vsel %vm331, 1.0, 0.0
    %v396 = vsel %vm332, 1.0, 0.0
    %v397 = vsel %vm333, 1.0, 0.0
    %v398 = vsel %vm334, 1.0, 0.0
    %v399 = vsel %vm335, 1.0, 0.0
    %v400 = vsel %vm336, 1.0, 0.0
    %v401 = vsel %vm337, 1.0, 0.0
    %v402 = vsel %vm338, 1.0, 0.0
    %v403 = vsel %vm339, 1.0, 0.0
    %v404 = vsel %vm340, 1.0, 0.0
    %v405 = vsel %vm341, 1.0, 0.0
    %v406 = vsel %vm342, 1.0, 0.0
    %v407 = vsel %vm343, 1.0, 0.0
    %v408 = vsel %vm344, 1.0, 0.0
    %v409 = vsel %vm345, 1.0, 0.0
    %v410 = vsel %vm346, 1.0, 0.0
    %v411 = vsel %vm347, 1.0, 0.0
    %v412 = vsel %vm348, 1.0, 0.0
    %v413 = vsel %vm349, 1.0, 0.0
    %v414 = vsel %vm350, 1.0, 0.0
    %v415 = vsel %vm351, 1.0, 0.0
    %v416 = vpack.c.bf16 %v356, %v352
    %v417 = vpack.c.bf16 %v357, %v353
    %v418 = vpack.c.bf16 %v358, %v354
    %v419 = vpack.c.bf16 %v359, %v355
    %v420 = vpack.c.bf16 %v364, %v360
    %v421 = vpack.c.bf16 %v365, %v361
    %v422 = vpack.c.bf16 %v366, %v362
    %v423 = vpack.c.bf16 %v367, %v363
    %v424 = vpack.c.bf16 %v372, %v368
    %v425 = vpack.c.bf16 %v373, %v369
    %v426 = vpack.c.bf16 %v374, %v370
    %v427 = vpack.c.bf16 %v375, %v371
    %v428 = vpack.c.bf16 %v380, %v376
    %v429 = vpack.c.bf16 %v381, %v377
    %v430 = vpack.c.bf16 %v382, %v378
    %v431 = vpack.c.bf16 %v383, %v379
    %v432 = vpack.c.bf16 %v388, %v384
    %v433 = vpack.c.bf16 %v389, %v385
    %v434 = vpack.c.bf16 %v390, %v386
    %v435 = vpack.c.bf16 %v391, %v387
    %v436 = vpack.c.bf16 %v396, %v392
    %v437 = vpack.c.bf16 %v397, %v393
    %v438 = vpack.c.bf16 %v398, %v394
    %v439 = vpack.c.bf16 %v399, %v395
    %v440 = vpack.c.bf16 %v404, %v400
    %v441 = vpack.c.bf16 %v405, %v401
    %v442 = vpack.c.bf16 %v406, %v402
    %v443 = vpack.c.bf16 %v407, %v403
    %v444 = vpack.c.bf16 %v412, %v408
    %v445 = vpack.c.bf16 %v413, %v409
    %v446 = vpack.c.bf16 %v414, %v410
    %v447 = vpack.c.bf16 %v415, %v411
    %448 = vmatprep.subr.bf16.mxu0 0
    %449 = vmatpush1.bf16.msra.mxu0 %v187
    %450 = vmatprep.subr.bf16.mxu0 0
    %451 = vmatpush1.bf16.msra.mxu0 %v188
    %452 = vmatprep.subr.bf16.mxu0 0
    %453 = vmatpush1.bf16.msra.mxu0 %v189
    %454 = vmatprep.subr.bf16.mxu0 0
    %455 = vmatpush1.bf16.msra.mxu0 %v190
    %456 = vmatprep.subr.bf16.mxu0 0
    %457 = vmatpush1.bf16.msra.mxu0 %v191
    %458 = vmatprep.subr.bf16.mxu0 0
    %459 = vmatpush1.bf16.msra.mxu0 %v192
    %460 = vmatprep.subr.bf16.mxu0 0
    %461 = vmatpush1.bf16.msra.mxu0 %v193
    %462 = vmatprep.subr.bf16.mxu0 0
    %463 = vmatpush1.bf16.msra.mxu0 %v194
    %464 = vmatprep.subr.bf16.mxu0 0
    %465 = vmatpush1.bf16.msra.mxu0 %v195
    %466 = vmatprep.subr.bf16.mxu0 0
    %467 = vmatpush1.bf16.msra.mxu0 %v196
    %468 = vmatprep.subr.bf16.mxu0 0
    %469 = vmatpush1.bf16.msra.mxu0 %v197
    %470 = vmatprep.subr.bf16.mxu0 0
    %471 = vmatpush1.bf16.msra.mxu0 %v198
    %472 = vmatprep.subr.bf16.mxu0 0
    %473 = vmatpush1.bf16.msra.mxu0 %v199
    %474 = vmatprep.subr.bf16.mxu0 0
    %475 = vmatpush1.bf16.msra.mxu0 %v200
    %476 = vmatprep.subr.bf16.mxu0 0
    %477 = vmatpush1.bf16.msra.mxu0 %v201
    %478 = vmatprep.subr.bf16.mxu0 0
    %479 = vmatpush1.bf16.msra.mxu0 %v202
    %480 = vmatprep.mubr.bf16.mxu0 %v417
    %481 = vmatmul.mubr.bf16.gmra.mrb[0].mxu0 %v416
    %v482 = vpop.f32.mrb[0].mxu0
    %v483 = vadd.f32 0.0, %v482
    %v484 = vpop.f32.mrb[0].mxu0
    %v485 = vpop.f32.mrb[0].mxu0
    %v486 = vadd.f32 0.0, %v485
    %v487 = vpop.f32.mrb[0].mxu0
    %488 = vmatprep.mubr.bf16.mxu0 %v421
    %489 = vmatmul.mubr.bf16.gmra.mrb[0].mxu0 %v420
    %v490 = vpop.f32.mrb[0].mxu0
    %v491 = vadd.f32 0.0, %v490
    %v492 = vpop.f32.mrb[0].mxu0
    %v493 = vpop.f32.mrb[0].mxu0
    %v494 = vadd.f32 0.0, %v493
    %v495 = vpop.f32.mrb[0].mxu0
    %496 = vmatprep.mubr.bf16.mxu0 %v425
    %497 = vmatmul.mubr.bf16.gmra.mrb[0].mxu0 %v424
    %v498 = vpop.f32.mrb[0].mxu0
    %v499 = vadd.f32 0.0, %v498
    %v500 = vpop.f32.mrb[0].mxu0
    %v501 = vpop.f32.mrb[0].mxu0
    %v502 = vadd.f32 0.0, %v501
    %v503 = vpop.f32.mrb[0].mxu0
    %504 = vmatprep.mubr.bf16.mxu0 %v429
    %505 = vmatmul.mubr.bf16.gmra.mrb[0].mxu0 %v428
    %v506 = vpop.f32.mrb[0].mxu0
    %v507 = vadd.f32 0.0, %v506
    %v508 = vpop.f32.mrb[0].mxu0
    %v509 = vpop.f32.mrb[0].mxu0
    %v510 = vadd.f32 0.0, %v509
    %v511 = vpop.f32.mrb[0].mxu0
    %512 = vmatprep.mubr.bf16.mxu0 %v433
    %513 = vmatmul.mubr.bf16.gmra.mrb[0].mxu0 %v432
    %v514 = vpop.f32.mrb[0].mxu0
    %v515 = vadd.f32 0.0, %v514
    %v516 = vpop.f32.mrb[0].mxu0
    %v517 = vpop.f32.mrb[0].mxu0
    %v518 = vadd.f32 0.0, %v517
    %v519 = vpop.f32.mrb[0].mxu0
    %520 = vmatprep.mubr.bf16.mxu0 %v437
    %521 = vmatmul.mubr.bf16.gmra.mrb[0].mxu0 %v436
    %v522 = vpop.f32.mrb[0].mxu0
    %v523 = vadd.f32 0.0, %v522
    %v524 = vpop.f32.mrb[0].mxu0
    %v525 = vpop.f32.mrb[0].mxu0
    %v526 = vadd.f32 0.0, %v525
    %v527 = vpop.f32.mrb[0].mxu0
    %528 = vmatprep.mubr.bf16.mxu0 %v441
    %529 = vmatmul.mubr.bf16.gmra.mrb[0].mxu0 %v440
    %v530 = vpop.f32.mrb[0].mxu0
    %v531 = vadd.f32 0.0, %v530
    %v532 = vpop.f32.mrb[0].mxu0
    %v533 = vpop.f32.mrb[0].mxu0
    %v534 = vadd.f32 0.0, %v533
    %v535 = vpop.f32.mrb[0].mxu0
    %536 = vmatprep.mubr.bf16.mxu0 %v445
    %537 = vmatmul.mubr.bf16.gmra.mrb[0].mxu0 %v444
    %v538 = vpop.f32.mrb[0].mxu0
    %v539 = vadd.f32 0.0, %v538
    %v540 = vpop.f32.mrb[0].mxu0
    %v541 = vpop.f32.mrb[0].mxu0
    %v542 = vadd.f32 0.0, %v541
    %v543 = vpop.f32.mrb[0].mxu0
    %544 = vdwg.mxu0
    %545 = vmatprep.subr.bf16.mxu0 0
    %546 = vmatpush1.bf16.msra.mxu0 %v203
    %547 = vmatprep.subr.bf16.mxu0 0
    %548 = vmatpush1.bf16.msra.mxu0 %v204
    %549 = vmatprep.subr.bf16.mxu0 0
    %550 = vmatpush1.bf16.msra.mxu0 %v205
    %551 = vmatprep.subr.bf16.mxu0 0
    %552 = vmatpush1.bf16.msra.mxu0 %v206
    %553 = vmatprep.subr.bf16.mxu0 0
    %554 = vmatpush1.bf16.msra.mxu0 %v207
    %555 = vmatprep.subr.bf16.mxu0 0
    %556 = vmatpush1.bf16.msra.mxu0 %v208
    %557 = vmatprep.subr.bf16.mxu0 0
    %558 = vmatpush1.bf16.msra.mxu0 %v209
    %559 = vmatprep.subr.bf16.mxu0 0
    %560 = vmatpush1.bf16.msra.mxu0 %v210
    %561 = vmatprep.subr.bf16.mxu0 0
    %562 = vmatpush1.bf16.msra.mxu0 %v211
    %563 = vmatprep.subr.bf16.mxu0 0
    %564 = vmatpush1.bf16.msra.mxu0 %v212
    %565 = vmatprep.subr.bf16.mxu0 0
    %566 = vmatpush1.bf16.msra.mxu0 %v213
    %567 = vmatprep.subr.bf16.mxu0 0
    %568 = vmatpush1.bf16.msra.mxu0 %v214
    %569 = vmatprep.subr.bf16.mxu0 0
    %570 = vmatpush1.bf16.msra.mxu0 %v215
    %571 = vmatprep.subr.bf16.mxu0 0
    %572 = vmatpush1.bf16.msra.mxu0 %v216
    %573 = vmatprep.subr.bf16.mxu0 0
    %574 = vmatpush1.bf16.msra.mxu0 %v217
    %575 = vmatprep.subr.bf16.mxu0 0
    %576 = vmatpush1.bf16.msra.mxu0 %v218
    %577 = vmatprep.mubr.bf16.mxu0 %v419
    %578 = vmatmul.mubr.bf16.gmra.mrb[0].mxu0 %v418
    %v579 = vpop.f32.mrb[0].mxu0
    %v580 = vadd.f32 %v483, %v579
    %v581 = vpop.f32.mrb[0].mxu0
    %v582 = vpop.f32.mrb[0].mxu0
    %v583 = vadd.f32 %v486, %v582
    %v584 = vpop.f32.mrb[0].mxu0
    %585 = vmatprep.mubr.bf16.mxu0 %v423
    %586 = vmatmul.mubr.bf16.gmra.mrb[0].mxu0 %v422
    %v587 = vpop.f32.mrb[0].mxu0
    %v588 = vadd.f32 %v491, %v587
    %v589 = vpop.f32.mrb[0].mxu0
    %v590 = vpop.f32.mrb[0].mxu0
    %v591 = vadd.f32 %v494, %v590
    %v592 = vpop.f32.mrb[0].mxu0
    %593 = vmatprep.mubr.bf16.mxu0 %v427
    %594 = vmatmul.mubr.bf16.gmra.mrb[0].mxu0 %v426
    %v595 = vpop.f32.mrb[0].mxu0
    %v596 = vadd.f32 %v499, %v595
    %v597 = vpop.f32.mrb[0].mxu0
    %v598 = vpop.f32.mrb[0].mxu0
    %v599 = vadd.f32 %v502, %v598
    %v600 = vpop.f32.mrb[0].mxu0
    %601 = vmatprep.mubr.bf16.mxu0 %v431
    %602 = vmatmul.mubr.bf16.gmra.mrb[0].mxu0 %v430
    %v603 = vpop.f32.mrb[0].mxu0
    %v604 = vadd.f32 %v507, %v603
    %v605 = vpop.f32.mrb[0].mxu0
    %v606 = vpop.f32.mrb[0].mxu0
    %v607 = vadd.f32 %v510, %v606
    %v608 = vpop.f32.mrb[0].mxu0
    %609 = vmatprep.mubr.bf16.mxu0 %v435
    %610 = vmatmul.mubr.bf16.gmra.mrb[0].mxu0 %v434
    %v611 = vpop.f32.mrb[0].mxu0
    %v612 = vadd.f32 %v515, %v611
    %v613 = vpop.f32.mrb[0].mxu0
    %v614 = vpop.f32.mrb[0].mxu0
    %v615 = vadd.f32 %v518, %v614
    %v616 = vpop.f32.mrb[0].mxu0
    %617 = vmatprep.mubr.bf16.mxu0 %v439
    %618 = vmatmul.mubr.bf16.gmra.mrb[0].mxu0 %v438
    %v619 = vpop.f32.mrb[0].mxu0
    %v620 = vadd.f32 %v523, %v619
    %v621 = vpop.f32.mrb[0].mxu0
    %v622 = vpop.f32.mrb[0].mxu0
    %v623 = vadd.f32 %v526, %v622
    %v624 = vpop.f32.mrb[0].mxu0
    %625 = vmatprep.mubr.bf16.mxu0 %v443
    %626 = vmatmul.mubr.bf16.gmra.mrb[0].mxu0 %v442
    %v627 = vpop.f32.mrb[0].mxu0
    %v628 = vadd.f32 %v531, %v627
    %v629 = vpop.f32.mrb[0].mxu0
    %v630 = vpop.f32.mrb[0].mxu0
    %v631 = vadd.f32 %v534, %v630
    %v632 = vpop.f32.mrb[0].mxu0
    %633 = vmatprep.mubr.bf16.mxu0 %v447
    %634 = vmatmul.mubr.bf16.gmra.mrb[0].mxu0 %v446
    %v635 = vpop.f32.mrb[0].mxu0
    %v636 = vadd.f32 %v539, %v635
    %v637 = vpop.f32.mrb[0].mxu0
    %v638 = vpop.f32.mrb[0].mxu0
    %v639 = vadd.f32 %v542, %v638
    %v640 = vpop.f32.mrb[0].mxu0
    %641 = vdwg.mxu0
    %v642 = vpack.c.bf16 %v583, %v580
    %v643 = vpack.c.bf16 %v591, %v588
    %v644 = vpack.c.bf16 %v599, %v596
    %v645 = vpack.c.bf16 %v607, %v604
    %v646 = vpack.c.bf16 %v615, %v612
    %v647 = vpack.c.bf16 %v623, %v620
    %v648 = vpack.c.bf16 %v631, %v628
    %v649 = vpack.c.bf16 %v639, %v636
    %v650 = vld [vmem:[#allocation5] sm:$0xf]
    %v651 = vld [vmem:[#allocation5 + $0x4] sm:$0xf]
    %v652 = vld [vmem:[#allocation5 + $0x8] sm:$0xf]
    %v653 = vld [vmem:[#allocation5 + $0xc] sm:$0xf]
    %v654 = vld [vmem:[#allocation5 + $0x10] sm:$0xf]
    %v655 = vld [vmem:[#allocation5 + $0x14] sm:$0xf]
    %v656 = vld [vmem:[#allocation5 + $0x18] sm:$0xf]
    %v657 = vld [vmem:[#allocation5 + $0x1c] sm:$0xf]
    %v658 = vld [vmem:[#allocation5 + $0x20] sm:$0xf]
    %v659 = vld [vmem:[#allocation5 + $0x24] sm:$0xf]
    %v660 = vld [vmem:[#allocation5 + $0x28] sm:$0xf]
    %v661 = vld [vmem:[#allocation5 + $0x2c] sm:$0xf]
    %v662 = vld [vmem:[#allocation5 + $0x30] sm:$0xf]
    %v663 = vld [vmem:[#allocation5 + $0x34] sm:$0xf]
    %v664 = vld [vmem:[#allocation5 + $0x38] sm:$0xf]
    %v665 = vld [vmem:[#allocation5 + $0x3c] sm:$0xf]
    %666 = vset.pattern.permute.xlu0 1
    %667 = vperm.xlu0 %666, %v224
    %v668 = vpop.permute.xlu0 %667
    %669 = vset.pattern.permute.xlu0 1
    %670 = vperm.xlu0 %669, %v225
    %v671 = vpop.permute.xlu0 %670
    %672 = vset.pattern.permute.xlu0 1
    %673 = vperm.xlu0 %672, %v226
    %v674 = vpop.permute.xlu0 %673
    %675 = vset.pattern.permute.xlu0 1
    %676 = vperm.xlu0 %675, %v227
    %v677 = vpop.permute.xlu0 %676
    %678 = vset.pattern.permute.xlu0 1
    %679 = vperm.xlu0 %678, %v228
    %v680 = vpop.permute.xlu0 %679
    %681 = vset.pattern.permute.xlu0 1
    %682 = vperm.xlu0 %681, %v229
    %v683 = vpop.permute.xlu0 %682
    %684 = vset.pattern.permute.xlu0 1
    %685 = vperm.xlu0 %684, %v230
    %v686 = vpop.permute.xlu0 %685
    %687 = vset.pattern.permute.xlu0 1
    %688 = vperm.xlu0 %687, %v231
    %v689 = vpop.permute.xlu0 %688
    %690 = vset.pattern.permute.xlu0 1
    %691 = vperm.xlu0 %690, %v232
    %v692 = vpop.permute.xlu0 %691
    %693 = vset.pattern.permute.xlu0 1
    %694 = vperm.xlu0 %693, %v233
    %v695 = vpop.permute.xlu0 %694
    %696 = vset.pattern.permute.xlu0 1
    %697 = vperm.xlu0 %696, %v234
    %v698 = vpop.permute.xlu0 %697
    %699 = vset.pattern.permute.xlu0 1
    %700 = vperm.xlu0 %699, %v235
    %v701 = vpop.permute.xlu0 %700
    %702 = vset.pattern.permute.xlu0 1
    %703 = vperm.xlu0 %702, %v236
    %v704 = vpop.permute.xlu0 %703
    %705 = vset.pattern.permute.xlu0 1
    %706 = vperm.xlu0 %705, %v237
    %v707 = vpop.permute.xlu0 %706
    %708 = vset.pattern.permute.xlu0 1
    %709 = vperm.xlu0 %708, %v238
    %v710 = vpop.permute.xlu0 %709
    %711 = vset.pattern.permute.xlu0 1
    %712 = vperm.xlu0 %711, %v239
    %v713 = vpop.permute.xlu0 %712
    %vm714 = vcmp.eq.s32.totalorder %v220, %v668
    %vm715 = vcmp.eq.s32.totalorder %v221, %v668
    %vm716 = vcmp.eq.s32.totalorder %v222, %v668
    %vm717 = vcmp.eq.s32.totalorder %v223, %v668
    %vm718 = vcmp.eq.s32.totalorder %v220, %v671
    %vm719 = vcmp.eq.s32.totalorder %v221, %v671
    %vm720 = vcmp.eq.s32.totalorder %v222, %v671
    %vm721 = vcmp.eq.s32.totalorder %v223, %v671
    %vm722 = vcmp.eq.s32.totalorder %v220, %v674
    %vm723 = vcmp.eq.s32.totalorder %v221, %v674
    %vm724 = vcmp.eq.s32.totalorder %v222, %v674
    %vm725 = vcmp.eq.s32.totalorder %v223, %v674
    %vm726 = vcmp.eq.s32.totalorder %v220, %v677
    %vm727 = vcmp.eq.s32.totalorder %v221, %v677
    %vm728 = vcmp.eq.s32.totalorder %v222, %v677
    %vm729 = vcmp.eq.s32.totalorder %v223, %v677
    %vm730 = vcmp.eq.s32.totalorder %v220, %v680
    %vm731 = vcmp.eq.s32.totalorder %v221, %v680
    %vm732 = vcmp.eq.s32.totalorder %v222, %v680
    %vm733 = vcmp.eq.s32.totalorder %v223, %v680
    %vm734 = vcmp.eq.s32.totalorder %v220, %v683
    %vm735 = vcmp.eq.s32.totalorder %v221, %v683
    %vm736 = vcmp.eq.s32.totalorder %v222, %v683
    %vm737 = vcmp.eq.s32.totalorder %v223, %v683
    %vm738 = vcmp.eq.s32.totalorder %v220, %v686
    %vm739 = vcmp.eq.s32.totalorder %v221, %v686
    %vm740 = vcmp.eq.s32.totalorder %v222, %v686
    %vm741 = vcmp.eq.s32.totalorder %v223, %v686
    %vm742 = vcmp.eq.s32.totalorder %v220, %v689
    %vm743 = vcmp.eq.s32.totalorder %v221, %v689
    %vm744 = vcmp.eq.s32.totalorder %v222, %v689
    %vm745 = vcmp.eq.s32.totalorder %v223, %v689
    %vm746 = vcmp.eq.s32.totalorder %v220, %v692
    %vm747 = vcmp.eq.s32.totalorder %v221, %v692
    %vm748 = vcmp.eq.s32.totalorder %v222, %v692
    %vm749 = vcmp.eq.s32.totalorder %v223, %v692
    %vm750 = vcmp.eq.s32.totalorder %v220, %v695
    %vm751 = vcmp.eq.s32.totalorder %v221, %v695
    %vm752 = vcmp.eq.s32.totalorder %v222, %v695
    %vm753 = vcmp.eq.s32.totalorder %v223, %v695
    %vm754 = vcmp.eq.s32.totalorder %v220, %v698
    %vm755 = vcmp.eq.s32.totalorder %v221, %v698
    %vm756 = vcmp.eq.s32.totalorder %v222, %v698
    %vm757 = vcmp.eq.s32.totalorder %v223, %v698
    %vm758 = vcmp.eq.s32.totalorder %v220, %v701
    %vm759 = vcmp.eq.s32.totalorder %v221, %v701
    %vm760 = vcmp.eq.s32.totalorder %v222, %v701
    %vm761 = vcmp.eq.s32.totalorder %v223, %v701
    %vm762 = vcmp.eq.s32.totalorder %v220, %v704
    %vm763 = vcmp.eq.s32.totalorder %v221, %v704
    %vm764 = vcmp.eq.s32.totalorder %v222, %v704
    %vm765 = vcmp.eq.s32.totalorder %v223, %v704
    %vm766 = vcmp.eq.s32.totalorder %v220, %v707
    %vm767 = vcmp.eq.s32.totalorder %v221, %v707
    %vm768 = vcmp.eq.s32.totalorder %v222, %v707
    %vm769 = vcmp.eq.s32.totalorder %v223, %v707
    %vm770 = vcmp.eq.s32.totalorder %v220, %v710
    %vm771 = vcmp.eq.s32.totalorder %v221, %v710
    %vm772 = vcmp.eq.s32.totalorder %v222, %v710
    %vm773 = vcmp.eq.s32.totalorder %v223, %v710
    %vm774 = vcmp.eq.s32.totalorder %v220, %v713
    %vm775 = vcmp.eq.s32.totalorder %v221, %v713
    %vm776 = vcmp.eq.s32.totalorder %v222, %v713
    %vm777 = vcmp.eq.s32.totalorder %v223, %v713
    %v778 = vsel %vm714, 1.0, 0.0
    %v779 = vsel %vm715, 1.0, 0.0
    %v780 = vsel %vm716, 1.0, 0.0
    %v781 = vsel %vm717, 1.0, 0.0
    %v782 = vsel %vm718, 1.0, 0.0
    %v783 = vsel %vm719, 1.0, 0.0
    %v784 = vsel %vm720, 1.0, 0.0
    %v785 = vsel %vm721, 1.0, 0.0
    %v786 = vsel %vm722, 1.0, 0.0
    %v787 = vsel %vm723, 1.0, 0.0
    %v788 = vsel %vm724, 1.0, 0.0
    %v789 = vsel %vm725, 1.0, 0.0
    %v790 = vsel %vm726, 1.0, 0.0
    %v791 = vsel %vm727, 1.0, 0.0
    %v792 = vsel %vm728, 1.0, 0.0
    %v793 = vsel %vm729, 1.0, 0.0
    %v794 = vsel %vm730, 1.0, 0.0
    %v795 = vsel %vm731, 1.0, 0.0
    %v796 = vsel %vm732, 1.0, 0.0
    %v797 = vsel %vm733, 1.0, 0.0
    %v798 = vsel %vm734, 1.0, 0.0
    %v799 = vsel %vm735, 1.0, 0.0
    %v800 = vsel %vm736, 1.0, 0.0
    %v801 = vsel %vm737, 1.0, 0.0
    %v802 = vsel %vm738, 1.0, 0.0
    %v803 = vsel %vm739, 1.0, 0.0
    %v804 = vsel %vm740, 1.0, 0.0
    %v805 = vsel %vm741, 1.0, 0.0
    %v806 = vsel %vm742, 1.0, 0.0
    %v807 = vsel %vm743, 1.0, 0.0
    %v808 = vsel %vm744, 1.0, 0.0
    %v809 = vsel %vm745, 1.0, 0.0
    %v810 = vsel %vm746, 1.0, 0.0
    %v811 = vsel %vm747, 1.0, 0.0
    %v812 = vsel %vm748, 1.0, 0.0
    %v813 = vsel %vm749, 1.0, 0.0
    %v814 = vsel %vm750, 1.0, 0.0
    %v815 = vsel %vm751, 1.0, 0.0
    %v816 = vsel %vm752, 1.0, 0.0
    %v817 = vsel %vm753, 1.0, 0.0
    %v818 = vsel %vm754, 1.0, 0.0
    %v819 = vsel %vm755, 1.0, 0.0
    %v820 = vsel %vm756, 1.0, 0.0
    %v821 = vsel %vm757, 1.0, 0.0
    %v822 = vsel %vm758, 1.0, 0.0
    %v823 = vsel %vm759, 1.0, 0.0
    %v824 = vsel %vm760, 1.0, 0.0
    %v825 = vsel %vm761, 1.0, 0.0
    %v826 = vsel %vm762, 1.0, 0.0
    %v827 = vsel %vm763, 1.0, 0.0
    %v828 = vsel %vm764, 1.0, 0.0
    %v829 = vsel %vm765, 1.0, 0.0
    %v830 = vsel %vm766, 1.0, 0.0
    %v831 = vsel %vm767, 1.0, 0.0
    %v832 = vsel %vm768, 1.0, 0.0
    %v833 = vsel %vm769, 1.0, 0.0
    %v834 = vsel %vm770, 1.0, 0.0
    %v835 = vsel %vm771, 1.0, 0.0
    %v836 = vsel %vm772, 1.0, 0.0
    %v837 = vsel %vm773, 1.0, 0.0
    %v838 = vsel %vm774, 1.0, 0.0
    %v839 = vsel %vm775, 1.0, 0.0
    %v840 = vsel %vm776, 1.0, 0.0
    %v841 = vsel %vm777, 1.0, 0.0
    %v842 = vpack.c.bf16 %v782, %v778
    %v843 = vpack.c.bf16 %v783, %v779
    %v844 = vpack.c.bf16 %v784, %v780
    %v845 = vpack.c.bf16 %v785, %v781
    %v846 = vpack.c.bf16 %v790, %v786
    %v847 = vpack.c.bf16 %v791, %v787
    %v848 = vpack.c.bf16 %v792, %v788
    %v849 = vpack.c.bf16 %v793, %v789
    %v850 = vpack.c.bf16 %v798, %v794
    %v851 = vpack.c.bf16 %v799, %v795
    %v852 = vpack.c.bf16 %v800, %v796
    %v853 = vpack.c.bf16 %v801, %v797
    %v854 = vpack.c.bf16 %v806, %v802
    %v855 = vpack.c.bf16 %v807, %v803
    %v856 = vpack.c.bf16 %v808, %v804
    %v857 = vpack.c.bf16 %v809, %v805
    %v858 = vpack.c.bf16 %v814, %v810
    %v859 = vpack.c.bf16 %v815, %v811
    %v860 = vpack.c.bf16 %v816, %v812
    %v861 = vpack.c.bf16 %v817, %v813
    %v862 = vpack.c.bf16 %v822, %v818
    %v863 = vpack.c.bf16 %v823, %v819
    %v864 = vpack.c.bf16 %v824, %v820
    %v865 = vpack.c.bf16 %v825, %v821
    %v866 = vpack.c.bf16 %v830, %v826
    %v867 = vpack.c.bf16 %v831, %v827
    %v868 = vpack.c.bf16 %v832, %v828
    %v869 = vpack.c.bf16 %v833, %v829
    %v870 = vpack.c.bf16 %v838, %v834
    %v871 = vpack.c.bf16 %v839, %v835
    %v872 = vpack.c.bf16 %v840, %v836
    %v873 = vpack.c.bf16 %v841, %v837
    %874 = vmatprep.subr.bf16.mxu0 0
    %875 = vmatpush1.bf16.msra.mxu0 %v187
    %876 = vmatprep.subr.bf16.mxu0 0
    %877 = vmatpush1.bf16.msra.mxu0 %v188
    %878 = vmatprep.subr.bf16.mxu0 0
    %879 = vmatpush1.bf16.msra.mxu0 %v189
    %880 = vmatprep.subr.bf16.mxu0 0
    %881 = vmatpush1.bf16.msra.mxu0 %v190
    %882 = vmatprep.subr.bf16.mxu0 0
    %883 = vmatpush1.bf16.msra.mxu0 %v191
    %884 = vmatprep.subr.bf16.mxu0 0
    %885 = vmatpush1.bf16.msra.mxu0 %v192
    %886 = vmatprep.subr.bf16.mxu0 0
    %887 = vmatpush1.bf16.msra.mxu0 %v193
    %888 = vmatprep.subr.bf16.mxu0 0
    %889 = vmatpush1.bf16.msra.mxu0 %v194
    %890 = vmatprep.subr.bf16.mxu0 0
    %891 = vmatpush1.bf16.msra.mxu0 %v195
    %892 = vmatprep.subr.bf16.mxu0 0
    %893 = vmatpush1.bf16.msra.mxu0 %v196
    %894 = vmatprep.subr.bf16.mxu0 0
    %895 = vmatpush1.bf16.msra.mxu0 %v197
    %896 = vmatprep.subr.bf16.mxu0 0
    %897 = vmatpush1.bf16.msra.mxu0 %v198
    %898 = vmatprep.subr.bf16.mxu0 0
    %899 = vmatpush1.bf16.msra.mxu0 %v199
    %900 = vmatprep.subr.bf16.mxu0 0
    %901 = vmatpush1.bf16.msra.mxu0 %v200
    %902 = vmatprep.subr.bf16.mxu0 0
    %903 = vmatpush1.bf16.msra.mxu0 %v201
    %904 = vmatprep.subr.bf16.mxu0 0
    %905 = vmatpush1.bf16.msra.mxu0 %v202
    %906 = vmatprep.mubr.bf16.mxu0 %v843
    %907 = vmatmul.mubr.bf16.gmra.mrb[0].mxu0 %v842
    %v908 = vpop.f32.mrb[0].mxu0
    %v909 = vadd.f32 0.0, %v908
    %v910 = vpop.f32.mrb[0].mxu0
    %v911 = vpop.f32.mrb[0].mxu0
    %v912 = vadd.f32 0.0, %v911
    %v913 = vpop.f32.mrb[0].mxu0
    %914 = vmatprep.mubr.bf16.mxu0 %v847
    %915 = vmatmul.mubr.bf16.gmra.mrb[0].mxu0 %v846
    %v916 = vpop.f32.mrb[0].mxu0
    %v917 = vadd.f32 0.0, %v916
    %v918 = vpop.f32.mrb[0].mxu0
    %v919 = vpop.f32.mrb[0].mxu0
    %v920 = vadd.f32 0.0, %v919
    %v921 = vpop.f32.mrb[0].mxu0
    %922 = vmatprep.mubr.bf16.mxu0 %v851
    %923 = vmatmul.mubr.bf16.gmra.mrb[0].mxu0 %v850
    %v924 = vpop.f32.mrb[0].mxu0
    %v925 = vadd.f32 0.0, %v924
    %v926 = vpop.f32.mrb[0].mxu0
    %v927 = vpop.f32.mrb[0].mxu0
    %v928 = vadd.f32 0.0, %v927
    %v929 = vpop.f32.mrb[0].mxu0
    %930 = vmatprep.mubr.bf16.mxu0 %v855
    %931 = vmatmul.mubr.bf16.gmra.mrb[0].mxu0 %v854
    %v932 = vpop.f32.mrb[0].mxu0
    %v933 = vadd.f32 0.0, %v932
    %v934 = vpop.f32.mrb[0].mxu0
    %v935 = vpop.f32.mrb[0].mxu0
    %v936 = vadd.f32 0.0, %v935
    %v937 = vpop.f32.mrb[0].mxu0
    %938 = vmatprep.mubr.bf16.mxu0 %v859
    %939 = vmatmul.mubr.bf16.gmra.mrb[0].mxu0 %v858
    %v940 = vpop.f32.mrb[0].mxu0
    %v941 = vadd.f32 0.0, %v940
    %v942 = vpop.f32.mrb[0].mxu0
    %v943 = vpop.f32.mrb[0].mxu0
    %v944 = vadd.f32 0.0, %v943
    %v945 = vpop.f32.mrb[0].mxu0
    %946 = vmatprep.mubr.bf16.mxu0 %v863
    %947 = vmatmul.mubr.bf16.gmra.mrb[0].mxu0 %v862
    %v948 = vpop.f32.mrb[0].mxu0
    %v949 = vadd.f32 0.0, %v948
    %v950 = vpop.f32.mrb[0].mxu0
    %v951 = vpop.f32.mrb[0].mxu0
    %v952 = vadd.f32 0.0, %v951
    %v953 = vpop.f32.mrb[0].mxu0
    %954 = vmatprep.mubr.bf16.mxu0 %v867
    %955 = vmatmul.mubr.bf16.gmra.mrb[0].mxu0 %v866
    %v956 = vpop.f32.mrb[0].mxu0
    %v957 = vadd.f32 0.0, %v956
    %v958 = vpop.f32.mrb[0].mxu0
    %v959 = vpop.f32.mrb[0].mxu0
    %v960 = vadd.f32 0.0, %v959
    %v961 = vpop.f32.mrb[0].mxu0
    %962 = vmatprep.mubr.bf16.mxu0 %v871
    %963 = vmatmul.mubr.bf16.gmra.mrb[0].mxu0 %v870
    %v964 = vpop.f32.mrb[0].mxu0
    %v965 = vadd.f32 0.0, %v964
    %v966 = vpop.f32.mrb[0].mxu0
    %v967 = vpop.f32.mrb[0].mxu0
    %v968 = vadd.f32 0.0, %v967
    %v969 = vpop.f32.mrb[0].mxu0
    %970 = vdwg.mxu0
    %971 = vmatprep.subr.bf16.mxu0 0
    %972 = vmatpush1.bf16.msra.mxu0 %v203
    %973 = vmatprep.subr.bf16.mxu0 0
    %974 = vmatpush1.bf16.msra.mxu0 %v204
    %975 = vmatprep.subr.bf16.mxu0 0
    %976 = vmatpush1.bf16.msra.mxu0 %v205
    %977 = vmatprep.subr.bf16.mxu0 0
    %978 = vmatpush1.bf16.msra.mxu0 %v206
    %979 = vmatprep.subr.bf16.mxu0 0
    %980 = vmatpush1.bf16.msra.mxu0 %v207
    %981 = vmatprep.subr.bf16.mxu0 0
    %982 = vmatpush1.bf16.msra.mxu0 %v208
    %983 = vmatprep.subr.bf16.mxu0 0
    %984 = vmatpush1.bf16.msra.mxu0 %v209
    %985 = vmatprep.subr.bf16.mxu0 0
    %986 = vmatpush1.bf16.msra.mxu0 %v210
    %987 = vmatprep.subr.bf16.mxu0 0
    %988 = vmatpush1.bf16.msra.mxu0 %v211
    %989 = vmatprep.subr.bf16.mxu0 0
    %990 = vmatpush1.bf16.msra.mxu0 %v212
    %991 = vmatprep.subr.bf16.mxu0 0
    %992 = vmatpush1.bf16.msra.mxu0 %v213
    %993 = vmatprep.subr.bf16.mxu0 0
    %994 = vmatpush1.bf16.msra.mxu0 %v214
    %995 = vmatprep.subr.bf16.mxu0 0
    %996 = vmatpush1.bf16.msra.mxu0 %v215
    %997 = vmatprep.subr.bf16.mxu0 0
    %998 = vmatpush1.bf16.msra.mxu0 %v216
    %999 = vmatprep.subr.bf16.mxu0 0
    %1000 = vmatpush1.bf16.msra.mxu0 %v217
    %1001 = vmatprep.subr.bf16.mxu0 0
    %1002 = vmatpush1.bf16.msra.mxu0 %v218
    %1003 = vmatprep.mubr.bf16.mxu0 %v845
    %1004 = vmatmul.mubr.bf16.gmra.mrb[0].mxu0 %v844
    %v1005 = vpop.f32.mrb[0].mxu0
    %v1006 = vadd.f32 %v909, %v1005
    %v1007 = vpop.f32.mrb[0].mxu0
    %v1008 = vpop.f32.mrb[0].mxu0
    %v1009 = vadd.f32 %v912, %v1008
    %v1010 = vpop.f32.mrb[0].mxu0
    %1011 = vmatprep.mubr.bf16.mxu0 %v849
    %1012 = vmatmul.mubr.bf16.gmra.mrb[0].mxu0 %v848
    %v1013 = vpop.f32.mrb[0].mxu0
    %v1014 = vadd.f32 %v917, %v1013
    %v1015 = vpop.f32.mrb[0].mxu0
    %v1016 = vpop.f32.mrb[0].mxu0
    %v1017 = vadd.f32 %v920, %v1016
    %v1018 = vpop.f32.mrb[0].mxu0
    %1019 = vmatprep.mubr.bf16.mxu0 %v853
    %1020 = vmatmul.mubr.bf16.gmra.mrb[0].mxu0 %v852
    %v1021 = vpop.f32.mrb[0].mxu0
    %v1022 = vadd.f32 %v925, %v1021
    %v1023 = vpop.f32.mrb[0].mxu0
    %v1024 = vpop.f32.mrb[0].mxu0
    %v1025 = vadd.f32 %v928, %v1024
    %v1026 = vpop.f32.mrb[0].mxu0
    %1027 = vmatprep.mubr.bf16.mxu0 %v857
    %1028 = vmatmul.mubr.bf16.gmra.mrb[0].mxu0 %v856
    %v1029 = vpop.f32.mrb[0].mxu0
    %v1030 = vadd.f32 %v933, %v1029
    %v1031 = vpop.f32.mrb[0].mxu0
    %v1032 = vpop.f32.mrb[0].mxu0
    %v1033 = vadd.f32 %v936, %v1032
    %v1034 = vpop.f32.mrb[0].mxu0
    %1035 = vmatprep.mubr.bf16.mxu0 %v861
    %1036 = vmatmul.mubr.bf16.gmra.mrb[0].mxu0 %v860
    %v1037 = vpop.f32.mrb[0].mxu0
    %v1038 = vadd.f32 %v941, %v1037
    %v1039 = vpop.f32.mrb[0].mxu0
    %v1040 = vpop.f32.mrb[0].mxu0
    %v1041 = vadd.f32 %v944, %v1040
    %v1042 = vpop.f32.mrb[0].mxu0
    %1043 = vmatprep.mubr.bf16.mxu0 %v865
    %1044 = vmatmul.mubr.bf16.gmra.mrb[0].mxu0 %v864
    %v1045 = vpop.f32.mrb[0].mxu0
    %v1046 = vadd.f32 %v949, %v1045
    %v1047 = vpop.f32.mrb[0].mxu0
    %v1048 = vpop.f32.mrb[0].mxu0
    %v1049 = vadd.f32 %v952, %v1048
    %v1050 = vpop.f32.mrb[0].mxu0
    %1051 = vmatprep.mubr.bf16.mxu0 %v869
    %1052 = vmatmul.mubr.bf16.gmra.mrb[0].mxu0 %v868
    %v1053 = vpop.f32.mrb[0].mxu0
    %v1054 = vadd.f32 %v957, %v1053
    %v1055 = vpop.f32.mrb[0].mxu0
    %v1056 = vpop.f32.mrb[0].mxu0
    %v1057 = vadd.f32 %v960, %v1056
    %v1058 = vpop.f32.mrb[0].mxu0
    %1059 = vmatprep.mubr.bf16.mxu0 %v873
    %1060 = vmatmul.mubr.bf16.gmra.mrb[0].mxu0 %v872
    %v1061 = vpop.f32.mrb[0].mxu0
    %v1062 = vadd.f32 %v965, %v1061
    %v1063 = vpop.f32.mrb[0].mxu0
    %v1064 = vpop.f32.mrb[0].mxu0
    %v1065 = vadd.f32 %v968, %v1064
    %v1066 = vpop.f32.mrb[0].mxu0
    %1067 = vdwg.mxu0
    %v1068 = vpack.c.bf16 %v1009, %v1006
    %v1069 = vpack.c.bf16 %v1017, %v1014
    %v1070 = vpack.c.bf16 %v1025, %v1022
    %v1071 = vpack.c.bf16 %v1033, %v1030
    %v1072 = vpack.c.bf16 %v1041, %v1038
    %v1073 = vpack.c.bf16 %v1049, %v1046
    %v1074 = vpack.c.bf16 %v1057, %v1054
    %v1075 = vpack.c.bf16 %v1065, %v1062
    %s1076 = scalar_lea.vmem [#allocation5], 64
    %v1077 = vld [vmem:[%s1076] sm:$0xf]
    %v1078 = vld [vmem:[%s1076 + $0x4] sm:$0xf]
    %v1079 = vld [vmem:[%s1076 + $0x8] sm:$0xf]
    %v1080 = vld [vmem:[%s1076 + $0xc] sm:$0xf]
    %v1081 = vld [vmem:[%s1076 + $0x10] sm:$0xf]
    %v1082 = vld [vmem:[%s1076 + $0x14] sm:$0xf]
    %v1083 = vld [vmem:[%s1076 + $0x18] sm:$0xf]
    %v1084 = vld [vmem:[%s1076 + $0x1c] sm:$0xf]
    %v1085 = vld [vmem:[%s1076 + $0x20] sm:$0xf]
    %v1086 = vld [vmem:[%s1076 + $0x24] sm:$0xf]
    %v1087 = vld [vmem:[%s1076 + $0x28] sm:$0xf]
    %v1088 = vld [vmem:[%s1076 + $0x2c] sm:$0xf]
    %v1089 = vld [vmem:[%s1076 + $0x30] sm:$0xf]
    %v1090 = vld [vmem:[%s1076 + $0x34] sm:$0xf]
    %v1091 = vld [vmem:[%s1076 + $0x38] sm:$0xf]
    %v1092 = vld [vmem:[%s1076 + $0x3c] sm:$0xf]
    %v1109 = vunpack.c.l.b16 %v1077
    %v1110 = vunpack.c.l.b16 %v1078
    %v1111 = vunpack.c.l.b16 %v1079
    %v1112 = vunpack.c.l.b16 %v1080
    %v1113 = vunpack.c.l.b16 %v1081
    %v1114 = vunpack.c.l.b16 %v1082
    %v1115 = vunpack.c.l.b16 %v1083
    %v1116 = vunpack.c.l.b16 %v1084
    %v1117 = vunpack.c.l.b16 %v1085
    %v1118 = vunpack.c.l.b16 %v1086
    %v1119 = vunpack.c.l.b16 %v1087
    %v1120 = vunpack.c.l.b16 %v1088
    %v1121 = vunpack.c.l.b16 %v1089
    %v1122 = vunpack.c.l.b16 %v1090
    %v1123 = vunpack.c.l.b16 %v1091
    %v1124 = vunpack.c.l.b16 %v1092
    %v1125 = vpack.c.b16 %v1110, %v1109
    %v1126 = vpack.c.b16 %v1112, %v1111
    %v1127 = vpack.c.b16 %v1114, %v1113
    %v1128 = vpack.c.b16 %v1116, %v1115
    %v1129 = vpack.c.b16 %v1118, %v1117
    %v1130 = vpack.c.b16 %v1120, %v1119
    %v1131 = vpack.c.b16 %v1122, %v1121
    %v1132 = vpack.c.b16 %v1124, %v1123
    %1141 = vmatprep.subr.bf16.mxu0 0
    %1142 = vmatpush1.bf16.msra.mxu0 %v1125
    %1143 = vmatprep.subr.bf16.mxu0 0
    %1144 = vmatpush1.bf16.msra.mxu0 %v1126
    %1145 = vmatprep.subr.bf16.mxu0 0
    %1146 = vmatpush1.bf16.msra.mxu0 %v1127
    %1147 = vmatprep.subr.bf16.mxu0 0
    %1148 = vmatpush1.bf16.msra.mxu0 %v1128
    %1149 = vmatprep.subr.bf16.mxu0 0
    %1150 = vmatpush1.bf16.msra.mxu0 %v1129
    %1151 = vmatprep.subr.bf16.mxu0 0
    %1152 = vmatpush1.bf16.msra.mxu0 %v1130
    %1153 = vmatprep.subr.bf16.mxu0 0
    %1154 = vmatpush1.bf16.msra.mxu0 %v1131
    %1155 = vmatprep.subr.bf16.mxu0 0
    %1156 = vmatpush1.bf16.msra.mxu0 %v1132
    %1157 = vmatprep.subr.bf16.mxu0 0
    %1158 = vmatpush1.bf16.msra.mxu0 0
    %1159 = vmatprep.subr.bf16.mxu0 0
    %1160 = vmatpush1.bf16.msra.mxu0 0
    %1161 = vmatprep.subr.bf16.mxu0 0
    %1162 = vmatpush1.bf16.msra.mxu0 0
    %1163 = vmatprep.subr.bf16.mxu0 0
    %1164 = vmatpush1.bf16.msra.mxu0 0
    %1165 = vmatprep.subr.bf16.mxu0 0
    %1166 = vmatpush1.bf16.msra.mxu0 0
    %1167 = vmatprep.subr.bf16.mxu0 0
    %1168 = vmatpush1.bf16.msra.mxu0 0
    %1169 = vmatprep.subr.bf16.mxu0 0
    %1170 = vmatpush1.bf16.msra.mxu0 0
    %1171 = vmatprep.subr.bf16.mxu0 0
    %1172 = vmatpush1.bf16.msra.mxu0 0
    %1173 = vmatprep.mubr.bf16.mxu0 0
    %1174 = vmatmul.mubr.bf16.gmra.mrb[0].mxu0 %v1068
    %v1175 = vpop.f32.mrb[0].mxu0
    %v1176 = vadd.f32 0.0, %v1175
    %v1177 = vpop.f32.mrb[0].mxu0
    %v1178 = vpop.f32.mrb[0].mxu0
    %v1179 = vadd.f32 0.0, %v1178
    %v1180 = vpop.f32.mrb[0].mxu0
    %1181 = vmatprep.mubr.bf16.mxu0 0
    %1182 = vmatmul.mubr.bf16.gmra.mrb[0].mxu0 %v1069
    %v1183 = vpop.f32.mrb[0].mxu0
    %v1184 = vadd.f32 0.0, %v1183
    %v1185 = vpop.f32.mrb[0].mxu0
    %v1186 = vpop.f32.mrb[0].mxu0
    %v1187 = vadd.f32 0.0, %v1186
    %v1188 = vpop.f32.mrb[0].mxu0
    %1189 = vmatprep.mubr.bf16.mxu0 0
    %1190 = vmatmul.mubr.bf16.gmra.mrb[0].mxu0 %v1070
    %v1191 = vpop.f32.mrb[0].mxu0
    %v1192 = vadd.f32 0.0, %v1191
    %v1193 = vpop.f32.mrb[0].mxu0
    %v1194 = vpop.f32.mrb[0].mxu0
    %v1195 = vadd.f32 0.0, %v1194
    %v1196 = vpop.f32.mrb[0].mxu0
    %1197 = vmatprep.mubr.bf16.mxu0 0
    %1198 = vmatmul.mubr.bf16.gmra.mrb[0].mxu0 %v1071
    %v1199 = vpop.f32.mrb[0].mxu0
    %v1200 = vadd.f32 0.0, %v1199
    %v1201 = vpop.f32.mrb[0].mxu0
    %v1202 = vpop.f32.mrb[0].mxu0
    %v1203 = vadd.f32 0.0, %v1202
    %v1204 = vpop.f32.mrb[0].mxu0
    %1205 = vmatprep.mubr.bf16.mxu0 0
    %1206 = vmatmul.mubr.bf16.gmra.mrb[0].mxu0 %v1072
    %v1207 = vpop.f32.mrb[0].mxu0
    %v1208 = vadd.f32 0.0, %v1207
    %v1209 = vpop.f32.mrb[0].mxu0
    %v1210 = vpop.f32.mrb[0].mxu0
    %v1211 = vadd.f32 0.0, %v1210
    %v1212 = vpop.f32.mrb[0].mxu0
    %1213 = vmatprep.mubr.bf16.mxu0 0
    %1214 = vmatmul.mubr.bf16.gmra.mrb[0].mxu0 %v1073
    %v1215 = vpop.f32.mrb[0].mxu0
    %v1216 = vadd.f32 0.0, %v1215
    %v1217 = vpop.f32.mrb[0].mxu0
    %v1218 = vpop.f32.mrb[0].mxu0
    %v1219 = vadd.f32 0.0, %v1218
    %v1220 = vpop.f32.mrb[0].mxu0
    %1221 = vmatprep.mubr.bf16.mxu0 0
    %1222 = vmatmul.mubr.bf16.gmra.mrb[0].mxu0 %v1074
    %v1223 = vpop.f32.mrb[0].mxu0
    %v1224 = vadd.f32 0.0, %v1223
    %v1225 = vpop.f32.mrb[0].mxu0
    %v1226 = vpop.f32.mrb[0].mxu0
    %v1227 = vadd.f32 0.0, %v1226
    %v1228 = vpop.f32.mrb[0].mxu0
    %1229 = vmatprep.mubr.bf16.mxu0 0
    %1230 = vmatmul.mubr.bf16.gmra.mrb[0].mxu0 %v1075
    %v1231 = vpop.f32.mrb[0].mxu0
    %v1232 = vadd.f32 0.0, %v1231
    %v1233 = vpop.f32.mrb[0].mxu0
    %v1234 = vpop.f32.mrb[0].mxu0
    %v1235 = vadd.f32 0.0, %v1234
    %v1236 = vpop.f32.mrb[0].mxu0
    %1237 = vdwg.mxu0
    %v1254 = vunpack.c.l.b16 %v650
    %v1255 = vunpack.c.l.b16 %v651
    %v1256 = vunpack.c.l.b16 %v652
    %v1257 = vunpack.c.l.b16 %v653
    %v1258 = vunpack.c.l.b16 %v654
    %v1259 = vunpack.c.l.b16 %v655
    %v1260 = vunpack.c.l.b16 %v656
    %v1261 = vunpack.c.l.b16 %v657
    %v1262 = vunpack.c.l.b16 %v658
    %v1263 = vunpack.c.l.b16 %v659
    %v1264 = vunpack.c.l.b16 %v660
    %v1265 = vunpack.c.l.b16 %v661
    %v1266 = vunpack.c.l.b16 %v662
    %v1267 = vunpack.c.l.b16 %v663
    %v1268 = vunpack.c.l.b16 %v664
    %v1269 = vunpack.c.l.b16 %v665
    %v1270 = vpack.c.b16 %v1255, %v1254
    %v1271 = vpack.c.b16 %v1257, %v1256
    %v1272 = vpack.c.b16 %v1259, %v1258
    %v1273 = vpack.c.b16 %v1261, %v1260
    %v1274 = vpack.c.b16 %v1263, %v1262
    %v1275 = vpack.c.b16 %v1265, %v1264
    %v1276 = vpack.c.b16 %v1267, %v1266
    %v1277 = vpack.c.b16 %v1269, %v1268
    %1286 = vmatprep.subr.bf16.mxu0 0
    %1287 = vmatpush1.bf16.msra.mxu0 %v1270
    %1288 = vmatprep.subr.bf16.mxu0 0
    %1289 = vmatpush1.bf16.msra.mxu0 %v1271
    %1290 = vmatprep.subr.bf16.mxu0 0
    %1291 = vmatpush1.bf16.msra.mxu0 %v1272
    %1292 = vmatprep.subr.bf16.mxu0 0
    %1293 = vmatpush1.bf16.msra.mxu0 %v1273
    %1294 = vmatprep.subr.bf16.mxu0 0
    %1295 = vmatpush1.bf16.msra.mxu0 %v1274
    %1296 = vmatprep.subr.bf16.mxu0 0
    %1297 = vmatpush1.bf16.msra.mxu0 %v1275
    %1298 = vmatprep.subr.bf16.mxu0 0
    %1299 = vmatpush1.bf16.msra.mxu0 %v1276
    %1300 = vmatprep.subr.bf16.mxu0 0
    %1301 = vmatpush1.bf16.msra.mxu0 %v1277
    %1302 = vmatprep.subr.bf16.mxu0 0
    %1303 = vmatpush1.bf16.msra.mxu0 0
    %1304 = vmatprep.subr.bf16.mxu0 0
    %1305 = vmatpush1.bf16.msra.mxu0 0
    %1306 = vmatprep.subr.bf16.mxu0 0
    %1307 = vmatpush1.bf16.msra.mxu0 0
    %1308 = vmatprep.subr.bf16.mxu0 0
    %1309 = vmatpush1.bf16.msra.mxu0 0
    %1310 = vmatprep.subr.bf16.mxu0 0
    %1311 = vmatpush1.bf16.msra.mxu0 0
    %1312 = vmatprep.subr.bf16.mxu0 0
    %1313 = vmatpush1.bf16.msra.mxu0 0
    %1314 = vmatprep.subr.bf16.mxu0 0
    %1315 = vmatpush1.bf16.msra.mxu0 0
    %1316 = vmatprep.subr.bf16.mxu0 0
    %1317 = vmatpush1.bf16.msra.mxu0 0
    %1318 = vmatprep.mubr.bf16.mxu0 0
    %1319 = vmatmul.mubr.bf16.gmra.mrb[0].mxu0 %v642
    %v1320 = vpop.f32.mrb[0].mxu0
    %v1321 = vadd.f32 %v1176, %v1320
    %v1322 = vpop.f32.mrb[0].mxu0
    %v1323 = vpop.f32.mrb[0].mxu0
    %v1324 = vadd.f32 %v1179, %v1323
    %v1325 = vpop.f32.mrb[0].mxu0
    %1326 = vmatprep.mubr.bf16.mxu0 0
    %1327 = vmatmul.mubr.bf16.gmra.mrb[0].mxu0 %v643
    %v1328 = vpop.f32.mrb[0].mxu0
    %v1329 = vadd.f32 %v1184, %v1328
    %v1330 = vpop.f32.mrb[0].mxu0
    %v1331 = vpop.f32.mrb[0].mxu0
    %v1332 = vadd.f32 %v1187, %v1331
    %v1333 = vpop.f32.mrb[0].mxu0
    %1334 = vmatprep.mubr.bf16.mxu0 0
    %1335 = vmatmul.mubr.bf16.gmra.mrb[0].mxu0 %v644
    %v1336 = vpop.f32.mrb[0].mxu0
    %v1337 = vadd.f32 %v1192, %v1336
    %v1338 = vpop.f32.mrb[0].mxu0
    %v1339 = vpop.f32.mrb[0].mxu0
    %v1340 = vadd.f32 %v1195, %v1339
    %v1341 = vpop.f32.mrb[0].mxu0
    %1342 = vmatprep.mubr.bf16.mxu0 0
    %1343 = vmatmul.mubr.bf16.gmra.mrb[0].mxu0 %v645
    %v1344 = vpop.f32.mrb[0].mxu0
    %v1345 = vadd.f32 %v1200, %v1344
    %v1346 = vpop.f32.mrb[0].mxu0
    %v1347 = vpop.f32.mrb[0].mxu0
    %v1348 = vadd.f32 %v1203, %v1347
    %v1349 = vpop.f32.mrb[0].mxu0
    %1350 = vmatprep.mubr.bf16.mxu0 0
    %1351 = vmatmul.mubr.bf16.gmra.mrb[0].mxu0 %v646
    %v1352 = vpop.f32.mrb[0].mxu0
    %v1353 = vadd.f32 %v1208, %v1352
    %v1354 = vpop.f32.mrb[0].mxu0
    %v1355 = vpop.f32.mrb[0].mxu0
    %v1356 = vadd.f32 %v1211, %v1355
    %v1357 = vpop.f32.mrb[0].mxu0
    %1358 = vmatprep.mubr.bf16.mxu0 0
    %1359 = vmatmul.mubr.bf16.gmra.mrb[0].mxu0 %v647
    %v1360 = vpop.f32.mrb[0].mxu0
    %v1361 = vadd.f32 %v1216, %v1360
    %v1362 = vpop.f32.mrb[0].mxu0
    %v1363 = vpop.f32.mrb[0].mxu0
    %v1364 = vadd.f32 %v1219, %v1363
    %v1365 = vpop.f32.mrb[0].mxu0
    %1366 = vmatprep.mubr.bf16.mxu0 0
    %1367 = vmatmul.mubr.bf16.gmra.mrb[0].mxu0 %v648
    %v1368 = vpop.f32.mrb[0].mxu0
    %v1369 = vadd.f32 %v1224, %v1368
    %v1370 = vpop.f32.mrb[0].mxu0
    %v1371 = vpop.f32.mrb[0].mxu0
    %v1372 = vadd.f32 %v1227, %v1371
    %v1373 = vpop.f32.mrb[0].mxu0
    %1374 = vmatprep.mubr.bf16.mxu0 0
    %1375 = vmatmul.mubr.bf16.gmra.mrb[0].mxu0 %v649
    %v1376 = vpop.f32.mrb[0].mxu0
    %v1377 = vadd.f32 %v1232, %v1376
    %v1378 = vpop.f32.mrb[0].mxu0
    %v1379 = vpop.f32.mrb[0].mxu0
    %v1380 = vadd.f32 %v1235, %v1379
    %v1381 = vpop.f32.mrb[0].mxu0
    %1382 = vdwg.mxu0
    %1383 = vset.pattern.permute.xlu0 2
    %1384 = vperm.xlu0 %1383, %v224
    %v1385 = vpop.permute.xlu0 %1384
    %1386 = vset.pattern.permute.xlu0 2
    %1387 = vperm.xlu0 %1386, %v225
    %v1388 = vpop.permute.xlu0 %1387
    %1389 = vset.pattern.permute.xlu0 2
    %1390 = vperm.xlu0 %1389, %v226
    %v1391 = vpop.permute.xlu0 %1390
    %1392 = vset.pattern.permute.xlu0 2
    %1393 = vperm.xlu0 %1392, %v227
    %v1394 = vpop.permute.xlu0 %1393
    %1395 = vset.pattern.permute.xlu0 2
    %1396 = vperm.xlu0 %1395, %v228
    %v1397 = vpop.permute.xlu0 %1396
    %1398 = vset.pattern.permute.xlu0 2
    %1399 = vperm.xlu0 %1398, %v229
    %v1400 = vpop.permute.xlu0 %1399
    %1401 = vset.pattern.permute.xlu0 2
    %1402 = vperm.xlu0 %1401, %v230
    %v1403 = vpop.permute.xlu0 %1402
    %1404 = vset.pattern.permute.xlu0 2
    %1405 = vperm.xlu0 %1404, %v231
    %v1406 = vpop.permute.xlu0 %1405
    %1407 = vset.pattern.permute.xlu0 2
    %1408 = vperm.xlu0 %1407, %v232
    %v1409 = vpop.permute.xlu0 %1408
    %1410 = vset.pattern.permute.xlu0 2
    %1411 = vperm.xlu0 %1410, %v233
    %v1412 = vpop.permute.xlu0 %1411
    %1413 = vset.pattern.permute.xlu0 2
    %1414 = vperm.xlu0 %1413, %v234
    %v1415 = vpop.permute.xlu0 %1414
    %1416 = vset.pattern.permute.xlu0 2
    %1417 = vperm.xlu0 %1416, %v235
    %v1418 = vpop.permute.xlu0 %1417
    %1419 = vset.pattern.permute.xlu0 2
    %1420 = vperm.xlu0 %1419, %v236
    %v1421 = vpop.permute.xlu0 %1420
    %1422 = vset.pattern.permute.xlu0 2
    %1423 = vperm.xlu0 %1422, %v237
    %v1424 = vpop.permute.xlu0 %1423
    %1425 = vset.pattern.permute.xlu0 2
    %1426 = vperm.xlu0 %1425, %v238
    %v1427 = vpop.permute.xlu0 %1426
    %1428 = vset.pattern.permute.xlu0 2
    %1429 = vperm.xlu0 %1428, %v239
    %v1430 = vpop.permute.xlu0 %1429
    %vm1431 = vcmp.eq.s32.totalorder %v220, %v1385
    %vm1432 = vcmp.eq.s32.totalorder %v221, %v1385
    %vm1433 = vcmp.eq.s32.totalorder %v222, %v1385
    %vm1434 = vcmp.eq.s32.totalorder %v223, %v1385
    %vm1435 = vcmp.eq.s32.totalorder %v220, %v1388
    %vm1436 = vcmp.eq.s32.totalorder %v221, %v1388
    %vm1437 = vcmp.eq.s32.totalorder %v222, %v1388
    %vm1438 = vcmp.eq.s32.totalorder %v223, %v1388
    %vm1439 = vcmp.eq.s32.totalorder %v220, %v1391
    %vm1440 = vcmp.eq.s32.totalorder %v221, %v1391
    %vm1441 = vcmp.eq.s32.totalorder %v222, %v1391
    %vm1442 = vcmp.eq.s32.totalorder %v223, %v1391
    %vm1443 = vcmp.eq.s32.totalorder %v220, %v1394
    %vm1444 = vcmp.eq.s32.totalorder %v221, %v1394
    %vm1445 = vcmp.eq.s32.totalorder %v222, %v1394
    %vm1446 = vcmp.eq.s32.totalorder %v223, %v1394
    %vm1447 = vcmp.eq.s32.totalorder %v220, %v1397
    %vm1448 = vcmp.eq.s32.totalorder %v221, %v1397
    %vm1449 = vcmp.eq.s32.totalorder %v222, %v1397
    %vm1450 = vcmp.eq.s32.totalorder %v223, %v1397
    %vm1451 = vcmp.eq.s32.totalorder %v220, %v1400
    %vm1452 = vcmp.eq.s32.totalorder %v221, %v1400
    %vm1453 = vcmp.eq.s32.totalorder %v222, %v1400
    %vm1454 = vcmp.eq.s32.totalorder %v223, %v1400
    %vm1455 = vcmp.eq.s32.totalorder %v220, %v1403
    %vm1456 = vcmp.eq.s32.totalorder %v221, %v1403
    %vm1457 = vcmp.eq.s32.totalorder %v222, %v1403
    %vm1458 = vcmp.eq.s32.totalorder %v223, %v1403
    %vm1459 = vcmp.eq.s32.totalorder %v220, %v1406
    %vm1460 = vcmp.eq.s32.totalorder %v221, %v1406
    %vm1461 = vcmp.eq.s32.totalorder %v222, %v1406
    %vm1462 = vcmp.eq.s32.totalorder %v223, %v1406
    %vm1463 = vcmp.eq.s32.totalorder %v220, %v1409
    %vm1464 = vcmp.eq.s32.totalorder %v221, %v1409
    %vm1465 = vcmp.eq.s32.totalorder %v222, %v1409
    %vm1466 = vcmp.eq.s32.totalorder %v223, %v1409
    %vm1467 = vcmp.eq.s32.totalorder %v220, %v1412
    %vm1468 = vcmp.eq.s32.totalorder %v221, %v1412
    %vm1469 = vcmp.eq.s32.totalorder %v222, %v1412
    %vm1470 = vcmp.eq.s32.totalorder %v223, %v1412
    %vm1471 = vcmp.eq.s32.totalorder %v220, %v1415
    %vm1472 = vcmp.eq.s32.totalorder %v221, %v1415
    %vm1473 = vcmp.eq.s32.totalorder %v222, %v1415
    %vm1474 = vcmp.eq.s32.totalorder %v223, %v1415
    %vm1475 = vcmp.eq.s32.totalorder %v220, %v1418
    %vm1476 = vcmp.eq.s32.totalorder %v221, %v1418
    %vm1477 = vcmp.eq.s32.totalorder %v222, %v1418
    %vm1478 = vcmp.eq.s32.totalorder %v223, %v1418
    %vm1479 = vcmp.eq.s32.totalorder %v220, %v1421
    %vm1480 = vcmp.eq.s32.totalorder %v221, %v1421
    %vm1481 = vcmp.eq.s32.totalorder %v222, %v1421
    %vm1482 = vcmp.eq.s32.totalorder %v223, %v1421
    %vm1483 = vcmp.eq.s32.totalorder %v220, %v1424
    %vm1484 = vcmp.eq.s32.totalorder %v221, %v1424
    %vm1485 = vcmp.eq.s32.totalorder %v222, %v1424
    %vm1486 = vcmp.eq.s32.totalorder %v223, %v1424
    %vm1487 = vcmp.eq.s32.totalorder %v220, %v1427
    %vm1488 = vcmp.eq.s32.totalorder %v221, %v1427
    %vm1489 = vcmp.eq.s32.totalorder %v222, %v1427
    %vm1490 = vcmp.eq.s32.totalorder %v223, %v1427
    %vm1491 = vcmp.eq.s32.totalorder %v220, %v1430
    %vm1492 = vcmp.eq.s32.totalorder %v221, %v1430
    %vm1493 = vcmp.eq.s32.totalorder %v222, %v1430
    %vm1494 = vcmp.eq.s32.totalorder %v223, %v1430
    %v1495 = vsel %vm1431, 1.0, 0.0
    %v1496 = vsel %vm1432, 1.0, 0.0
    %v1497 = vsel %vm1433, 1.0, 0.0
    %v1498 = vsel %vm1434, 1.0, 0.0
    %v1499 = vsel %vm1435, 1.0, 0.0
    %v1500 = vsel %vm1436, 1.0, 0.0
    %v1501 = vsel %vm1437, 1.0, 0.0
    %v1502 = vsel %vm1438, 1.0, 0.0
    %v1503 = vsel %vm1439, 1.0, 0.0
    %v1504 = vsel %vm1440, 1.0, 0.0
    %v1505 = vsel %vm1441, 1.0, 0.0
    %v1506 = vsel %vm1442, 1.0, 0.0
    %v1507 = vsel %vm1443, 1.0, 0.0
    %v1508 = vsel %vm1444, 1.0, 0.0
    %v1509 = vsel %vm1445, 1.0, 0.0
    %v1510 = vsel %vm1446, 1.0, 0.0
    %v1511 = vsel %vm1447, 1.0, 0.0
    %v1512 = vsel %vm1448, 1.0, 0.0
    %v1513 = vsel %vm1449, 1.0, 0.0
    %v1514 = vsel %vm1450, 1.0, 0.0
    %v1515 = vsel %vm1451, 1.0, 0.0
    %v1516 = vsel %vm1452, 1.0, 0.0
    %v1517 = vsel %vm1453, 1.0, 0.0
    %v1518 = vsel %vm1454, 1.0, 0.0
    %v1519 = vsel %vm1455, 1.0, 0.0
    %v1520 = vsel %vm1456, 1.0, 0.0
    %v1521 = vsel %vm1457, 1.0, 0.0
    %v1522 = vsel %vm1458, 1.0, 0.0
    %v1523 = vsel %vm1459, 1.0, 0.0
    %v1524 = vsel %vm1460, 1.0, 0.0
    %v1525 = vsel %vm1461, 1.0, 0.0
    %v1526 = vsel %vm1462, 1.0, 0.0
    %v1527 = vsel %vm1463, 1.0, 0.0
    %v1528 = vsel %vm1464, 1.0, 0.0
    %v1529 = vsel %vm1465, 1.0, 0.0
    %v1530 = vsel %vm1466, 1.0, 0.0
    %v1531 = vsel %vm1467, 1.0, 0.0
    %v1532 = vsel %vm1468, 1.0, 0.0
    %v1533 = vsel %vm1469, 1.0, 0.0
    %v1534 = vsel %vm1470, 1.0, 0.0
    %v1535 = vsel %vm1471, 1.0, 0.0
    %v1536 = vsel %vm1472, 1.0, 0.0
    %v1537 = vsel %vm1473, 1.0, 0.0
    %v1538 = vsel %vm1474, 1.0, 0.0
    %v1539 = vsel %vm1475, 1.0, 0.0
    %v1540 = vsel %vm1476, 1.0, 0.0
    %v1541 = vsel %vm1477, 1.0, 0.0
    %v1542 = vsel %vm1478, 1.0, 0.0
    %v1543 = vsel %vm1479, 1.0, 0.0
    %v1544 = vsel %vm1480, 1.0, 0.0
    %v1545 = vsel %vm1481, 1.0, 0.0
    %v1546 = vsel %vm1482, 1.0, 0.0
    %v1547 = vsel %vm1483, 1.0, 0.0
    %v1548 = vsel %vm1484, 1.0, 0.0
    %v1549 = vsel %vm1485, 1.0, 0.0
    %v1550 = vsel %vm1486, 1.0, 0.0
    %v1551 = vsel %vm1487, 1.0, 0.0
    %v1552 = vsel %vm1488, 1.0, 0.0
    %v1553 = vsel %vm1489, 1.0, 0.0
    %v1554 = vsel %vm1490, 1.0, 0.0
    %v1555 = vsel %vm1491, 1.0, 0.0
    %v1556 = vsel %vm1492, 1.0, 0.0
    %v1557 = vsel %vm1493, 1.0, 0.0
    %v1558 = vsel %vm1494, 1.0, 0.0
    %v1559 = vpack.c.bf16 %v1499, %v1495
    %v1560 = vpack.c.bf16 %v1500, %v1496
    %v1561 = vpack.c.bf16 %v1501, %v1497
    %v1562 = vpack.c.bf16 %v1502, %v1498
    %v1563 = vpack.c.bf16 %v1507, %v1503
    %v1564 = vpack.c.bf16 %v1508, %v1504
    %v1565 = vpack.c.bf16 %v1509, %v1505
    %v1566 = vpack.c.bf16 %v1510, %v1506
    %v1567 = vpack.c.bf16 %v1515, %v1511
    %v1568 = vpack.c.bf16 %v1516, %v1512
    %v1569 = vpack.c.bf16 %v1517, %v1513
    %v1570 = vpack.c.bf16 %v1518, %v1514
    %v1571 = vpack.c.bf16 %v1523, %v1519
    %v1572 = vpack.c.bf16 %v1524, %v1520
    %v1573 = vpack.c.bf16 %v1525, %v1521
    %v1574 = vpack.c.bf16 %v1526, %v1522
    %v1575 = vpack.c.bf16 %v1531, %v1527
    %v1576 = vpack.c.bf16 %v1532, %v1528
    %v1577 = vpack.c.bf16 %v1533, %v1529
    %v1578 = vpack.c.bf16 %v1534, %v1530
    %v1579 = vpack.c.bf16 %v1539, %v1535
    %v1580 = vpack.c.bf16 %v1540, %v1536
    %v1581 = vpack.c.bf16 %v1541, %v1537
    %v1582 = vpack.c.bf16 %v1542, %v1538
    %v1583 = vpack.c.bf16 %v1547, %v1543
    %v1584 = vpack.c.bf16 %v1548, %v1544
    %v1585 = vpack.c.bf16 %v1549, %v1545
    %v1586 = vpack.c.bf16 %v1550, %v1546
    %v1587 = vpack.c.bf16 %v1555, %v1551
    %v1588 = vpack.c.bf16 %v1556, %v1552
    %v1589 = vpack.c.bf16 %v1557, %v1553
    %v1590 = vpack.c.bf16 %v1558, %v1554
    %1591 = vmatprep.subr.bf16.mxu0 0
    %1592 = vmatpush1.bf16.msra.mxu0 %v187
    %1593 = vmatprep.subr.bf16.mxu0 0
    %1594 = vmatpush1.bf16.msra.mxu0 %v188
    %1595 = vmatprep.subr.bf16.mxu0 0
    %1596 = vmatpush1.bf16.msra.mxu0 %v189
    %1597 = vmatprep.subr.bf16.mxu0 0
    %1598 = vmatpush1.bf16.msra.mxu0 %v190
    %1599 = vmatprep.subr.bf16.mxu0 0
    %1600 = vmatpush1.bf16.msra.mxu0 %v191
    %1601 = vmatprep.subr.bf16.mxu0 0
    %1602 = vmatpush1.bf16.msra.mxu0 %v192
    %1603 = vmatprep.subr.bf16.mxu0 0
    %1604 = vmatpush1.bf16.msra.mxu0 %v193
    %1605 = vmatprep.subr.bf16.mxu0 0
    %1606 = vmatpush1.bf16.msra.mxu0 %v194
    %1607 = vmatprep.subr.bf16.mxu0 0
    %1608 = vmatpush1.bf16.msra.mxu0 %v195
    %1609 = vmatprep.subr.bf16.mxu0 0
    %1610 = vmatpush1.bf16.msra.mxu0 %v196
    %1611 = vmatprep.subr.bf16.mxu0 0
    %1612 = vmatpush1.bf16.msra.mxu0 %v197
    %1613 = vmatprep.subr.bf16.mxu0 0
    %1614 = vmatpush1.bf16.msra.mxu0 %v198
    %1615 = vmatprep.subr.bf16.mxu0 0
    %1616 = vmatpush1.bf16.msra.mxu0 %v199
    %1617 = vmatprep.subr.bf16.mxu0 0
    %1618 = vmatpush1.bf16.msra.mxu0 %v200
    %1619 = vmatprep.subr.bf16.mxu0 0
    %1620 = vmatpush1.bf16.msra.mxu0 %v201
    %1621 = vmatprep.subr.bf16.mxu0 0
    %1622 = vmatpush1.bf16.msra.mxu0 %v202
    %1623 = vmatprep.mubr.bf16.mxu0 %v1560
    %1624 = vmatmul.mubr.bf16.gmra.mrb[0].mxu0 %v1559
    %v1625 = vpop.f32.mrb[0].mxu0
    %v1626 = vadd.f32 0.0, %v1625
    %v1627 = vpop.f32.mrb[0].mxu0
    %v1628 = vpop.f32.mrb[0].mxu0
    %v1629 = vadd.f32 0.0, %v1628
    %v1630 = vpop.f32.mrb[0].mxu0
    %1631 = vmatprep.mubr.bf16.mxu0 %v1564
    %1632 = vmatmul.mubr.bf16.gmra.mrb[0].mxu0 %v1563
    %v1633 = vpop.f32.mrb[0].mxu0
    %v1634 = vadd.f32 0.0, %v1633
    %v1635 = vpop.f32.mrb[0].mxu0
    %v1636 = vpop.f32.mrb[0].mxu0
    %v1637 = vadd.f32 0.0, %v1636
    %v1638 = vpop.f32.mrb[0].mxu0
    %1639 = vmatprep.mubr.bf16.mxu0 %v1568
    %1640 = vmatmul.mubr.bf16.gmra.mrb[0].mxu0 %v1567
    %v1641 = vpop.f32.mrb[0].mxu0
    %v1642 = vadd.f32 0.0, %v1641
    %v1643 = vpop.f32.mrb[0].mxu0
    %v1644 = vpop.f32.mrb[0].mxu0
    %v1645 = vadd.f32 0.0, %v1644
    %v1646 = vpop.f32.mrb[0].mxu0
    %1647 = vmatprep.mubr.bf16.mxu0 %v1572
    %1648 = vmatmul.mubr.bf16.gmra.mrb[0].mxu0 %v1571
    %v1649 = vpop.f32.mrb[0].mxu0
    %v1650 = vadd.f32 0.0, %v1649
    %v1651 = vpop.f32.mrb[0].mxu0
    %v1652 = vpop.f32.mrb[0].mxu0
    %v1653 = vadd.f32 0.0, %v1652
    %v1654 = vpop.f32.mrb[0].mxu0
    %1655 = vmatprep.mubr.bf16.mxu0 %v1576
    %1656 = vmatmul.mubr.bf16.gmra.mrb[0].mxu0 %v1575
    %v1657 = vpop.f32.mrb[0].mxu0
    %v1658 = vadd.f32 0.0, %v1657
    %v1659 = vpop.f32.mrb[0].mxu0
    %v1660 = vpop.f32.mrb[0].mxu0
    %v1661 = vadd.f32 0.0, %v1660
    %v1662 = vpop.f32.mrb[0].mxu0
    %1663 = vmatprep.mubr.bf16.mxu0 %v1580
    %1664 = vmatmul.mubr.bf16.gmra.mrb[0].mxu0 %v1579
    %v1665 = vpop.f32.mrb[0].mxu0
    %v1666 = vadd.f32 0.0, %v1665
    %v1667 = vpop.f32.mrb[0].mxu0
    %v1668 = vpop.f32.mrb[0].mxu0
    %v1669 = vadd.f32 0.0, %v1668
    %v1670 = vpop.f32.mrb[0].mxu0
    %1671 = vmatprep.mubr.bf16.mxu0 %v1584
    %1672 = vmatmul.mubr.bf16.gmra.mrb[0].mxu0 %v1583
    %v1673 = vpop.f32.mrb[0].mxu0
    %v1674 = vadd.f32 0.0, %v1673
    %v1675 = vpop.f32.mrb[0].mxu0
    %v1676 = vpop.f32.mrb[0].mxu0
    %v1677 = vadd.f32 0.0, %v1676
    %v1678 = vpop.f32.mrb[0].mxu0
    %1679 = vmatprep.mubr.bf16.mxu0 %v1588
    %1680 = vmatmul.mubr.bf16.gmra.mrb[0].mxu0 %v1587
    %v1681 = vpop.f32.mrb[0].mxu0
    %v1682 = vadd.f32 0.0, %v1681
    %v1683 = vpop.f32.mrb[0].mxu0
    %v1684 = vpop.f32.mrb[0].mxu0
    %v1685 = vadd.f32 0.0, %v1684
    %v1686 = vpop.f32.mrb[0].mxu0
    %1687 = vdwg.mxu0
    %1688 = vmatprep.subr.bf16.mxu0 0
    %1689 = vmatpush1.bf16.msra.mxu0 %v203
    %1690 = vmatprep.subr.bf16.mxu0 0
    %1691 = vmatpush1.bf16.msra.mxu0 %v204
    %1692 = vmatprep.subr.bf16.mxu0 0
    %1693 = vmatpush1.bf16.msra.mxu0 %v205
    %1694 = vmatprep.subr.bf16.mxu0 0
    %1695 = vmatpush1.bf16.msra.mxu0 %v206
    %1696 = vmatprep.subr.bf16.mxu0 0
    %1697 = vmatpush1.bf16.msra.mxu0 %v207
    %1698 = vmatprep.subr.bf16.mxu0 0
    %1699 = vmatpush1.bf16.msra.mxu0 %v208
    %1700 = vmatprep.subr.bf16.mxu0 0
    %1701 = vmatpush1.bf16.msra.mxu0 %v209
    %1702 = vmatprep.subr.bf16.mxu0 0
    %1703 = vmatpush1.bf16.msra.mxu0 %v210
    %1704 = vmatprep.subr.bf16.mxu0 0
    %1705 = vmatpush1.bf16.msra.mxu0 %v211
    %1706 = vmatprep.subr.bf16.mxu0 0
    %1707 = vmatpush1.bf16.msra.mxu0 %v212
    %1708 = vmatprep.subr.bf16.mxu0 0
    %1709 = vmatpush1.bf16.msra.mxu0 %v213
    %1710 = vmatprep.subr.bf16.mxu0 0
    %1711 = vmatpush1.bf16.msra.mxu0 %v214
    %1712 = vmatprep.subr.bf16.mxu0 0
    %1713 = vmatpush1.bf16.msra.mxu0 %v215
    %1714 = vmatprep.subr.bf16.mxu0 0
    %1715 = vmatpush1.bf16.msra.mxu0 %v216
    %1716 = vmatprep.subr.bf16.mxu0 0
    %1717 = vmatpush1.bf16.msra.mxu0 %v217
    %1718 = vmatprep.subr.bf16.mxu0 0
    %1719 = vmatpush1.bf16.msra.mxu0 %v218
    %1720 = vmatprep.mubr.bf16.mxu0 %v1562
    %1721 = vmatmul.mubr.bf16.gmra.mrb[0].mxu0 %v1561
    %v1722 = vpop.f32.mrb[0].mxu0
    %v1723 = vadd.f32 %v1626, %v1722
    %v1724 = vpop.f32.mrb[0].mxu0
    %v1725 = vpop.f32.mrb[0].mxu0
    %v1726 = vadd.f32 %v1629, %v1725
    %v1727 = vpop.f32.mrb[0].mxu0
    %1728 = vmatprep.mubr.bf16.mxu0 %v1566
    %1729 = vmatmul.mubr.bf16.gmra.mrb[0].mxu0 %v1565
    %v1730 = vpop.f32.mrb[0].mxu0
    %v1731 = vadd.f32 %v1634, %v1730
    %v1732 = vpop.f32.mrb[0].mxu0
    %v1733 = vpop.f32.mrb[0].mxu0
    %v1734 = vadd.f32 %v1637, %v1733
    %v1735 = vpop.f32.mrb[0].mxu0
    %1736 = vmatprep.mubr.bf16.mxu0 %v1570
    %1737 = vmatmul.mubr.bf16.gmra.mrb[0].mxu0 %v1569
    %v1738 = vpop.f32.mrb[0].mxu0
    %v1739 = vadd.f32 %v1642, %v1738
    %v1740 = vpop.f32.mrb[0].mxu0
    %v1741 = vpop.f32.mrb[0].mxu0
    %v1742 = vadd.f32 %v1645, %v1741
    %v1743 = vpop.f32.mrb[0].mxu0
    %1744 = vmatprep.mubr.bf16.mxu0 %v1574
    %1745 = vmatmul.mubr.bf16.gmra.mrb[0].mxu0 %v1573
    %v1746 = vpop.f32.mrb[0].mxu0
    %v1747 = vadd.f32 %v1650, %v1746
    %v1748 = vpop.f32.mrb[0].mxu0
    %v1749 = vpop.f32.mrb[0].mxu0
    %v1750 = vadd.f32 %v1653, %v1749
    %v1751 = vpop.f32.mrb[0].mxu0
    %1752 = vmatprep.mubr.bf16.mxu0 %v1578
    %1753 = vmatmul.mubr.bf16.gmra.mrb[0].mxu0 %v1577
    %v1754 = vpop.f32.mrb[0].mxu0
    %v1755 = vadd.f32 %v1658, %v1754
    %v1756 = vpop.f32.mrb[0].mxu0
    %v1757 = vpop.f32.mrb[0].mxu0
    %v1758 = vadd.f32 %v1661, %v1757
    %v1759 = vpop.f32.mrb[0].mxu0
    %1760 = vmatprep.mubr.bf16.mxu0 %v1582
    %1761 = vmatmul.mubr.bf16.gmra.mrb[0].mxu0 %v1581
    %v1762 = vpop.f32.mrb[0].mxu0
    %v1763 = vadd.f32 %v1666, %v1762
    %v1764 = vpop.f32.mrb[0].mxu0
    %v1765 = vpop.f32.mrb[0].mxu0
    %v1766 = vadd.f32 %v1669, %v1765
    %v1767 = vpop.f32.mrb[0].mxu0
    %1768 = vmatprep.mubr.bf16.mxu0 %v1586
    %1769 = vmatmul.mubr.bf16.gmra.mrb[0].mxu0 %v1585
    %v1770 = vpop.f32.mrb[0].mxu0
    %v1771 = vadd.f32 %v1674, %v1770
    %v1772 = vpop.f32.mrb[0].mxu0
    %v1773 = vpop.f32.mrb[0].mxu0
    %v1774 = vadd.f32 %v1677, %v1773
    %v1775 = vpop.f32.mrb[0].mxu0
    %1776 = vmatprep.mubr.bf16.mxu0 %v1590
    %1777 = vmatmul.mubr.bf16.gmra.mrb[0].mxu0 %v1589
    %v1778 = vpop.f32.mrb[0].mxu0
    %v1779 = vadd.f32 %v1682, %v1778
    %v1780 = vpop.f32.mrb[0].mxu0
    %v1781 = vpop.f32.mrb[0].mxu0
    %v1782 = vadd.f32 %v1685, %v1781
    %v1783 = vpop.f32.mrb[0].mxu0
    %1784 = vdwg.mxu0
    %v1785 = vpack.c.bf16 %v1726, %v1723
    %v1786 = vpack.c.bf16 %v1734, %v1731
    %v1787 = vpack.c.bf16 %v1742, %v1739
    %v1788 = vpack.c.bf16 %v1750, %v1747
    %v1789 = vpack.c.bf16 %v1758, %v1755
    %v1790 = vpack.c.bf16 %v1766, %v1763
    %v1791 = vpack.c.bf16 %v1774, %v1771
    %v1792 = vpack.c.bf16 %v1782, %v1779
    %s1793 = scalar_lea.vmem [#allocation5], 128
    %v1794 = vld [vmem:[%s1793] sm:$0xf]
    %v1795 = vld [vmem:[%s1793 + $0x4] sm:$0xf]
    %v1796 = vld [vmem:[%s1793 + $0x8] sm:$0xf]
    %v1797 = vld [vmem:[%s1793 + $0xc] sm:$0xf]
    %v1798 = vld [vmem:[%s1793 + $0x10] sm:$0xf]
    %v1799 = vld [vmem:[%s1793 + $0x14] sm:$0xf]
    %v1800 = vld [vmem:[%s1793 + $0x18] sm:$0xf]
    %v1801 = vld [vmem:[%s1793 + $0x1c] sm:$0xf]
    %v1802 = vld [vmem:[%s1793 + $0x20] sm:$0xf]
    %v1803 = vld [vmem:[%s1793 + $0x24] sm:$0xf]
    %v1804 = vld [vmem:[%s1793 + $0x28] sm:$0xf]
    %v1805 = vld [vmem:[%s1793 + $0x2c] sm:$0xf]
    %v1806 = vld [vmem:[%s1793 + $0x30] sm:$0xf]
    %v1807 = vld [vmem:[%s1793 + $0x34] sm:$0xf]
    %v1808 = vld [vmem:[%s1793 + $0x38] sm:$0xf]
    %v1809 = vld [vmem:[%s1793 + $0x3c] sm:$0xf]
    %v1826 = vunpack.c.l.b16 %v1794
    %v1827 = vunpack.c.l.b16 %v1795
    %v1828 = vunpack.c.l.b16 %v1796
    %v1829 = vunpack.c.l.b16 %v1797
    %v1830 = vunpack.c.l.b16 %v1798
    %v1831 = vunpack.c.l.b16 %v1799
    %v1832 = vunpack.c.l.b16 %v1800
    %v1833 = vunpack.c.l.b16 %v1801
    %v1834 = vunpack.c.l.b16 %v1802
    %v1835 = vunpack.c.l.b16 %v1803
    %v1836 = vunpack.c.l.b16 %v1804
    %v1837 = vunpack.c.l.b16 %v1805
    %v1838 = vunpack.c.l.b16 %v1806
    %v1839 = vunpack.c.l.b16 %v1807
    %v1840 = vunpack.c.l.b16 %v1808
    %v1841 = vunpack.c.l.b16 %v1809
    %v1842 = vpack.c.b16 %v1827, %v1826
    %v1843 = vpack.c.b16 %v1829, %v1828
    %v1844 = vpack.c.b16 %v1831, %v1830
    %v1845 = vpack.c.b16 %v1833, %v1832
    %v1846 = vpack.c.b16 %v1835, %v1834
    %v1847 = vpack.c.b16 %v1837, %v1836
    %v1848 = vpack.c.b16 %v1839, %v1838
    %v1849 = vpack.c.b16 %v1841, %v1840
    %1858 = vmatprep.subr.bf16.mxu0 0
    %1859 = vmatpush1.bf16.msra.mxu0 %v1842
    %1860 = vmatprep.subr.bf16.mxu0 0
    %1861 = vmatpush1.bf16.msra.mxu0 %v1843
    %1862 = vmatprep.subr.bf16.mxu0 0
    %1863 = vmatpush1.bf16.msra.mxu0 %v1844
    %1864 = vmatprep.subr.bf16.mxu0 0
    %1865 = vmatpush1.bf16.msra.mxu0 %v1845
    %1866 = vmatprep.subr.bf16.mxu0 0
    %1867 = vmatpush1.bf16.msra.mxu0 %v1846
    %1868 = vmatprep.subr.bf16.mxu0 0
    %1869 = vmatpush1.bf16.msra.mxu0 %v1847
    %1870 = vmatprep.subr.bf16.mxu0 0
    %1871 = vmatpush1.bf16.msra.mxu0 %v1848
    %1872 = vmatprep.subr.bf16.mxu0 0
    %1873 = vmatpush1.bf16.msra.mxu0 %v1849
    %1874 = vmatprep.subr.bf16.mxu0 0
    %1875 = vmatpush1.bf16.msra.mxu0 0
    %1876 = vmatprep.subr.bf16.mxu0 0
    %1877 = vmatpush1.bf16.msra.mxu0 0
    %1878 = vmatprep.subr.bf16.mxu0 0
    %1879 = vmatpush1.bf16.msra.mxu0 0
    %1880 = vmatprep.subr.bf16.mxu0 0
    %1881 = vmatpush1.bf16.msra.mxu0 0
    %1882 = vmatprep.subr.bf16.mxu0 0
    %1883 = vmatpush1.bf16.msra.mxu0 0
    %1884 = vmatprep.subr.bf16.mxu0 0
    %1885 = vmatpush1.bf16.msra.mxu0 0
    %1886 = vmatprep.subr.bf16.mxu0 0
    %1887 = vmatpush1.bf16.msra.mxu0 0
    %1888 = vmatprep.subr.bf16.mxu0 0
    %1889 = vmatpush1.bf16.msra.mxu0 0
    %1890 = vmatprep.mubr.bf16.mxu0 0
    %1891 = vmatmul.mubr.bf16.gmra.mrb[0].mxu0 %v1785
    %v1892 = vpop.f32.mrb[0].mxu0
    %v1893 = vadd.f32 0.0, %v1892
    %v1894 = vpop.f32.mrb[0].mxu0
    %v1895 = vpop.f32.mrb[0].mxu0
    %v1896 = vadd.f32 0.0, %v1895
    %v1897 = vpop.f32.mrb[0].mxu0
    %1898 = vmatprep.mubr.bf16.mxu0 0
    %1899 = vmatmul.mubr.bf16.gmra.mrb[0].mxu0 %v1786
    %v1900 = vpop.f32.mrb[0].mxu0
    %v1901 = vadd.f32 0.0, %v1900
    %v1902 = vpop.f32.mrb[0].mxu0
    %v1903 = vpop.f32.mrb[0].mxu0
    %v1904 = vadd.f32 0.0, %v1903
    %v1905 = vpop.f32.mrb[0].mxu0
    %1906 = vmatprep.mubr.bf16.mxu0 0
    %1907 = vmatmul.mubr.bf16.gmra.mrb[0].mxu0 %v1787
    %v1908 = vpop.f32.mrb[0].mxu0
    %v1909 = vadd.f32 0.0, %v1908
    %v1910 = vpop.f32.mrb[0].mxu0
    %v1911 = vpop.f32.mrb[0].mxu0
    %v1912 = vadd.f32 0.0, %v1911
    %v1913 = vpop.f32.mrb[0].mxu0
    %1914 = vmatprep.mubr.bf16.mxu0 0
    %1915 = vmatmul.mubr.bf16.gmra.mrb[0].mxu0 %v1788
    %v1916 = vpop.f32.mrb[0].mxu0
    %v1917 = vadd.f32 0.0, %v1916
    %v1918 = vpop.f32.mrb[0].mxu0
    %v1919 = vpop.f32.mrb[0].mxu0
    %v1920 = vadd.f32 0.0, %v1919
    %v1921 = vpop.f32.mrb[0].mxu0
    %1922 = vmatprep.mubr.bf16.mxu0 0
    %1923 = vmatmul.mubr.bf16.gmra.mrb[0].mxu0 %v1789
    %v1924 = vpop.f32.mrb[0].mxu0
    %v1925 = vadd.f32 0.0, %v1924
    %v1926 = vpop.f32.mrb[0].mxu0
    %v1927 = vpop.f32.mrb[0].mxu0
    %v1928 = vadd.f32 0.0, %v1927
    %v1929 = vpop.f32.mrb[0].mxu0
    %1930 = vmatprep.mubr.bf16.mxu0 0
    %1931 = vmatmul.mubr.bf16.gmra.mrb[0].mxu0 %v1790
    %v1932 = vpop.f32.mrb[0].mxu0
    %v1933 = vadd.f32 0.0, %v1932
    %v1934 = vpop.f32.mrb[0].mxu0
    %v1935 = vpop.f32.mrb[0].mxu0
    %v1936 = vadd.f32 0.0, %v1935
    %v1937 = vpop.f32.mrb[0].mxu0
    %1938 = vmatprep.mubr.bf16.mxu0 0
    %1939 = vmatmul.mubr.bf16.gmra.mrb[0].mxu0 %v1791
    %v1940 = vpop.f32.mrb[0].mxu0
    %v1941 = vadd.f32 0.0, %v1940
    %v1942 = vpop.f32.mrb[0].mxu0
    %v1943 = vpop.f32.mrb[0].mxu0
    %v1944 = vadd.f32 0.0, %v1943
    %v1945 = vpop.f32.mrb[0].mxu0
    %1946 = vmatprep.mubr.bf16.mxu0 0
    %1947 = vmatmul.mubr.bf16.gmra.mrb[0].mxu0 %v1792
    %v1948 = vpop.f32.mrb[0].mxu0
    %v1949 = vadd.f32 0.0, %v1948
    %v1950 = vpop.f32.mrb[0].mxu0
    %v1951 = vpop.f32.mrb[0].mxu0
    %v1952 = vadd.f32 0.0, %v1951
    %v1953 = vpop.f32.mrb[0].mxu0
    %1954 = vdwg.mxu0
    %v1955 = vadd.f32 %v1321, %v1893
    %v1956 = vadd.f32 %v1324, %v1896
    %v1957 = vadd.f32 %v1329, %v1901
    %v1958 = vadd.f32 %v1332, %v1904
    %v1959 = vadd.f32 %v1337, %v1909
    %v1960 = vadd.f32 %v1340, %v1912
    %v1961 = vadd.f32 %v1345, %v1917
    %v1962 = vadd.f32 %v1348, %v1920
    %v1963 = vadd.f32 %v1353, %v1925
    %v1964 = vadd.f32 %v1356, %v1928
    %v1965 = vadd.f32 %v1361, %v1933
    %v1966 = vadd.f32 %v1364, %v1936
    %v1967 = vadd.f32 %v1369, %v1941
    %v1968 = vadd.f32 %v1372, %v1944
    %v1969 = vadd.f32 %v1377, %v1949
    %v1970 = vadd.f32 %v1380, %v1952
    %1971 = vset.pattern.permute.xlu0 3
    %1972 = vperm.xlu0 %1971, %v224
    %v1973 = vpop.permute.xlu0 %1972
    %1974 = vset.pattern.permute.xlu0 3
    %1975 = vperm.xlu0 %1974, %v225
    %v1976 = vpop.permute.xlu0 %1975
    %1977 = vset.pattern.permute.xlu0 3
    %1978 = vperm.xlu0 %1977, %v226
    %v1979 = vpop.permute.xlu0 %1978
    %1980 = vset.pattern.permute.xlu0 3
    %1981 = vperm.xlu0 %1980, %v227
    %v1982 = vpop.permute.xlu0 %1981
    %1983 = vset.pattern.permute.xlu0 3
    %1984 = vperm.xlu0 %1983, %v228
    %v1985 = vpop.permute.xlu0 %1984
    %1986 = vset.pattern.permute.xlu0 3
    %1987 = vperm.xlu0 %1986, %v229
    %v1988 = vpop.permute.xlu0 %1987
    %1989 = vset.pattern.permute.xlu0 3
    %1990 = vperm.xlu0 %1989, %v230
    %v1991 = vpop.permute.xlu0 %1990
    %1992 = vset.pattern.permute.xlu0 3
    %1993 = vperm.xlu0 %1992, %v231
    %v1994 = vpop.permute.xlu0 %1993
    %1995 = vset.pattern.permute.xlu0 3
    %1996 = vperm.xlu0 %1995, %v232
    %v1997 = vpop.permute.xlu0 %1996
    %1998 = vset.pattern.permute.xlu0 3
    %1999 = vperm.xlu0 %1998, %v233
    %v2000 = vpop.permute.xlu0 %1999
    %2001 = vset.pattern.permute.xlu0 3
    %2002 = vperm.xlu0 %2001, %v234
    %v2003 = vpop.permute.xlu0 %2002
    %2004 = vset.pattern.permute.xlu0 3
    %2005 = vperm.xlu0 %2004, %v235
    %v2006 = vpop.permute.xlu0 %2005
    %2007 = vset.pattern.permute.xlu0 3
    %2008 = vperm.xlu0 %2007, %v236
    %v2009 = vpop.permute.xlu0 %2008
    %2010 = vset.pattern.permute.xlu0 3
    %2011 = vperm.xlu0 %2010, %v237
    %v2012 = vpop.permute.xlu0 %2011
    %2013 = vset.pattern.permute.xlu0 3
    %2014 = vperm.xlu0 %2013, %v238
    %v2015 = vpop.permute.xlu0 %2014
    %2016 = vset.pattern.permute.xlu0 3
    %2017 = vperm.xlu0 %2016, %v239
    %v2018 = vpop.permute.xlu0 %2017
    %vm2019 = vcmp.eq.s32.totalorder %v220, %v1973
    %vm2020 = vcmp.eq.s32.totalorder %v221, %v1973
    %vm2021 = vcmp.eq.s32.totalorder %v222, %v1973
    %vm2022 = vcmp.eq.s32.totalorder %v223, %v1973
    %vm2023 = vcmp.eq.s32.totalorder %v220, %v1976
    %vm2024 = vcmp.eq.s32.totalorder %v221, %v1976
    %vm2025 = vcmp.eq.s32.totalorder %v222, %v1976
    %vm2026 = vcmp.eq.s32.totalorder %v223, %v1976
    %vm2027 = vcmp.eq.s32.totalorder %v220, %v1979
    %vm2028 = vcmp.eq.s32.totalorder %v221, %v1979
    %vm2029 = vcmp.eq.s32.totalorder %v222, %v1979
    %vm2030 = vcmp.eq.s32.totalorder %v223, %v1979
    %vm2031 = vcmp.eq.s32.totalorder %v220, %v1982
    %vm2032 = vcmp.eq.s32.totalorder %v221, %v1982
    %vm2033 = vcmp.eq.s32.totalorder %v222, %v1982
    %vm2034 = vcmp.eq.s32.totalorder %v223, %v1982
    %vm2035 = vcmp.eq.s32.totalorder %v220, %v1985
    %vm2036 = vcmp.eq.s32.totalorder %v221, %v1985
    %vm2037 = vcmp.eq.s32.totalorder %v222, %v1985
    %vm2038 = vcmp.eq.s32.totalorder %v223, %v1985
    %vm2039 = vcmp.eq.s32.totalorder %v220, %v1988
    %vm2040 = vcmp.eq.s32.totalorder %v221, %v1988
    %vm2041 = vcmp.eq.s32.totalorder %v222, %v1988
    %vm2042 = vcmp.eq.s32.totalorder %v223, %v1988
    %vm2043 = vcmp.eq.s32.totalorder %v220, %v1991
    %vm2044 = vcmp.eq.s32.totalorder %v221, %v1991
    %vm2045 = vcmp.eq.s32.totalorder %v222, %v1991
    %vm2046 = vcmp.eq.s32.totalorder %v223, %v1991
    %vm2047 = vcmp.eq.s32.totalorder %v220, %v1994
    %vm2048 = vcmp.eq.s32.totalorder %v221, %v1994
    %vm2049 = vcmp.eq.s32.totalorder %v222, %v1994
    %vm2050 = vcmp.eq.s32.totalorder %v223, %v1994
    %vm2051 = vcmp.eq.s32.totalorder %v220, %v1997
    %vm2052 = vcmp.eq.s32.totalorder %v221, %v1997
    %vm2053 = vcmp.eq.s32.totalorder %v222, %v1997
    %vm2054 = vcmp.eq.s32.totalorder %v223, %v1997
    %vm2055 = vcmp.eq.s32.totalorder %v220, %v2000
    %vm2056 = vcmp.eq.s32.totalorder %v221, %v2000
    %vm2057 = vcmp.eq.s32.totalorder %v222, %v2000
    %vm2058 = vcmp.eq.s32.totalorder %v223, %v2000
    %vm2059 = vcmp.eq.s32.totalorder %v220, %v2003
    %vm2060 = vcmp.eq.s32.totalorder %v221, %v2003
    %vm2061 = vcmp.eq.s32.totalorder %v222, %v2003
    %vm2062 = vcmp.eq.s32.totalorder %v223, %v2003
    %vm2063 = vcmp.eq.s32.totalorder %v220, %v2006
    %vm2064 = vcmp.eq.s32.totalorder %v221, %v2006
    %vm2065 = vcmp.eq.s32.totalorder %v222, %v2006
    %vm2066 = vcmp.eq.s32.totalorder %v223, %v2006
    %vm2067 = vcmp.eq.s32.totalorder %v220, %v2009
    %vm2068 = vcmp.eq.s32.totalorder %v221, %v2009
    %vm2069 = vcmp.eq.s32.totalorder %v222, %v2009
    %vm2070 = vcmp.eq.s32.totalorder %v223, %v2009
    %vm2071 = vcmp.eq.s32.totalorder %v220, %v2012
    %vm2072 = vcmp.eq.s32.totalorder %v221, %v2012
    %vm2073 = vcmp.eq.s32.totalorder %v222, %v2012
    %vm2074 = vcmp.eq.s32.totalorder %v223, %v2012
    %vm2075 = vcmp.eq.s32.totalorder %v220, %v2015
    %vm2076 = vcmp.eq.s32.totalorder %v221, %v2015
    %vm2077 = vcmp.eq.s32.totalorder %v222, %v2015
    %vm2078 = vcmp.eq.s32.totalorder %v223, %v2015
    %vm2079 = vcmp.eq.s32.totalorder %v220, %v2018
    %vm2080 = vcmp.eq.s32.totalorder %v221, %v2018
    %vm2081 = vcmp.eq.s32.totalorder %v222, %v2018
    %vm2082 = vcmp.eq.s32.totalorder %v223, %v2018
    %v2083 = vsel %vm2019, 1.0, 0.0
    %v2084 = vsel %vm2020, 1.0, 0.0
    %v2085 = vsel %vm2021, 1.0, 0.0
    %v2086 = vsel %vm2022, 1.0, 0.0
    %v2087 = vsel %vm2023, 1.0, 0.0
    %v2088 = vsel %vm2024, 1.0, 0.0
    %v2089 = vsel %vm2025, 1.0, 0.0
    %v2090 = vsel %vm2026, 1.0, 0.0
    %v2091 = vsel %vm2027, 1.0, 0.0
    %v2092 = vsel %vm2028, 1.0, 0.0
    %v2093 = vsel %vm2029, 1.0, 0.0
    %v2094 = vsel %vm2030, 1.0, 0.0
    %v2095 = vsel %vm2031, 1.0, 0.0
    %v2096 = vsel %vm2032, 1.0, 0.0
    %v2097 = vsel %vm2033, 1.0, 0.0
    %v2098 = vsel %vm2034, 1.0, 0.0
    %v2099 = vsel %vm2035, 1.0, 0.0
    %v2100 = vsel %vm2036, 1.0, 0.0
    %v2101 = vsel %vm2037, 1.0, 0.0
    %v2102 = vsel %vm2038, 1.0, 0.0
    %v2103 = vsel %vm2039, 1.0, 0.0
    %v2104 = vsel %vm2040, 1.0, 0.0
    %v2105 = vsel %vm2041, 1.0, 0.0
    %v2106 = vsel %vm2042, 1.0, 0.0
    %v2107 = vsel %vm2043, 1.0, 0.0
    %v2108 = vsel %vm2044, 1.0, 0.0
    %v2109 = vsel %vm2045, 1.0, 0.0
    %v2110 = vsel %vm2046, 1.0, 0.0
    %v2111 = vsel %vm2047, 1.0, 0.0
    %v2112 = vsel %vm2048, 1.0, 0.0
    %v2113 = vsel %vm2049, 1.0, 0.0
    %v2114 = vsel %vm2050, 1.0, 0.0
    %v2115 = vsel %vm2051, 1.0, 0.0
    %v2116 = vsel %vm2052, 1.0, 0.0
    %v2117 = vsel %vm2053, 1.0, 0.0
    %v2118 = vsel %vm2054, 1.0, 0.0
    %v2119 = vsel %vm2055, 1.0, 0.0
    %v2120 = vsel %vm2056, 1.0, 0.0
    %v2121 = vsel %vm2057, 1.0, 0.0
    %v2122 = vsel %vm2058, 1.0, 0.0
    %v2123 = vsel %vm2059, 1.0, 0.0
    %v2124 = vsel %vm2060, 1.0, 0.0
    %v2125 = vsel %vm2061, 1.0, 0.0
    %v2126 = vsel %vm2062, 1.0, 0.0
    %v2127 = vsel %vm2063, 1.0, 0.0
    %v2128 = vsel %vm2064, 1.0, 0.0
    %v2129 = vsel %vm2065, 1.0, 0.0
    %v2130 = vsel %vm2066, 1.0, 0.0
    %v2131 = vsel %vm2067, 1.0, 0.0
    %v2132 = vsel %vm2068, 1.0, 0.0
    %v2133 = vsel %vm2069, 1.0, 0.0
    %v2134 = vsel %vm2070, 1.0, 0.0
    %v2135 = vsel %vm2071, 1.0, 0.0
    %v2136 = vsel %vm2072, 1.0, 0.0
    %v2137 = vsel %vm2073, 1.0, 0.0
    %v2138 = vsel %vm2074, 1.0, 0.0
    %v2139 = vsel %vm2075, 1.0, 0.0
    %v2140 = vsel %vm2076, 1.0, 0.0
    %v2141 = vsel %vm2077, 1.0, 0.0
    %v2142 = vsel %vm2078, 1.0, 0.0
    %v2143 = vsel %vm2079, 1.0, 0.0
    %v2144 = vsel %vm2080, 1.0, 0.0
    %v2145 = vsel %vm2081, 1.0, 0.0
    %v2146 = vsel %vm2082, 1.0, 0.0
    %v2147 = vpack.c.bf16 %v2087, %v2083
    %v2148 = vpack.c.bf16 %v2088, %v2084
    %v2149 = vpack.c.bf16 %v2089, %v2085
    %v2150 = vpack.c.bf16 %v2090, %v2086
    %v2151 = vpack.c.bf16 %v2095, %v2091
    %v2152 = vpack.c.bf16 %v2096, %v2092
    %v2153 = vpack.c.bf16 %v2097, %v2093
    %v2154 = vpack.c.bf16 %v2098, %v2094
    %v2155 = vpack.c.bf16 %v2103, %v2099
    %v2156 = vpack.c.bf16 %v2104, %v2100
    %v2157 = vpack.c.bf16 %v2105, %v2101
    %v2158 = vpack.c.bf16 %v2106, %v2102
    %v2159 = vpack.c.bf16 %v2111, %v2107
    %v2160 = vpack.c.bf16 %v2112, %v2108
    %v2161 = vpack.c.bf16 %v2113, %v2109
    %v2162 = vpack.c.bf16 %v2114, %v2110
    %v2163 = vpack.c.bf16 %v2119, %v2115
    %v2164 = vpack.c.bf16 %v2120, %v2116
    %v2165 = vpack.c.bf16 %v2121, %v2117
    %v2166 = vpack.c.bf16 %v2122, %v2118
    %v2167 = vpack.c.bf16 %v2127, %v2123
    %v2168 = vpack.c.bf16 %v2128, %v2124
    %v2169 = vpack.c.bf16 %v2129, %v2125
    %v2170 = vpack.c.bf16 %v2130, %v2126
    %v2171 = vpack.c.bf16 %v2135, %v2131
    %v2172 = vpack.c.bf16 %v2136, %v2132
    %v2173 = vpack.c.bf16 %v2137, %v2133
    %v2174 = vpack.c.bf16 %v2138, %v2134
    %v2175 = vpack.c.bf16 %v2143, %v2139
    %v2176 = vpack.c.bf16 %v2144, %v2140
    %v2177 = vpack.c.bf16 %v2145, %v2141
    %v2178 = vpack.c.bf16 %v2146, %v2142
    %2179 = vmatprep.subr.bf16.mxu0 0
    %2180 = vmatpush1.bf16.msra.mxu0 %v187
    %2181 = vmatprep.subr.bf16.mxu0 0
    %2182 = vmatpush1.bf16.msra.mxu0 %v188
    %2183 = vmatprep.subr.bf16.mxu0 0
    %2184 = vmatpush1.bf16.msra.mxu0 %v189
    %2185 = vmatprep.subr.bf16.mxu0 0
    %2186 = vmatpush1.bf16.msra.mxu0 %v190
    %2187 = vmatprep.subr.bf16.mxu0 0
    %2188 = vmatpush1.bf16.msra.mxu0 %v191
    %2189 = vmatprep.subr.bf16.mxu0 0
    %2190 = vmatpush1.bf16.msra.mxu0 %v192
    %2191 = vmatprep.subr.bf16.mxu0 0
    %2192 = vmatpush1.bf16.msra.mxu0 %v193
    %2193 = vmatprep.subr.bf16.mxu0 0
    %2194 = vmatpush1.bf16.msra.mxu0 %v194
    %2195 = vmatprep.subr.bf16.mxu0 0
    %2196 = vmatpush1.bf16.msra.mxu0 %v195
    %2197 = vmatprep.subr.bf16.mxu0 0
    %2198 = vmatpush1.bf16.msra.mxu0 %v196
    %2199 = vmatprep.subr.bf16.mxu0 0
    %2200 = vmatpush1.bf16.msra.mxu0 %v197
    %2201 = vmatprep.subr.bf16.mxu0 0
    %2202 = vmatpush1.bf16.msra.mxu0 %v198
    %2203 = vmatprep.subr.bf16.mxu0 0
    %2204 = vmatpush1.bf16.msra.mxu0 %v199
    %2205 = vmatprep.subr.bf16.mxu0 0
    %2206 = vmatpush1.bf16.msra.mxu0 %v200
    %2207 = vmatprep.subr.bf16.mxu0 0
    %2208 = vmatpush1.bf16.msra.mxu0 %v201
    %2209 = vmatprep.subr.bf16.mxu0 0
    %2210 = vmatpush1.bf16.msra.mxu0 %v202
    %2211 = vmatprep.mubr.bf16.mxu0 %v2148
    %2212 = vmatmul.mubr.bf16.gmra.mrb[0].mxu0 %v2147
    %v2213 = vpop.f32.mrb[0].mxu0
    %v2214 = vadd.f32 0.0, %v2213
    %v2215 = vpop.f32.mrb[0].mxu0
    %v2216 = vpop.f32.mrb[0].mxu0
    %v2217 = vadd.f32 0.0, %v2216
    %v2218 = vpop.f32.mrb[0].mxu0
    %2219 = vmatprep.mubr.bf16.mxu0 %v2152
    %2220 = vmatmul.mubr.bf16.gmra.mrb[0].mxu0 %v2151
    %v2221 = vpop.f32.mrb[0].mxu0
    %v2222 = vadd.f32 0.0, %v2221
    %v2223 = vpop.f32.mrb[0].mxu0
    %v2224 = vpop.f32.mrb[0].mxu0
    %v2225 = vadd.f32 0.0, %v2224
    %v2226 = vpop.f32.mrb[0].mxu0
    %2227 = vmatprep.mubr.bf16.mxu0 %v2156
    %2228 = vmatmul.mubr.bf16.gmra.mrb[0].mxu0 %v2155
    %v2229 = vpop.f32.mrb[0].mxu0
    %v2230 = vadd.f32 0.0, %v2229
    %v2231 = vpop.f32.mrb[0].mxu0
    %v2232 = vpop.f32.mrb[0].mxu0
    %v2233 = vadd.f32 0.0, %v2232
    %v2234 = vpop.f32.mrb[0].mxu0
    %2235 = vmatprep.mubr.bf16.mxu0 %v2160
    %2236 = vmatmul.mubr.bf16.gmra.mrb[0].mxu0 %v2159
    %v2237 = vpop.f32.mrb[0].mxu0
    %v2238 = vadd.f32 0.0, %v2237
    %v2239 = vpop.f32.mrb[0].mxu0
    %v2240 = vpop.f32.mrb[0].mxu0
    %v2241 = vadd.f32 0.0, %v2240
    %v2242 = vpop.f32.mrb[0].mxu0
    %2243 = vmatprep.mubr.bf16.mxu0 %v2164
    %2244 = vmatmul.mubr.bf16.gmra.mrb[0].mxu0 %v2163
    %v2245 = vpop.f32.mrb[0].mxu0
    %v2246 = vadd.f32 0.0, %v2245
    %v2247 = vpop.f32.mrb[0].mxu0
    %v2248 = vpop.f32.mrb[0].mxu0
    %v2249 = vadd.f32 0.0, %v2248
    %v2250 = vpop.f32.mrb[0].mxu0
    %2251 = vmatprep.mubr.bf16.mxu0 %v2168
    %2252 = vmatmul.mubr.bf16.gmra.mrb[0].mxu0 %v2167
    %v2253 = vpop.f32.mrb[0].mxu0
    %v2254 = vadd.f32 0.0, %v2253
    %v2255 = vpop.f32.mrb[0].mxu0
    %v2256 = vpop.f32.mrb[0].mxu0
    %v2257 = vadd.f32 0.0, %v2256
    %v2258 = vpop.f32.mrb[0].mxu0
    %2259 = vmatprep.mubr.bf16.mxu0 %v2172
    %2260 = vmatmul.mubr.bf16.gmra.mrb[0].mxu0 %v2171
    %v2261 = vpop.f32.mrb[0].mxu0
    %v2262 = vadd.f32 0.0, %v2261
    %v2263 = vpop.f32.mrb[0].mxu0
    %v2264 = vpop.f32.mrb[0].mxu0
    %v2265 = vadd.f32 0.0, %v2264
    %v2266 = vpop.f32.mrb[0].mxu0
    %2267 = vmatprep.mubr.bf16.mxu0 %v2176
    %2268 = vmatmul.mubr.bf16.gmra.mrb[0].mxu0 %v2175
    %v2269 = vpop.f32.mrb[0].mxu0
    %v2270 = vadd.f32 0.0, %v2269
    %v2271 = vpop.f32.mrb[0].mxu0
    %v2272 = vpop.f32.mrb[0].mxu0
    %v2273 = vadd.f32 0.0, %v2272
    %v2274 = vpop.f32.mrb[0].mxu0
    %2275 = vdwg.mxu0
    %2276 = vmatprep.subr.bf16.mxu0 0
    %2277 = vmatpush1.bf16.msra.mxu0 %v203
    %2278 = vmatprep.subr.bf16.mxu0 0
    %2279 = vmatpush1.bf16.msra.mxu0 %v204
    %2280 = vmatprep.subr.bf16.mxu0 0
    %2281 = vmatpush1.bf16.msra.mxu0 %v205
    %2282 = vmatprep.subr.bf16.mxu0 0
    %2283 = vmatpush1.bf16.msra.mxu0 %v206
    %2284 = vmatprep.subr.bf16.mxu0 0
    %2285 = vmatpush1.bf16.msra.mxu0 %v207
    %2286 = vmatprep.subr.bf16.mxu0 0
    %2287 = vmatpush1.bf16.msra.mxu0 %v208
    %2288 = vmatprep.subr.bf16.mxu0 0
    %2289 = vmatpush1.bf16.msra.mxu0 %v209
    %2290 = vmatprep.subr.bf16.mxu0 0
    %2291 = vmatpush1.bf16.msra.mxu0 %v210
    %2292 = vmatprep.subr.bf16.mxu0 0
    %2293 = vmatpush1.bf16.msra.mxu0 %v211
    %2294 = vmatprep.subr.bf16.mxu0 0
    %2295 = vmatpush1.bf16.msra.mxu0 %v212
    %2296 = vmatprep.subr.bf16.mxu0 0
    %2297 = vmatpush1.bf16.msra.mxu0 %v213
    %2298 = vmatprep.subr.bf16.mxu0 0
    %2299 = vmatpush1.bf16.msra.mxu0 %v214
    %2300 = vmatprep.subr.bf16.mxu0 0
    %2301 = vmatpush1.bf16.msra.mxu0 %v215
    %2302 = vmatprep.subr.bf16.mxu0 0
    %2303 = vmatpush1.bf16.msra.mxu0 %v216
    %2304 = vmatprep.subr.bf16.mxu0 0
    %2305 = vmatpush1.bf16.msra.mxu0 %v217
    %2306 = vmatprep.subr.bf16.mxu0 0
    %2307 = vmatpush1.bf16.msra.mxu0 %v218
    %2308 = vmatprep.mubr.bf16.mxu0 %v2150
    %2309 = vmatmul.mubr.bf16.gmra.mrb[0].mxu0 %v2149
    %v2310 = vpop.f32.mrb[0].mxu0
    %v2311 = vadd.f32 %v2214, %v2310
    %v2312 = vpop.f32.mrb[0].mxu0
    %v2313 = vpop.f32.mrb[0].mxu0
    %v2314 = vadd.f32 %v2217, %v2313
    %v2315 = vpop.f32.mrb[0].mxu0
    %2316 = vmatprep.mubr.bf16.mxu0 %v2154
    %2317 = vmatmul.mubr.bf16.gmra.mrb[0].mxu0 %v2153
    %v2318 = vpop.f32.mrb[0].mxu0
    %v2319 = vadd.f32 %v2222, %v2318
    %v2320 = vpop.f32.mrb[0].mxu0
    %v2321 = vpop.f32.mrb[0].mxu0
    %v2322 = vadd.f32 %v2225, %v2321
    %v2323 = vpop.f32.mrb[0].mxu0
    %2324 = vmatprep.mubr.bf16.mxu0 %v2158
    %2325 = vmatmul.mubr.bf16.gmra.mrb[0].mxu0 %v2157
    %v2326 = vpop.f32.mrb[0].mxu0
    %v2327 = vadd.f32 %v2230, %v2326
    %v2328 = vpop.f32.mrb[0].mxu0
    %v2329 = vpop.f32.mrb[0].mxu0
    %v2330 = vadd.f32 %v2233, %v2329
    %v2331 = vpop.f32.mrb[0].mxu0
    %2332 = vmatprep.mubr.bf16.mxu0 %v2162
    %2333 = vmatmul.mubr.bf16.gmra.mrb[0].mxu0 %v2161
    %v2334 = vpop.f32.mrb[0].mxu0
    %v2335 = vadd.f32 %v2238, %v2334
    %v2336 = vpop.f32.mrb[0].mxu0
    %v2337 = vpop.f32.mrb[0].mxu0
    %v2338 = vadd.f32 %v2241, %v2337
    %v2339 = vpop.f32.mrb[0].mxu0
    %2340 = vmatprep.mubr.bf16.mxu0 %v2166
    %2341 = vmatmul.mubr.bf16.gmra.mrb[0].mxu0 %v2165
    %v2342 = vpop.f32.mrb[0].mxu0
    %v2343 = vadd.f32 %v2246, %v2342
    %v2344 = vpop.f32.mrb[0].mxu0
    %v2345 = vpop.f32.mrb[0].mxu0
    %v2346 = vadd.f32 %v2249, %v2345
    %v2347 = vpop.f32.mrb[0].mxu0
    %2348 = vmatprep.mubr.bf16.mxu0 %v2170
    %2349 = vmatmul.mubr.bf16.gmra.mrb[0].mxu0 %v2169
    %v2350 = vpop.f32.mrb[0].mxu0
    %v2351 = vadd.f32 %v2254, %v2350
    %v2352 = vpop.f32.mrb[0].mxu0
    %v2353 = vpop.f32.mrb[0].mxu0
    %v2354 = vadd.f32 %v2257, %v2353
    %v2355 = vpop.f32.mrb[0].mxu0
    %2356 = vmatprep.mubr.bf16.mxu0 %v2174
    %2357 = vmatmul.mubr.bf16.gmra.mrb[0].mxu0 %v2173
    %v2358 = vpop.f32.mrb[0].mxu0
    %v2359 = vadd.f32 %v2262, %v2358
    %v2360 = vpop.f32.mrb[0].mxu0
    %v2361 = vpop.f32.mrb[0].mxu0
    %v2362 = vadd.f32 %v2265, %v2361
    %v2363 = vpop.f32.mrb[0].mxu0
    %2364 = vmatprep.mubr.bf16.mxu0 %v2178
    %2365 = vmatmul.mubr.bf16.gmra.mrb[0].mxu0 %v2177
    %v2366 = vpop.f32.mrb[0].mxu0
    %v2367 = vadd.f32 %v2270, %v2366
    %v2368 = vpop.f32.mrb[0].mxu0
    %v2369 = vpop.f32.mrb[0].mxu0
    %v2370 = vadd.f32 %v2273, %v2369
    %v2371 = vpop.f32.mrb[0].mxu0
    %2372 = vdwg.mxu0
    %v2373 = vpack.c.bf16 %v2314, %v2311
    %v2374 = vpack.c.bf16 %v2322, %v2319
    %v2375 = vpack.c.bf16 %v2330, %v2327
    %v2376 = vpack.c.bf16 %v2338, %v2335
    %v2377 = vpack.c.bf16 %v2346, %v2343
    %v2378 = vpack.c.bf16 %v2354, %v2351
    %v2379 = vpack.c.bf16 %v2362, %v2359
    %v2380 = vpack.c.bf16 %v2370, %v2367
    %s2381 = scalar_lea.vmem [#allocation5], 192
    %v2382 = vld [vmem:[%s2381] sm:$0xf]
    %v2383 = vld [vmem:[%s2381 + $0x4] sm:$0xf]
    %v2384 = vld [vmem:[%s2381 + $0x8] sm:$0xf]
    %v2385 = vld [vmem:[%s2381 + $0xc] sm:$0xf]
    %v2386 = vld [vmem:[%s2381 + $0x10] sm:$0xf]
    %v2387 = vld [vmem:[%s2381 + $0x14] sm:$0xf]
    %v2388 = vld [vmem:[%s2381 + $0x18] sm:$0xf]
    %v2389 = vld [vmem:[%s2381 + $0x1c] sm:$0xf]
    %v2390 = vld [vmem:[%s2381 + $0x20] sm:$0xf]
    %v2391 = vld [vmem:[%s2381 + $0x24] sm:$0xf]
    %v2392 = vld [vmem:[%s2381 + $0x28] sm:$0xf]
    %v2393 = vld [vmem:[%s2381 + $0x2c] sm:$0xf]
    %v2394 = vld [vmem:[%s2381 + $0x30] sm:$0xf]
    %v2395 = vld [vmem:[%s2381 + $0x34] sm:$0xf]
    %v2396 = vld [vmem:[%s2381 + $0x38] sm:$0xf]
    %v2397 = vld [vmem:[%s2381 + $0x3c] sm:$0xf]
    %v2414 = vunpack.c.l.b16 %v2382
    %v2415 = vunpack.c.l.b16 %v2383
    %v2416 = vunpack.c.l.b16 %v2384
    %v2417 = vunpack.c.l.b16 %v2385
    %v2418 = vunpack.c.l.b16 %v2386
    %v2419 = vunpack.c.l.b16 %v2387
    %v2420 = vunpack.c.l.b16 %v2388
    %v2421 = vunpack.c.l.b16 %v2389
    %v2422 = vunpack.c.l.b16 %v2390
    %v2423 = vunpack.c.l.b16 %v2391
    %v2424 = vunpack.c.l.b16 %v2392
    %v2425 = vunpack.c.l.b16 %v2393
    %v2426 = vunpack.c.l.b16 %v2394
    %v2427 = vunpack.c.l.b16 %v2395
    %v2428 = vunpack.c.l.b16 %v2396
    %v2429 = vunpack.c.l.b16 %v2397
    %v2430 = vpack.c.b16 %v2415, %v2414
    %v2431 = vpack.c.b16 %v2417, %v2416
    %v2432 = vpack.c.b16 %v2419, %v2418
    %v2433 = vpack.c.b16 %v2421, %v2420
    %v2434 = vpack.c.b16 %v2423, %v2422
    %v2435 = vpack.c.b16 %v2425, %v2424
    %v2436 = vpack.c.b16 %v2427, %v2426
    %v2437 = vpack.c.b16 %v2429, %v2428
    %2446 = vmatprep.subr.bf16.mxu0 0
    %2447 = vmatpush1.bf16.msra.mxu0 %v2430
    %2448 = vmatprep.subr.bf16.mxu0 0
    %2449 = vmatpush1.bf16.msra.mxu0 %v2431
    %2450 = vmatprep.subr.bf16.mxu0 0
    %2451 = vmatpush1.bf16.msra.mxu0 %v2432
    %2452 = vmatprep.subr.bf16.mxu0 0
    %2453 = vmatpush1.bf16.msra.mxu0 %v2433
    %2454 = vmatprep.subr.bf16.mxu0 0
    %2455 = vmatpush1.bf16.msra.mxu0 %v2434
    %2456 = vmatprep.subr.bf16.mxu0 0
    %2457 = vmatpush1.bf16.msra.mxu0 %v2435
    %2458 = vmatprep.subr.bf16.mxu0 0
    %2459 = vmatpush1.bf16.msra.mxu0 %v2436
    %2460 = vmatprep.subr.bf16.mxu0 0
    %2461 = vmatpush1.bf16.msra.mxu0 %v2437
    %2462 = vmatprep.subr.bf16.mxu0 0
    %2463 = vmatpush1.bf16.msra.mxu0 0
    %2464 = vmatprep.subr.bf16.mxu0 0
    %2465 = vmatpush1.bf16.msra.mxu0 0
    %2466 = vmatprep.subr.bf16.mxu0 0
    %2467 = vmatpush1.bf16.msra.mxu0 0
    %2468 = vmatprep.subr.bf16.mxu0 0
    %2469 = vmatpush1.bf16.msra.mxu0 0
    %2470 = vmatprep.subr.bf16.mxu0 0
    %2471 = vmatpush1.bf16.msra.mxu0 0
    %2472 = vmatprep.subr.bf16.mxu0 0
    %2473 = vmatpush1.bf16.msra.mxu0 0
    %2474 = vmatprep.subr.bf16.mxu0 0
    %2475 = vmatpush1.bf16.msra.mxu0 0
    %2476 = vmatprep.subr.bf16.mxu0 0
    %2477 = vmatpush1.bf16.msra.mxu0 0
    %2478 = vmatprep.mubr.bf16.mxu0 0
    %2479 = vmatmul.mubr.bf16.gmra.mrb[0].mxu0 %v2373
    %v2480 = vpop.f32.mrb[0].mxu0
    %v2481 = vadd.f32 0.0, %v2480
    %v2482 = vpop.f32.mrb[0].mxu0
    %v2483 = vpop.f32.mrb[0].mxu0
    %v2484 = vadd.f32 0.0, %v2483
    %v2485 = vpop.f32.mrb[0].mxu0
    %2486 = vmatprep.mubr.bf16.mxu0 0
    %2487 = vmatmul.mubr.bf16.gmra.mrb[0].mxu0 %v2374
    %v2488 = vpop.f32.mrb[0].mxu0
    %v2489 = vadd.f32 0.0, %v2488
    %v2490 = vpop.f32.mrb[0].mxu0
    %v2491 = vpop.f32.mrb[0].mxu0
    %v2492 = vadd.f32 0.0, %v2491
    %v2493 = vpop.f32.mrb[0].mxu0
    %2494 = vmatprep.mubr.bf16.mxu0 0
    %2495 = vmatmul.mubr.bf16.gmra.mrb[0].mxu0 %v2375
    %v2496 = vpop.f32.mrb[0].mxu0
    %v2497 = vadd.f32 0.0, %v2496
    %v2498 = vpop.f32.mrb[0].mxu0
    %v2499 = vpop.f32.mrb[0].mxu0
    %v2500 = vadd.f32 0.0, %v2499
    %v2501 = vpop.f32.mrb[0].mxu0
    %2502 = vmatprep.mubr.bf16.mxu0 0
    %2503 = vmatmul.mubr.bf16.gmra.mrb[0].mxu0 %v2376
    %v2504 = vpop.f32.mrb[0].mxu0
    %v2505 = vadd.f32 0.0, %v2504
    %v2506 = vpop.f32.mrb[0].mxu0
    %v2507 = vpop.f32.mrb[0].mxu0
    %v2508 = vadd.f32 0.0, %v2507
    %v2509 = vpop.f32.mrb[0].mxu0
    %2510 = vmatprep.mubr.bf16.mxu0 0
    %2511 = vmatmul.mubr.bf16.gmra.mrb[0].mxu0 %v2377
    %v2512 = vpop.f32.mrb[0].mxu0
    %v2513 = vadd.f32 0.0, %v2512
    %v2514 = vpop.f32.mrb[0].mxu0
    %v2515 = vpop.f32.mrb[0].mxu0
    %v2516 = vadd.f32 0.0, %v2515
    %v2517 = vpop.f32.mrb[0].mxu0
    %2518 = vmatprep.mubr.bf16.mxu0 0
    %2519 = vmatmul.mubr.bf16.gmra.mrb[0].mxu0 %v2378
    %v2520 = vpop.f32.mrb[0].mxu0
    %v2521 = vadd.f32 0.0, %v2520
    %v2522 = vpop.f32.mrb[0].mxu0
    %v2523 = vpop.f32.mrb[0].mxu0
    %v2524 = vadd.f32 0.0, %v2523
    %v2525 = vpop.f32.mrb[0].mxu0
    %2526 = vmatprep.mubr.bf16.mxu0 0
    %2527 = vmatmul.mubr.bf16.gmra.mrb[0].mxu0 %v2379
    %v2528 = vpop.f32.mrb[0].mxu0
    %v2529 = vadd.f32 0.0, %v2528
    %v2530 = vpop.f32.mrb[0].mxu0
    %v2531 = vpop.f32.mrb[0].mxu0
    %v2532 = vadd.f32 0.0, %v2531
    %v2533 = vpop.f32.mrb[0].mxu0
    %2534 = vmatprep.mubr.bf16.mxu0 0
    %2535 = vmatmul.mubr.bf16.gmra.mrb[0].mxu0 %v2380
    %v2536 = vpop.f32.mrb[0].mxu0
    %v2537 = vadd.f32 0.0, %v2536
    %v2538 = vpop.f32.mrb[0].mxu0
    %v2539 = vpop.f32.mrb[0].mxu0
    %v2540 = vadd.f32 0.0, %v2539
    %v2541 = vpop.f32.mrb[0].mxu0
    %2542 = vdwg.mxu0
    %v2543 = vadd.f32 %v1955, %v2481
    %v2544 = vadd.f32 %v1956, %v2484
    %v2545 = vadd.f32 %v1957, %v2489
    %v2546 = vadd.f32 %v1958, %v2492
    %v2547 = vadd.f32 %v1959, %v2497
    %v2548 = vadd.f32 %v1960, %v2500
    %v2549 = vadd.f32 %v1961, %v2505
    %v2550 = vadd.f32 %v1962, %v2508
    %v2551 = vadd.f32 %v1963, %v2513
    %v2552 = vadd.f32 %v1964, %v2516
    %v2553 = vadd.f32 %v1965, %v2521
    %v2554 = vadd.f32 %v1966, %v2524
    %v2555 = vadd.f32 %v1967, %v2529
    %v2556 = vadd.f32 %v1968, %v2532
    %v2557 = vadd.f32 %v1969, %v2537
    %v2558 = vadd.f32 %v1970, %v2540
    %2559 = vset.pattern.permute.xlu0 4
    %2560 = vperm.xlu0 %2559, %v224
    %v2561 = vpop.permute.xlu0 %2560
    %2562 = vset.pattern.permute.xlu0 4
    %2563 = vperm.xlu0 %2562, %v225
    %v2564 = vpop.permute.xlu0 %2563
    %2565 = vset.pattern.permute.xlu0 4
    %2566 = vperm.xlu0 %2565, %v226
    %v2567 = vpop.permute.xlu0 %2566
    %2568 = vset.pattern.permute.xlu0 4
    %2569 = vperm.xlu0 %2568, %v227
    %v2570 = vpop.permute.xlu0 %2569
    %2571 = vset.pattern.permute.xlu0 4
    %2572 = vperm.xlu0 %2571, %v228
    %v2573 = vpop.permute.xlu0 %2572
    %2574 = vset.pattern.permute.xlu0 4
    %2575 = vperm.xlu0 %2574, %v229
    %v2576 = vpop.permute.xlu0 %2575
    %2577 = vset.pattern.permute.xlu0 4
    %2578 = vperm.xlu0 %2577, %v230
    %v2579 = vpop.permute.xlu0 %2578
    %2580 = vset.pattern.permute.xlu0 4
    %2581 = vperm.xlu0 %2580, %v231
    %v2582 = vpop.permute.xlu0 %2581
    %2583 = vset.pattern.permute.xlu0 4
    %2584 = vperm.xlu0 %2583, %v232
    %v2585 = vpop.permute.xlu0 %2584
    %2586 = vset.pattern.permute.xlu0 4
    %2587 = vperm.xlu0 %2586, %v233
    %v2588 = vpop.permute.xlu0 %2587
    %2589 = vset.pattern.permute.xlu0 4
    %2590 = vperm.xlu0 %2589, %v234
    %v2591 = vpop.permute.xlu0 %2590
    %2592 = vset.pattern.permute.xlu0 4
    %2593 = vperm.xlu0 %2592, %v235
    %v2594 = vpop.permute.xlu0 %2593
    %2595 = vset.pattern.permute.xlu0 4
    %2596 = vperm.xlu0 %2595, %v236
    %v2597 = vpop.permute.xlu0 %2596
    %2598 = vset.pattern.permute.xlu0 4
    %2599 = vperm.xlu0 %2598, %v237
    %v2600 = vpop.permute.xlu0 %2599
    %2601 = vset.pattern.permute.xlu0 4
    %2602 = vperm.xlu0 %2601, %v238
    %v2603 = vpop.permute.xlu0 %2602
    %2604 = vset.pattern.permute.xlu0 4
    %2605 = vperm.xlu0 %2604, %v239
    %v2606 = vpop.permute.xlu0 %2605
    %vm2607 = vcmp.eq.s32.totalorder %v220, %v2561
    %vm2608 = vcmp.eq.s32.totalorder %v221, %v2561
    %vm2609 = vcmp.eq.s32.totalorder %v222, %v2561
    %vm2610 = vcmp.eq.s32.totalorder %v223, %v2561
    %vm2611 = vcmp.eq.s32.totalorder %v220, %v2564
    %vm2612 = vcmp.eq.s32.totalorder %v221, %v2564
    %vm2613 = vcmp.eq.s32.totalorder %v222, %v2564
    %vm2614 = vcmp.eq.s32.totalorder %v223, %v2564
    %vm2615 = vcmp.eq.s32.totalorder %v220, %v2567
    %vm2616 = vcmp.eq.s32.totalorder %v221, %v2567
    %vm2617 = vcmp.eq.s32.totalorder %v222, %v2567
    %vm2618 = vcmp.eq.s32.totalorder %v223, %v2567
    %vm2619 = vcmp.eq.s32.totalorder %v220, %v2570
    %vm2620 = vcmp.eq.s32.totalorder %v221, %v2570
    %vm2621 = vcmp.eq.s32.totalorder %v222, %v2570
    %vm2622 = vcmp.eq.s32.totalorder %v223, %v2570
    %vm2623 = vcmp.eq.s32.totalorder %v220, %v2573
    %vm2624 = vcmp.eq.s32.totalorder %v221, %v2573
    %vm2625 = vcmp.eq.s32.totalorder %v222, %v2573
    %vm2626 = vcmp.eq.s32.totalorder %v223, %v2573
    %vm2627 = vcmp.eq.s32.totalorder %v220, %v2576
    %vm2628 = vcmp.eq.s32.totalorder %v221, %v2576
    %vm2629 = vcmp.eq.s32.totalorder %v222, %v2576
    %vm2630 = vcmp.eq.s32.totalorder %v223, %v2576
    %vm2631 = vcmp.eq.s32.totalorder %v220, %v2579
    %vm2632 = vcmp.eq.s32.totalorder %v221, %v2579
    %vm2633 = vcmp.eq.s32.totalorder %v222, %v2579
    %vm2634 = vcmp.eq.s32.totalorder %v223, %v2579
    %vm2635 = vcmp.eq.s32.totalorder %v220, %v2582
    %vm2636 = vcmp.eq.s32.totalorder %v221, %v2582
    %vm2637 = vcmp.eq.s32.totalorder %v222, %v2582
    %vm2638 = vcmp.eq.s32.totalorder %v223, %v2582
    %vm2639 = vcmp.eq.s32.totalorder %v220, %v2585
    %vm2640 = vcmp.eq.s32.totalorder %v221, %v2585
    %vm2641 = vcmp.eq.s32.totalorder %v222, %v2585
    %vm2642 = vcmp.eq.s32.totalorder %v223, %v2585
    %vm2643 = vcmp.eq.s32.totalorder %v220, %v2588
    %vm2644 = vcmp.eq.s32.totalorder %v221, %v2588
    %vm2645 = vcmp.eq.s32.totalorder %v222, %v2588
    %vm2646 = vcmp.eq.s32.totalorder %v223, %v2588
    %vm2647 = vcmp.eq.s32.totalorder %v220, %v2591
    %vm2648 = vcmp.eq.s32.totalorder %v221, %v2591
    %vm2649 = vcmp.eq.s32.totalorder %v222, %v2591
    %vm2650 = vcmp.eq.s32.totalorder %v223, %v2591
    %vm2651 = vcmp.eq.s32.totalorder %v220, %v2594
    %vm2652 = vcmp.eq.s32.totalorder %v221, %v2594
    %vm2653 = vcmp.eq.s32.totalorder %v222, %v2594
    %vm2654 = vcmp.eq.s32.totalorder %v223, %v2594
    %vm2655 = vcmp.eq.s32.totalorder %v220, %v2597
    %vm2656 = vcmp.eq.s32.totalorder %v221, %v2597
    %vm2657 = vcmp.eq.s32.totalorder %v222, %v2597
    %vm2658 = vcmp.eq.s32.totalorder %v223, %v2597
    %vm2659 = vcmp.eq.s32.totalorder %v220, %v2600
    %vm2660 = vcmp.eq.s32.totalorder %v221, %v2600
    %vm2661 = vcmp.eq.s32.totalorder %v222, %v2600
    %vm2662 = vcmp.eq.s32.totalorder %v223, %v2600
    %vm2663 = vcmp.eq.s32.totalorder %v220, %v2603
    %vm2664 = vcmp.eq.s32.totalorder %v221, %v2603
    %vm2665 = vcmp.eq.s32.totalorder %v222, %v2603
    %vm2666 = vcmp.eq.s32.totalorder %v223, %v2603
    %vm2667 = vcmp.eq.s32.totalorder %v220, %v2606
    %vm2668 = vcmp.eq.s32.totalorder %v221, %v2606
    %vm2669 = vcmp.eq.s32.totalorder %v222, %v2606
    %vm2670 = vcmp.eq.s32.totalorder %v223, %v2606
    %v2671 = vsel %vm2607, 1.0, 0.0
    %v2672 = vsel %vm2608, 1.0, 0.0
    %v2673 = vsel %vm2609, 1.0, 0.0
    %v2674 = vsel %vm2610, 1.0, 0.0
    %v2675 = vsel %vm2611, 1.0, 0.0
    %v2676 = vsel %vm2612, 1.0, 0.0
    %v2677 = vsel %vm2613, 1.0, 0.0
    %v2678 = vsel %vm2614, 1.0, 0.0
    %v2679 = vsel %vm2615, 1.0, 0.0
    %v2680 = vsel %vm2616, 1.0, 0.0
    %v2681 = vsel %vm2617, 1.0, 0.0
    %v2682 = vsel %vm2618, 1.0, 0.0
    %v2683 = vsel %vm2619, 1.0, 0.0
    %v2684 = vsel %vm2620, 1.0, 0.0
    %v2685 = vsel %vm2621, 1.0, 0.0
    %v2686 = vsel %vm2622, 1.0, 0.0
    %v2687 = vsel %vm2623, 1.0, 0.0
    %v2688 = vsel %vm2624, 1.0, 0.0
    %v2689 = vsel %vm2625, 1.0, 0.0
    %v2690 = vsel %vm2626, 1.0, 0.0
    %v2691 = vsel %vm2627, 1.0, 0.0
    %v2692 = vsel %vm2628, 1.0, 0.0
    %v2693 = vsel %vm2629, 1.0, 0.0
    %v2694 = vsel %vm2630, 1.0, 0.0
    %v2695 = vsel %vm2631, 1.0, 0.0
    %v2696 = vsel %vm2632, 1.0, 0.0
    %v2697 = vsel %vm2633, 1.0, 0.0
    %v2698 = vsel %vm2634, 1.0, 0.0
    %v2699 = vsel %vm2635, 1.0, 0.0
    %v2700 = vsel %vm2636, 1.0, 0.0
    %v2701 = vsel %vm2637, 1.0, 0.0
    %v2702 = vsel %vm2638, 1.0, 0.0
    %v2703 = vsel %vm2639, 1.0, 0.0
    %v2704 = vsel %vm2640, 1.0, 0.0
    %v2705 = vsel %vm2641, 1.0, 0.0
    %v2706 = vsel %vm2642, 1.0, 0.0
    %v2707 = vsel %vm2643, 1.0, 0.0
    %v2708 = vsel %vm2644, 1.0, 0.0
    %v2709 = vsel %vm2645, 1.0, 0.0
    %v2710 = vsel %vm2646, 1.0, 0.0
    %v2711 = vsel %vm2647, 1.0, 0.0
    %v2712 = vsel %vm2648, 1.0, 0.0
    %v2713 = vsel %vm2649, 1.0, 0.0
    %v2714 = vsel %vm2650, 1.0, 0.0
    %v2715 = vsel %vm2651, 1.0, 0.0
    %v2716 = vsel %vm2652, 1.0, 0.0
    %v2717 = vsel %vm2653, 1.0, 0.0
    %v2718 = vsel %vm2654, 1.0, 0.0
    %v2719 = vsel %vm2655, 1.0, 0.0
    %v2720 = vsel %vm2656, 1.0, 0.0
    %v2721 = vsel %vm2657, 1.0, 0.0
    %v2722 = vsel %vm2658, 1.0, 0.0
    %v2723 = vsel %vm2659, 1.0, 0.0
    %v2724 = vsel %vm2660, 1.0, 0.0
    %v2725 = vsel %vm2661, 1.0, 0.0
    %v2726 = vsel %vm2662, 1.0, 0.0
    %v2727 = vsel %vm2663, 1.0, 0.0
    %v2728 = vsel %vm2664, 1.0, 0.0
    %v2729 = vsel %vm2665, 1.0, 0.0
    %v2730 = vsel %vm2666, 1.0, 0.0
    %v2731 = vsel %vm2667, 1.0, 0.0
    %v2732 = vsel %vm2668, 1.0, 0.0
    %v2733 = vsel %vm2669, 1.0, 0.0
    %v2734 = vsel %vm2670, 1.0, 0.0
    %v2735 = vpack.c.bf16 %v2675, %v2671
    %v2736 = vpack.c.bf16 %v2676, %v2672
    %v2737 = vpack.c.bf16 %v2677, %v2673
    %v2738 = vpack.c.bf16 %v2678, %v2674
    %v2739 = vpack.c.bf16 %v2683, %v2679
    %v2740 = vpack.c.bf16 %v2684, %v2680
    %v2741 = vpack.c.bf16 %v2685, %v2681
    %v2742 = vpack.c.bf16 %v2686, %v2682
    %v2743 = vpack.c.bf16 %v2691, %v2687
    %v2744 = vpack.c.bf16 %v2692, %v2688
    %v2745 = vpack.c.bf16 %v2693, %v2689
    %v2746 = vpack.c.bf16 %v2694, %v2690
    %v2747 = vpack.c.bf16 %v2699, %v2695
    %v2748 = vpack.c.bf16 %v2700, %v2696
    %v2749 = vpack.c.bf16 %v2701, %v2697
    %v2750 = vpack.c.bf16 %v2702, %v2698
    %v2751 = vpack.c.bf16 %v2707, %v2703
    %v2752 = vpack.c.bf16 %v2708, %v2704
    %v2753 = vpack.c.bf16 %v2709, %v2705
    %v2754 = vpack.c.bf16 %v2710, %v2706
    %v2755 = vpack.c.bf16 %v2715, %v2711
    %v2756 = vpack.c.bf16 %v2716, %v2712
    %v2757 = vpack.c.bf16 %v2717, %v2713
    %v2758 = vpack.c.bf16 %v2718, %v2714
    %v2759 = vpack.c.bf16 %v2723, %v2719
    %v2760 = vpack.c.bf16 %v2724, %v2720
    %v2761 = vpack.c.bf16 %v2725, %v2721
    %v2762 = vpack.c.bf16 %v2726, %v2722
    %v2763 = vpack.c.bf16 %v2731, %v2727
    %v2764 = vpack.c.bf16 %v2732, %v2728
    %v2765 = vpack.c.bf16 %v2733, %v2729
    %v2766 = vpack.c.bf16 %v2734, %v2730
    %2767 = vmatprep.subr.bf16.mxu0 0
    %2768 = vmatpush1.bf16.msra.mxu0 %v187
    %2769 = vmatprep.subr.bf16.mxu0 0
    %2770 = vmatpush1.bf16.msra.mxu0 %v188
    %2771 = vmatprep.subr.bf16.mxu0 0
    %2772 = vmatpush1.bf16.msra.mxu0 %v189
    %2773 = vmatprep.subr.bf16.mxu0 0
    %2774 = vmatpush1.bf16.msra.mxu0 %v190
    %2775 = vmatprep.subr.bf16.mxu0 0
    %2776 = vmatpush1.bf16.msra.mxu0 %v191
    %2777 = vmatprep.subr.bf16.mxu0 0
    %2778 = vmatpush1.bf16.msra.mxu0 %v192
    %2779 = vmatprep.subr.bf16.mxu0 0
    %2780 = vmatpush1.bf16.msra.mxu0 %v193
    %2781 = vmatprep.subr.bf16.mxu0 0
    %2782 = vmatpush1.bf16.msra.mxu0 %v194
    %2783 = vmatprep.subr.bf16.mxu0 0
    %2784 = vmatpush1.bf16.msra.mxu0 %v195
    %2785 = vmatprep.subr.bf16.mxu0 0
    %2786 = vmatpush1.bf16.msra.mxu0 %v196
    %2787 = vmatprep.subr.bf16.mxu0 0
    %2788 = vmatpush1.bf16.msra.mxu0 %v197
    %2789 = vmatprep.subr.bf16.mxu0 0
    %2790 = vmatpush1.bf16.msra.mxu0 %v198
    %2791 = vmatprep.subr.bf16.mxu0 0
    %2792 = vmatpush1.bf16.msra.mxu0 %v199
    %2793 = vmatprep.subr.bf16.mxu0 0
    %2794 = vmatpush1.bf16.msra.mxu0 %v200
    %2795 = vmatprep.subr.bf16.mxu0 0
    %2796 = vmatpush1.bf16.msra.mxu0 %v201
    %2797 = vmatprep.subr.bf16.mxu0 0
    %2798 = vmatpush1.bf16.msra.mxu0 %v202
    %2799 = vmatprep.mubr.bf16.mxu0 %v2736
    %2800 = vmatmul.mubr.bf16.gmra.mrb[0].mxu0 %v2735
    %v2801 = vpop.f32.mrb[0].mxu0
    %v2802 = vadd.f32 0.0, %v2801
    %v2803 = vpop.f32.mrb[0].mxu0
    %v2804 = vpop.f32.mrb[0].mxu0
    %v2805 = vadd.f32 0.0, %v2804
    %v2806 = vpop.f32.mrb[0].mxu0
    %2807 = vmatprep.mubr.bf16.mxu0 %v2740
    %2808 = vmatmul.mubr.bf16.gmra.mrb[0].mxu0 %v2739
    %v2809 = vpop.f32.mrb[0].mxu0
    %v2810 = vadd.f32 0.0, %v2809
    %v2811 = vpop.f32.mrb[0].mxu0
    %v2812 = vpop.f32.mrb[0].mxu0
    %v2813 = vadd.f32 0.0, %v2812
    %v2814 = vpop.f32.mrb[0].mxu0
    %2815 = vmatprep.mubr.bf16.mxu0 %v2744
    %2816 = vmatmul.mubr.bf16.gmra.mrb[0].mxu0 %v2743
    %v2817 = vpop.f32.mrb[0].mxu0
    %v2818 = vadd.f32 0.0, %v2817
    %v2819 = vpop.f32.mrb[0].mxu0
    %v2820 = vpop.f32.mrb[0].mxu0
    %v2821 = vadd.f32 0.0, %v2820
    %v2822 = vpop.f32.mrb[0].mxu0
    %2823 = vmatprep.mubr.bf16.mxu0 %v2748
    %2824 = vmatmul.mubr.bf16.gmra.mrb[0].mxu0 %v2747
    %v2825 = vpop.f32.mrb[0].mxu0
    %v2826 = vadd.f32 0.0, %v2825
    %v2827 = vpop.f32.mrb[0].mxu0
    %v2828 = vpop.f32.mrb[0].mxu0
    %v2829 = vadd.f32 0.0, %v2828
    %v2830 = vpop.f32.mrb[0].mxu0
    %2831 = vmatprep.mubr.bf16.mxu0 %v2752
    %2832 = vmatmul.mubr.bf16.gmra.mrb[0].mxu0 %v2751
    %v2833 = vpop.f32.mrb[0].mxu0
    %v2834 = vadd.f32 0.0, %v2833
    %v2835 = vpop.f32.mrb[0].mxu0
    %v2836 = vpop.f32.mrb[0].mxu0
    %v2837 = vadd.f32 0.0, %v2836
    %v2838 = vpop.f32.mrb[0].mxu0
    %2839 = vmatprep.mubr.bf16.mxu0 %v2756
    %2840 = vmatmul.mubr.bf16.gmra.mrb[0].mxu0 %v2755
    %v2841 = vpop.f32.mrb[0].mxu0
    %v2842 = vadd.f32 0.0, %v2841
    %v2843 = vpop.f32.mrb[0].mxu0
    %v2844 = vpop.f32.mrb[0].mxu0
    %v2845 = vadd.f32 0.0, %v2844
    %v2846 = vpop.f32.mrb[0].mxu0
    %2847 = vmatprep.mubr.bf16.mxu0 %v2760
    %2848 = vmatmul.mubr.bf16.gmra.mrb[0].mxu0 %v2759
    %v2849 = vpop.f32.mrb[0].mxu0
    %v2850 = vadd.f32 0.0, %v2849
    %v2851 = vpop.f32.mrb[0].mxu0
    %v2852 = vpop.f32.mrb[0].mxu0
    %v2853 = vadd.f32 0.0, %v2852
    %v2854 = vpop.f32.mrb[0].mxu0
    %2855 = vmatprep.mubr.bf16.mxu0 %v2764
    %2856 = vmatmul.mubr.bf16.gmra.mrb[0].mxu0 %v2763
    %v2857 = vpop.f32.mrb[0].mxu0
    %v2858 = vadd.f32 0.0, %v2857
    %v2859 = vpop.f32.mrb[0].mxu0
    %v2860 = vpop.f32.mrb[0].mxu0
    %v2861 = vadd.f32 0.0, %v2860
    %v2862 = vpop.f32.mrb[0].mxu0
    %2863 = vdwg.mxu0
    %2864 = vmatprep.subr.bf16.mxu0 0
    %2865 = vmatpush1.bf16.msra.mxu0 %v203
    %2866 = vmatprep.subr.bf16.mxu0 0
    %2867 = vmatpush1.bf16.msra.mxu0 %v204
    %2868 = vmatprep.subr.bf16.mxu0 0
    %2869 = vmatpush1.bf16.msra.mxu0 %v205
    %2870 = vmatprep.subr.bf16.mxu0 0
    %2871 = vmatpush1.bf16.msra.mxu0 %v206
    %2872 = vmatprep.subr.bf16.mxu0 0
    %2873 = vmatpush1.bf16.msra.mxu0 %v207
    %2874 = vmatprep.subr.bf16.mxu0 0
    %2875 = vmatpush1.bf16.msra.mxu0 %v208
    %2876 = vmatprep.subr.bf16.mxu0 0
    %2877 = vmatpush1.bf16.msra.mxu0 %v209
    %2878 = vmatprep.subr.bf16.mxu0 0
    %2879 = vmatpush1.bf16.msra.mxu0 %v210
    %2880 = vmatprep.subr.bf16.mxu0 0
    %2881 = vmatpush1.bf16.msra.mxu0 %v211
    %2882 = vmatprep.subr.bf16.mxu0 0
    %2883 = vmatpush1.bf16.msra.mxu0 %v212
    %2884 = vmatprep.subr.bf16.mxu0 0
    %2885 = vmatpush1.bf16.msra.mxu0 %v213
    %2886 = vmatprep.subr.bf16.mxu0 0
    %2887 = vmatpush1.bf16.msra.mxu0 %v214
    %2888 = vmatprep.subr.bf16.mxu0 0
    %2889 = vmatpush1.bf16.msra.mxu0 %v215
    %2890 = vmatprep.subr.bf16.mxu0 0
    %2891 = vmatpush1.bf16.msra.mxu0 %v216
    %2892 = vmatprep.subr.bf16.mxu0 0
    %2893 = vmatpush1.bf16.msra.mxu0 %v217
    %2894 = vmatprep.subr.bf16.mxu0 0
    %2895 = vmatpush1.bf16.msra.mxu0 %v218
    %2896 = vmatprep.mubr.bf16.mxu0 %v2738
    %2897 = vmatmul.mubr.bf16.gmra.mrb[0].mxu0 %v2737
    %v2898 = vpop.f32.mrb[0].mxu0
    %v2899 = vadd.f32 %v2802, %v2898
    %v2900 = vpop.f32.mrb[0].mxu0
    %v2901 = vpop.f32.mrb[0].mxu0
    %v2902 = vadd.f32 %v2805, %v2901
    %v2903 = vpop.f32.mrb[0].mxu0
    %2904 = vmatprep.mubr.bf16.mxu0 %v2742
    %2905 = vmatmul.mubr.bf16.gmra.mrb[0].mxu0 %v2741
    %v2906 = vpop.f32.mrb[0].mxu0
    %v2907 = vadd.f32 %v2810, %v2906
    %v2908 = vpop.f32.mrb[0].mxu0
    %v2909 = vpop.f32.mrb[0].mxu0
    %v2910 = vadd.f32 %v2813, %v2909
    %v2911 = vpop.f32.mrb[0].mxu0
    %2912 = vmatprep.mubr.bf16.mxu0 %v2746
    %2913 = vmatmul.mubr.bf16.gmra.mrb[0].mxu0 %v2745
    %v2914 = vpop.f32.mrb[0].mxu0
    %v2915 = vadd.f32 %v2818, %v2914
    %v2916 = vpop.f32.mrb[0].mxu0
    %v2917 = vpop.f32.mrb[0].mxu0
    %v2918 = vadd.f32 %v2821, %v2917
    %v2919 = vpop.f32.mrb[0].mxu0
    %2920 = vmatprep.mubr.bf16.mxu0 %v2750
    %2921 = vmatmul.mubr.bf16.gmra.mrb[0].mxu0 %v2749
    %v2922 = vpop.f32.mrb[0].mxu0
    %v2923 = vadd.f32 %v2826, %v2922
    %v2924 = vpop.f32.mrb[0].mxu0
    %v2925 = vpop.f32.mrb[0].mxu0
    %v2926 = vadd.f32 %v2829, %v2925
    %v2927 = vpop.f32.mrb[0].mxu0
    %2928 = vmatprep.mubr.bf16.mxu0 %v2754
    %2929 = vmatmul.mubr.bf16.gmra.mrb[0].mxu0 %v2753
    %v2930 = vpop.f32.mrb[0].mxu0
    %v2931 = vadd.f32 %v2834, %v2930
    %v2932 = vpop.f32.mrb[0].mxu0
    %v2933 = vpop.f32.mrb[0].mxu0
    %v2934 = vadd.f32 %v2837, %v2933
    %v2935 = vpop.f32.mrb[0].mxu0
    %2936 = vmatprep.mubr.bf16.mxu0 %v2758
    %2937 = vmatmul.mubr.bf16.gmra.mrb[0].mxu0 %v2757
    %v2938 = vpop.f32.mrb[0].mxu0
    %v2939 = vadd.f32 %v2842, %v2938
    %v2940 = vpop.f32.mrb[0].mxu0
    %v2941 = vpop.f32.mrb[0].mxu0
    %v2942 = vadd.f32 %v2845, %v2941
    %v2943 = vpop.f32.mrb[0].mxu0
    %2944 = vmatprep.mubr.bf16.mxu0 %v2762
    %2945 = vmatmul.mubr.bf16.gmra.mrb[0].mxu0 %v2761
    %v2946 = vpop.f32.mrb[0].mxu0
    %v2947 = vadd.f32 %v2850, %v2946
    %v2948 = vpop.f32.mrb[0].mxu0
    %v2949 = vpop.f32.mrb[0].mxu0
    %v2950 = vadd.f32 %v2853, %v2949
    %v2951 = vpop.f32.mrb[0].mxu0
    %2952 = vmatprep.mubr.bf16.mxu0 %v2766
    %2953 = vmatmul.mubr.bf16.gmra.mrb[0].mxu0 %v2765
    %v2954 = vpop.f32.mrb[0].mxu0
    %v2955 = vadd.f32 %v2858, %v2954
    %v2956 = vpop.f32.mrb[0].mxu0
    %v2957 = vpop.f32.mrb[0].mxu0
    %v2958 = vadd.f32 %v2861, %v2957
    %v2959 = vpop.f32.mrb[0].mxu0
    %2960 = vdwg.mxu0
    %v2961 = vpack.c.bf16 %v2902, %v2899
    %v2962 = vpack.c.bf16 %v2910, %v2907
    %v2963 = vpack.c.bf16 %v2918, %v2915
    %v2964 = vpack.c.bf16 %v2926, %v2923
    %v2965 = vpack.c.bf16 %v2934, %v2931
    %v2966 = vpack.c.bf16 %v2942, %v2939
    %v2967 = vpack.c.bf16 %v2950, %v2947
    %v2968 = vpack.c.bf16 %v2958, %v2955
    %s2969 = scalar_lea.vmem [#allocation5], 256
    %v2970 = vld [vmem:[%s2969] sm:$0xf]
    %v2971 = vld [vmem:[%s2969 + $0x4] sm:$0xf]
    %v2972 = vld [vmem:[%s2969 + $0x8] sm:$0xf]
    %v2973 = vld [vmem:[%s2969 + $0xc] sm:$0xf]
    %v2974 = vld [vmem:[%s2969 + $0x10] sm:$0xf]
    %v2975 = vld [vmem:[%s2969 + $0x14] sm:$0xf]
    %v2976 = vld [vmem:[%s2969 + $0x18] sm:$0xf]
    %v2977 = vld [vmem:[%s2969 + $0x1c] sm:$0xf]
    %v2978 = vld [vmem:[%s2969 + $0x20] sm:$0xf]
    %v2979 = vld [vmem:[%s2969 + $0x24] sm:$0xf]
    %v2980 = vld [vmem:[%s2969 + $0x28] sm:$0xf]
    %v2981 = vld [vmem:[%s2969 + $0x2c] sm:$0xf]
    %v2982 = vld [vmem:[%s2969 + $0x30] sm:$0xf]
    %v2983 = vld [vmem:[%s2969 + $0x34] sm:$0xf]
    %v2984 = vld [vmem:[%s2969 + $0x38] sm:$0xf]
    %v2985 = vld [vmem:[%s2969 + $0x3c] sm:$0xf]
    %v3002 = vunpack.c.l.b16 %v2970
    %v3003 = vunpack.c.l.b16 %v2971
    %v3004 = vunpack.c.l.b16 %v2972
    %v3005 = vunpack.c.l.b16 %v2973
    %v3006 = vunpack.c.l.b16 %v2974
    %v3007 = vunpack.c.l.b16 %v2975
    %v3008 = vunpack.c.l.b16 %v2976
    %v3009 = vunpack.c.l.b16 %v2977
    %v3010 = vunpack.c.l.b16 %v2978
    %v3011 = vunpack.c.l.b16 %v2979
    %v3012 = vunpack.c.l.b16 %v2980
    %v3013 = vunpack.c.l.b16 %v2981
    %v3014 = vunpack.c.l.b16 %v2982
    %v3015 = vunpack.c.l.b16 %v2983
    %v3016 = vunpack.c.l.b16 %v2984
    %v3017 = vunpack.c.l.b16 %v2985
    %v3018 = vpack.c.b16 %v3003, %v3002
    %v3019 = vpack.c.b16 %v3005, %v3004
    %v3020 = vpack.c.b16 %v3007, %v3006
    %v3021 = vpack.c.b16 %v3009, %v3008
    %v3022 = vpack.c.b16 %v3011, %v3010
    %v3023 = vpack.c.b16 %v3013, %v3012
    %v3024 = vpack.c.b16 %v3015, %v3014
    %v3025 = vpack.c.b16 %v3017, %v3016
    %3034 = vmatprep.subr.bf16.mxu0 0
    %3035 = vmatpush1.bf16.msra.mxu0 %v3018
    %3036 = vmatprep.subr.bf16.mxu0 0
    %3037 = vmatpush1.bf16.msra.mxu0 %v3019
    %3038 = vmatprep.subr.bf16.mxu0 0
    %3039 = vmatpush1.bf16.msra.mxu0 %v3020
    %3040 = vmatprep.subr.bf16.mxu0 0
    %3041 = vmatpush1.bf16.msra.mxu0 %v3021
    %3042 = vmatprep.subr.bf16.mxu0 0
    %3043 = vmatpush1.bf16.msra.mxu0 %v3022
    %3044 = vmatprep.subr.bf16.mxu0 0
    %3045 = vmatpush1.bf16.msra.mxu0 %v3023
    %3046 = vmatprep.subr.bf16.mxu0 0
    %3047 = vmatpush1.bf16.msra.mxu0 %v3024
    %3048 = vmatprep.subr.bf16.mxu0 0
    %3049 = vmatpush1.bf16.msra.mxu0 %v3025
    %3050 = vmatprep.subr.bf16.mxu0 0
    %3051 = vmatpush1.bf16.msra.mxu0 0
    %3052 = vmatprep.subr.bf16.mxu0 0
    %3053 = vmatpush1.bf16.msra.mxu0 0
    %3054 = vmatprep.subr.bf16.mxu0 0
    %3055 = vmatpush1.bf16.msra.mxu0 0
    %3056 = vmatprep.subr.bf16.mxu0 0
    %3057 = vmatpush1.bf16.msra.mxu0 0
    %3058 = vmatprep.subr.bf16.mxu0 0
    %3059 = vmatpush1.bf16.msra.mxu0 0
    %3060 = vmatprep.subr.bf16.mxu0 0
    %3061 = vmatpush1.bf16.msra.mxu0 0
    %3062 = vmatprep.subr.bf16.mxu0 0
    %3063 = vmatpush1.bf16.msra.mxu0 0
    %3064 = vmatprep.subr.bf16.mxu0 0
    %3065 = vmatpush1.bf16.msra.mxu0 0
    %3066 = vmatprep.mubr.bf16.mxu0 0
    %3067 = vmatmul.mubr.bf16.gmra.mrb[0].mxu0 %v2961
    %v3068 = vpop.f32.mrb[0].mxu0
    %v3069 = vadd.f32 0.0, %v3068
    %v3070 = vpop.f32.mrb[0].mxu0
    %v3071 = vpop.f32.mrb[0].mxu0
    %v3072 = vadd.f32 0.0, %v3071
    %v3073 = vpop.f32.mrb[0].mxu0
    %3074 = vmatprep.mubr.bf16.mxu0 0
    %3075 = vmatmul.mubr.bf16.gmra.mrb[0].mxu0 %v2962
    %v3076 = vpop.f32.mrb[0].mxu0
    %v3077 = vadd.f32 0.0, %v3076
    %v3078 = vpop.f32.mrb[0].mxu0
    %v3079 = vpop.f32.mrb[0].mxu0
    %v3080 = vadd.f32 0.0, %v3079
    %v3081 = vpop.f32.mrb[0].mxu0
    %3082 = vmatprep.mubr.bf16.mxu0 0
    %3083 = vmatmul.mubr.bf16.gmra.mrb[0].mxu0 %v2963
    %v3084 = vpop.f32.mrb[0].mxu0
    %v3085 = vadd.f32 0.0, %v3084
    %v3086 = vpop.f32.mrb[0].mxu0
    %v3087 = vpop.f32.mrb[0].mxu0
    %v3088 = vadd.f32 0.0, %v3087
    %v3089 = vpop.f32.mrb[0].mxu0
    %3090 = vmatprep.mubr.bf16.mxu0 0
    %3091 = vmatmul.mubr.bf16.gmra.mrb[0].mxu0 %v2964
    %v3092 = vpop.f32.mrb[0].mxu0
    %v3093 = vadd.f32 0.0, %v3092
    %v3094 = vpop.f32.mrb[0].mxu0
    %v3095 = vpop.f32.mrb[0].mxu0
    %v3096 = vadd.f32 0.0, %v3095
    %v3097 = vpop.f32.mrb[0].mxu0
    %3098 = vmatprep.mubr.bf16.mxu0 0
    %3099 = vmatmul.mubr.bf16.gmra.mrb[0].mxu0 %v2965
    %v3100 = vpop.f32.mrb[0].mxu0
    %v3101 = vadd.f32 0.0, %v3100
    %v3102 = vpop.f32.mrb[0].mxu0
    %v3103 = vpop.f32.mrb[0].mxu0
    %v3104 = vadd.f32 0.0, %v3103
    %v3105 = vpop.f32.mrb[0].mxu0
    %3106 = vmatprep.mubr.bf16.mxu0 0
    %3107 = vmatmul.mubr.bf16.gmra.mrb[0].mxu0 %v2966
    %v3108 = vpop.f32.mrb[0].mxu0
    %v3109 = vadd.f32 0.0, %v3108
    %v3110 = vpop.f32.mrb[0].mxu0
    %v3111 = vpop.f32.mrb[0].mxu0
    %v3112 = vadd.f32 0.0, %v3111
    %v3113 = vpop.f32.mrb[0].mxu0
    %3114 = vmatprep.mubr.bf16.mxu0 0
    %3115 = vmatmul.mubr.bf16.gmra.mrb[0].mxu0 %v2967
    %v3116 = vpop.f32.mrb[0].mxu0
    %v3117 = vadd.f32 0.0, %v3116
    %v3118 = vpop.f32.mrb[0].mxu0
    %v3119 = vpop.f32.mrb[0].mxu0
    %v3120 = vadd.f32 0.0, %v3119
    %v3121 = vpop.f32.mrb[0].mxu0
    %3122 = vmatprep.mubr.bf16.mxu0 0
    %3123 = vmatmul.mubr.bf16.gmra.mrb[0].mxu0 %v2968
    %v3124 = vpop.f32.mrb[0].mxu0
    %v3125 = vadd.f32 0.0, %v3124
    %v3126 = vpop.f32.mrb[0].mxu0
    %v3127 = vpop.f32.mrb[0].mxu0
    %v3128 = vadd.f32 0.0, %v3127
    %v3129 = vpop.f32.mrb[0].mxu0
    %3130 = vdwg.mxu0
    %v3131 = vadd.f32 %v2543, %v3069
    %v3132 = vadd.f32 %v2544, %v3072
    %v3133 = vadd.f32 %v2545, %v3077
    %v3134 = vadd.f32 %v2546, %v3080
    %v3135 = vadd.f32 %v2547, %v3085
    %v3136 = vadd.f32 %v2548, %v3088
    %v3137 = vadd.f32 %v2549, %v3093
    %v3138 = vadd.f32 %v2550, %v3096
    %v3139 = vadd.f32 %v2551, %v3101
    %v3140 = vadd.f32 %v2552, %v3104
    %v3141 = vadd.f32 %v2553, %v3109
    %v3142 = vadd.f32 %v2554, %v3112
    %v3143 = vadd.f32 %v2555, %v3117
    %v3144 = vadd.f32 %v2556, %v3120
    %v3145 = vadd.f32 %v2557, %v3125
    %v3146 = vadd.f32 %v2558, %v3128
    %3147 = vset.pattern.permute.xlu0 5
    %3148 = vperm.xlu0 %3147, %v224
    %v3149 = vpop.permute.xlu0 %3148
    %3150 = vset.pattern.permute.xlu0 5
    %3151 = vperm.xlu0 %3150, %v225
    %v3152 = vpop.permute.xlu0 %3151
    %3153 = vset.pattern.permute.xlu0 5
    %3154 = vperm.xlu0 %3153, %v226
    %v3155 = vpop.permute.xlu0 %3154
    %3156 = vset.pattern.permute.xlu0 5
    %3157 = vperm.xlu0 %3156, %v227
    %v3158 = vpop.permute.xlu0 %3157
    %3159 = vset.pattern.permute.xlu0 5
    %3160 = vperm.xlu0 %3159, %v228
    %v3161 = vpop.permute.xlu0 %3160
    %3162 = vset.pattern.permute.xlu0 5
    %3163 = vperm.xlu0 %3162, %v229
    %v3164 = vpop.permute.xlu0 %3163
    %3165 = vset.pattern.permute.xlu0 5
    %3166 = vperm.xlu0 %3165, %v230
    %v3167 = vpop.permute.xlu0 %3166
    %3168 = vset.pattern.permute.xlu0 5
    %3169 = vperm.xlu0 %3168, %v231
    %v3170 = vpop.permute.xlu0 %3169
    %3171 = vset.pattern.permute.xlu0 5
    %3172 = vperm.xlu0 %3171, %v232
    %v3173 = vpop.permute.xlu0 %3172
    %3174 = vset.pattern.permute.xlu0 5
    %3175 = vperm.xlu0 %3174, %v233
    %v3176 = vpop.permute.xlu0 %3175
    %3177 = vset.pattern.permute.xlu0 5
    %3178 = vperm.xlu0 %3177, %v234
    %v3179 = vpop.permute.xlu0 %3178
    %3180 = vset.pattern.permute.xlu0 5
    %3181 = vperm.xlu0 %3180, %v235
    %v3182 = vpop.permute.xlu0 %3181
    %3183 = vset.pattern.permute.xlu0 5
    %3184 = vperm.xlu0 %3183, %v236
    %v3185 = vpop.permute.xlu0 %3184
    %3186 = vset.pattern.permute.xlu0 5
    %3187 = vperm.xlu0 %3186, %v237
    %v3188 = vpop.permute.xlu0 %3187
    %3189 = vset.pattern.permute.xlu0 5
    %3190 = vperm.xlu0 %3189, %v238
    %v3191 = vpop.permute.xlu0 %3190
    %3192 = vset.pattern.permute.xlu0 5
    %3193 = vperm.xlu0 %3192, %v239
    %v3194 = vpop.permute.xlu0 %3193
    %vm3195 = vcmp.eq.s32.totalorder %v220, %v3149
    %vm3196 = vcmp.eq.s32.totalorder %v221, %v3149
    %vm3197 = vcmp.eq.s32.totalorder %v222, %v3149
    %vm3198 = vcmp.eq.s32.totalorder %v223, %v3149
    %vm3199 = vcmp.eq.s32.totalorder %v220, %v3152
    %vm3200 = vcmp.eq.s32.totalorder %v221, %v3152
    %vm3201 = vcmp.eq.s32.totalorder %v222, %v3152
    %vm3202 = vcmp.eq.s32.totalorder %v223, %v3152
    %vm3203 = vcmp.eq.s32.totalorder %v220, %v3155
    %vm3204 = vcmp.eq.s32.totalorder %v221, %v3155
    %vm3205 = vcmp.eq.s32.totalorder %v222, %v3155
    %vm3206 = vcmp.eq.s32.totalorder %v223, %v3155
    %vm3207 = vcmp.eq.s32.totalorder %v220, %v3158
    %vm3208 = vcmp.eq.s32.totalorder %v221, %v3158
    %vm3209 = vcmp.eq.s32.totalorder %v222, %v3158
    %vm3210 = vcmp.eq.s32.totalorder %v223, %v3158
    %vm3211 = vcmp.eq.s32.totalorder %v220, %v3161
    %vm3212 = vcmp.eq.s32.totalorder %v221, %v3161
    %vm3213 = vcmp.eq.s32.totalorder %v222, %v3161
    %vm3214 = vcmp.eq.s32.totalorder %v223, %v3161
    %vm3215 = vcmp.eq.s32.totalorder %v220, %v3164
    %vm3216 = vcmp.eq.s32.totalorder %v221, %v3164
    %vm3217 = vcmp.eq.s32.totalorder %v222, %v3164
    %vm3218 = vcmp.eq.s32.totalorder %v223, %v3164
    %vm3219 = vcmp.eq.s32.totalorder %v220, %v3167
    %vm3220 = vcmp.eq.s32.totalorder %v221, %v3167
    %vm3221 = vcmp.eq.s32.totalorder %v222, %v3167
    %vm3222 = vcmp.eq.s32.totalorder %v223, %v3167
    %vm3223 = vcmp.eq.s32.totalorder %v220, %v3170
    %vm3224 = vcmp.eq.s32.totalorder %v221, %v3170
    %vm3225 = vcmp.eq.s32.totalorder %v222, %v3170
    %vm3226 = vcmp.eq.s32.totalorder %v223, %v3170
    %vm3227 = vcmp.eq.s32.totalorder %v220, %v3173
    %vm3228 = vcmp.eq.s32.totalorder %v221, %v3173
    %vm3229 = vcmp.eq.s32.totalorder %v222, %v3173
    %vm3230 = vcmp.eq.s32.totalorder %v223, %v3173
    %vm3231 = vcmp.eq.s32.totalorder %v220, %v3176
    %vm3232 = vcmp.eq.s32.totalorder %v221, %v3176
    %vm3233 = vcmp.eq.s32.totalorder %v222, %v3176
    %vm3234 = vcmp.eq.s32.totalorder %v223, %v3176
    %vm3235 = vcmp.eq.s32.totalorder %v220, %v3179
    %vm3236 = vcmp.eq.s32.totalorder %v221, %v3179
    %vm3237 = vcmp.eq.s32.totalorder %v222, %v3179
    %vm3238 = vcmp.eq.s32.totalorder %v223, %v3179
    %vm3239 = vcmp.eq.s32.totalorder %v220, %v3182
    %vm3240 = vcmp.eq.s32.totalorder %v221, %v3182
    %vm3241 = vcmp.eq.s32.totalorder %v222, %v3182
    %vm3242 = vcmp.eq.s32.totalorder %v223, %v3182
    %vm3243 = vcmp.eq.s32.totalorder %v220, %v3185
    %vm3244 = vcmp.eq.s32.totalorder %v221, %v3185
    %vm3245 = vcmp.eq.s32.totalorder %v222, %v3185
    %vm3246 = vcmp.eq.s32.totalorder %v223, %v3185
    %vm3247 = vcmp.eq.s32.totalorder %v220, %v3188
    %vm3248 = vcmp.eq.s32.totalorder %v221, %v3188
    %vm3249 = vcmp.eq.s32.totalorder %v222, %v3188
    %vm3250 = vcmp.eq.s32.totalorder %v223, %v3188
    %vm3251 = vcmp.eq.s32.totalorder %v220, %v3191
    %vm3252 = vcmp.eq.s32.totalorder %v221, %v3191
    %vm3253 = vcmp.eq.s32.totalorder %v222, %v3191
    %vm3254 = vcmp.eq.s32.totalorder %v223, %v3191
    %vm3255 = vcmp.eq.s32.totalorder %v220, %v3194
    %vm3256 = vcmp.eq.s32.totalorder %v221, %v3194
    %vm3257 = vcmp.eq.s32.totalorder %v222, %v3194
    %vm3258 = vcmp.eq.s32.totalorder %v223, %v3194
    %v3259 = vsel %vm3195, 1.0, 0.0
    %v3260 = vsel %vm3196, 1.0, 0.0
    %v3261 = vsel %vm3197, 1.0, 0.0
    %v3262 = vsel %vm3198, 1.0, 0.0
    %v3263 = vsel %vm3199, 1.0, 0.0
    %v3264 = vsel %vm3200, 1.0, 0.0
    %v3265 = vsel %vm3201, 1.0, 0.0
    %v3266 = vsel %vm3202, 1.0, 0.0
    %v3267 = vsel %vm3203, 1.0, 0.0
    %v3268 = vsel %vm3204, 1.0, 0.0
    %v3269 = vsel %vm3205, 1.0, 0.0
    %v3270 = vsel %vm3206, 1.0, 0.0
    %v3271 = vsel %vm3207, 1.0, 0.0
    %v3272 = vsel %vm3208, 1.0, 0.0
    %v3273 = vsel %vm3209, 1.0, 0.0
    %v3274 = vsel %vm3210, 1.0, 0.0
    %v3275 = vsel %vm3211, 1.0, 0.0
    %v3276 = vsel %vm3212, 1.0, 0.0
    %v3277 = vsel %vm3213, 1.0, 0.0
    %v3278 = vsel %vm3214, 1.0, 0.0
    %v3279 = vsel %vm3215, 1.0, 0.0
    %v3280 = vsel %vm3216, 1.0, 0.0
    %v3281 = vsel %vm3217, 1.0, 0.0
    %v3282 = vsel %vm3218, 1.0, 0.0
    %v3283 = vsel %vm3219, 1.0, 0.0
    %v3284 = vsel %vm3220, 1.0, 0.0
    %v3285 = vsel %vm3221, 1.0, 0.0
    %v3286 = vsel %vm3222, 1.0, 0.0
    %v3287 = vsel %vm3223, 1.0, 0.0
    %v3288 = vsel %vm3224, 1.0, 0.0
    %v3289 = vsel %vm3225, 1.0, 0.0
    %v3290 = vsel %vm3226, 1.0, 0.0
    %v3291 = vsel %vm3227, 1.0, 0.0
    %v3292 = vsel %vm3228, 1.0, 0.0
    %v3293 = vsel %vm3229, 1.0, 0.0
    %v3294 = vsel %vm3230, 1.0, 0.0
    %v3295 = vsel %vm3231, 1.0, 0.0
    %v3296 = vsel %vm3232, 1.0, 0.0
    %v3297 = vsel %vm3233, 1.0, 0.0
    %v3298 = vsel %vm3234, 1.0, 0.0
    %v3299 = vsel %vm3235, 1.0, 0.0
    %v3300 = vsel %vm3236, 1.0, 0.0
    %v3301 = vsel %vm3237, 1.0, 0.0
    %v3302 = vsel %vm3238, 1.0, 0.0
    %v3303 = vsel %vm3239, 1.0, 0.0
    %v3304 = vsel %vm3240, 1.0, 0.0
    %v3305 = vsel %vm3241, 1.0, 0.0
    %v3306 = vsel %vm3242, 1.0, 0.0
    %v3307 = vsel %vm3243, 1.0, 0.0
    %v3308 = vsel %vm3244, 1.0, 0.0
    %v3309 = vsel %vm3245, 1.0, 0.0
    %v3310 = vsel %vm3246, 1.0, 0.0
    %v3311 = vsel %vm3247, 1.0, 0.0
    %v3312 = vsel %vm3248, 1.0, 0.0
    %v3313 = vsel %vm3249, 1.0, 0.0
    %v3314 = vsel %vm3250, 1.0, 0.0
    %v3315 = vsel %vm3251, 1.0, 0.0
    %v3316 = vsel %vm3252, 1.0, 0.0
    %v3317 = vsel %vm3253, 1.0, 0.0
    %v3318 = vsel %vm3254, 1.0, 0.0
    %v3319 = vsel %vm3255, 1.0, 0.0
    %v3320 = vsel %vm3256, 1.0, 0.0
    %v3321 = vsel %vm3257, 1.0, 0.0
    %v3322 = vsel %vm3258, 1.0, 0.0
    %v3323 = vpack.c.bf16 %v3263, %v3259
    %v3324 = vpack.c.bf16 %v3264, %v3260
    %v3325 = vpack.c.bf16 %v3265, %v3261
    %v3326 = vpack.c.bf16 %v3266, %v3262
    %v3327 = vpack.c.bf16 %v3271, %v3267
    %v3328 = vpack.c.bf16 %v3272, %v3268
    %v3329 = vpack.c.bf16 %v3273, %v3269
    %v3330 = vpack.c.bf16 %v3274, %v3270
    %v3331 = vpack.c.bf16 %v3279, %v3275
    %v3332 = vpack.c.bf16 %v3280, %v3276
    %v3333 = vpack.c.bf16 %v3281, %v3277
    %v3334 = vpack.c.bf16 %v3282, %v3278
    %v3335 = vpack.c.bf16 %v3287, %v3283
    %v3336 = vpack.c.bf16 %v3288, %v3284
    %v3337 = vpack.c.bf16 %v3289, %v3285
    %v3338 = vpack.c.bf16 %v3290, %v3286
    %v3339 = vpack.c.bf16 %v3295, %v3291
    %v3340 = vpack.c.bf16 %v3296, %v3292
    %v3341 = vpack.c.bf16 %v3297, %v3293
    %v3342 = vpack.c.bf16 %v3298, %v3294
    %v3343 = vpack.c.bf16 %v3303, %v3299
    %v3344 = vpack.c.bf16 %v3304, %v3300
    %v3345 = vpack.c.bf16 %v3305, %v3301
    %v3346 = vpack.c.bf16 %v3306, %v3302
    %v3347 = vpack.c.bf16 %v3311, %v3307
    %v3348 = vpack.c.bf16 %v3312, %v3308
    %v3349 = vpack.c.bf16 %v3313, %v3309
    %v3350 = vpack.c.bf16 %v3314, %v3310
    %v3351 = vpack.c.bf16 %v3319, %v3315
    %v3352 = vpack.c.bf16 %v3320, %v3316
    %v3353 = vpack.c.bf16 %v3321, %v3317
    %v3354 = vpack.c.bf16 %v3322, %v3318
    %3355 = vmatprep.subr.bf16.mxu0 0
    %3356 = vmatpush1.bf16.msra.mxu0 %v187
    %3357 = vmatprep.subr.bf16.mxu0 0
    %3358 = vmatpush1.bf16.msra.mxu0 %v188
    %3359 = vmatprep.subr.bf16.mxu0 0
    %3360 = vmatpush1.bf16.msra.mxu0 %v189
    %3361 = vmatprep.subr.bf16.mxu0 0
    %3362 = vmatpush1.bf16.msra.mxu0 %v190
    %3363 = vmatprep.subr.bf16.mxu0 0
    %3364 = vmatpush1.bf16.msra.mxu0 %v191
    %3365 = vmatprep.subr.bf16.mxu0 0
    %3366 = vmatpush1.bf16.msra.mxu0 %v192
    %3367 = vmatprep.subr.bf16.mxu0 0
    %3368 = vmatpush1.bf16.msra.mxu0 %v193
    %3369 = vmatprep.subr.bf16.mxu0 0
    %3370 = vmatpush1.bf16.msra.mxu0 %v194
    %3371 = vmatprep.subr.bf16.mxu0 0
    %3372 = vmatpush1.bf16.msra.mxu0 %v195
    %3373 = vmatprep.subr.bf16.mxu0 0
    %3374 = vmatpush1.bf16.msra.mxu0 %v196
    %3375 = vmatprep.subr.bf16.mxu0 0
    %3376 = vmatpush1.bf16.msra.mxu0 %v197
    %3377 = vmatprep.subr.bf16.mxu0 0
    %3378 = vmatpush1.bf16.msra.mxu0 %v198
    %3379 = vmatprep.subr.bf16.mxu0 0
    %3380 = vmatpush1.bf16.msra.mxu0 %v199
    %3381 = vmatprep.subr.bf16.mxu0 0
    %3382 = vmatpush1.bf16.msra.mxu0 %v200
    %3383 = vmatprep.subr.bf16.mxu0 0
    %3384 = vmatpush1.bf16.msra.mxu0 %v201
    %3385 = vmatprep.subr.bf16.mxu0 0
    %3386 = vmatpush1.bf16.msra.mxu0 %v202
    %3387 = vmatprep.mubr.bf16.mxu0 %v3324
    %3388 = vmatmul.mubr.bf16.gmra.mrb[0].mxu0 %v3323
    %v3389 = vpop.f32.mrb[0].mxu0
    %v3390 = vadd.f32 0.0, %v3389
    %v3391 = vpop.f32.mrb[0].mxu0
    %v3392 = vpop.f32.mrb[0].mxu0
    %v3393 = vadd.f32 0.0, %v3392
    %v3394 = vpop.f32.mrb[0].mxu0
    %3395 = vmatprep.mubr.bf16.mxu0 %v3328
    %3396 = vmatmul.mubr.bf16.gmra.mrb[0].mxu0 %v3327
    %v3397 = vpop.f32.mrb[0].mxu0
    %v3398 = vadd.f32 0.0, %v3397
    %v3399 = vpop.f32.mrb[0].mxu0
    %v3400 = vpop.f32.mrb[0].mxu0
    %v3401 = vadd.f32 0.0, %v3400
    %v3402 = vpop.f32.mrb[0].mxu0
    %3403 = vmatprep.mubr.bf16.mxu0 %v3332
    %3404 = vmatmul.mubr.bf16.gmra.mrb[0].mxu0 %v3331
    %v3405 = vpop.f32.mrb[0].mxu0
    %v3406 = vadd.f32 0.0, %v3405
    %v3407 = vpop.f32.mrb[0].mxu0
    %v3408 = vpop.f32.mrb[0].mxu0
    %v3409 = vadd.f32 0.0, %v3408
    %v3410 = vpop.f32.mrb[0].mxu0
    %3411 = vmatprep.mubr.bf16.mxu0 %v3336
    %3412 = vmatmul.mubr.bf16.gmra.mrb[0].mxu0 %v3335
    %v3413 = vpop.f32.mrb[0].mxu0
    %v3414 = vadd.f32 0.0, %v3413
    %v3415 = vpop.f32.mrb[0].mxu0
    %v3416 = vpop.f32.mrb[0].mxu0
    %v3417 = vadd.f32 0.0, %v3416
    %v3418 = vpop.f32.mrb[0].mxu0
    %3419 = vmatprep.mubr.bf16.mxu0 %v3340
    %3420 = vmatmul.mubr.bf16.gmra.mrb[0].mxu0 %v3339
    %v3421 = vpop.f32.mrb[0].mxu0
    %v3422 = vadd.f32 0.0, %v3421
    %v3423 = vpop.f32.mrb[0].mxu0
    %v3424 = vpop.f32.mrb[0].mxu0
    %v3425 = vadd.f32 0.0, %v3424
    %v3426 = vpop.f32.mrb[0].mxu0
    %3427 = vmatprep.mubr.bf16.mxu0 %v3344
    %3428 = vmatmul.mubr.bf16.gmra.mrb[0].mxu0 %v3343
    %v3429 = vpop.f32.mrb[0].mxu0
    %v3430 = vadd.f32 0.0, %v3429
    %v3431 = vpop.f32.mrb[0].mxu0
    %v3432 = vpop.f32.mrb[0].mxu0
    %v3433 = vadd.f32 0.0, %v3432
    %v3434 = vpop.f32.mrb[0].mxu0
    %3435 = vmatprep.mubr.bf16.mxu0 %v3348
    %3436 = vmatmul.mubr.bf16.gmra.mrb[0].mxu0 %v3347
    %v3437 = vpop.f32.mrb[0].mxu0
    %v3438 = vadd.f32 0.0, %v3437
    %v3439 = vpop.f32.mrb[0].mxu0
    %v3440 = vpop.f32.mrb[0].mxu0
    %v3441 = vadd.f32 0.0, %v3440
    %v3442 = vpop.f32.mrb[0].mxu0
    %3443 = vmatprep.mubr.bf16.mxu0 %v3352
    %3444 = vmatmul.mubr.bf16.gmra.mrb[0].mxu0 %v3351
    %v3445 = vpop.f32.mrb[0].mxu0
    %v3446 = vadd.f32 0.0, %v3445
    %v3447 = vpop.f32.mrb[0].mxu0
    %v3448 = vpop.f32.mrb[0].mxu0
    %v3449 = vadd.f32 0.0, %v3448
    %v3450 = vpop.f32.mrb[0].mxu0
    %3451 = vdwg.mxu0
    %3452 = vmatprep.subr.bf16.mxu0 0
    %3453 = vmatpush1.bf16.msra.mxu0 %v203
    %3454 = vmatprep.subr.bf16.mxu0 0
    %3455 = vmatpush1.bf16.msra.mxu0 %v204
    %3456 = vmatprep.subr.bf16.mxu0 0
    %3457 = vmatpush1.bf16.msra.mxu0 %v205
    %3458 = vmatprep.subr.bf16.mxu0 0
    %3459 = vmatpush1.bf16.msra.mxu0 %v206
    %3460 = vmatprep.subr.bf16.mxu0 0
    %3461 = vmatpush1.bf16.msra.mxu0 %v207
    %3462 = vmatprep.subr.bf16.mxu0 0
    %3463 = vmatpush1.bf16.msra.mxu0 %v208
    %3464 = vmatprep.subr.bf16.mxu0 0
    %3465 = vmatpush1.bf16.msra.mxu0 %v209
    %3466 = vmatprep.subr.bf16.mxu0 0
    %3467 = vmatpush1.bf16.msra.mxu0 %v210
    %3468 = vmatprep.subr.bf16.mxu0 0
    %3469 = vmatpush1.bf16.msra.mxu0 %v211
    %3470 = vmatprep.subr.bf16.mxu0 0
    %3471 = vmatpush1.bf16.msra.mxu0 %v212
    %3472 = vmatprep.subr.bf16.mxu0 0
    %3473 = vmatpush1.bf16.msra.mxu0 %v213
    %3474 = vmatprep.subr.bf16.mxu0 0
    %3475 = vmatpush1.bf16.msra.mxu0 %v214
    %3476 = vmatprep.subr.bf16.mxu0 0
    %3477 = vmatpush1.bf16.msra.mxu0 %v215
    %3478 = vmatprep.subr.bf16.mxu0 0
    %3479 = vmatpush1.bf16.msra.mxu0 %v216
    %3480 = vmatprep.subr.bf16.mxu0 0
    %3481 = vmatpush1.bf16.msra.mxu0 %v217
    %3482 = vmatprep.subr.bf16.mxu0 0
    %3483 = vmatpush1.bf16.msra.mxu0 %v218
    %3484 = vmatprep.mubr.bf16.mxu0 %v3326
    %3485 = vmatmul.mubr.bf16.gmra.mrb[0].mxu0 %v3325
    %v3486 = vpop.f32.mrb[0].mxu0
    %v3487 = vadd.f32 %v3390, %v3486
    %v3488 = vpop.f32.mrb[0].mxu0
    %v3489 = vpop.f32.mrb[0].mxu0
    %v3490 = vadd.f32 %v3393, %v3489
    %v3491 = vpop.f32.mrb[0].mxu0
    %3492 = vmatprep.mubr.bf16.mxu0 %v3330
    %3493 = vmatmul.mubr.bf16.gmra.mrb[0].mxu0 %v3329
    %v3494 = vpop.f32.mrb[0].mxu0
    %v3495 = vadd.f32 %v3398, %v3494
    %v3496 = vpop.f32.mrb[0].mxu0
    %v3497 = vpop.f32.mrb[0].mxu0
    %v3498 = vadd.f32 %v3401, %v3497
    %v3499 = vpop.f32.mrb[0].mxu0
    %3500 = vmatprep.mubr.bf16.mxu0 %v3334
    %3501 = vmatmul.mubr.bf16.gmra.mrb[0].mxu0 %v3333
    %v3502 = vpop.f32.mrb[0].mxu0
    %v3503 = vadd.f32 %v3406, %v3502
    %v3504 = vpop.f32.mrb[0].mxu0
    %v3505 = vpop.f32.mrb[0].mxu0
    %v3506 = vadd.f32 %v3409, %v3505
    %v3507 = vpop.f32.mrb[0].mxu0
    %3508 = vmatprep.mubr.bf16.mxu0 %v3338
    %3509 = vmatmul.mubr.bf16.gmra.mrb[0].mxu0 %v3337
    %v3510 = vpop.f32.mrb[0].mxu0
    %v3511 = vadd.f32 %v3414, %v3510
    %v3512 = vpop.f32.mrb[0].mxu0
    %v3513 = vpop.f32.mrb[0].mxu0
    %v3514 = vadd.f32 %v3417, %v3513
    %v3515 = vpop.f32.mrb[0].mxu0
    %3516 = vmatprep.mubr.bf16.mxu0 %v3342
    %3517 = vmatmul.mubr.bf16.gmra.mrb[0].mxu0 %v3341
    %v3518 = vpop.f32.mrb[0].mxu0
    %v3519 = vadd.f32 %v3422, %v3518
    %v3520 = vpop.f32.mrb[0].mxu0
    %v3521 = vpop.f32.mrb[0].mxu0
    %v3522 = vadd.f32 %v3425, %v3521
    %v3523 = vpop.f32.mrb[0].mxu0
    %3524 = vmatprep.mubr.bf16.mxu0 %v3346
    %3525 = vmatmul.mubr.bf16.gmra.mrb[0].mxu0 %v3345
    %v3526 = vpop.f32.mrb[0].mxu0
    %v3527 = vadd.f32 %v3430, %v3526
    %v3528 = vpop.f32.mrb[0].mxu0
    %v3529 = vpop.f32.mrb[0].mxu0
    %v3530 = vadd.f32 %v3433, %v3529
    %v3531 = vpop.f32.mrb[0].mxu0
    %3532 = vmatprep.mubr.bf16.mxu0 %v3350
    %3533 = vmatmul.mubr.bf16.gmra.mrb[0].mxu0 %v3349
    %v3534 = vpop.f32.mrb[0].mxu0
    %v3535 = vadd.f32 %v3438, %v3534
    %v3536 = vpop.f32.mrb[0].mxu0
    %v3537 = vpop.f32.mrb[0].mxu0
    %v3538 = vadd.f32 %v3441, %v3537
    %v3539 = vpop.f32.mrb[0].mxu0
    %3540 = vmatprep.mubr.bf16.mxu0 %v3354
    %3541 = vmatmul.mubr.bf16.gmra.mrb[0].mxu0 %v3353
    %v3542 = vpop.f32.mrb[0].mxu0
    %v3543 = vadd.f32 %v3446, %v3542
    %v3544 = vpop.f32.mrb[0].mxu0
    %v3545 = vpop.f32.mrb[0].mxu0
    %v3546 = vadd.f32 %v3449, %v3545
    %v3547 = vpop.f32.mrb[0].mxu0
    %3548 = vdwg.mxu0
    %v3549 = vpack.c.bf16 %v3490, %v3487
    %v3550 = vpack.c.bf16 %v3498, %v3495
    %v3551 = vpack.c.bf16 %v3506, %v3503
    %v3552 = vpack.c.bf16 %v3514, %v3511
    %v3553 = vpack.c.bf16 %v3522, %v3519
    %v3554 = vpack.c.bf16 %v3530, %v3527
    %v3555 = vpack.c.bf16 %v3538, %v3535
    %v3556 = vpack.c.bf16 %v3546, %v3543
    %s3557 = scalar_lea.vmem [#allocation5], 320
    %v3558 = vld [vmem:[%s3557] sm:$0xf]
    %v3559 = vld [vmem:[%s3557 + $0x4] sm:$0xf]
    %v3560 = vld [vmem:[%s3557 + $0x8] sm:$0xf]
    %v3561 = vld [vmem:[%s3557 + $0xc] sm:$0xf]
    %v3562 = vld [vmem:[%s3557 + $0x10] sm:$0xf]
    %v3563 = vld [vmem:[%s3557 + $0x14] sm:$0xf]
    %v3564 = vld [vmem:[%s3557 + $0x18] sm:$0xf]
    %v3565 = vld [vmem:[%s3557 + $0x1c] sm:$0xf]
    %v3566 = vld [vmem:[%s3557 + $0x20] sm:$0xf]
    %v3567 = vld [vmem:[%s3557 + $0x24] sm:$0xf]
    %v3568 = vld [vmem:[%s3557 + $0x28] sm:$0xf]
    %v3569 = vld [vmem:[%s3557 + $0x2c] sm:$0xf]
    %v3570 = vld [vmem:[%s3557 + $0x30] sm:$0xf]
    %v3571 = vld [vmem:[%s3557 + $0x34] sm:$0xf]
    %v3572 = vld [vmem:[%s3557 + $0x38] sm:$0xf]
    %v3573 = vld [vmem:[%s3557 + $0x3c] sm:$0xf]
    %v3590 = vunpack.c.l.b16 %v3558
    %v3591 = vunpack.c.l.b16 %v3559
    %v3592 = vunpack.c.l.b16 %v3560
    %v3593 = vunpack.c.l.b16 %v3561
    %v3594 = vunpack.c.l.b16 %v3562
    %v3595 = vunpack.c.l.b16 %v3563
    %v3596 = vunpack.c.l.b16 %v3564
    %v3597 = vunpack.c.l.b16 %v3565
    %v3598 = vunpack.c.l.b16 %v3566
    %v3599 = vunpack.c.l.b16 %v3567
    %v3600 = vunpack.c.l.b16 %v3568
    %v3601 = vunpack.c.l.b16 %v3569
    %v3602 = vunpack.c.l.b16 %v3570
    %v3603 = vunpack.c.l.b16 %v3571
    %v3604 = vunpack.c.l.b16 %v3572
    %v3605 = vunpack.c.l.b16 %v3573
    %v3606 = vpack.c.b16 %v3591, %v3590
    %v3607 = vpack.c.b16 %v3593, %v3592
    %v3608 = vpack.c.b16 %v3595, %v3594
    %v3609 = vpack.c.b16 %v3597, %v3596
    %v3610 = vpack.c.b16 %v3599, %v3598
    %v3611 = vpack.c.b16 %v3601, %v3600
    %v3612 = vpack.c.b16 %v3603, %v3602
    %v3613 = vpack.c.b16 %v3605, %v3604
    %3622 = vmatprep.subr.bf16.mxu0 0
    %3623 = vmatpush1.bf16.msra.mxu0 %v3606
    %3624 = vmatprep.subr.bf16.mxu0 0
    %3625 = vmatpush1.bf16.msra.mxu0 %v3607
    %3626 = vmatprep.subr.bf16.mxu0 0
    %3627 = vmatpush1.bf16.msra.mxu0 %v3608
    %3628 = vmatprep.subr.bf16.mxu0 0
    %3629 = vmatpush1.bf16.msra.mxu0 %v3609
    %3630 = vmatprep.subr.bf16.mxu0 0
    %3631 = vmatpush1.bf16.msra.mxu0 %v3610
    %3632 = vmatprep.subr.bf16.mxu0 0
    %3633 = vmatpush1.bf16.msra.mxu0 %v3611
    %3634 = vmatprep.subr.bf16.mxu0 0
    %3635 = vmatpush1.bf16.msra.mxu0 %v3612
    %3636 = vmatprep.subr.bf16.mxu0 0
    %3637 = vmatpush1.bf16.msra.mxu0 %v3613
    %3638 = vmatprep.subr.bf16.mxu0 0
    %3639 = vmatpush1.bf16.msra.mxu0 0
    %3640 = vmatprep.subr.bf16.mxu0 0
    %3641 = vmatpush1.bf16.msra.mxu0 0
    %3642 = vmatprep.subr.bf16.mxu0 0
    %3643 = vmatpush1.bf16.msra.mxu0 0
    %3644 = vmatprep.subr.bf16.mxu0 0
    %3645 = vmatpush1.bf16.msra.mxu0 0
    %3646 = vmatprep.subr.bf16.mxu0 0
    %3647 = vmatpush1.bf16.msra.mxu0 0
    %3648 = vmatprep.subr.bf16.mxu0 0
    %3649 = vmatpush1.bf16.msra.mxu0 0
    %3650 = vmatprep.subr.bf16.mxu0 0
    %3651 = vmatpush1.bf16.msra.mxu0 0
    %3652 = vmatprep.subr.bf16.mxu0 0
    %3653 = vmatpush1.bf16.msra.mxu0 0
    %3654 = vmatprep.mubr.bf16.mxu0 0
    %3655 = vmatmul.mubr.bf16.gmra.mrb[0].mxu0 %v3549
    %v3656 = vpop.f32.mrb[0].mxu0
    %v3657 = vadd.f32 0.0, %v3656
    %v3658 = vpop.f32.mrb[0].mxu0
    %v3659 = vpop.f32.mrb[0].mxu0
    %v3660 = vadd.f32 0.0, %v3659
    %v3661 = vpop.f32.mrb[0].mxu0
    %3662 = vmatprep.mubr.bf16.mxu0 0
    %3663 = vmatmul.mubr.bf16.gmra.mrb[0].mxu0 %v3550
    %v3664 = vpop.f32.mrb[0].mxu0
    %v3665 = vadd.f32 0.0, %v3664
    %v3666 = vpop.f32.mrb[0].mxu0
    %v3667 = vpop.f32.mrb[0].mxu0
    %v3668 = vadd.f32 0.0, %v3667
    %v3669 = vpop.f32.mrb[0].mxu0
    %3670 = vmatprep.mubr.bf16.mxu0 0
    %3671 = vmatmul.mubr.bf16.gmra.mrb[0].mxu0 %v3551
    %v3672 = vpop.f32.mrb[0].mxu0
    %v3673 = vadd.f32 0.0, %v3672
    %v3674 = vpop.f32.mrb[0].mxu0
    %v3675 = vpop.f32.mrb[0].mxu0
    %v3676 = vadd.f32 0.0, %v3675
    %v3677 = vpop.f32.mrb[0].mxu0
    %3678 = vmatprep.mubr.bf16.mxu0 0
    %3679 = vmatmul.mubr.bf16.gmra.mrb[0].mxu0 %v3552
    %v3680 = vpop.f32.mrb[0].mxu0
    %v3681 = vadd.f32 0.0, %v3680
    %v3682 = vpop.f32.mrb[0].mxu0
    %v3683 = vpop.f32.mrb[0].mxu0
    %v3684 = vadd.f32 0.0, %v3683
    %v3685 = vpop.f32.mrb[0].mxu0
    %3686 = vmatprep.mubr.bf16.mxu0 0
    %3687 = vmatmul.mubr.bf16.gmra.mrb[0].mxu0 %v3553
    %v3688 = vpop.f32.mrb[0].mxu0
    %v3689 = vadd.f32 0.0, %v3688
    %v3690 = vpop.f32.mrb[0].mxu0
    %v3691 = vpop.f32.mrb[0].mxu0
    %v3692 = vadd.f32 0.0, %v3691
    %v3693 = vpop.f32.mrb[0].mxu0
    %3694 = vmatprep.mubr.bf16.mxu0 0
    %3695 = vmatmul.mubr.bf16.gmra.mrb[0].mxu0 %v3554
    %v3696 = vpop.f32.mrb[0].mxu0
    %v3697 = vadd.f32 0.0, %v3696
    %v3698 = vpop.f32.mrb[0].mxu0
    %v3699 = vpop.f32.mrb[0].mxu0
    %v3700 = vadd.f32 0.0, %v3699
    %v3701 = vpop.f32.mrb[0].mxu0
    %3702 = vmatprep.mubr.bf16.mxu0 0
    %3703 = vmatmul.mubr.bf16.gmra.mrb[0].mxu0 %v3555
    %v3704 = vpop.f32.mrb[0].mxu0
    %v3705 = vadd.f32 0.0, %v3704
    %v3706 = vpop.f32.mrb[0].mxu0
    %v3707 = vpop.f32.mrb[0].mxu0
    %v3708 = vadd.f32 0.0, %v3707
    %v3709 = vpop.f32.mrb[0].mxu0
    %3710 = vmatprep.mubr.bf16.mxu0 0
    %3711 = vmatmul.mubr.bf16.gmra.mrb[0].mxu0 %v3556
    %v3712 = vpop.f32.mrb[0].mxu0
    %v3713 = vadd.f32 0.0, %v3712
    %v3714 = vpop.f32.mrb[0].mxu0
    %v3715 = vpop.f32.mrb[0].mxu0
    %v3716 = vadd.f32 0.0, %v3715
    %v3717 = vpop.f32.mrb[0].mxu0
    %3718 = vdwg.mxu0
    %v3719 = vadd.f32 %v3131, %v3657
    %v3720 = vadd.f32 %v3132, %v3660
    %v3721 = vadd.f32 %v3133, %v3665
    %v3722 = vadd.f32 %v3134, %v3668
    %v3723 = vadd.f32 %v3135, %v3673
    %v3724 = vadd.f32 %v3136, %v3676
    %v3725 = vadd.f32 %v3137, %v3681
    %v3726 = vadd.f32 %v3138, %v3684
    %v3727 = vadd.f32 %v3139, %v3689
    %v3728 = vadd.f32 %v3140, %v3692
    %v3729 = vadd.f32 %v3141, %v3697
    %v3730 = vadd.f32 %v3142, %v3700
    %v3731 = vadd.f32 %v3143, %v3705
    %v3732 = vadd.f32 %v3144, %v3708
    %v3733 = vadd.f32 %v3145, %v3713
    %v3734 = vadd.f32 %v3146, %v3716
    %3735 = vset.pattern.permute.xlu0 6
    %3736 = vperm.xlu0 %3735, %v224
    %v3737 = vpop.permute.xlu0 %3736
    %3738 = vset.pattern.permute.xlu0 6
    %3739 = vperm.xlu0 %3738, %v225
    %v3740 = vpop.permute.xlu0 %3739
    %3741 = vset.pattern.permute.xlu0 6
    %3742 = vperm.xlu0 %3741, %v226
    %v3743 = vpop.permute.xlu0 %3742
    %3744 = vset.pattern.permute.xlu0 6
    %3745 = vperm.xlu0 %3744, %v227
    %v3746 = vpop.permute.xlu0 %3745
    %3747 = vset.pattern.permute.xlu0 6
    %3748 = vperm.xlu0 %3747, %v228
    %v3749 = vpop.permute.xlu0 %3748
    %3750 = vset.pattern.permute.xlu0 6
    %3751 = vperm.xlu0 %3750, %v229
    %v3752 = vpop.permute.xlu0 %3751
    %3753 = vset.pattern.permute.xlu0 6
    %3754 = vperm.xlu0 %3753, %v230
    %v3755 = vpop.permute.xlu0 %3754
    %3756 = vset.pattern.permute.xlu0 6
    %3757 = vperm.xlu0 %3756, %v231
    %v3758 = vpop.permute.xlu0 %3757
    %3759 = vset.pattern.permute.xlu0 6
    %3760 = vperm.xlu0 %3759, %v232
    %v3761 = vpop.permute.xlu0 %3760
    %3762 = vset.pattern.permute.xlu0 6
    %3763 = vperm.xlu0 %3762, %v233
    %v3764 = vpop.permute.xlu0 %3763
    %3765 = vset.pattern.permute.xlu0 6
    %3766 = vperm.xlu0 %3765, %v234
    %v3767 = vpop.permute.xlu0 %3766
    %3768 = vset.pattern.permute.xlu0 6
    %3769 = vperm.xlu0 %3768, %v235
    %v3770 = vpop.permute.xlu0 %3769
    %3771 = vset.pattern.permute.xlu0 6
    %3772 = vperm.xlu0 %3771, %v236
    %v3773 = vpop.permute.xlu0 %3772
    %3774 = vset.pattern.permute.xlu0 6
    %3775 = vperm.xlu0 %3774, %v237
    %v3776 = vpop.permute.xlu0 %3775
    %3777 = vset.pattern.permute.xlu0 6
    %3778 = vperm.xlu0 %3777, %v238
    %v3779 = vpop.permute.xlu0 %3778
    %3780 = vset.pattern.permute.xlu0 6
    %3781 = vperm.xlu0 %3780, %v239
    %v3782 = vpop.permute.xlu0 %3781
    %vm3783 = vcmp.eq.s32.totalorder %v220, %v3737
    %vm3784 = vcmp.eq.s32.totalorder %v221, %v3737
    %vm3785 = vcmp.eq.s32.totalorder %v222, %v3737
    %vm3786 = vcmp.eq.s32.totalorder %v223, %v3737
    %vm3787 = vcmp.eq.s32.totalorder %v220, %v3740
    %vm3788 = vcmp.eq.s32.totalorder %v221, %v3740
    %vm3789 = vcmp.eq.s32.totalorder %v222, %v3740
    %vm3790 = vcmp.eq.s32.totalorder %v223, %v3740
    %vm3791 = vcmp.eq.s32.totalorder %v220, %v3743
    %vm3792 = vcmp.eq.s32.totalorder %v221, %v3743
    %vm3793 = vcmp.eq.s32.totalorder %v222, %v3743
    %vm3794 = vcmp.eq.s32.totalorder %v223, %v3743
    %vm3795 = vcmp.eq.s32.totalorder %v220, %v3746
    %vm3796 = vcmp.eq.s32.totalorder %v221, %v3746
    %vm3797 = vcmp.eq.s32.totalorder %v222, %v3746
    %vm3798 = vcmp.eq.s32.totalorder %v223, %v3746
    %vm3799 = vcmp.eq.s32.totalorder %v220, %v3749
    %vm3800 = vcmp.eq.s32.totalorder %v221, %v3749
    %vm3801 = vcmp.eq.s32.totalorder %v222, %v3749
    %vm3802 = vcmp.eq.s32.totalorder %v223, %v3749
    %vm3803 = vcmp.eq.s32.totalorder %v220, %v3752
    %vm3804 = vcmp.eq.s32.totalorder %v221, %v3752
    %vm3805 = vcmp.eq.s32.totalorder %v222, %v3752
    %vm3806 = vcmp.eq.s32.totalorder %v223, %v3752
    %vm3807 = vcmp.eq.s32.totalorder %v220, %v3755
    %vm3808 = vcmp.eq.s32.totalorder %v221, %v3755
    %vm3809 = vcmp.eq.s32.totalorder %v222, %v3755
    %vm3810 = vcmp.eq.s32.totalorder %v223, %v3755
    %vm3811 = vcmp.eq.s32.totalorder %v220, %v3758
    %vm3812 = vcmp.eq.s32.totalorder %v221, %v3758
    %vm3813 = vcmp.eq.s32.totalorder %v222, %v3758
    %vm3814 = vcmp.eq.s32.totalorder %v223, %v3758
    %vm3815 = vcmp.eq.s32.totalorder %v220, %v3761
    %vm3816 = vcmp.eq.s32.totalorder %v221, %v3761
    %vm3817 = vcmp.eq.s32.totalorder %v222, %v3761
    %vm3818 = vcmp.eq.s32.totalorder %v223, %v3761
    %vm3819 = vcmp.eq.s32.totalorder %v220, %v3764
    %vm3820 = vcmp.eq.s32.totalorder %v221, %v3764
    %vm3821 = vcmp.eq.s32.totalorder %v222, %v3764
    %vm3822 = vcmp.eq.s32.totalorder %v223, %v3764
    %vm3823 = vcmp.eq.s32.totalorder %v220, %v3767
    %vm3824 = vcmp.eq.s32.totalorder %v221, %v3767
    %vm3825 = vcmp.eq.s32.totalorder %v222, %v3767
    %vm3826 = vcmp.eq.s32.totalorder %v223, %v3767
    %vm3827 = vcmp.eq.s32.totalorder %v220, %v3770
    %vm3828 = vcmp.eq.s32.totalorder %v221, %v3770
    %vm3829 = vcmp.eq.s32.totalorder %v222, %v3770
    %vm3830 = vcmp.eq.s32.totalorder %v223, %v3770
    %vm3831 = vcmp.eq.s32.totalorder %v220, %v3773
    %vm3832 = vcmp.eq.s32.totalorder %v221, %v3773
    %vm3833 = vcmp.eq.s32.totalorder %v222, %v3773
    %vm3834 = vcmp.eq.s32.totalorder %v223, %v3773
    %vm3835 = vcmp.eq.s32.totalorder %v220, %v3776
    %vm3836 = vcmp.eq.s32.totalorder %v221, %v3776
    %vm3837 = vcmp.eq.s32.totalorder %v222, %v3776
    %vm3838 = vcmp.eq.s32.totalorder %v223, %v3776
    %vm3839 = vcmp.eq.s32.totalorder %v220, %v3779
    %vm3840 = vcmp.eq.s32.totalorder %v221, %v3779
    %vm3841 = vcmp.eq.s32.totalorder %v222, %v3779
    %vm3842 = vcmp.eq.s32.totalorder %v223, %v3779
    %vm3843 = vcmp.eq.s32.totalorder %v220, %v3782
    %vm3844 = vcmp.eq.s32.totalorder %v221, %v3782
    %vm3845 = vcmp.eq.s32.totalorder %v222, %v3782
    %vm3846 = vcmp.eq.s32.totalorder %v223, %v3782
    %v3847 = vsel %vm3783, 1.0, 0.0
    %v3848 = vsel %vm3784, 1.0, 0.0
    %v3849 = vsel %vm3785, 1.0, 0.0
    %v3850 = vsel %vm3786, 1.0, 0.0
    %v3851 = vsel %vm3787, 1.0, 0.0
    %v3852 = vsel %vm3788, 1.0, 0.0
    %v3853 = vsel %vm3789, 1.0, 0.0
    %v3854 = vsel %vm3790, 1.0, 0.0
    %v3855 = vsel %vm3791, 1.0, 0.0
    %v3856 = vsel %vm3792, 1.0, 0.0
    %v3857 = vsel %vm3793, 1.0, 0.0
    %v3858 = vsel %vm3794, 1.0, 0.0
    %v3859 = vsel %vm3795, 1.0, 0.0
    %v3860 = vsel %vm3796, 1.0, 0.0
    %v3861 = vsel %vm3797, 1.0, 0.0
    %v3862 = vsel %vm3798, 1.0, 0.0
    %v3863 = vsel %vm3799, 1.0, 0.0
    %v3864 = vsel %vm3800, 1.0, 0.0
    %v3865 = vsel %vm3801, 1.0, 0.0
    %v3866 = vsel %vm3802, 1.0, 0.0
    %v3867 = vsel %vm3803, 1.0, 0.0
    %v3868 = vsel %vm3804, 1.0, 0.0
    %v3869 = vsel %vm3805, 1.0, 0.0
    %v3870 = vsel %vm3806, 1.0, 0.0
    %v3871 = vsel %vm3807, 1.0, 0.0
    %v3872 = vsel %vm3808, 1.0, 0.0
    %v3873 = vsel %vm3809, 1.0, 0.0
    %v3874 = vsel %vm3810, 1.0, 0.0
    %v3875 = vsel %vm3811, 1.0, 0.0
    %v3876 = vsel %vm3812, 1.0, 0.0
    %v3877 = vsel %vm3813, 1.0, 0.0
    %v3878 = vsel %vm3814, 1.0, 0.0
    %v3879 = vsel %vm3815, 1.0, 0.0
    %v3880 = vsel %vm3816, 1.0, 0.0
    %v3881 = vsel %vm3817, 1.0, 0.0
    %v3882 = vsel %vm3818, 1.0, 0.0
    %v3883 = vsel %vm3819, 1.0, 0.0
    %v3884 = vsel %vm3820, 1.0, 0.0
    %v3885 = vsel %vm3821, 1.0, 0.0
    %v3886 = vsel %vm3822, 1.0, 0.0
    %v3887 = vsel %vm3823, 1.0, 0.0
    %v3888 = vsel %vm3824, 1.0, 0.0
    %v3889 = vsel %vm3825, 1.0, 0.0
    %v3890 = vsel %vm3826, 1.0, 0.0
    %v3891 = vsel %vm3827, 1.0, 0.0
    %v3892 = vsel %vm3828, 1.0, 0.0
    %v3893 = vsel %vm3829, 1.0, 0.0
    %v3894 = vsel %vm3830, 1.0, 0.0
    %v3895 = vsel %vm3831, 1.0, 0.0
    %v3896 = vsel %vm3832, 1.0, 0.0
    %v3897 = vsel %vm3833, 1.0, 0.0
    %v3898 = vsel %vm3834, 1.0, 0.0
    %v3899 = vsel %vm3835, 1.0, 0.0
    %v3900 = vsel %vm3836, 1.0, 0.0
    %v3901 = vsel %vm3837, 1.0, 0.0
    %v3902 = vsel %vm3838, 1.0, 0.0
    %v3903 = vsel %vm3839, 1.0, 0.0
    %v3904 = vsel %vm3840, 1.0, 0.0
    %v3905 = vsel %vm3841, 1.0, 0.0
    %v3906 = vsel %vm3842, 1.0, 0.0
    %v3907 = vsel %vm3843, 1.0, 0.0
    %v3908 = vsel %vm3844, 1.0, 0.0
    %v3909 = vsel %vm3845, 1.0, 0.0
    %v3910 = vsel %vm3846, 1.0, 0.0
    %v3911 = vpack.c.bf16 %v3851, %v3847
    %v3912 = vpack.c.bf16 %v3852, %v3848
    %v3913 = vpack.c.bf16 %v3853, %v3849
    %v3914 = vpack.c.bf16 %v3854, %v3850
    %v3915 = vpack.c.bf16 %v3859, %v3855
    %v3916 = vpack.c.bf16 %v3860, %v3856
    %v3917 = vpack.c.bf16 %v3861, %v3857
    %v3918 = vpack.c.bf16 %v3862, %v3858
    %v3919 = vpack.c.bf16 %v3867, %v3863
    %v3920 = vpack.c.bf16 %v3868, %v3864
    %v3921 = vpack.c.bf16 %v3869, %v3865
    %v3922 = vpack.c.bf16 %v3870, %v3866
    %v3923 = vpack.c.bf16 %v3875, %v3871
    %v3924 = vpack.c.bf16 %v3876, %v3872
    %v3925 = vpack.c.bf16 %v3877, %v3873
    %v3926 = vpack.c.bf16 %v3878, %v3874
    %v3927 = vpack.c.bf16 %v3883, %v3879
    %v3928 = vpack.c.bf16 %v3884, %v3880
    %v3929 = vpack.c.bf16 %v3885, %v3881
    %v3930 = vpack.c.bf16 %v3886, %v3882
    %v3931 = vpack.c.bf16 %v3891, %v3887
    %v3932 = vpack.c.bf16 %v3892, %v3888
    %v3933 = vpack.c.bf16 %v3893, %v3889
    %v3934 = vpack.c.bf16 %v3894, %v3890
    %v3935 = vpack.c.bf16 %v3899, %v3895
    %v3936 = vpack.c.bf16 %v3900, %v3896
    %v3937 = vpack.c.bf16 %v3901, %v3897
    %v3938 = vpack.c.bf16 %v3902, %v3898
    %v3939 = vpack.c.bf16 %v3907, %v3903
    %v3940 = vpack.c.bf16 %v3908, %v3904
    %v3941 = vpack.c.bf16 %v3909, %v3905
    %v3942 = vpack.c.bf16 %v3910, %v3906
    %3943 = vmatprep.subr.bf16.mxu0 0
    %3944 = vmatpush1.bf16.msra.mxu0 %v187
    %3945 = vmatprep.subr.bf16.mxu0 0
    %3946 = vmatpush1.bf16.msra.mxu0 %v188
    %3947 = vmatprep.subr.bf16.mxu0 0
    %3948 = vmatpush1.bf16.msra.mxu0 %v189
    %3949 = vmatprep.subr.bf16.mxu0 0
    %3950 = vmatpush1.bf16.msra.mxu0 %v190
    %3951 = vmatprep.subr.bf16.mxu0 0
    %3952 = vmatpush1.bf16.msra.mxu0 %v191
    %3953 = vmatprep.subr.bf16.mxu0 0
    %3954 = vmatpush1.bf16.msra.mxu0 %v192
    %3955 = vmatprep.subr.bf16.mxu0 0
    %3956 = vmatpush1.bf16.msra.mxu0 %v193
    %3957 = vmatprep.subr.bf16.mxu0 0
    %3958 = vmatpush1.bf16.msra.mxu0 %v194
    %3959 = vmatprep.subr.bf16.mxu0 0
    %3960 = vmatpush1.bf16.msra.mxu0 %v195
    %3961 = vmatprep.subr.bf16.mxu0 0
    %3962 = vmatpush1.bf16.msra.mxu0 %v196
    %3963 = vmatprep.subr.bf16.mxu0 0
    %3964 = vmatpush1.bf16.msra.mxu0 %v197
    %3965 = vmatprep.subr.bf16.mxu0 0
    %3966 = vmatpush1.bf16.msra.mxu0 %v198
    %3967 = vmatprep.subr.bf16.mxu0 0
    %3968 = vmatpush1.bf16.msra.mxu0 %v199
    %3969 = vmatprep.subr.bf16.mxu0 0
    %3970 = vmatpush1.bf16.msra.mxu0 %v200
    %3971 = vmatprep.subr.bf16.mxu0 0
    %3972 = vmatpush1.bf16.msra.mxu0 %v201
    %3973 = vmatprep.subr.bf16.mxu0 0
    %3974 = vmatpush1.bf16.msra.mxu0 %v202
    %3975 = vmatprep.mubr.bf16.mxu0 %v3912
    %3976 = vmatmul.mubr.bf16.gmra.mrb[0].mxu0 %v3911
    %v3977 = vpop.f32.mrb[0].mxu0
    %v3978 = vadd.f32 0.0, %v3977
    %v3979 = vpop.f32.mrb[0].mxu0
    %v3980 = vpop.f32.mrb[0].mxu0
    %v3981 = vadd.f32 0.0, %v3980
    %v3982 = vpop.f32.mrb[0].mxu0
    %3983 = vmatprep.mubr.bf16.mxu0 %v3916
    %3984 = vmatmul.mubr.bf16.gmra.mrb[0].mxu0 %v3915
    %v3985 = vpop.f32.mrb[0].mxu0
    %v3986 = vadd.f32 0.0, %v3985
    %v3987 = vpop.f32.mrb[0].mxu0
    %v3988 = vpop.f32.mrb[0].mxu0
    %v3989 = vadd.f32 0.0, %v3988
    %v3990 = vpop.f32.mrb[0].mxu0
    %3991 = vmatprep.mubr.bf16.mxu0 %v3920
    %3992 = vmatmul.mubr.bf16.gmra.mrb[0].mxu0 %v3919
    %v3993 = vpop.f32.mrb[0].mxu0
    %v3994 = vadd.f32 0.0, %v3993
    %v3995 = vpop.f32.mrb[0].mxu0
    %v3996 = vpop.f32.mrb[0].mxu0
    %v3997 = vadd.f32 0.0, %v3996
    %v3998 = vpop.f32.mrb[0].mxu0
    %3999 = vmatprep.mubr.bf16.mxu0 %v3924
    %4000 = vmatmul.mubr.bf16.gmra.mrb[0].mxu0 %v3923
    %v4001 = vpop.f32.mrb[0].mxu0
    %v4002 = vadd.f32 0.0, %v4001
    %v4003 = vpop.f32.mrb[0].mxu0
    %v4004 = vpop.f32.mrb[0].mxu0
    %v4005 = vadd.f32 0.0, %v4004
    %v4006 = vpop.f32.mrb[0].mxu0
    %4007 = vmatprep.mubr.bf16.mxu0 %v3928
    %4008 = vmatmul.mubr.bf16.gmra.mrb[0].mxu0 %v3927
    %v4009 = vpop.f32.mrb[0].mxu0
    %v4010 = vadd.f32 0.0, %v4009
    %v4011 = vpop.f32.mrb[0].mxu0
    %v4012 = vpop.f32.mrb[0].mxu0
    %v4013 = vadd.f32 0.0, %v4012
    %v4014 = vpop.f32.mrb[0].mxu0
    %4015 = vmatprep.mubr.bf16.mxu0 %v3932
    %4016 = vmatmul.mubr.bf16.gmra.mrb[0].mxu0 %v3931
    %v4017 = vpop.f32.mrb[0].mxu0
    %v4018 = vadd.f32 0.0, %v4017
    %v4019 = vpop.f32.mrb[0].mxu0
    %v4020 = vpop.f32.mrb[0].mxu0
    %v4021 = vadd.f32 0.0, %v4020
    %v4022 = vpop.f32.mrb[0].mxu0
    %4023 = vmatprep.mubr.bf16.mxu0 %v3936
    %4024 = vmatmul.mubr.bf16.gmra.mrb[0].mxu0 %v3935
    %v4025 = vpop.f32.mrb[0].mxu0
    %v4026 = vadd.f32 0.0, %v4025
    %v4027 = vpop.f32.mrb[0].mxu0
    %v4028 = vpop.f32.mrb[0].mxu0
    %v4029 = vadd.f32 0.0, %v4028
    %v4030 = vpop.f32.mrb[0].mxu0
    %4031 = vmatprep.mubr.bf16.mxu0 %v3940
    %4032 = vmatmul.mubr.bf16.gmra.mrb[0].mxu0 %v3939
    %v4033 = vpop.f32.mrb[0].mxu0
    %v4034 = vadd.f32 0.0, %v4033
    %v4035 = vpop.f32.mrb[0].mxu0
    %v4036 = vpop.f32.mrb[0].mxu0
    %v4037 = vadd.f32 0.0, %v4036
    %v4038 = vpop.f32.mrb[0].mxu0
    %4039 = vdwg.mxu0
    %4040 = vmatprep.subr.bf16.mxu0 0
    %4041 = vmatpush1.bf16.msra.mxu0 %v203
    %4042 = vmatprep.subr.bf16.mxu0 0
    %4043 = vmatpush1.bf16.msra.mxu0 %v204
    %4044 = vmatprep.subr.bf16.mxu0 0
    %4045 = vmatpush1.bf16.msra.mxu0 %v205
    %4046 = vmatprep.subr.bf16.mxu0 0
    %4047 = vmatpush1.bf16.msra.mxu0 %v206
    %4048 = vmatprep.subr.bf16.mxu0 0
    %4049 = vmatpush1.bf16.msra.mxu0 %v207
    %4050 = vmatprep.subr.bf16.mxu0 0
    %4051 = vmatpush1.bf16.msra.mxu0 %v208
    %4052 = vmatprep.subr.bf16.mxu0 0
    %4053 = vmatpush1.bf16.msra.mxu0 %v209
    %4054 = vmatprep.subr.bf16.mxu0 0
    %4055 = vmatpush1.bf16.msra.mxu0 %v210
    %4056 = vmatprep.subr.bf16.mxu0 0
    %4057 = vmatpush1.bf16.msra.mxu0 %v211
    %4058 = vmatprep.subr.bf16.mxu0 0
    %4059 = vmatpush1.bf16.msra.mxu0 %v212
    %4060 = vmatprep.subr.bf16.mxu0 0
    %4061 = vmatpush1.bf16.msra.mxu0 %v213
    %4062 = vmatprep.subr.bf16.mxu0 0
    %4063 = vmatpush1.bf16.msra.mxu0 %v214
    %4064 = vmatprep.subr.bf16.mxu0 0
    %4065 = vmatpush1.bf16.msra.mxu0 %v215
    %4066 = vmatprep.subr.bf16.mxu0 0
    %4067 = vmatpush1.bf16.msra.mxu0 %v216
    %4068 = vmatprep.subr.bf16.mxu0 0
    %4069 = vmatpush1.bf16.msra.mxu0 %v217
    %4070 = vmatprep.subr.bf16.mxu0 0
    %4071 = vmatpush1.bf16.msra.mxu0 %v218
    %4072 = vmatprep.mubr.bf16.mxu0 %v3914
    %4073 = vmatmul.mubr.bf16.gmra.mrb[0].mxu0 %v3913
    %v4074 = vpop.f32.mrb[0].mxu0
    %v4075 = vadd.f32 %v3978, %v4074
    %v4076 = vpop.f32.mrb[0].mxu0
    %v4077 = vpop.f32.mrb[0].mxu0
    %v4078 = vadd.f32 %v3981, %v4077
    %v4079 = vpop.f32.mrb[0].mxu0
    %4080 = vmatprep.mubr.bf16.mxu0 %v3918
    %4081 = vmatmul.mubr.bf16.gmra.mrb[0].mxu0 %v3917
    %v4082 = vpop.f32.mrb[0].mxu0
    %v4083 = vadd.f32 %v3986, %v4082
    %v4084 = vpop.f32.mrb[0].mxu0
    %v4085 = vpop.f32.mrb[0].mxu0
    %v4086 = vadd.f32 %v3989, %v4085
    %v4087 = vpop.f32.mrb[0].mxu0
    %4088 = vmatprep.mubr.bf16.mxu0 %v3922
    %4089 = vmatmul.mubr.bf16.gmra.mrb[0].mxu0 %v3921
    %v4090 = vpop.f32.mrb[0].mxu0
    %v4091 = vadd.f32 %v3994, %v4090
    %v4092 = vpop.f32.mrb[0].mxu0
    %v4093 = vpop.f32.mrb[0].mxu0
    %v4094 = vadd.f32 %v3997, %v4093
    %v4095 = vpop.f32.mrb[0].mxu0
    %4096 = vmatprep.mubr.bf16.mxu0 %v3926
    %4097 = vmatmul.mubr.bf16.gmra.mrb[0].mxu0 %v3925
    %v4098 = vpop.f32.mrb[0].mxu0
    %v4099 = vadd.f32 %v4002, %v4098
    %v4100 = vpop.f32.mrb[0].mxu0
    %v4101 = vpop.f32.mrb[0].mxu0
    %v4102 = vadd.f32 %v4005, %v4101
    %v4103 = vpop.f32.mrb[0].mxu0
    %4104 = vmatprep.mubr.bf16.mxu0 %v3930
    %4105 = vmatmul.mubr.bf16.gmra.mrb[0].mxu0 %v3929
    %v4106 = vpop.f32.mrb[0].mxu0
    %v4107 = vadd.f32 %v4010, %v4106
    %v4108 = vpop.f32.mrb[0].mxu0
    %v4109 = vpop.f32.mrb[0].mxu0
    %v4110 = vadd.f32 %v4013, %v4109
    %v4111 = vpop.f32.mrb[0].mxu0
    %4112 = vmatprep.mubr.bf16.mxu0 %v3934
    %4113 = vmatmul.mubr.bf16.gmra.mrb[0].mxu0 %v3933
    %v4114 = vpop.f32.mrb[0].mxu0
    %v4115 = vadd.f32 %v4018, %v4114
    %v4116 = vpop.f32.mrb[0].mxu0
    %v4117 = vpop.f32.mrb[0].mxu0
    %v4118 = vadd.f32 %v4021, %v4117
    %v4119 = vpop.f32.mrb[0].mxu0
    %4120 = vmatprep.mubr.bf16.mxu0 %v3938
    %4121 = vmatmul.mubr.bf16.gmra.mrb[0].mxu0 %v3937
    %v4122 = vpop.f32.mrb[0].mxu0
    %v4123 = vadd.f32 %v4026, %v4122
    %v4124 = vpop.f32.mrb[0].mxu0
    %v4125 = vpop.f32.mrb[0].mxu0
    %v4126 = vadd.f32 %v4029, %v4125
    %v4127 = vpop.f32.mrb[0].mxu0
    %4128 = vmatprep.mubr.bf16.mxu0 %v3942
    %4129 = vmatmul.mubr.bf16.gmra.mrb[0].mxu0 %v3941
    %v4130 = vpop.f32.mrb[0].mxu0
    %v4131 = vadd.f32 %v4034, %v4130
    %v4132 = vpop.f32.mrb[0].mxu0
    %v4133 = vpop.f32.mrb[0].mxu0
    %v4134 = vadd.f32 %v4037, %v4133
    %v4135 = vpop.f32.mrb[0].mxu0
    %4136 = vdwg.mxu0
    %v4137 = vpack.c.bf16 %v4078, %v4075
    %v4138 = vpack.c.bf16 %v4086, %v4083
    %v4139 = vpack.c.bf16 %v4094, %v4091
    %v4140 = vpack.c.bf16 %v4102, %v4099
    %v4141 = vpack.c.bf16 %v4110, %v4107
    %v4142 = vpack.c.bf16 %v4118, %v4115
    %v4143 = vpack.c.bf16 %v4126, %v4123
    %v4144 = vpack.c.bf16 %v4134, %v4131
    %s4145 = scalar_lea.vmem [#allocation5], 384
    %v4146 = vld [vmem:[%s4145] sm:$0xf]
    %v4147 = vld [vmem:[%s4145 + $0x4] sm:$0xf]
    %v4148 = vld [vmem:[%s4145 + $0x8] sm:$0xf]
    %v4149 = vld [vmem:[%s4145 + $0xc] sm:$0xf]
    %v4150 = vld [vmem:[%s4145 + $0x10] sm:$0xf]
    %v4151 = vld [vmem:[%s4145 + $0x14] sm:$0xf]
    %v4152 = vld [vmem:[%s4145 + $0x18] sm:$0xf]
    %v4153 = vld [vmem:[%s4145 + $0x1c] sm:$0xf]
    %v4154 = vld [vmem:[%s4145 + $0x20] sm:$0xf]
    %v4155 = vld [vmem:[%s4145 + $0x24] sm:$0xf]
    %v4156 = vld [vmem:[%s4145 + $0x28] sm:$0xf]
    %v4157 = vld [vmem:[%s4145 + $0x2c] sm:$0xf]
    %v4158 = vld [vmem:[%s4145 + $0x30] sm:$0xf]
    %v4159 = vld [vmem:[%s4145 + $0x34] sm:$0xf]
    %v4160 = vld [vmem:[%s4145 + $0x38] sm:$0xf]
    %v4161 = vld [vmem:[%s4145 + $0x3c] sm:$0xf]
    %v4178 = vunpack.c.l.b16 %v4146
    %v4179 = vunpack.c.l.b16 %v4147
    %v4180 = vunpack.c.l.b16 %v4148
    %v4181 = vunpack.c.l.b16 %v4149
    %v4182 = vunpack.c.l.b16 %v4150
    %v4183 = vunpack.c.l.b16 %v4151
    %v4184 = vunpack.c.l.b16 %v4152
    %v4185 = vunpack.c.l.b16 %v4153
    %v4186 = vunpack.c.l.b16 %v4154
    %v4187 = vunpack.c.l.b16 %v4155
    %v4188 = vunpack.c.l.b16 %v4156
    %v4189 = vunpack.c.l.b16 %v4157
    %v4190 = vunpack.c.l.b16 %v4158
    %v4191 = vunpack.c.l.b16 %v4159
    %v4192 = vunpack.c.l.b16 %v4160
    %v4193 = vunpack.c.l.b16 %v4161
    %v4194 = vpack.c.b16 %v4179, %v4178
    %v4195 = vpack.c.b16 %v4181, %v4180
    %v4196 = vpack.c.b16 %v4183, %v4182
    %v4197 = vpack.c.b16 %v4185, %v4184
    %v4198 = vpack.c.b16 %v4187, %v4186
    %v4199 = vpack.c.b16 %v4189, %v4188
    %v4200 = vpack.c.b16 %v4191, %v4190
    %v4201 = vpack.c.b16 %v4193, %v4192
    %4210 = vmatprep.subr.bf16.mxu0 0
    %4211 = vmatpush1.bf16.msra.mxu0 %v4194
    %4212 = vmatprep.subr.bf16.mxu0 0
    %4213 = vmatpush1.bf16.msra.mxu0 %v4195
    %4214 = vmatprep.subr.bf16.mxu0 0
    %4215 = vmatpush1.bf16.msra.mxu0 %v4196
    %4216 = vmatprep.subr.bf16.mxu0 0
    %4217 = vmatpush1.bf16.msra.mxu0 %v4197
    %4218 = vmatprep.subr.bf16.mxu0 0
    %4219 = vmatpush1.bf16.msra.mxu0 %v4198
    %4220 = vmatprep.subr.bf16.mxu0 0
    %4221 = vmatpush1.bf16.msra.mxu0 %v4199
    %4222 = vmatprep.subr.bf16.mxu0 0
    %4223 = vmatpush1.bf16.msra.mxu0 %v4200
    %4224 = vmatprep.subr.bf16.mxu0 0
    %4225 = vmatpush1.bf16.msra.mxu0 %v4201
    %4226 = vmatprep.subr.bf16.mxu0 0
    %4227 = vmatpush1.bf16.msra.mxu0 0
    %4228 = vmatprep.subr.bf16.mxu0 0
    %4229 = vmatpush1.bf16.msra.mxu0 0
    %4230 = vmatprep.subr.bf16.mxu0 0
    %4231 = vmatpush1.bf16.msra.mxu0 0
    %4232 = vmatprep.subr.bf16.mxu0 0
    %4233 = vmatpush1.bf16.msra.mxu0 0
    %4234 = vmatprep.subr.bf16.mxu0 0
    %4235 = vmatpush1.bf16.msra.mxu0 0
    %4236 = vmatprep.subr.bf16.mxu0 0
    %4237 = vmatpush1.bf16.msra.mxu0 0
    %4238 = vmatprep.subr.bf16.mxu0 0
    %4239 = vmatpush1.bf16.msra.mxu0 0
    %4240 = vmatprep.subr.bf16.mxu0 0
    %4241 = vmatpush1.bf16.msra.mxu0 0
    %4242 = vmatprep.mubr.bf16.mxu0 0
    %4243 = vmatmul.mubr.bf16.gmra.mrb[0].mxu0 %v4137
    %v4244 = vpop.f32.mrb[0].mxu0
    %v4245 = vadd.f32 0.0, %v4244
    %v4246 = vpop.f32.mrb[0].mxu0
    %v4247 = vpop.f32.mrb[0].mxu0
    %v4248 = vadd.f32 0.0, %v4247
    %v4249 = vpop.f32.mrb[0].mxu0
    %4250 = vmatprep.mubr.bf16.mxu0 0
    %4251 = vmatmul.mubr.bf16.gmra.mrb[0].mxu0 %v4138
    %v4252 = vpop.f32.mrb[0].mxu0
    %v4253 = vadd.f32 0.0, %v4252
    %v4254 = vpop.f32.mrb[0].mxu0
    %v4255 = vpop.f32.mrb[0].mxu0
    %v4256 = vadd.f32 0.0, %v4255
    %v4257 = vpop.f32.mrb[0].mxu0
    %4258 = vmatprep.mubr.bf16.mxu0 0
    %4259 = vmatmul.mubr.bf16.gmra.mrb[0].mxu0 %v4139
    %v4260 = vpop.f32.mrb[0].mxu0
    %v4261 = vadd.f32 0.0, %v4260
    %v4262 = vpop.f32.mrb[0].mxu0
    %v4263 = vpop.f32.mrb[0].mxu0
    %v4264 = vadd.f32 0.0, %v4263
    %v4265 = vpop.f32.mrb[0].mxu0
    %4266 = vmatprep.mubr.bf16.mxu0 0
    %4267 = vmatmul.mubr.bf16.gmra.mrb[0].mxu0 %v4140
    %v4268 = vpop.f32.mrb[0].mxu0
    %v4269 = vadd.f32 0.0, %v4268
    %v4270 = vpop.f32.mrb[0].mxu0
    %v4271 = vpop.f32.mrb[0].mxu0
    %v4272 = vadd.f32 0.0, %v4271
    %v4273 = vpop.f32.mrb[0].mxu0
    %4274 = vmatprep.mubr.bf16.mxu0 0
    %4275 = vmatmul.mubr.bf16.gmra.mrb[0].mxu0 %v4141
    %v4276 = vpop.f32.mrb[0].mxu0
    %v4277 = vadd.f32 0.0, %v4276
    %v4278 = vpop.f32.mrb[0].mxu0
    %v4279 = vpop.f32.mrb[0].mxu0
    %v4280 = vadd.f32 0.0, %v4279
    %v4281 = vpop.f32.mrb[0].mxu0
    %4282 = vmatprep.mubr.bf16.mxu0 0
    %4283 = vmatmul.mubr.bf16.gmra.mrb[0].mxu0 %v4142
    %v4284 = vpop.f32.mrb[0].mxu0
    %v4285 = vadd.f32 0.0, %v4284
    %v4286 = vpop.f32.mrb[0].mxu0
    %v4287 = vpop.f32.mrb[0].mxu0
    %v4288 = vadd.f32 0.0, %v4287
    %v4289 = vpop.f32.mrb[0].mxu0
    %4290 = vmatprep.mubr.bf16.mxu0 0
    %4291 = vmatmul.mubr.bf16.gmra.mrb[0].mxu0 %v4143
    %v4292 = vpop.f32.mrb[0].mxu0
    %v4293 = vadd.f32 0.0, %v4292
    %v4294 = vpop.f32.mrb[0].mxu0
    %v4295 = vpop.f32.mrb[0].mxu0
    %v4296 = vadd.f32 0.0, %v4295
    %v4297 = vpop.f32.mrb[0].mxu0
    %4298 = vmatprep.mubr.bf16.mxu0 0
    %4299 = vmatmul.mubr.bf16.gmra.mrb[0].mxu0 %v4144
    %v4300 = vpop.f32.mrb[0].mxu0
    %v4301 = vadd.f32 0.0, %v4300
    %v4302 = vpop.f32.mrb[0].mxu0
    %v4303 = vpop.f32.mrb[0].mxu0
    %v4304 = vadd.f32 0.0, %v4303
    %v4305 = vpop.f32.mrb[0].mxu0
    %4306 = vdwg.mxu0
    %v4307 = vadd.f32 %v3719, %v4245
    %v4308 = vadd.f32 %v3720, %v4248
    %v4309 = vadd.f32 %v3721, %v4253
    %v4310 = vadd.f32 %v3722, %v4256
    %v4311 = vadd.f32 %v3723, %v4261
    %v4312 = vadd.f32 %v3724, %v4264
    %v4313 = vadd.f32 %v3725, %v4269
    %v4314 = vadd.f32 %v3726, %v4272
    %v4315 = vadd.f32 %v3727, %v4277
    %v4316 = vadd.f32 %v3728, %v4280
    %v4317 = vadd.f32 %v3729, %v4285
    %v4318 = vadd.f32 %v3730, %v4288
    %v4319 = vadd.f32 %v3731, %v4293
    %v4320 = vadd.f32 %v3732, %v4296
    %v4321 = vadd.f32 %v3733, %v4301
    %v4322 = vadd.f32 %v3734, %v4304
    %4323 = vset.pattern.permute.xlu0 7
    %4324 = vperm.xlu0 %4323, %v224
    %v4325 = vpop.permute.xlu0 %4324
    %4326 = vset.pattern.permute.xlu0 7
    %4327 = vperm.xlu0 %4326, %v225
    %v4328 = vpop.permute.xlu0 %4327
    %4329 = vset.pattern.permute.xlu0 7
    %4330 = vperm.xlu0 %4329, %v226
    %v4331 = vpop.permute.xlu0 %4330
    %4332 = vset.pattern.permute.xlu0 7
    %4333 = vperm.xlu0 %4332, %v227
    %v4334 = vpop.permute.xlu0 %4333
    %4335 = vset.pattern.permute.xlu0 7
    %4336 = vperm.xlu0 %4335, %v228
    %v4337 = vpop.permute.xlu0 %4336
    %4338 = vset.pattern.permute.xlu0 7
    %4339 = vperm.xlu0 %4338, %v229
    %v4340 = vpop.permute.xlu0 %4339
    %4341 = vset.pattern.permute.xlu0 7
    %4342 = vperm.xlu0 %4341, %v230
    %v4343 = vpop.permute.xlu0 %4342
    %4344 = vset.pattern.permute.xlu0 7
    %4345 = vperm.xlu0 %4344, %v231
    %v4346 = vpop.permute.xlu0 %4345
    %4347 = vset.pattern.permute.xlu0 7
    %4348 = vperm.xlu0 %4347, %v232
    %v4349 = vpop.permute.xlu0 %4348
    %4350 = vset.pattern.permute.xlu0 7
    %4351 = vperm.xlu0 %4350, %v233
    %v4352 = vpop.permute.xlu0 %4351
    %4353 = vset.pattern.permute.xlu0 7
    %4354 = vperm.xlu0 %4353, %v234
    %v4355 = vpop.permute.xlu0 %4354
    %4356 = vset.pattern.permute.xlu0 7
    %4357 = vperm.xlu0 %4356, %v235
    %v4358 = vpop.permute.xlu0 %4357
    %4359 = vset.pattern.permute.xlu0 7
    %4360 = vperm.xlu0 %4359, %v236
    %v4361 = vpop.permute.xlu0 %4360
    %4362 = vset.pattern.permute.xlu0 7
    %4363 = vperm.xlu0 %4362, %v237
    %v4364 = vpop.permute.xlu0 %4363
    %4365 = vset.pattern.permute.xlu0 7
    %4366 = vperm.xlu0 %4365, %v238
    %v4367 = vpop.permute.xlu0 %4366
    %4368 = vset.pattern.permute.xlu0 7
    %4369 = vperm.xlu0 %4368, %v239
    %v4370 = vpop.permute.xlu0 %4369
    %vm4371 = vcmp.eq.s32.totalorder %v220, %v4325
    %vm4372 = vcmp.eq.s32.totalorder %v221, %v4325
    %vm4373 = vcmp.eq.s32.totalorder %v222, %v4325
    %vm4374 = vcmp.eq.s32.totalorder %v223, %v4325
    %vm4375 = vcmp.eq.s32.totalorder %v220, %v4328
    %vm4376 = vcmp.eq.s32.totalorder %v221, %v4328
    %vm4377 = vcmp.eq.s32.totalorder %v222, %v4328
    %vm4378 = vcmp.eq.s32.totalorder %v223, %v4328
    %vm4379 = vcmp.eq.s32.totalorder %v220, %v4331
    %vm4380 = vcmp.eq.s32.totalorder %v221, %v4331
    %vm4381 = vcmp.eq.s32.totalorder %v222, %v4331
    %vm4382 = vcmp.eq.s32.totalorder %v223, %v4331
    %vm4383 = vcmp.eq.s32.totalorder %v220, %v4334
    %vm4384 = vcmp.eq.s32.totalorder %v221, %v4334
    %vm4385 = vcmp.eq.s32.totalorder %v222, %v4334
    %vm4386 = vcmp.eq.s32.totalorder %v223, %v4334
    %vm4387 = vcmp.eq.s32.totalorder %v220, %v4337
    %vm4388 = vcmp.eq.s32.totalorder %v221, %v4337
    %vm4389 = vcmp.eq.s32.totalorder %v222, %v4337
    %vm4390 = vcmp.eq.s32.totalorder %v223, %v4337
    %vm4391 = vcmp.eq.s32.totalorder %v220, %v4340
    %vm4392 = vcmp.eq.s32.totalorder %v221, %v4340
    %vm4393 = vcmp.eq.s32.totalorder %v222, %v4340
    %vm4394 = vcmp.eq.s32.totalorder %v223, %v4340
    %vm4395 = vcmp.eq.s32.totalorder %v220, %v4343
    %vm4396 = vcmp.eq.s32.totalorder %v221, %v4343
    %vm4397 = vcmp.eq.s32.totalorder %v222, %v4343
    %vm4398 = vcmp.eq.s32.totalorder %v223, %v4343
    %vm4399 = vcmp.eq.s32.totalorder %v220, %v4346
    %vm4400 = vcmp.eq.s32.totalorder %v221, %v4346
    %vm4401 = vcmp.eq.s32.totalorder %v222, %v4346
    %vm4402 = vcmp.eq.s32.totalorder %v223, %v4346
    %vm4403 = vcmp.eq.s32.totalorder %v220, %v4349
    %vm4404 = vcmp.eq.s32.totalorder %v221, %v4349
    %vm4405 = vcmp.eq.s32.totalorder %v222, %v4349
    %vm4406 = vcmp.eq.s32.totalorder %v223, %v4349
    %vm4407 = vcmp.eq.s32.totalorder %v220, %v4352
    %vm4408 = vcmp.eq.s32.totalorder %v221, %v4352
    %vm4409 = vcmp.eq.s32.totalorder %v222, %v4352
    %vm4410 = vcmp.eq.s32.totalorder %v223, %v4352
    %vm4411 = vcmp.eq.s32.totalorder %v220, %v4355
    %vm4412 = vcmp.eq.s32.totalorder %v221, %v4355
    %vm4413 = vcmp.eq.s32.totalorder %v222, %v4355
    %vm4414 = vcmp.eq.s32.totalorder %v223, %v4355
    %vm4415 = vcmp.eq.s32.totalorder %v220, %v4358
    %vm4416 = vcmp.eq.s32.totalorder %v221, %v4358
    %vm4417 = vcmp.eq.s32.totalorder %v222, %v4358
    %vm4418 = vcmp.eq.s32.totalorder %v223, %v4358
    %vm4419 = vcmp.eq.s32.totalorder %v220, %v4361
    %vm4420 = vcmp.eq.s32.totalorder %v221, %v4361
    %vm4421 = vcmp.eq.s32.totalorder %v222, %v4361
    %vm4422 = vcmp.eq.s32.totalorder %v223, %v4361
    %vm4423 = vcmp.eq.s32.totalorder %v220, %v4364
    %vm4424 = vcmp.eq.s32.totalorder %v221, %v4364
    %vm4425 = vcmp.eq.s32.totalorder %v222, %v4364
    %vm4426 = vcmp.eq.s32.totalorder %v223, %v4364
    %vm4427 = vcmp.eq.s32.totalorder %v220, %v4367
    %vm4428 = vcmp.eq.s32.totalorder %v221, %v4367
    %vm4429 = vcmp.eq.s32.totalorder %v222, %v4367
    %vm4430 = vcmp.eq.s32.totalorder %v223, %v4367
    %vm4431 = vcmp.eq.s32.totalorder %v220, %v4370
    %vm4432 = vcmp.eq.s32.totalorder %v221, %v4370
    %vm4433 = vcmp.eq.s32.totalorder %v222, %v4370
    %vm4434 = vcmp.eq.s32.totalorder %v223, %v4370
    %v4435 = vsel %vm4371, 1.0, 0.0
    %v4436 = vsel %vm4372, 1.0, 0.0
    %v4437 = vsel %vm4373, 1.0, 0.0
    %v4438 = vsel %vm4374, 1.0, 0.0
    %v4439 = vsel %vm4375, 1.0, 0.0
    %v4440 = vsel %vm4376, 1.0, 0.0
    %v4441 = vsel %vm4377, 1.0, 0.0
    %v4442 = vsel %vm4378, 1.0, 0.0
    %v4443 = vsel %vm4379, 1.0, 0.0
    %v4444 = vsel %vm4380, 1.0, 0.0
    %v4445 = vsel %vm4381, 1.0, 0.0
    %v4446 = vsel %vm4382, 1.0, 0.0
    %v4447 = vsel %vm4383, 1.0, 0.0
    %v4448 = vsel %vm4384, 1.0, 0.0
    %v4449 = vsel %vm4385, 1.0, 0.0
    %v4450 = vsel %vm4386, 1.0, 0.0
    %v4451 = vsel %vm4387, 1.0, 0.0
    %v4452 = vsel %vm4388, 1.0, 0.0
    %v4453 = vsel %vm4389, 1.0, 0.0
    %v4454 = vsel %vm4390, 1.0, 0.0
    %v4455 = vsel %vm4391, 1.0, 0.0
    %v4456 = vsel %vm4392, 1.0, 0.0
    %v4457 = vsel %vm4393, 1.0, 0.0
    %v4458 = vsel %vm4394, 1.0, 0.0
    %v4459 = vsel %vm4395, 1.0, 0.0
    %v4460 = vsel %vm4396, 1.0, 0.0
    %v4461 = vsel %vm4397, 1.0, 0.0
    %v4462 = vsel %vm4398, 1.0, 0.0
    %v4463 = vsel %vm4399, 1.0, 0.0
    %v4464 = vsel %vm4400, 1.0, 0.0
    %v4465 = vsel %vm4401, 1.0, 0.0
    %v4466 = vsel %vm4402, 1.0, 0.0
    %v4467 = vsel %vm4403, 1.0, 0.0
    %v4468 = vsel %vm4404, 1.0, 0.0
    %v4469 = vsel %vm4405, 1.0, 0.0
    %v4470 = vsel %vm4406, 1.0, 0.0
    %v4471 = vsel %vm4407, 1.0, 0.0
    %v4472 = vsel %vm4408, 1.0, 0.0
    %v4473 = vsel %vm4409, 1.0, 0.0
    %v4474 = vsel %vm4410, 1.0, 0.0
    %v4475 = vsel %vm4411, 1.0, 0.0
    %v4476 = vsel %vm4412, 1.0, 0.0
    %v4477 = vsel %vm4413, 1.0, 0.0
    %v4478 = vsel %vm4414, 1.0, 0.0
    %v4479 = vsel %vm4415, 1.0, 0.0
    %v4480 = vsel %vm4416, 1.0, 0.0
    %v4481 = vsel %vm4417, 1.0, 0.0
    %v4482 = vsel %vm4418, 1.0, 0.0
    %v4483 = vsel %vm4419, 1.0, 0.0
    %v4484 = vsel %vm4420, 1.0, 0.0
    %v4485 = vsel %vm4421, 1.0, 0.0
    %v4486 = vsel %vm4422, 1.0, 0.0
    %v4487 = vsel %vm4423, 1.0, 0.0
    %v4488 = vsel %vm4424, 1.0, 0.0
    %v4489 = vsel %vm4425, 1.0, 0.0
    %v4490 = vsel %vm4426, 1.0, 0.0
    %v4491 = vsel %vm4427, 1.0, 0.0
    %v4492 = vsel %vm4428, 1.0, 0.0
    %v4493 = vsel %vm4429, 1.0, 0.0
    %v4494 = vsel %vm4430, 1.0, 0.0
    %v4495 = vsel %vm4431, 1.0, 0.0
    %v4496 = vsel %vm4432, 1.0, 0.0
    %v4497 = vsel %vm4433, 1.0, 0.0
    %v4498 = vsel %vm4434, 1.0, 0.0
    %v4499 = vpack.c.bf16 %v4439, %v4435
    %v4500 = vpack.c.bf16 %v4440, %v4436
    %v4501 = vpack.c.bf16 %v4441, %v4437
    %v4502 = vpack.c.bf16 %v4442, %v4438
    %v4503 = vpack.c.bf16 %v4447, %v4443
    %v4504 = vpack.c.bf16 %v4448, %v4444
    %v4505 = vpack.c.bf16 %v4449, %v4445
    %v4506 = vpack.c.bf16 %v4450, %v4446
    %v4507 = vpack.c.bf16 %v4455, %v4451
    %v4508 = vpack.c.bf16 %v4456, %v4452
    %v4509 = vpack.c.bf16 %v4457, %v4453
    %v4510 = vpack.c.bf16 %v4458, %v4454
    %v4511 = vpack.c.bf16 %v4463, %v4459
    %v4512 = vpack.c.bf16 %v4464, %v4460
    %v4513 = vpack.c.bf16 %v4465, %v4461
    %v4514 = vpack.c.bf16 %v4466, %v4462
    %v4515 = vpack.c.bf16 %v4471, %v4467
    %v4516 = vpack.c.bf16 %v4472, %v4468
    %v4517 = vpack.c.bf16 %v4473, %v4469
    %v4518 = vpack.c.bf16 %v4474, %v4470
    %v4519 = vpack.c.bf16 %v4479, %v4475
    %v4520 = vpack.c.bf16 %v4480, %v4476
    %v4521 = vpack.c.bf16 %v4481, %v4477
    %v4522 = vpack.c.bf16 %v4482, %v4478
    %v4523 = vpack.c.bf16 %v4487, %v4483
    %v4524 = vpack.c.bf16 %v4488, %v4484
    %v4525 = vpack.c.bf16 %v4489, %v4485
    %v4526 = vpack.c.bf16 %v4490, %v4486
    %v4527 = vpack.c.bf16 %v4495, %v4491
    %v4528 = vpack.c.bf16 %v4496, %v4492
    %v4529 = vpack.c.bf16 %v4497, %v4493
    %v4530 = vpack.c.bf16 %v4498, %v4494
    %4531 = vmatprep.subr.bf16.mxu0 0
    %4532 = vmatpush1.bf16.msra.mxu0 %v187
    %4533 = vmatprep.subr.bf16.mxu0 0
    %4534 = vmatpush1.bf16.msra.mxu0 %v188
    %4535 = vmatprep.subr.bf16.mxu0 0
    %4536 = vmatpush1.bf16.msra.mxu0 %v189
    %4537 = vmatprep.subr.bf16.mxu0 0
    %4538 = vmatpush1.bf16.msra.mxu0 %v190
    %4539 = vmatprep.subr.bf16.mxu0 0
    %4540 = vmatpush1.bf16.msra.mxu0 %v191
    %4541 = vmatprep.subr.bf16.mxu0 0
    %4542 = vmatpush1.bf16.msra.mxu0 %v192
    %4543 = vmatprep.subr.bf16.mxu0 0
    %4544 = vmatpush1.bf16.msra.mxu0 %v193
    %4545 = vmatprep.subr.bf16.mxu0 0
    %4546 = vmatpush1.bf16.msra.mxu0 %v194
    %4547 = vmatprep.subr.bf16.mxu0 0
    %4548 = vmatpush1.bf16.msra.mxu0 %v195
    %4549 = vmatprep.subr.bf16.mxu0 0
    %4550 = vmatpush1.bf16.msra.mxu0 %v196
    %4551 = vmatprep.subr.bf16.mxu0 0
    %4552 = vmatpush1.bf16.msra.mxu0 %v197
    %4553 = vmatprep.subr.bf16.mxu0 0
    %4554 = vmatpush1.bf16.msra.mxu0 %v198
    %4555 = vmatprep.subr.bf16.mxu0 0
    %4556 = vmatpush1.bf16.msra.mxu0 %v199
    %4557 = vmatprep.subr.bf16.mxu0 0
    %4558 = vmatpush1.bf16.msra.mxu0 %v200
    %4559 = vmatprep.subr.bf16.mxu0 0
    %4560 = vmatpush1.bf16.msra.mxu0 %v201
    %4561 = vmatprep.subr.bf16.mxu0 0
    %4562 = vmatpush1.bf16.msra.mxu0 %v202
    %4563 = vmatprep.mubr.bf16.mxu0 %v4500
    %4564 = vmatmul.mubr.bf16.gmra.mrb[0].mxu0 %v4499
    %v4565 = vpop.f32.mrb[0].mxu0
    %v4566 = vadd.f32 0.0, %v4565
    %v4567 = vpop.f32.mrb[0].mxu0
    %v4568 = vpop.f32.mrb[0].mxu0
    %v4569 = vadd.f32 0.0, %v4568
    %v4570 = vpop.f32.mrb[0].mxu0
    %4571 = vmatprep.mubr.bf16.mxu0 %v4504
    %4572 = vmatmul.mubr.bf16.gmra.mrb[0].mxu0 %v4503
    %v4573 = vpop.f32.mrb[0].mxu0
    %v4574 = vadd.f32 0.0, %v4573
    %v4575 = vpop.f32.mrb[0].mxu0
    %v4576 = vpop.f32.mrb[0].mxu0
    %v4577 = vadd.f32 0.0, %v4576
    %v4578 = vpop.f32.mrb[0].mxu0
    %4579 = vmatprep.mubr.bf16.mxu0 %v4508
    %4580 = vmatmul.mubr.bf16.gmra.mrb[0].mxu0 %v4507
    %v4581 = vpop.f32.mrb[0].mxu0
    %v4582 = vadd.f32 0.0, %v4581
    %v4583 = vpop.f32.mrb[0].mxu0
    %v4584 = vpop.f32.mrb[0].mxu0
    %v4585 = vadd.f32 0.0, %v4584
    %v4586 = vpop.f32.mrb[0].mxu0
    %4587 = vmatprep.mubr.bf16.mxu0 %v4512
    %4588 = vmatmul.mubr.bf16.gmra.mrb[0].mxu0 %v4511
    %v4589 = vpop.f32.mrb[0].mxu0
    %v4590 = vadd.f32 0.0, %v4589
    %v4591 = vpop.f32.mrb[0].mxu0
    %v4592 = vpop.f32.mrb[0].mxu0
    %v4593 = vadd.f32 0.0, %v4592
    %v4594 = vpop.f32.mrb[0].mxu0
    %4595 = vmatprep.mubr.bf16.mxu0 %v4516
    %4596 = vmatmul.mubr.bf16.gmra.mrb[0].mxu0 %v4515
    %v4597 = vpop.f32.mrb[0].mxu0
    %v4598 = vadd.f32 0.0, %v4597
    %v4599 = vpop.f32.mrb[0].mxu0
    %v4600 = vpop.f32.mrb[0].mxu0
    %v4601 = vadd.f32 0.0, %v4600
    %v4602 = vpop.f32.mrb[0].mxu0
    %4603 = vmatprep.mubr.bf16.mxu0 %v4520
    %4604 = vmatmul.mubr.bf16.gmra.mrb[0].mxu0 %v4519
    %v4605 = vpop.f32.mrb[0].mxu0
    %v4606 = vadd.f32 0.0, %v4605
    %v4607 = vpop.f32.mrb[0].mxu0
    %v4608 = vpop.f32.mrb[0].mxu0
    %v4609 = vadd.f32 0.0, %v4608
    %v4610 = vpop.f32.mrb[0].mxu0
    %4611 = vmatprep.mubr.bf16.mxu0 %v4524
    %4612 = vmatmul.mubr.bf16.gmra.mrb[0].mxu0 %v4523
    %v4613 = vpop.f32.mrb[0].mxu0
    %v4614 = vadd.f32 0.0, %v4613
    %v4615 = vpop.f32.mrb[0].mxu0
    %v4616 = vpop.f32.mrb[0].mxu0
    %v4617 = vadd.f32 0.0, %v4616
    %v4618 = vpop.f32.mrb[0].mxu0
    %4619 = vmatprep.mubr.bf16.mxu0 %v4528
    %4620 = vmatmul.mubr.bf16.gmra.mrb[0].mxu0 %v4527
    %v4621 = vpop.f32.mrb[0].mxu0
    %v4622 = vadd.f32 0.0, %v4621
    %v4623 = vpop.f32.mrb[0].mxu0
    %v4624 = vpop.f32.mrb[0].mxu0
    %v4625 = vadd.f32 0.0, %v4624
    %v4626 = vpop.f32.mrb[0].mxu0
    %4627 = vdwg.mxu0
    %4628 = vmatprep.subr.bf16.mxu0 0
    %4629 = vmatpush1.bf16.msra.mxu0 %v203
    %4630 = vmatprep.subr.bf16.mxu0 0
    %4631 = vmatpush1.bf16.msra.mxu0 %v204
    %4632 = vmatprep.subr.bf16.mxu0 0
    %4633 = vmatpush1.bf16.msra.mxu0 %v205
    %4634 = vmatprep.subr.bf16.mxu0 0
    %4635 = vmatpush1.bf16.msra.mxu0 %v206
    %4636 = vmatprep.subr.bf16.mxu0 0
    %4637 = vmatpush1.bf16.msra.mxu0 %v207
    %4638 = vmatprep.subr.bf16.mxu0 0
    %4639 = vmatpush1.bf16.msra.mxu0 %v208
    %4640 = vmatprep.subr.bf16.mxu0 0
    %4641 = vmatpush1.bf16.msra.mxu0 %v209
    %4642 = vmatprep.subr.bf16.mxu0 0
    %4643 = vmatpush1.bf16.msra.mxu0 %v210
    %4644 = vmatprep.subr.bf16.mxu0 0
    %4645 = vmatpush1.bf16.msra.mxu0 %v211
    %4646 = vmatprep.subr.bf16.mxu0 0
    %4647 = vmatpush1.bf16.msra.mxu0 %v212
    %4648 = vmatprep.subr.bf16.mxu0 0
    %4649 = vmatpush1.bf16.msra.mxu0 %v213
    %4650 = vmatprep.subr.bf16.mxu0 0
    %4651 = vmatpush1.bf16.msra.mxu0 %v214
    %4652 = vmatprep.subr.bf16.mxu0 0
    %4653 = vmatpush1.bf16.msra.mxu0 %v215
    %4654 = vmatprep.subr.bf16.mxu0 0
    %4655 = vmatpush1.bf16.msra.mxu0 %v216
    %4656 = vmatprep.subr.bf16.mxu0 0
    %4657 = vmatpush1.bf16.msra.mxu0 %v217
    %4658 = vmatprep.subr.bf16.mxu0 0
    %4659 = vmatpush1.bf16.msra.mxu0 %v218
    %4660 = vmatprep.mubr.bf16.mxu0 %v4502
    %4661 = vmatmul.mubr.bf16.gmra.mrb[0].mxu0 %v4501
    %v4662 = vpop.f32.mrb[0].mxu0
    %v4663 = vadd.f32 %v4566, %v4662
    %v4664 = vpop.f32.mrb[0].mxu0
    %v4665 = vpop.f32.mrb[0].mxu0
    %v4666 = vadd.f32 %v4569, %v4665
    %v4667 = vpop.f32.mrb[0].mxu0
    %4668 = vmatprep.mubr.bf16.mxu0 %v4506
    %4669 = vmatmul.mubr.bf16.gmra.mrb[0].mxu0 %v4505
    %v4670 = vpop.f32.mrb[0].mxu0
    %v4671 = vadd.f32 %v4574, %v4670
    %v4672 = vpop.f32.mrb[0].mxu0
    %v4673 = vpop.f32.mrb[0].mxu0
    %v4674 = vadd.f32 %v4577, %v4673
    %v4675 = vpop.f32.mrb[0].mxu0
    %4676 = vmatprep.mubr.bf16.mxu0 %v4510
    %4677 = vmatmul.mubr.bf16.gmra.mrb[0].mxu0 %v4509
    %v4678 = vpop.f32.mrb[0].mxu0
    %v4679 = vadd.f32 %v4582, %v4678
    %v4680 = vpop.f32.mrb[0].mxu0
    %v4681 = vpop.f32.mrb[0].mxu0
    %v4682 = vadd.f32 %v4585, %v4681
    %v4683 = vpop.f32.mrb[0].mxu0
    %4684 = vmatprep.mubr.bf16.mxu0 %v4514
    %4685 = vmatmul.mubr.bf16.gmra.mrb[0].mxu0 %v4513
    %v4686 = vpop.f32.mrb[0].mxu0
    %v4687 = vadd.f32 %v4590, %v4686
    %v4688 = vpop.f32.mrb[0].mxu0
    %v4689 = vpop.f32.mrb[0].mxu0
    %v4690 = vadd.f32 %v4593, %v4689
    %v4691 = vpop.f32.mrb[0].mxu0
    %4692 = vmatprep.mubr.bf16.mxu0 %v4518
    %4693 = vmatmul.mubr.bf16.gmra.mrb[0].mxu0 %v4517
    %v4694 = vpop.f32.mrb[0].mxu0
    %v4695 = vadd.f32 %v4598, %v4694
    %v4696 = vpop.f32.mrb[0].mxu0
    %v4697 = vpop.f32.mrb[0].mxu0
    %v4698 = vadd.f32 %v4601, %v4697
    %v4699 = vpop.f32.mrb[0].mxu0
    %4700 = vmatprep.mubr.bf16.mxu0 %v4522
    %4701 = vmatmul.mubr.bf16.gmra.mrb[0].mxu0 %v4521
    %v4702 = vpop.f32.mrb[0].mxu0
    %v4703 = vadd.f32 %v4606, %v4702
    %v4704 = vpop.f32.mrb[0].mxu0
    %v4705 = vpop.f32.mrb[0].mxu0
    %v4706 = vadd.f32 %v4609, %v4705
    %v4707 = vpop.f32.mrb[0].mxu0
    %4708 = vmatprep.mubr.bf16.mxu0 %v4526
    %4709 = vmatmul.mubr.bf16.gmra.mrb[0].mxu0 %v4525
    %v4710 = vpop.f32.mrb[0].mxu0
    %v4711 = vadd.f32 %v4614, %v4710
    %v4712 = vpop.f32.mrb[0].mxu0
    %v4713 = vpop.f32.mrb[0].mxu0
    %v4714 = vadd.f32 %v4617, %v4713
    %v4715 = vpop.f32.mrb[0].mxu0
    %4716 = vmatprep.mubr.bf16.mxu0 %v4530
    %4717 = vmatmul.mubr.bf16.gmra.mrb[0].mxu0 %v4529
    %v4718 = vpop.f32.mrb[0].mxu0
    %v4719 = vadd.f32 %v4622, %v4718
    %v4720 = vpop.f32.mrb[0].mxu0
    %v4721 = vpop.f32.mrb[0].mxu0
    %v4722 = vadd.f32 %v4625, %v4721
    %v4723 = vpop.f32.mrb[0].mxu0
    %4724 = vdwg.mxu0
    %v4725 = vpack.c.bf16 %v4666, %v4663
    %v4726 = vpack.c.bf16 %v4674, %v4671
    %v4727 = vpack.c.bf16 %v4682, %v4679
    %v4728 = vpack.c.bf16 %v4690, %v4687
    %v4729 = vpack.c.bf16 %v4698, %v4695
    %v4730 = vpack.c.bf16 %v4706, %v4703
    %v4731 = vpack.c.bf16 %v4714, %v4711
    %v4732 = vpack.c.bf16 %v4722, %v4719
    %s4733 = scalar_lea.vmem [#allocation5], 448
    %v4734 = vld [vmem:[%s4733] sm:$0xf]
    %v4735 = vld [vmem:[%s4733 + $0x4] sm:$0xf]
    %v4736 = vld [vmem:[%s4733 + $0x8] sm:$0xf]
    %v4737 = vld [vmem:[%s4733 + $0xc] sm:$0xf]
    %v4738 = vld [vmem:[%s4733 + $0x10] sm:$0xf]
    %v4739 = vld [vmem:[%s4733 + $0x14] sm:$0xf]
    %v4740 = vld [vmem:[%s4733 + $0x18] sm:$0xf]
    %v4741 = vld [vmem:[%s4733 + $0x1c] sm:$0xf]
    %v4742 = vld [vmem:[%s4733 + $0x20] sm:$0xf]
    %v4743 = vld [vmem:[%s4733 + $0x24] sm:$0xf]
    %v4744 = vld [vmem:[%s4733 + $0x28] sm:$0xf]
    %v4745 = vld [vmem:[%s4733 + $0x2c] sm:$0xf]
    %v4746 = vld [vmem:[%s4733 + $0x30] sm:$0xf]
    %v4747 = vld [vmem:[%s4733 + $0x34] sm:$0xf]
    %v4748 = vld [vmem:[%s4733 + $0x38] sm:$0xf]
    %v4749 = vld [vmem:[%s4733 + $0x3c] sm:$0xf]
    %v4766 = vunpack.c.l.b16 %v4734
    %v4767 = vunpack.c.l.b16 %v4735
    %v4768 = vunpack.c.l.b16 %v4736
    %v4769 = vunpack.c.l.b16 %v4737
    %v4770 = vunpack.c.l.b16 %v4738
    %v4771 = vunpack.c.l.b16 %v4739
    %v4772 = vunpack.c.l.b16 %v4740
    %v4773 = vunpack.c.l.b16 %v4741
    %v4774 = vunpack.c.l.b16 %v4742
    %v4775 = vunpack.c.l.b16 %v4743
    %v4776 = vunpack.c.l.b16 %v4744
    %v4777 = vunpack.c.l.b16 %v4745
    %v4778 = vunpack.c.l.b16 %v4746
    %v4779 = vunpack.c.l.b16 %v4747
    %v4780 = vunpack.c.l.b16 %v4748
    %v4781 = vunpack.c.l.b16 %v4749
    %v4782 = vpack.c.b16 %v4767, %v4766
    %v4783 = vpack.c.b16 %v4769, %v4768
    %v4784 = vpack.c.b16 %v4771, %v4770
    %v4785 = vpack.c.b16 %v4773, %v4772
    %v4786 = vpack.c.b16 %v4775, %v4774
    %v4787 = vpack.c.b16 %v4777, %v4776
    %v4788 = vpack.c.b16 %v4779, %v4778
    %v4789 = vpack.c.b16 %v4781, %v4780
    %4798 = vmatprep.subr.bf16.mxu0 0
    %4799 = vmatpush1.bf16.msra.mxu0 %v4782
    %4800 = vmatprep.subr.bf16.mxu0 0
    %4801 = vmatpush1.bf16.msra.mxu0 %v4783
    %4802 = vmatprep.subr.bf16.mxu0 0
    %4803 = vmatpush1.bf16.msra.mxu0 %v4784
    %4804 = vmatprep.subr.bf16.mxu0 0
    %4805 = vmatpush1.bf16.msra.mxu0 %v4785
    %4806 = vmatprep.subr.bf16.mxu0 0
    %4807 = vmatpush1.bf16.msra.mxu0 %v4786
    %4808 = vmatprep.subr.bf16.mxu0 0
    %4809 = vmatpush1.bf16.msra.mxu0 %v4787
    %4810 = vmatprep.subr.bf16.mxu0 0
    %4811 = vmatpush1.bf16.msra.mxu0 %v4788
    %4812 = vmatprep.subr.bf16.mxu0 0
    %4813 = vmatpush1.bf16.msra.mxu0 %v4789
    %4814 = vmatprep.subr.bf16.mxu0 0
    %4815 = vmatpush1.bf16.msra.mxu0 0
    %4816 = vmatprep.subr.bf16.mxu0 0
    %4817 = vmatpush1.bf16.msra.mxu0 0
    %4818 = vmatprep.subr.bf16.mxu0 0
    %4819 = vmatpush1.bf16.msra.mxu0 0
    %4820 = vmatprep.subr.bf16.mxu0 0
    %4821 = vmatpush1.bf16.msra.mxu0 0
    %4822 = vmatprep.subr.bf16.mxu0 0
    %4823 = vmatpush1.bf16.msra.mxu0 0
    %4824 = vmatprep.subr.bf16.mxu0 0
    %4825 = vmatpush1.bf16.msra.mxu0 0
    %4826 = vmatprep.subr.bf16.mxu0 0
    %4827 = vmatpush1.bf16.msra.mxu0 0
    %4828 = vmatprep.subr.bf16.mxu0 0
    %4829 = vmatpush1.bf16.msra.mxu0 0
    %4830 = vmatprep.mubr.bf16.mxu0 0
    %4831 = vmatmul.mubr.bf16.gmra.mrb[0].mxu0 %v4725
    %v4832 = vpop.f32.mrb[0].mxu0
    %v4833 = vadd.f32 0.0, %v4832
    %v4834 = vpop.f32.mrb[0].mxu0
    %v4835 = vpop.f32.mrb[0].mxu0
    %v4836 = vadd.f32 0.0, %v4835
    %v4837 = vpop.f32.mrb[0].mxu0
    %4838 = vmatprep.mubr.bf16.mxu0 0
    %4839 = vmatmul.mubr.bf16.gmra.mrb[0].mxu0 %v4726
    %v4840 = vpop.f32.mrb[0].mxu0
    %v4841 = vadd.f32 0.0, %v4840
    %v4842 = vpop.f32.mrb[0].mxu0
    %v4843 = vpop.f32.mrb[0].mxu0
    %v4844 = vadd.f32 0.0, %v4843
    %v4845 = vpop.f32.mrb[0].mxu0
    %4846 = vmatprep.mubr.bf16.mxu0 0
    %4847 = vmatmul.mubr.bf16.gmra.mrb[0].mxu0 %v4727
    %v4848 = vpop.f32.mrb[0].mxu0
    %v4849 = vadd.f32 0.0, %v4848
    %v4850 = vpop.f32.mrb[0].mxu0
    %v4851 = vpop.f32.mrb[0].mxu0
    %v4852 = vadd.f32 0.0, %v4851
    %v4853 = vpop.f32.mrb[0].mxu0
    %4854 = vmatprep.mubr.bf16.mxu0 0
    %4855 = vmatmul.mubr.bf16.gmra.mrb[0].mxu0 %v4728
    %v4856 = vpop.f32.mrb[0].mxu0
    %v4857 = vadd.f32 0.0, %v4856
    %v4858 = vpop.f32.mrb[0].mxu0
    %v4859 = vpop.f32.mrb[0].mxu0
    %v4860 = vadd.f32 0.0, %v4859
    %v4861 = vpop.f32.mrb[0].mxu0
    %4862 = vmatprep.mubr.bf16.mxu0 0
    %4863 = vmatmul.mubr.bf16.gmra.mrb[0].mxu0 %v4729
    %v4864 = vpop.f32.mrb[0].mxu0
    %v4865 = vadd.f32 0.0, %v4864
    %v4866 = vpop.f32.mrb[0].mxu0
    %v4867 = vpop.f32.mrb[0].mxu0
    %v4868 = vadd.f32 0.0, %v4867
    %v4869 = vpop.f32.mrb[0].mxu0
    %4870 = vmatprep.mubr.bf16.mxu0 0
    %4871 = vmatmul.mubr.bf16.gmra.mrb[0].mxu0 %v4730
    %v4872 = vpop.f32.mrb[0].mxu0
    %v4873 = vadd.f32 0.0, %v4872
    %v4874 = vpop.f32.mrb[0].mxu0
    %v4875 = vpop.f32.mrb[0].mxu0
    %v4876 = vadd.f32 0.0, %v4875
    %v4877 = vpop.f32.mrb[0].mxu0
    %4878 = vmatprep.mubr.bf16.mxu0 0
    %4879 = vmatmul.mubr.bf16.gmra.mrb[0].mxu0 %v4731
    %v4880 = vpop.f32.mrb[0].mxu0
    %v4881 = vadd.f32 0.0, %v4880
    %v4882 = vpop.f32.mrb[0].mxu0
    %v4883 = vpop.f32.mrb[0].mxu0
    %v4884 = vadd.f32 0.0, %v4883
    %v4885 = vpop.f32.mrb[0].mxu0
    %4886 = vmatprep.mubr.bf16.mxu0 0
    %4887 = vmatmul.mubr.bf16.gmra.mrb[0].mxu0 %v4732
    %v4888 = vpop.f32.mrb[0].mxu0
    %v4889 = vadd.f32 0.0, %v4888
    %v4890 = vpop.f32.mrb[0].mxu0
    %v4891 = vpop.f32.mrb[0].mxu0
    %v4892 = vadd.f32 0.0, %v4891
    %v4893 = vpop.f32.mrb[0].mxu0
    %4894 = vdwg.mxu0
    %v4895 = vadd.f32 %v4307, %v4833
    %v4896 = vadd.f32 %v4308, %v4836
    %v4897 = vadd.f32 %v4309, %v4841
    %v4898 = vadd.f32 %v4310, %v4844
    %v4899 = vadd.f32 %v4311, %v4849
    %v4900 = vadd.f32 %v4312, %v4852
    %v4901 = vadd.f32 %v4313, %v4857
    %v4902 = vadd.f32 %v4314, %v4860
    %v4903 = vadd.f32 %v4315, %v4865
    %v4904 = vadd.f32 %v4316, %v4868
    %v4905 = vadd.f32 %v4317, %v4873
    %v4906 = vadd.f32 %v4318, %v4876
    %v4907 = vadd.f32 %v4319, %v4881
    %v4908 = vadd.f32 %v4320, %v4884
    %v4909 = vadd.f32 %v4321, %v4889
    %v4910 = vadd.f32 %v4322, %v4892
    %4911 = vset.pattern.permute.xlu0 8
    %4912 = vperm.xlu0 %4911, %v224
    %v4913 = vpop.permute.xlu0 %4912
    %4914 = vset.pattern.permute.xlu0 8
    %4915 = vperm.xlu0 %4914, %v225
    %v4916 = vpop.permute.xlu0 %4915
    %4917 = vset.pattern.permute.xlu0 8
    %4918 = vperm.xlu0 %4917, %v226
    %v4919 = vpop.permute.xlu0 %4918
    %4920 = vset.pattern.permute.xlu0 8
    %4921 = vperm.xlu0 %4920, %v227
    %v4922 = vpop.permute.xlu0 %4921
    %4923 = vset.pattern.permute.xlu0 8
    %4924 = vperm.xlu0 %4923, %v228
    %v4925 = vpop.permute.xlu0 %4924
    %4926 = vset.pattern.permute.xlu0 8
    %4927 = vperm.xlu0 %4926, %v229
    %v4928 = vpop.permute.xlu0 %4927
    %4929 = vset.pattern.permute.xlu0 8
    %4930 = vperm.xlu0 %4929, %v230
    %v4931 = vpop.permute.xlu0 %4930
    %4932 = vset.pattern.permute.xlu0 8
    %4933 = vperm.xlu0 %4932, %v231
    %v4934 = vpop.permute.xlu0 %4933
    %4935 = vset.pattern.permute.xlu0 8
    %4936 = vperm.xlu0 %4935, %v232
    %v4937 = vpop.permute.xlu0 %4936
    %4938 = vset.pattern.permute.xlu0 8
    %4939 = vperm.xlu0 %4938, %v233
    %v4940 = vpop.permute.xlu0 %4939
    %4941 = vset.pattern.permute.xlu0 8
    %4942 = vperm.xlu0 %4941, %v234
    %v4943 = vpop.permute.xlu0 %4942
    %4944 = vset.pattern.permute.xlu0 8
    %4945 = vperm.xlu0 %4944, %v235
    %v4946 = vpop.permute.xlu0 %4945
    %4947 = vset.pattern.permute.xlu0 8
    %4948 = vperm.xlu0 %4947, %v236
    %v4949 = vpop.permute.xlu0 %4948
    %4950 = vset.pattern.permute.xlu0 8
    %4951 = vperm.xlu0 %4950, %v237
    %v4952 = vpop.permute.xlu0 %4951
    %4953 = vset.pattern.permute.xlu0 8
    %4954 = vperm.xlu0 %4953, %v238
    %v4955 = vpop.permute.xlu0 %4954
    %4956 = vset.pattern.permute.xlu0 8
    %4957 = vperm.xlu0 %4956, %v239
    %v4958 = vpop.permute.xlu0 %4957
    %vm4959 = vcmp.eq.s32.totalorder %v220, %v4913
    %vm4960 = vcmp.eq.s32.totalorder %v221, %v4913
    %vm4961 = vcmp.eq.s32.totalorder %v222, %v4913
    %vm4962 = vcmp.eq.s32.totalorder %v223, %v4913
    %vm4963 = vcmp.eq.s32.totalorder %v220, %v4916
    %vm4964 = vcmp.eq.s32.totalorder %v221, %v4916
    %vm4965 = vcmp.eq.s32.totalorder %v222, %v4916
    %vm4966 = vcmp.eq.s32.totalorder %v223, %v4916
    %vm4967 = vcmp.eq.s32.totalorder %v220, %v4919
    %vm4968 = vcmp.eq.s32.totalorder %v221, %v4919
    %vm4969 = vcmp.eq.s32.totalorder %v222, %v4919
    %vm4970 = vcmp.eq.s32.totalorder %v223, %v4919
    %vm4971 = vcmp.eq.s32.totalorder %v220, %v4922
    %vm4972 = vcmp.eq.s32.totalorder %v221, %v4922
    %vm4973 = vcmp.eq.s32.totalorder %v222, %v4922
    %vm4974 = vcmp.eq.s32.totalorder %v223, %v4922
    %vm4975 = vcmp.eq.s32.totalorder %v220, %v4925
    %vm4976 = vcmp.eq.s32.totalorder %v221, %v4925
    %vm4977 = vcmp.eq.s32.totalorder %v222, %v4925
    %vm4978 = vcmp.eq.s32.totalorder %v223, %v4925
    %vm4979 = vcmp.eq.s32.totalorder %v220, %v4928
    %vm4980 = vcmp.eq.s32.totalorder %v221, %v4928
    %vm4981 = vcmp.eq.s32.totalorder %v222, %v4928
    %vm4982 = vcmp.eq.s32.totalorder %v223, %v4928
    %vm4983 = vcmp.eq.s32.totalorder %v220, %v4931
    %vm4984 = vcmp.eq.s32.totalorder %v221, %v4931
    %vm4985 = vcmp.eq.s32.totalorder %v222, %v4931
    %vm4986 = vcmp.eq.s32.totalorder %v223, %v4931
    %vm4987 = vcmp.eq.s32.totalorder %v220, %v4934
    %vm4988 = vcmp.eq.s32.totalorder %v221, %v4934
    %vm4989 = vcmp.eq.s32.totalorder %v222, %v4934
    %vm4990 = vcmp.eq.s32.totalorder %v223, %v4934
    %vm4991 = vcmp.eq.s32.totalorder %v220, %v4937
    %vm4992 = vcmp.eq.s32.totalorder %v221, %v4937
    %vm4993 = vcmp.eq.s32.totalorder %v222, %v4937
    %vm4994 = vcmp.eq.s32.totalorder %v223, %v4937
    %vm4995 = vcmp.eq.s32.totalorder %v220, %v4940
    %vm4996 = vcmp.eq.s32.totalorder %v221, %v4940
    %vm4997 = vcmp.eq.s32.totalorder %v222, %v4940
    %vm4998 = vcmp.eq.s32.totalorder %v223, %v4940
    %vm4999 = vcmp.eq.s32.totalorder %v220, %v4943
    %vm5000 = vcmp.eq.s32.totalorder %v221, %v4943
    %vm5001 = vcmp.eq.s32.totalorder %v222, %v4943
    %vm5002 = vcmp.eq.s32.totalorder %v223, %v4943
    %vm5003 = vcmp.eq.s32.totalorder %v220, %v4946
    %vm5004 = vcmp.eq.s32.totalorder %v221, %v4946
    %vm5005 = vcmp.eq.s32.totalorder %v222, %v4946
    %vm5006 = vcmp.eq.s32.totalorder %v223, %v4946
    %vm5007 = vcmp.eq.s32.totalorder %v220, %v4949
    %vm5008 = vcmp.eq.s32.totalorder %v221, %v4949
    %vm5009 = vcmp.eq.s32.totalorder %v222, %v4949
    %vm5010 = vcmp.eq.s32.totalorder %v223, %v4949
    %vm5011 = vcmp.eq.s32.totalorder %v220, %v4952
    %vm5012 = vcmp.eq.s32.totalorder %v221, %v4952
    %vm5013 = vcmp.eq.s32.totalorder %v222, %v4952
    %vm5014 = vcmp.eq.s32.totalorder %v223, %v4952
    %vm5015 = vcmp.eq.s32.totalorder %v220, %v4955
    %vm5016 = vcmp.eq.s32.totalorder %v221, %v4955
    %vm5017 = vcmp.eq.s32.totalorder %v222, %v4955
    %vm5018 = vcmp.eq.s32.totalorder %v223, %v4955
    %vm5019 = vcmp.eq.s32.totalorder %v220, %v4958
    %vm5020 = vcmp.eq.s32.totalorder %v221, %v4958
    %vm5021 = vcmp.eq.s32.totalorder %v222, %v4958
    %vm5022 = vcmp.eq.s32.totalorder %v223, %v4958
    %v5023 = vsel %vm4959, 1.0, 0.0
    %v5024 = vsel %vm4960, 1.0, 0.0
    %v5025 = vsel %vm4961, 1.0, 0.0
    %v5026 = vsel %vm4962, 1.0, 0.0
    %v5027 = vsel %vm4963, 1.0, 0.0
    %v5028 = vsel %vm4964, 1.0, 0.0
    %v5029 = vsel %vm4965, 1.0, 0.0
    %v5030 = vsel %vm4966, 1.0, 0.0
    %v5031 = vsel %vm4967, 1.0, 0.0
    %v5032 = vsel %vm4968, 1.0, 0.0
    %v5033 = vsel %vm4969, 1.0, 0.0
    %v5034 = vsel %vm4970, 1.0, 0.0
    %v5035 = vsel %vm4971, 1.0, 0.0
    %v5036 = vsel %vm4972, 1.0, 0.0
    %v5037 = vsel %vm4973, 1.0, 0.0
    %v5038 = vsel %vm4974, 1.0, 0.0
    %v5039 = vsel %vm4975, 1.0, 0.0
    %v5040 = vsel %vm4976, 1.0, 0.0
    %v5041 = vsel %vm4977, 1.0, 0.0
    %v5042 = vsel %vm4978, 1.0, 0.0
    %v5043 = vsel %vm4979, 1.0, 0.0
    %v5044 = vsel %vm4980, 1.0, 0.0
    %v5045 = vsel %vm4981, 1.0, 0.0
    %v5046 = vsel %vm4982, 1.0, 0.0
    %v5047 = vsel %vm4983, 1.0, 0.0
    %v5048 = vsel %vm4984, 1.0, 0.0
    %v5049 = vsel %vm4985, 1.0, 0.0
    %v5050 = vsel %vm4986, 1.0, 0.0
    %v5051 = vsel %vm4987, 1.0, 0.0
    %v5052 = vsel %vm4988, 1.0, 0.0
    %v5053 = vsel %vm4989, 1.0, 0.0
    %v5054 = vsel %vm4990, 1.0, 0.0
    %v5055 = vsel %vm4991, 1.0, 0.0
    %v5056 = vsel %vm4992, 1.0, 0.0
    %v5057 = vsel %vm4993, 1.0, 0.0
    %v5058 = vsel %vm4994, 1.0, 0.0
    %v5059 = vsel %vm4995, 1.0, 0.0
    %v5060 = vsel %vm4996, 1.0, 0.0
    %v5061 = vsel %vm4997, 1.0, 0.0
    %v5062 = vsel %vm4998, 1.0, 0.0
    %v5063 = vsel %vm4999, 1.0, 0.0
    %v5064 = vsel %vm5000, 1.0, 0.0
    %v5065 = vsel %vm5001, 1.0, 0.0
    %v5066 = vsel %vm5002, 1.0, 0.0
    %v5067 = vsel %vm5003, 1.0, 0.0
    %v5068 = vsel %vm5004, 1.0, 0.0
    %v5069 = vsel %vm5005, 1.0, 0.0
    %v5070 = vsel %vm5006, 1.0, 0.0
    %v5071 = vsel %vm5007, 1.0, 0.0
    %v5072 = vsel %vm5008, 1.0, 0.0
    %v5073 = vsel %vm5009, 1.0, 0.0
    %v5074 = vsel %vm5010, 1.0, 0.0
    %v5075 = vsel %vm5011, 1.0, 0.0
    %v5076 = vsel %vm5012, 1.0, 0.0
    %v5077 = vsel %vm5013, 1.0, 0.0
    %v5078 = vsel %vm5014, 1.0, 0.0
    %v5079 = vsel %vm5015, 1.0, 0.0
    %v5080 = vsel %vm5016, 1.0, 0.0
    %v5081 = vsel %vm5017, 1.0, 0.0
    %v5082 = vsel %vm5018, 1.0, 0.0
    %v5083 = vsel %vm5019, 1.0, 0.0
    %v5084 = vsel %vm5020, 1.0, 0.0
    %v5085 = vsel %vm5021, 1.0, 0.0
    %v5086 = vsel %vm5022, 1.0, 0.0
    %v5087 = vpack.c.bf16 %v5027, %v5023
    %v5088 = vpack.c.bf16 %v5028, %v5024
    %v5089 = vpack.c.bf16 %v5029, %v5025
    %v5090 = vpack.c.bf16 %v5030, %v5026
    %v5091 = vpack.c.bf16 %v5035, %v5031
    %v5092 = vpack.c.bf16 %v5036, %v5032
    %v5093 = vpack.c.bf16 %v5037, %v5033
    %v5094 = vpack.c.bf16 %v5038, %v5034
    %v5095 = vpack.c.bf16 %v5043, %v5039
    %v5096 = vpack.c.bf16 %v5044, %v5040
    %v5097 = vpack.c.bf16 %v5045, %v5041
    %v5098 = vpack.c.bf16 %v5046, %v5042
    %v5099 = vpack.c.bf16 %v5051, %v5047
    %v5100 = vpack.c.bf16 %v5052, %v5048
    %v5101 = vpack.c.bf16 %v5053, %v5049
    %v5102 = vpack.c.bf16 %v5054, %v5050
    %v5103 = vpack.c.bf16 %v5059, %v5055
    %v5104 = vpack.c.bf16 %v5060, %v5056
    %v5105 = vpack.c.bf16 %v5061, %v5057
    %v5106 = vpack.c.bf16 %v5062, %v5058
    %v5107 = vpack.c.bf16 %v5067, %v5063
    %v5108 = vpack.c.bf16 %v5068, %v5064
    %v5109 = vpack.c.bf16 %v5069, %v5065
    %v5110 = vpack.c.bf16 %v5070, %v5066
    %v5111 = vpack.c.bf16 %v5075, %v5071
    %v5112 = vpack.c.bf16 %v5076, %v5072
    %v5113 = vpack.c.bf16 %v5077, %v5073
    %v5114 = vpack.c.bf16 %v5078, %v5074
    %v5115 = vpack.c.bf16 %v5083, %v5079
    %v5116 = vpack.c.bf16 %v5084, %v5080
    %v5117 = vpack.c.bf16 %v5085, %v5081
    %v5118 = vpack.c.bf16 %v5086, %v5082
    %5119 = vmatprep.subr.bf16.mxu0 0
    %5120 = vmatpush1.bf16.msra.mxu0 %v187
    %5121 = vmatprep.subr.bf16.mxu0 0
    %5122 = vmatpush1.bf16.msra.mxu0 %v188
    %5123 = vmatprep.subr.bf16.mxu0 0
    %5124 = vmatpush1.bf16.msra.mxu0 %v189
    %5125 = vmatprep.subr.bf16.mxu0 0
    %5126 = vmatpush1.bf16.msra.mxu0 %v190
    %5127 = vmatprep.subr.bf16.mxu0 0
    %5128 = vmatpush1.bf16.msra.mxu0 %v191
    %5129 = vmatprep.subr.bf16.mxu0 0
    %5130 = vmatpush1.bf16.msra.mxu0 %v192
    %5131 = vmatprep.subr.bf16.mxu0 0
    %5132 = vmatpush1.bf16.msra.mxu0 %v193
    %5133 = vmatprep.subr.bf16.mxu0 0
    %5134 = vmatpush1.bf16.msra.mxu0 %v194
    %5135 = vmatprep.subr.bf16.mxu0 0
    %5136 = vmatpush1.bf16.msra.mxu0 %v195
    %5137 = vmatprep.subr.bf16.mxu0 0
    %5138 = vmatpush1.bf16.msra.mxu0 %v196
    %5139 = vmatprep.subr.bf16.mxu0 0
    %5140 = vmatpush1.bf16.msra.mxu0 %v197
    %5141 = vmatprep.subr.bf16.mxu0 0
    %5142 = vmatpush1.bf16.msra.mxu0 %v198
    %5143 = vmatprep.subr.bf16.mxu0 0
    %5144 = vmatpush1.bf16.msra.mxu0 %v199
    %5145 = vmatprep.subr.bf16.mxu0 0
    %5146 = vmatpush1.bf16.msra.mxu0 %v200
    %5147 = vmatprep.subr.bf16.mxu0 0
    %5148 = vmatpush1.bf16.msra.mxu0 %v201
    %5149 = vmatprep.subr.bf16.mxu0 0
    %5150 = vmatpush1.bf16.msra.mxu0 %v202
    %5151 = vmatprep.mubr.bf16.mxu0 %v5088
    %5152 = vmatmul.mubr.bf16.gmra.mrb[0].mxu0 %v5087
    %v5153 = vpop.f32.mrb[0].mxu0
    %v5154 = vadd.f32 0.0, %v5153
    %v5155 = vpop.f32.mrb[0].mxu0
    %v5156 = vpop.f32.mrb[0].mxu0
    %v5157 = vadd.f32 0.0, %v5156
    %v5158 = vpop.f32.mrb[0].mxu0
    %5159 = vmatprep.mubr.bf16.mxu0 %v5092
    %5160 = vmatmul.mubr.bf16.gmra.mrb[0].mxu0 %v5091
    %v5161 = vpop.f32.mrb[0].mxu0
    %v5162 = vadd.f32 0.0, %v5161
    %v5163 = vpop.f32.mrb[0].mxu0
    %v5164 = vpop.f32.mrb[0].mxu0
    %v5165 = vadd.f32 0.0, %v5164
    %v5166 = vpop.f32.mrb[0].mxu0
    %5167 = vmatprep.mubr.bf16.mxu0 %v5096
    %5168 = vmatmul.mubr.bf16.gmra.mrb[0].mxu0 %v5095
    %v5169 = vpop.f32.mrb[0].mxu0
    %v5170 = vadd.f32 0.0, %v5169
    %v5171 = vpop.f32.mrb[0].mxu0
    %v5172 = vpop.f32.mrb[0].mxu0
    %v5173 = vadd.f32 0.0, %v5172
    %v5174 = vpop.f32.mrb[0].mxu0
    %5175 = vmatprep.mubr.bf16.mxu0 %v5100
    %5176 = vmatmul.mubr.bf16.gmra.mrb[0].mxu0 %v5099
    %v5177 = vpop.f32.mrb[0].mxu0
    %v5178 = vadd.f32 0.0, %v5177
    %v5179 = vpop.f32.mrb[0].mxu0
    %v5180 = vpop.f32.mrb[0].mxu0
    %v5181 = vadd.f32 0.0, %v5180
    %v5182 = vpop.f32.mrb[0].mxu0
    %5183 = vmatprep.mubr.bf16.mxu0 %v5104
    %5184 = vmatmul.mubr.bf16.gmra.mrb[0].mxu0 %v5103
    %v5185 = vpop.f32.mrb[0].mxu0
    %v5186 = vadd.f32 0.0, %v5185
    %v5187 = vpop.f32.mrb[0].mxu0
    %v5188 = vpop.f32.mrb[0].mxu0
    %v5189 = vadd.f32 0.0, %v5188
    %v5190 = vpop.f32.mrb[0].mxu0
    %5191 = vmatprep.mubr.bf16.mxu0 %v5108
    %5192 = vmatmul.mubr.bf16.gmra.mrb[0].mxu0 %v5107
    %v5193 = vpop.f32.mrb[0].mxu0
    %v5194 = vadd.f32 0.0, %v5193
    %v5195 = vpop.f32.mrb[0].mxu0
    %v5196 = vpop.f32.mrb[0].mxu0
    %v5197 = vadd.f32 0.0, %v5196
    %v5198 = vpop.f32.mrb[0].mxu0
    %5199 = vmatprep.mubr.bf16.mxu0 %v5112
    %5200 = vmatmul.mubr.bf16.gmra.mrb[0].mxu0 %v5111
    %v5201 = vpop.f32.mrb[0].mxu0
    %v5202 = vadd.f32 0.0, %v5201
    %v5203 = vpop.f32.mrb[0].mxu0
    %v5204 = vpop.f32.mrb[0].mxu0
    %v5205 = vadd.f32 0.0, %v5204
    %v5206 = vpop.f32.mrb[0].mxu0
    %5207 = vmatprep.mubr.bf16.mxu0 %v5116
    %5208 = vmatmul.mubr.bf16.gmra.mrb[0].mxu0 %v5115
    %v5209 = vpop.f32.mrb[0].mxu0
    %v5210 = vadd.f32 0.0, %v5209
    %v5211 = vpop.f32.mrb[0].mxu0
    %v5212 = vpop.f32.mrb[0].mxu0
    %v5213 = vadd.f32 0.0, %v5212
    %v5214 = vpop.f32.mrb[0].mxu0
    %5215 = vdwg.mxu0
    %5216 = vmatprep.subr.bf16.mxu0 0
    %5217 = vmatpush1.bf16.msra.mxu0 %v203
    %5218 = vmatprep.subr.bf16.mxu0 0
    %5219 = vmatpush1.bf16.msra.mxu0 %v204
    %5220 = vmatprep.subr.bf16.mxu0 0
    %5221 = vmatpush1.bf16.msra.mxu0 %v205
    %5222 = vmatprep.subr.bf16.mxu0 0
    %5223 = vmatpush1.bf16.msra.mxu0 %v206
    %5224 = vmatprep.subr.bf16.mxu0 0
    %5225 = vmatpush1.bf16.msra.mxu0 %v207
    %5226 = vmatprep.subr.bf16.mxu0 0
    %5227 = vmatpush1.bf16.msra.mxu0 %v208
    %5228 = vmatprep.subr.bf16.mxu0 0
    %5229 = vmatpush1.bf16.msra.mxu0 %v209
    %5230 = vmatprep.subr.bf16.mxu0 0
    %5231 = vmatpush1.bf16.msra.mxu0 %v210
    %5232 = vmatprep.subr.bf16.mxu0 0
    %5233 = vmatpush1.bf16.msra.mxu0 %v211
    %5234 = vmatprep.subr.bf16.mxu0 0
    %5235 = vmatpush1.bf16.msra.mxu0 %v212
    %5236 = vmatprep.subr.bf16.mxu0 0
    %5237 = vmatpush1.bf16.msra.mxu0 %v213
    %5238 = vmatprep.subr.bf16.mxu0 0
    %5239 = vmatpush1.bf16.msra.mxu0 %v214
    %5240 = vmatprep.subr.bf16.mxu0 0
    %5241 = vmatpush1.bf16.msra.mxu0 %v215
    %5242 = vmatprep.subr.bf16.mxu0 0
    %5243 = vmatpush1.bf16.msra.mxu0 %v216
    %5244 = vmatprep.subr.bf16.mxu0 0
    %5245 = vmatpush1.bf16.msra.mxu0 %v217
    %5246 = vmatprep.subr.bf16.mxu0 0
    %5247 = vmatpush1.bf16.msra.mxu0 %v218
    %5248 = vmatprep.mubr.bf16.mxu0 %v5090
    %5249 = vmatmul.mubr.bf16.gmra.mrb[0].mxu0 %v5089
    %v5250 = vpop.f32.mrb[0].mxu0
    %v5251 = vadd.f32 %v5154, %v5250
    %v5252 = vpop.f32.mrb[0].mxu0
    %v5253 = vpop.f32.mrb[0].mxu0
    %v5254 = vadd.f32 %v5157, %v5253
    %v5255 = vpop.f32.mrb[0].mxu0
    %5256 = vmatprep.mubr.bf16.mxu0 %v5094
    %5257 = vmatmul.mubr.bf16.gmra.mrb[0].mxu0 %v5093
    %v5258 = vpop.f32.mrb[0].mxu0
    %v5259 = vadd.f32 %v5162, %v5258
    %v5260 = vpop.f32.mrb[0].mxu0
    %v5261 = vpop.f32.mrb[0].mxu0
    %v5262 = vadd.f32 %v5165, %v5261
    %v5263 = vpop.f32.mrb[0].mxu0
    %5264 = vmatprep.mubr.bf16.mxu0 %v5098
    %5265 = vmatmul.mubr.bf16.gmra.mrb[0].mxu0 %v5097
    %v5266 = vpop.f32.mrb[0].mxu0
    %v5267 = vadd.f32 %v5170, %v5266
    %v5268 = vpop.f32.mrb[0].mxu0
    %v5269 = vpop.f32.mrb[0].mxu0
    %v5270 = vadd.f32 %v5173, %v5269
    %v5271 = vpop.f32.mrb[0].mxu0
    %5272 = vmatprep.mubr.bf16.mxu0 %v5102
    %5273 = vmatmul.mubr.bf16.gmra.mrb[0].mxu0 %v5101
    %v5274 = vpop.f32.mrb[0].mxu0
    %v5275 = vadd.f32 %v5178, %v5274
    %v5276 = vpop.f32.mrb[0].mxu0
    %v5277 = vpop.f32.mrb[0].mxu0
    %v5278 = vadd.f32 %v5181, %v5277
    %v5279 = vpop.f32.mrb[0].mxu0
    %5280 = vmatprep.mubr.bf16.mxu0 %v5106
    %5281 = vmatmul.mubr.bf16.gmra.mrb[0].mxu0 %v5105
    %v5282 = vpop.f32.mrb[0].mxu0
    %v5283 = vadd.f32 %v5186, %v5282
    %v5284 = vpop.f32.mrb[0].mxu0
    %v5285 = vpop.f32.mrb[0].mxu0
    %v5286 = vadd.f32 %v5189, %v5285
    %v5287 = vpop.f32.mrb[0].mxu0
    %5288 = vmatprep.mubr.bf16.mxu0 %v5110
    %5289 = vmatmul.mubr.bf16.gmra.mrb[0].mxu0 %v5109
    %v5290 = vpop.f32.mrb[0].mxu0
    %v5291 = vadd.f32 %v5194, %v5290
    %v5292 = vpop.f32.mrb[0].mxu0
    %v5293 = vpop.f32.mrb[0].mxu0
    %v5294 = vadd.f32 %v5197, %v5293
    %v5295 = vpop.f32.mrb[0].mxu0
    %5296 = vmatprep.mubr.bf16.mxu0 %v5114
    %5297 = vmatmul.mubr.bf16.gmra.mrb[0].mxu0 %v5113
    %v5298 = vpop.f32.mrb[0].mxu0
    %v5299 = vadd.f32 %v5202, %v5298
    %v5300 = vpop.f32.mrb[0].mxu0
    %v5301 = vpop.f32.mrb[0].mxu0
    %v5302 = vadd.f32 %v5205, %v5301
    %v5303 = vpop.f32.mrb[0].mxu0
    %5304 = vmatprep.mubr.bf16.mxu0 %v5118
    %5305 = vmatmul.mubr.bf16.gmra.mrb[0].mxu0 %v5117
    %v5306 = vpop.f32.mrb[0].mxu0
    %v5307 = vadd.f32 %v5210, %v5306
    %v5308 = vpop.f32.mrb[0].mxu0
    %v5309 = vpop.f32.mrb[0].mxu0
    %v5310 = vadd.f32 %v5213, %v5309
    %v5311 = vpop.f32.mrb[0].mxu0
    %5312 = vdwg.mxu0
    %v5313 = vpack.c.bf16 %v5254, %v5251
    %v5314 = vpack.c.bf16 %v5262, %v5259
    %v5315 = vpack.c.bf16 %v5270, %v5267
    %v5316 = vpack.c.bf16 %v5278, %v5275
    %v5317 = vpack.c.bf16 %v5286, %v5283
    %v5318 = vpack.c.bf16 %v5294, %v5291
    %v5319 = vpack.c.bf16 %v5302, %v5299
    %v5320 = vpack.c.bf16 %v5310, %v5307
    %s5321 = scalar_lea.vmem [#allocation5], 512
    %v5322 = vld [vmem:[%s5321] sm:$0xf]
    %v5323 = vld [vmem:[%s5321 + $0x4] sm:$0xf]
    %v5324 = vld [vmem:[%s5321 + $0x8] sm:$0xf]
    %v5325 = vld [vmem:[%s5321 + $0xc] sm:$0xf]
    %v5326 = vld [vmem:[%s5321 + $0x10] sm:$0xf]
    %v5327 = vld [vmem:[%s5321 + $0x14] sm:$0xf]
    %v5328 = vld [vmem:[%s5321 + $0x18] sm:$0xf]
    %v5329 = vld [vmem:[%s5321 + $0x1c] sm:$0xf]
    %v5330 = vld [vmem:[%s5321 + $0x20] sm:$0xf]
    %v5331 = vld [vmem:[%s5321 + $0x24] sm:$0xf]
    %v5332 = vld [vmem:[%s5321 + $0x28] sm:$0xf]
    %v5333 = vld [vmem:[%s5321 + $0x2c] sm:$0xf]
    %v5334 = vld [vmem:[%s5321 + $0x30] sm:$0xf]
    %v5335 = vld [vmem:[%s5321 + $0x34] sm:$0xf]
    %v5336 = vld [vmem:[%s5321 + $0x38] sm:$0xf]
    %v5337 = vld [vmem:[%s5321 + $0x3c] sm:$0xf]
    %v5354 = vunpack.c.l.b16 %v5322
    %v5355 = vunpack.c.l.b16 %v5323
    %v5356 = vunpack.c.l.b16 %v5324
    %v5357 = vunpack.c.l.b16 %v5325
    %v5358 = vunpack.c.l.b16 %v5326
    %v5359 = vunpack.c.l.b16 %v5327
    %v5360 = vunpack.c.l.b16 %v5328
    %v5361 = vunpack.c.l.b16 %v5329
    %v5362 = vunpack.c.l.b16 %v5330
    %v5363 = vunpack.c.l.b16 %v5331
    %v5364 = vunpack.c.l.b16 %v5332
    %v5365 = vunpack.c.l.b16 %v5333
    %v5366 = vunpack.c.l.b16 %v5334
    %v5367 = vunpack.c.l.b16 %v5335
    %v5368 = vunpack.c.l.b16 %v5336
    %v5369 = vunpack.c.l.b16 %v5337
    %v5370 = vpack.c.b16 %v5355, %v5354
    %v5371 = vpack.c.b16 %v5357, %v5356
    %v5372 = vpack.c.b16 %v5359, %v5358
    %v5373 = vpack.c.b16 %v5361, %v5360
    %v5374 = vpack.c.b16 %v5363, %v5362
    %v5375 = vpack.c.b16 %v5365, %v5364
    %v5376 = vpack.c.b16 %v5367, %v5366
    %v5377 = vpack.c.b16 %v5369, %v5368
    %5386 = vmatprep.subr.bf16.mxu0 0
    %5387 = vmatpush1.bf16.msra.mxu0 %v5370
    %5388 = vmatprep.subr.bf16.mxu0 0
    %5389 = vmatpush1.bf16.msra.mxu0 %v5371
    %5390 = vmatprep.subr.bf16.mxu0 0
    %5391 = vmatpush1.bf16.msra.mxu0 %v5372
    %5392 = vmatprep.subr.bf16.mxu0 0
    %5393 = vmatpush1.bf16.msra.mxu0 %v5373
    %5394 = vmatprep.subr.bf16.mxu0 0
    %5395 = vmatpush1.bf16.msra.mxu0 %v5374
    %5396 = vmatprep.subr.bf16.mxu0 0
    %5397 = vmatpush1.bf16.msra.mxu0 %v5375
    %5398 = vmatprep.subr.bf16.mxu0 0
    %5399 = vmatpush1.bf16.msra.mxu0 %v5376
    %5400 = vmatprep.subr.bf16.mxu0 0
    %5401 = vmatpush1.bf16.msra.mxu0 %v5377
    %5402 = vmatprep.subr.bf16.mxu0 0
    %5403 = vmatpush1.bf16.msra.mxu0 0
    %5404 = vmatprep.subr.bf16.mxu0 0
    %5405 = vmatpush1.bf16.msra.mxu0 0
    %5406 = vmatprep.subr.bf16.mxu0 0
    %5407 = vmatpush1.bf16.msra.mxu0 0
    %5408 = vmatprep.subr.bf16.mxu0 0
    %5409 = vmatpush1.bf16.msra.mxu0 0
    %5410 = vmatprep.subr.bf16.mxu0 0
    %5411 = vmatpush1.bf16.msra.mxu0 0
    %5412 = vmatprep.subr.bf16.mxu0 0
    %5413 = vmatpush1.bf16.msra.mxu0 0
    %5414 = vmatprep.subr.bf16.mxu0 0
    %5415 = vmatpush1.bf16.msra.mxu0 0
    %5416 = vmatprep.subr.bf16.mxu0 0
    %5417 = vmatpush1.bf16.msra.mxu0 0
    %5418 = vmatprep.mubr.bf16.mxu0 0
    %5419 = vmatmul.mubr.bf16.gmra.mrb[0].mxu0 %v5313
    %v5420 = vpop.f32.mrb[0].mxu0
    %v5421 = vadd.f32 0.0, %v5420
    %v5422 = vpop.f32.mrb[0].mxu0
    %v5423 = vpop.f32.mrb[0].mxu0
    %v5424 = vadd.f32 0.0, %v5423
    %v5425 = vpop.f32.mrb[0].mxu0
    %5426 = vmatprep.mubr.bf16.mxu0 0
    %5427 = vmatmul.mubr.bf16.gmra.mrb[0].mxu0 %v5314
    %v5428 = vpop.f32.mrb[0].mxu0
    %v5429 = vadd.f32 0.0, %v5428
    %v5430 = vpop.f32.mrb[0].mxu0
    %v5431 = vpop.f32.mrb[0].mxu0
    %v5432 = vadd.f32 0.0, %v5431
    %v5433 = vpop.f32.mrb[0].mxu0
    %5434 = vmatprep.mubr.bf16.mxu0 0
    %5435 = vmatmul.mubr.bf16.gmra.mrb[0].mxu0 %v5315
    %v5436 = vpop.f32.mrb[0].mxu0
    %v5437 = vadd.f32 0.0, %v5436
    %v5438 = vpop.f32.mrb[0].mxu0
    %v5439 = vpop.f32.mrb[0].mxu0
    %v5440 = vadd.f32 0.0, %v5439
    %v5441 = vpop.f32.mrb[0].mxu0
    %5442 = vmatprep.mubr.bf16.mxu0 0
    %5443 = vmatmul.mubr.bf16.gmra.mrb[0].mxu0 %v5316
    %v5444 = vpop.f32.mrb[0].mxu0
    %v5445 = vadd.f32 0.0, %v5444
    %v5446 = vpop.f32.mrb[0].mxu0
    %v5447 = vpop.f32.mrb[0].mxu0
    %v5448 = vadd.f32 0.0, %v5447
    %v5449 = vpop.f32.mrb[0].mxu0
    %5450 = vmatprep.mubr.bf16.mxu0 0
    %5451 = vmatmul.mubr.bf16.gmra.mrb[0].mxu0 %v5317
    %v5452 = vpop.f32.mrb[0].mxu0
    %v5453 = vadd.f32 0.0, %v5452
    %v5454 = vpop.f32.mrb[0].mxu0
    %v5455 = vpop.f32.mrb[0].mxu0
    %v5456 = vadd.f32 0.0, %v5455
    %v5457 = vpop.f32.mrb[0].mxu0
    %5458 = vmatprep.mubr.bf16.mxu0 0
    %5459 = vmatmul.mubr.bf16.gmra.mrb[0].mxu0 %v5318
    %v5460 = vpop.f32.mrb[0].mxu0
    %v5461 = vadd.f32 0.0, %v5460
    %v5462 = vpop.f32.mrb[0].mxu0
    %v5463 = vpop.f32.mrb[0].mxu0
    %v5464 = vadd.f32 0.0, %v5463
    %v5465 = vpop.f32.mrb[0].mxu0
    %5466 = vmatprep.mubr.bf16.mxu0 0
    %5467 = vmatmul.mubr.bf16.gmra.mrb[0].mxu0 %v5319
    %v5468 = vpop.f32.mrb[0].mxu0
    %v5469 = vadd.f32 0.0, %v5468
    %v5470 = vpop.f32.mrb[0].mxu0
    %v5471 = vpop.f32.mrb[0].mxu0
    %v5472 = vadd.f32 0.0, %v5471
    %v5473 = vpop.f32.mrb[0].mxu0
    %5474 = vmatprep.mubr.bf16.mxu0 0
    %5475 = vmatmul.mubr.bf16.gmra.mrb[0].mxu0 %v5320
    %v5476 = vpop.f32.mrb[0].mxu0
    %v5477 = vadd.f32 0.0, %v5476
    %v5478 = vpop.f32.mrb[0].mxu0
    %v5479 = vpop.f32.mrb[0].mxu0
    %v5480 = vadd.f32 0.0, %v5479
    %v5481 = vpop.f32.mrb[0].mxu0
    %5482 = vdwg.mxu0
    %v5483 = vadd.f32 %v4895, %v5421
    %v5484 = vadd.f32 %v4896, %v5424
    %v5485 = vadd.f32 %v4897, %v5429
    %v5486 = vadd.f32 %v4898, %v5432
    %v5487 = vadd.f32 %v4899, %v5437
    %v5488 = vadd.f32 %v4900, %v5440
    %v5489 = vadd.f32 %v4901, %v5445
    %v5490 = vadd.f32 %v4902, %v5448
    %v5491 = vadd.f32 %v4903, %v5453
    %v5492 = vadd.f32 %v4904, %v5456
    %v5493 = vadd.f32 %v4905, %v5461
    %v5494 = vadd.f32 %v4906, %v5464
    %v5495 = vadd.f32 %v4907, %v5469
    %v5496 = vadd.f32 %v4908, %v5472
    %v5497 = vadd.f32 %v4909, %v5477
    %v5498 = vadd.f32 %v4910, %v5480
    %v5499 = vadd.f32 %v5483, %v5484
    %v5500 = vadd.f32 %v5499, %v5485
    %v5501 = vadd.f32 %v5500, %v5486
    %v5502 = vadd.f32 %v5501, %v5487
    %v5503 = vadd.f32 %v5502, %v5488
    %v5504 = vadd.f32 %v5503, %v5489
    %v5505 = vadd.f32 %v5504, %v5490
    %v5506 = vadd.f32 %v5505, %v5491
    %v5507 = vadd.f32 %v5506, %v5492
    %v5508 = vadd.f32 %v5507, %v5493
    %v5509 = vadd.f32 %v5508, %v5494
    %v5510 = vadd.f32 %v5509, %v5495
    %v5511 = vadd.f32 %v5510, %v5496
    %v5512 = vadd.f32 %v5511, %v5497
    %v5513 = vadd.f32 %v5512, %v5498
    %v5514 = vrot.slane %v5513, 4
    %v5515 = vadd.f32 %v5513, %v5514
    %v5516 = vrot.slane %v5515, 2
    %v5517 = vadd.f32 %v5515, %v5516
    %v5518 = vrot.slane %v5517, 1
    %v5519 = vadd.f32 %v5517, %v5518
    %v5520 = vrcp.pop 128.0
    %v5521 = vmul.f32 %v5519, %v5520
    %v5522 = vmul.f32 %v5483, %v5483
    %v5523 = vmul.f32 %v5484, %v5484
    %v5524 = vmul.f32 %v5485, %v5485
    %v5525 = vmul.f32 %v5486, %v5486
    %v5526 = vmul.f32 %v5487, %v5487
    %v5527 = vmul.f32 %v5488, %v5488
    %v5528 = vmul.f32 %v5489, %v5489
    %v5529 = vmul.f32 %v5490, %v5490
    %v5530 = vmul.f32 %v5491, %v5491
    %v5531 = vmul.f32 %v5492, %v5492
    %v5532 = vmul.f32 %v5493, %v5493
    %v5533 = vmul.f32 %v5494, %v5494
    %v5534 = vmul.f32 %v5495, %v5495
    %v5535 = vmul.f32 %v5496, %v5496
    %v5536 = vmul.f32 %v5497, %v5497
    %v5537 = vmul.f32 %v5498, %v5498
    %v5538 = vadd.f32 %v5522, %v5523
    %v5539 = vadd.f32 %v5538, %v5524
    %v5540 = vadd.f32 %v5539, %v5525
    %v5541 = vadd.f32 %v5540, %v5526
    %v5542 = vadd.f32 %v5541, %v5527
    %v5543 = vadd.f32 %v5542, %v5528
    %v5544 = vadd.f32 %v5543, %v5529
    %v5545 = vadd.f32 %v5544, %v5530
    %v5546 = vadd.f32 %v5545, %v5531
    %v5547 = vadd.f32 %v5546, %v5532
    %v5548 = vadd.f32 %v5547, %v5533
    %v5549 = vadd.f32 %v5548, %v5534
    %v5550 = vadd.f32 %v5549, %v5535
    %v5551 = vadd.f32 %v5550, %v5536
    %v5552 = vadd.f32 %v5551, %v5537
    %v5553 = vrot.slane %v5552, 4
    %v5554 = vadd.f32 %v5552, %v5553
    %v5555 = vrot.slane %v5554, 2
    %v5556 = vadd.f32 %v5554, %v5555
    %v5557 = vrot.slane %v5556, 1
    %v5558 = vadd.f32 %v5556, %v5557
    %v5559 = vmul.f32 %v5558, %v5520
    %v5560 = vmul.f32 %v5521, %v5521
    %v5561 = vsub.f32 %v5559, %v5560
    %v5562 = vld [vmem:[%s3] sm:$0x1]
    %v5563 = vadd.f32 %v5561, 1e-05
    %v5564 = vrsqrt.pop %v5563
    %v5565 = vmul.f32 %v5562, %v5564
    %v5566 = vld [vmem:[%s3 + $0x1] sm:$0x1]
    %v5567 = vmul.f32 %v5521, %v5565
    %v5568 = vsub.f32 %v5566, %v5567
    %v5569 = vlaneseq
    %v5570 = vshrl.u32 %v5569, 7
    %v5571 = vsub.s32 0, %v5570
    %v5572 = vrot.slane %v5565, %v5571
    %v5573 = vmul.f32 %v5483, %v5572
    %v5574 = vmul.f32 %v5484, %v5572
    %v5575 = vmul.f32 %v5485, %v5572
    %v5576 = vmul.f32 %v5486, %v5572
    %v5577 = vmul.f32 %v5487, %v5572
    %v5578 = vmul.f32 %v5488, %v5572
    %v5579 = vmul.f32 %v5489, %v5572
    %v5580 = vmul.f32 %v5490, %v5572
    %v5581 = vmul.f32 %v5491, %v5572
    %v5582 = vmul.f32 %v5492, %v5572
    %v5583 = vmul.f32 %v5493, %v5572
    %v5584 = vmul.f32 %v5494, %v5572
    %v5585 = vmul.f32 %v5495, %v5572
    %v5586 = vmul.f32 %v5496, %v5572
    %v5587 = vmul.f32 %v5497, %v5572
    %v5588 = vmul.f32 %v5498, %v5572
    %v5589 = vlaneseq
    %v5590 = vshrl.u32 %v5589, 7
    %v5591 = vsub.s32 0, %v5590
    %v5592 = vrot.slane %v5568, %v5591
    %v5593 = vadd.f32 %v5573, %v5592
    %v5594 = vadd.f32 %v5574, %v5592
    %v5595 = vadd.f32 %v5575, %v5592
    %v5596 = vadd.f32 %v5576, %v5592
    %v5597 = vadd.f32 %v5577, %v5592
    %v5598 = vadd.f32 %v5578, %v5592
    %v5599 = vadd.f32 %v5579, %v5592
    %v5600 = vadd.f32 %v5580, %v5592
    %v5601 = vadd.f32 %v5581, %v5592
    %v5602 = vadd.f32 %v5582, %v5592
    %v5603 = vadd.f32 %v5583, %v5592
    %v5604 = vadd.f32 %v5584, %v5592
    %v5605 = vadd.f32 %v5585, %v5592
    %v5606 = vadd.f32 %v5586, %v5592
    %v5607 = vadd.f32 %v5587, %v5592
    %v5608 = vadd.f32 %v5588, %v5592
    %vm5609 = vcmp.ge.f32.partialorder %v5593, 0.0
    %vm5610 = vcmp.ge.f32.partialorder %v5594, 0.0
    %vm5611 = vcmp.ge.f32.partialorder %v5595, 0.0
    %vm5612 = vcmp.ge.f32.partialorder %v5596, 0.0
    %vm5613 = vcmp.ge.f32.partialorder %v5597, 0.0
    %vm5614 = vcmp.ge.f32.partialorder %v5598, 0.0
    %vm5615 = vcmp.ge.f32.partialorder %v5599, 0.0
    %vm5616 = vcmp.ge.f32.partialorder %v5600, 0.0
    %vm5617 = vcmp.ge.f32.partialorder %v5601, 0.0
    %vm5618 = vcmp.ge.f32.partialorder %v5602, 0.0
    %vm5619 = vcmp.ge.f32.partialorder %v5603, 0.0
    %vm5620 = vcmp.ge.f32.partialorder %v5604, 0.0
    %vm5621 = vcmp.ge.f32.partialorder %v5605, 0.0
    %vm5622 = vcmp.ge.f32.partialorder %v5606, 0.0
    %vm5623 = vcmp.ge.f32.partialorder %v5607, 0.0
    %vm5624 = vcmp.ge.f32.partialorder %v5608, 0.0
    %v5625 = vmul.f32 %v5593, 0.01
    %v5626 = vmul.f32 %v5594, 0.01
    %v5627 = vmul.f32 %v5595, 0.01
    %v5628 = vmul.f32 %v5596, 0.01
    %v5629 = vmul.f32 %v5597, 0.01
    %v5630 = vmul.f32 %v5598, 0.01
    %v5631 = vmul.f32 %v5599, 0.01
    %v5632 = vmul.f32 %v5600, 0.01
    %v5633 = vmul.f32 %v5601, 0.01
    %v5634 = vmul.f32 %v5602, 0.01
    %v5635 = vmul.f32 %v5603, 0.01
    %v5636 = vmul.f32 %v5604, 0.01
    %v5637 = vmul.f32 %v5605, 0.01
    %v5638 = vmul.f32 %v5606, 0.01
    %v5639 = vmul.f32 %v5607, 0.01
    %v5640 = vmul.f32 %v5608, 0.01
    %v5641 = vsel %vm5609, %v5593, %v5625
    %v5642 = vsel %vm5610, %v5594, %v5626
    %v5643 = vsel %vm5611, %v5595, %v5627
    %v5644 = vsel %vm5612, %v5596, %v5628
    %v5645 = vsel %vm5613, %v5597, %v5629
    %v5646 = vsel %vm5614, %v5598, %v5630
    %v5647 = vsel %vm5615, %v5599, %v5631
    %v5648 = vsel %vm5616, %v5600, %v5632
    %v5649 = vsel %vm5617, %v5601, %v5633
    %v5650 = vsel %vm5618, %v5602, %v5634
    %v5651 = vsel %vm5619, %v5603, %v5635
    %v5652 = vsel %vm5620, %v5604, %v5636
    %v5653 = vsel %vm5621, %v5605, %v5637
    %v5654 = vsel %vm5622, %v5606, %v5638
    %v5655 = vsel %vm5623, %v5607, %v5639
    %v5656 = vsel %vm5624, %v5608, %v5640
    %v5657 = vpack.c.bf16 %v5642, %v5641
    %v5658 = vpack.c.bf16 %v5644, %v5643
    %v5659 = vpack.c.bf16 %v5646, %v5645
    %v5660 = vpack.c.bf16 %v5648, %v5647
    %v5661 = vpack.c.bf16 %v5650, %v5649
    %v5662 = vpack.c.bf16 %v5652, %v5651
    %v5663 = vpack.c.bf16 %v5654, %v5653
    %v5664 = vpack.c.bf16 %v5656, %v5655
    %v5665 = vld [vmem:[%s4] sm:$0xff]
    %v5666 = vld [vmem:[%s4 + $0x8] sm:$0xff]
    %v5667 = vld [vmem:[%s4 + $0x10] sm:$0xff]
    %v5668 = vld [vmem:[%s4 + $0x18] sm:$0xff]
    %5669 = vset.pattern.permute.xlu0 0
    %5670 = vperm.xlu0 %5669, %v5665
    %v5671 = vpop.permute.xlu0 %5670
    %5672 = vset.pattern.permute.xlu0 0
    %5673 = vperm.xlu0 %5672, %v5666
    %v5674 = vpop.permute.xlu0 %5673
    %5675 = vset.pattern.permute.xlu0 0
    %5676 = vperm.xlu0 %5675, %v5667
    %v5677 = vpop.permute.xlu0 %5676
    %5678 = vset.pattern.permute.xlu0 0
    %5679 = vperm.xlu0 %5678, %v5668
    %v5680 = vpop.permute.xlu0 %5679
    %vm5681 = vcmp.eq.s32.totalorder %v220, %v5671
    %vm5682 = vcmp.eq.s32.totalorder %v220, %v5674
    %vm5683 = vcmp.eq.s32.totalorder %v220, %v5677
    %vm5684 = vcmp.eq.s32.totalorder %v220, %v5680
    %v5685 = vsel %vm5681, 1.0, 0.0
    %v5686 = vsel %vm5682, 1.0, 0.0
    %v5687 = vsel %vm5683, 1.0, 0.0
    %v5688 = vsel %vm5684, 1.0, 0.0
    %v5689 = vpack.c.bf16 %v5686, %v5685
    %v5690 = vpack.c.bf16 %v5688, %v5687
    %5691 = vmatprep.subr.bf16.mxu0 0
    %5692 = vmatpush1.bf16.msra.mxu0 %v5657
    %5693 = vmatprep.subr.bf16.mxu0 0
    %5694 = vmatpush1.bf16.msra.mxu0 %v5658
    %5695 = vmatprep.subr.bf16.mxu0 0
    %5696 = vmatpush1.bf16.msra.mxu0 %v5659
    %5697 = vmatprep.subr.bf16.mxu0 0
    %5698 = vmatpush1.bf16.msra.mxu0 %v5660
    %5699 = vmatprep.subr.bf16.mxu0 0
    %5700 = vmatpush1.bf16.msra.mxu0 %v5661
    %5701 = vmatprep.subr.bf16.mxu0 0
    %5702 = vmatpush1.bf16.msra.mxu0 %v5662
    %5703 = vmatprep.subr.bf16.mxu0 0
    %5704 = vmatpush1.bf16.msra.mxu0 %v5663
    %5705 = vmatprep.subr.bf16.mxu0 0
    %5706 = vmatpush1.bf16.msra.mxu0 %v5664
    %5707 = vmatprep.subr.bf16.mxu0 0
    %5708 = vmatpush1.bf16.msra.mxu0 0
    %5709 = vmatprep.subr.bf16.mxu0 0
    %5710 = vmatpush1.bf16.msra.mxu0 0
    %5711 = vmatprep.subr.bf16.mxu0 0
    %5712 = vmatpush1.bf16.msra.mxu0 0
    %5713 = vmatprep.subr.bf16.mxu0 0
    %5714 = vmatpush1.bf16.msra.mxu0 0
    %5715 = vmatprep.subr.bf16.mxu0 0
    %5716 = vmatpush1.bf16.msra.mxu0 0
    %5717 = vmatprep.subr.bf16.mxu0 0
    %5718 = vmatpush1.bf16.msra.mxu0 0
    %5719 = vmatprep.subr.bf16.mxu0 0
    %5720 = vmatpush1.bf16.msra.mxu0 0
    %5721 = vmatprep.subr.bf16.mxu0 0
    %5722 = vmatpush1.bf16.msra.mxu0 0
    %5723 = vmatprep.mubr.bf16.mxu0 0
    %5724 = vmatmul.mubr.bf16.gmra.mrb[0].mxu0 %v5689
    %v5725 = vpop.f32.mrb[0].mxu0
    %v5726 = vadd.f32 0.0, %v5725
    %v5727 = vpop.f32.mrb[0].mxu0
    %v5728 = vpop.f32.mrb[0].mxu0
    %v5729 = vadd.f32 0.0, %v5728
    %v5730 = vpop.f32.mrb[0].mxu0
    %5731 = vmatprep.mubr.bf16.mxu0 0
    %5732 = vmatmul.mubr.bf16.gmra.mrb[0].mxu0 %v5690
    %v5733 = vpop.f32.mrb[0].mxu0
    %v5734 = vadd.f32 0.0, %v5733
    %v5735 = vpop.f32.mrb[0].mxu0
    %v5736 = vpop.f32.mrb[0].mxu0
    %v5737 = vadd.f32 0.0, %v5736
    %v5738 = vpop.f32.mrb[0].mxu0
    %5739 = vdwg.mxu0
    %v5740 = vpack.c.bf16 %v5729, %v5726
    %v5741 = vpack.c.bf16 %v5737, %v5734
    %v5742 = vld [vmem:[#allocation7] sm:$0xf]
    %v5743 = vld [vmem:[#allocation7 + $0x4] sm:$0xf]
    %v5744 = vld [vmem:[#allocation7 + $0x8] sm:$0xf]
    %v5745 = vld [vmem:[#allocation7 + $0xc] sm:$0xf]
    %v5746 = vld [vmem:[#allocation7 + $0x10] sm:$0xf]
    %v5747 = vld [vmem:[#allocation7 + $0x14] sm:$0xf]
    %v5748 = vld [vmem:[#allocation7 + $0x18] sm:$0xf]
    %v5749 = vld [vmem:[#allocation7 + $0x1c] sm:$0xf]
    %v5750 = vld [vmem:[#allocation7 + $0x20] sm:$0xf]
    %v5751 = vld [vmem:[#allocation7 + $0x24] sm:$0xf]
    %v5752 = vld [vmem:[#allocation7 + $0x28] sm:$0xf]
    %v5753 = vld [vmem:[#allocation7 + $0x2c] sm:$0xf]
    %v5754 = vld [vmem:[#allocation7 + $0x30] sm:$0xf]
    %v5755 = vld [vmem:[#allocation7 + $0x34] sm:$0xf]
    %v5756 = vld [vmem:[#allocation7 + $0x38] sm:$0xf]
    %v5757 = vld [vmem:[#allocation7 + $0x3c] sm:$0xf]
    %5758 = vset.pattern.permute.xlu0 1
    %5759 = vperm.xlu0 %5758, %v5665
    %v5760 = vpop.permute.xlu0 %5759
    %5761 = vset.pattern.permute.xlu0 1
    %5762 = vperm.xlu0 %5761, %v5666
    %v5763 = vpop.permute.xlu0 %5762
    %5764 = vset.pattern.permute.xlu0 1
    %5765 = vperm.xlu0 %5764, %v5667
    %v5766 = vpop.permute.xlu0 %5765
    %5767 = vset.pattern.permute.xlu0 1
    %5768 = vperm.xlu0 %5767, %v5668
    %v5769 = vpop.permute.xlu0 %5768
    %vm5770 = vcmp.eq.s32.totalorder %v220, %v5760
    %vm5771 = vcmp.eq.s32.totalorder %v220, %v5763
    %vm5772 = vcmp.eq.s32.totalorder %v220, %v5766
    %vm5773 = vcmp.eq.s32.totalorder %v220, %v5769
    %v5774 = vsel %vm5770, 1.0, 0.0
    %v5775 = vsel %vm5771, 1.0, 0.0
    %v5776 = vsel %vm5772, 1.0, 0.0
    %v5777 = vsel %vm5773, 1.0, 0.0
    %v5778 = vpack.c.bf16 %v5775, %v5774
    %v5779 = vpack.c.bf16 %v5777, %v5776
    %5780 = vmatprep.subr.bf16.mxu0 0
    %5781 = vmatpush1.bf16.msra.mxu0 %v5657
    %5782 = vmatprep.subr.bf16.mxu0 0
    %5783 = vmatpush1.bf16.msra.mxu0 %v5658
    %5784 = vmatprep.subr.bf16.mxu0 0
    %5785 = vmatpush1.bf16.msra.mxu0 %v5659
    %5786 = vmatprep.subr.bf16.mxu0 0
    %5787 = vmatpush1.bf16.msra.mxu0 %v5660
    %5788 = vmatprep.subr.bf16.mxu0 0
    %5789 = vmatpush1.bf16.msra.mxu0 %v5661
    %5790 = vmatprep.subr.bf16.mxu0 0
    %5791 = vmatpush1.bf16.msra.mxu0 %v5662
    %5792 = vmatprep.subr.bf16.mxu0 0
    %5793 = vmatpush1.bf16.msra.mxu0 %v5663
    %5794 = vmatprep.subr.bf16.mxu0 0
    %5795 = vmatpush1.bf16.msra.mxu0 %v5664
    %5796 = vmatprep.subr.bf16.mxu0 0
    %5797 = vmatpush1.bf16.msra.mxu0 0
    %5798 = vmatprep.subr.bf16.mxu0 0
    %5799 = vmatpush1.bf16.msra.mxu0 0
    %5800 = vmatprep.subr.bf16.mxu0 0
    %5801 = vmatpush1.bf16.msra.mxu0 0
    %5802 = vmatprep.subr.bf16.mxu0 0
    %5803 = vmatpush1.bf16.msra.mxu0 0
    %5804 = vmatprep.subr.bf16.mxu0 0
    %5805 = vmatpush1.bf16.msra.mxu0 0
    %5806 = vmatprep.subr.bf16.mxu0 0
    %5807 = vmatpush1.bf16.msra.mxu0 0
    %5808 = vmatprep.subr.bf16.mxu0 0
    %5809 = vmatpush1.bf16.msra.mxu0 0
    %5810 = vmatprep.subr.bf16.mxu0 0
    %5811 = vmatpush1.bf16.msra.mxu0 0
    %5812 = vmatprep.mubr.bf16.mxu0 0
    %5813 = vmatmul.mubr.bf16.gmra.mrb[0].mxu0 %v5778
    %v5814 = vpop.f32.mrb[0].mxu0
    %v5815 = vadd.f32 0.0, %v5814
    %v5816 = vpop.f32.mrb[0].mxu0
    %v5817 = vpop.f32.mrb[0].mxu0
    %v5818 = vadd.f32 0.0, %v5817
    %v5819 = vpop.f32.mrb[0].mxu0
    %5820 = vmatprep.mubr.bf16.mxu0 0
    %5821 = vmatmul.mubr.bf16.gmra.mrb[0].mxu0 %v5779
    %v5822 = vpop.f32.mrb[0].mxu0
    %v5823 = vadd.f32 0.0, %v5822
    %v5824 = vpop.f32.mrb[0].mxu0
    %v5825 = vpop.f32.mrb[0].mxu0
    %v5826 = vadd.f32 0.0, %v5825
    %v5827 = vpop.f32.mrb[0].mxu0
    %5828 = vdwg.mxu0
    %v5829 = vpack.c.bf16 %v5818, %v5815
    %v5830 = vpack.c.bf16 %v5826, %v5823
    %s5831 = scalar_lea.vmem [#allocation7], 64
    %v5832 = vld [vmem:[%s5831] sm:$0xf]
    %v5833 = vld [vmem:[%s5831 + $0x4] sm:$0xf]
    %v5834 = vld [vmem:[%s5831 + $0x8] sm:$0xf]
    %v5835 = vld [vmem:[%s5831 + $0xc] sm:$0xf]
    %v5836 = vld [vmem:[%s5831 + $0x10] sm:$0xf]
    %v5837 = vld [vmem:[%s5831 + $0x14] sm:$0xf]
    %v5838 = vld [vmem:[%s5831 + $0x18] sm:$0xf]
    %v5839 = vld [vmem:[%s5831 + $0x1c] sm:$0xf]
    %v5840 = vld [vmem:[%s5831 + $0x20] sm:$0xf]
    %v5841 = vld [vmem:[%s5831 + $0x24] sm:$0xf]
    %v5842 = vld [vmem:[%s5831 + $0x28] sm:$0xf]
    %v5843 = vld [vmem:[%s5831 + $0x2c] sm:$0xf]
    %v5844 = vld [vmem:[%s5831 + $0x30] sm:$0xf]
    %v5845 = vld [vmem:[%s5831 + $0x34] sm:$0xf]
    %v5846 = vld [vmem:[%s5831 + $0x38] sm:$0xf]
    %v5847 = vld [vmem:[%s5831 + $0x3c] sm:$0xf]
    %v5864 = vunpack.c.l.b16 %v5832
    %v5865 = vunpack.c.l.b16 %v5833
    %v5866 = vunpack.c.l.b16 %v5834
    %v5867 = vunpack.c.l.b16 %v5835
    %v5868 = vunpack.c.l.b16 %v5836
    %v5869 = vunpack.c.l.b16 %v5837
    %v5870 = vunpack.c.l.b16 %v5838
    %v5871 = vunpack.c.l.b16 %v5839
    %v5872 = vunpack.c.l.b16 %v5840
    %v5873 = vunpack.c.l.b16 %v5841
    %v5874 = vunpack.c.l.b16 %v5842
    %v5875 = vunpack.c.l.b16 %v5843
    %v5876 = vunpack.c.l.b16 %v5844
    %v5877 = vunpack.c.l.b16 %v5845
    %v5878 = vunpack.c.l.b16 %v5846
    %v5879 = vunpack.c.l.b16 %v5847
    %v5880 = vpack.c.b16 %v5865, %v5864
    %v5881 = vpack.c.b16 %v5867, %v5866
    %v5882 = vpack.c.b16 %v5869, %v5868
    %v5883 = vpack.c.b16 %v5871, %v5870
    %v5884 = vpack.c.b16 %v5873, %v5872
    %v5885 = vpack.c.b16 %v5875, %v5874
    %v5886 = vpack.c.b16 %v5877, %v5876
    %v5887 = vpack.c.b16 %v5879, %v5878
    %5896 = vmatprep.subr.bf16.mxu0 0
    %5897 = vmatpush1.bf16.msra.mxu0 %v5880
    %5898 = vmatprep.subr.bf16.mxu0 0
    %5899 = vmatpush1.bf16.msra.mxu0 %v5881
    %5900 = vmatprep.subr.bf16.mxu0 0
    %5901 = vmatpush1.bf16.msra.mxu0 %v5882
    %5902 = vmatprep.subr.bf16.mxu0 0
    %5903 = vmatpush1.bf16.msra.mxu0 %v5883
    %5904 = vmatprep.subr.bf16.mxu0 0
    %5905 = vmatpush1.bf16.msra.mxu0 %v5884
    %5906 = vmatprep.subr.bf16.mxu0 0
    %5907 = vmatpush1.bf16.msra.mxu0 %v5885
    %5908 = vmatprep.subr.bf16.mxu0 0
    %5909 = vmatpush1.bf16.msra.mxu0 %v5886
    %5910 = vmatprep.subr.bf16.mxu0 0
    %5911 = vmatpush1.bf16.msra.mxu0 %v5887
    %5912 = vmatprep.subr.bf16.mxu0 0
    %5913 = vmatpush1.bf16.msra.mxu0 0
    %5914 = vmatprep.subr.bf16.mxu0 0
    %5915 = vmatpush1.bf16.msra.mxu0 0
    %5916 = vmatprep.subr.bf16.mxu0 0
    %5917 = vmatpush1.bf16.msra.mxu0 0
    %5918 = vmatprep.subr.bf16.mxu0 0
    %5919 = vmatpush1.bf16.msra.mxu0 0
    %5920 = vmatprep.subr.bf16.mxu0 0
    %5921 = vmatpush1.bf16.msra.mxu0 0
    %5922 = vmatprep.subr.bf16.mxu0 0
    %5923 = vmatpush1.bf16.msra.mxu0 0
    %5924 = vmatprep.subr.bf16.mxu0 0
    %5925 = vmatpush1.bf16.msra.mxu0 0
    %5926 = vmatprep.subr.bf16.mxu0 0
    %5927 = vmatpush1.bf16.msra.mxu0 0
    %5928 = vmatprep.mubr.bf16.mxu0 0
    %5929 = vmatmul.mubr.bf16.gmra.mrb[0].mxu0 %v5829
    %v5930 = vpop.f32.mrb[0].mxu0
    %v5931 = vadd.f32 0.0, %v5930
    %v5932 = vpop.f32.mrb[0].mxu0
    %v5933 = vpop.f32.mrb[0].mxu0
    %v5934 = vadd.f32 0.0, %v5933
    %v5935 = vpop.f32.mrb[0].mxu0
    %5936 = vmatprep.mubr.bf16.mxu0 0
    %5937 = vmatmul.mubr.bf16.gmra.mrb[0].mxu0 %v5830
    %v5938 = vpop.f32.mrb[0].mxu0
    %v5939 = vadd.f32 0.0, %v5938
    %v5940 = vpop.f32.mrb[0].mxu0
    %v5941 = vpop.f32.mrb[0].mxu0
    %v5942 = vadd.f32 0.0, %v5941
    %v5943 = vpop.f32.mrb[0].mxu0
    %5944 = vdwg.mxu0
    %v5961 = vunpack.c.l.b16 %v5742
    %v5962 = vunpack.c.l.b16 %v5743
    %v5963 = vunpack.c.l.b16 %v5744
    %v5964 = vunpack.c.l.b16 %v5745
    %v5965 = vunpack.c.l.b16 %v5746
    %v5966 = vunpack.c.l.b16 %v5747
    %v5967 = vunpack.c.l.b16 %v5748
    %v5968 = vunpack.c.l.b16 %v5749
    %v5969 = vunpack.c.l.b16 %v5750
    %v5970 = vunpack.c.l.b16 %v5751
    %v5971 = vunpack.c.l.b16 %v5752
    %v5972 = vunpack.c.l.b16 %v5753
    %v5973 = vunpack.c.l.b16 %v5754
    %v5974 = vunpack.c.l.b16 %v5755
    %v5975 = vunpack.c.l.b16 %v5756
    %v5976 = vunpack.c.l.b16 %v5757
    %v5977 = vpack.c.b16 %v5962, %v5961
    %v5978 = vpack.c.b16 %v5964, %v5963
    %v5979 = vpack.c.b16 %v5966, %v5965
    %v5980 = vpack.c.b16 %v5968, %v5967
    %v5981 = vpack.c.b16 %v5970, %v5969
    %v5982 = vpack.c.b16 %v5972, %v5971
    %v5983 = vpack.c.b16 %v5974, %v5973
    %v5984 = vpack.c.b16 %v5976, %v5975
    %5993 = vmatprep.subr.bf16.mxu0 0
    %5994 = vmatpush1.bf16.msra.mxu0 %v5977
    %5995 = vmatprep.subr.bf16.mxu0 0
    %5996 = vmatpush1.bf16.msra.mxu0 %v5978
    %5997 = vmatprep.subr.bf16.mxu0 0
    %5998 = vmatpush1.bf16.msra.mxu0 %v5979
    %5999 = vmatprep.subr.bf16.mxu0 0
    %6000 = vmatpush1.bf16.msra.mxu0 %v5980
    %6001 = vmatprep.subr.bf16.mxu0 0
    %6002 = vmatpush1.bf16.msra.mxu0 %v5981
    %6003 = vmatprep.subr.bf16.mxu0 0
    %6004 = vmatpush1.bf16.msra.mxu0 %v5982
    %6005 = vmatprep.subr.bf16.mxu0 0
    %6006 = vmatpush1.bf16.msra.mxu0 %v5983
    %6007 = vmatprep.subr.bf16.mxu0 0
    %6008 = vmatpush1.bf16.msra.mxu0 %v5984
    %6009 = vmatprep.subr.bf16.mxu0 0
    %6010 = vmatpush1.bf16.msra.mxu0 0
    %6011 = vmatprep.subr.bf16.mxu0 0
    %6012 = vmatpush1.bf16.msra.mxu0 0
    %6013 = vmatprep.subr.bf16.mxu0 0
    %6014 = vmatpush1.bf16.msra.mxu0 0
    %6015 = vmatprep.subr.bf16.mxu0 0
    %6016 = vmatpush1.bf16.msra.mxu0 0
    %6017 = vmatprep.subr.bf16.mxu0 0
    %6018 = vmatpush1.bf16.msra.mxu0 0
    %6019 = vmatprep.subr.bf16.mxu0 0
    %6020 = vmatpush1.bf16.msra.mxu0 0
    %6021 = vmatprep.subr.bf16.mxu0 0
    %6022 = vmatpush1.bf16.msra.mxu0 0
    %6023 = vmatprep.subr.bf16.mxu0 0
    %6024 = vmatpush1.bf16.msra.mxu0 0
    %6025 = vmatprep.mubr.bf16.mxu0 0
    %6026 = vmatmul.mubr.bf16.gmra.mrb[0].mxu0 %v5740
    %v6027 = vpop.f32.mrb[0].mxu0
    %v6028 = vadd.f32 %v5931, %v6027
    %v6029 = vpop.f32.mrb[0].mxu0
    %v6030 = vpop.f32.mrb[0].mxu0
    %v6031 = vadd.f32 %v5934, %v6030
    %v6032 = vpop.f32.mrb[0].mxu0
    %6033 = vmatprep.mubr.bf16.mxu0 0
    %6034 = vmatmul.mubr.bf16.gmra.mrb[0].mxu0 %v5741
    %v6035 = vpop.f32.mrb[0].mxu0
    %v6036 = vadd.f32 %v5939, %v6035
    %v6037 = vpop.f32.mrb[0].mxu0
    %v6038 = vpop.f32.mrb[0].mxu0
    %v6039 = vadd.f32 %v5942, %v6038
    %v6040 = vpop.f32.mrb[0].mxu0
    %6041 = vdwg.mxu0
    %6042 = vset.pattern.permute.xlu0 2
    %6043 = vperm.xlu0 %6042, %v5665
    %v6044 = vpop.permute.xlu0 %6043
    %6045 = vset.pattern.permute.xlu0 2
    %6046 = vperm.xlu0 %6045, %v5666
    %v6047 = vpop.permute.xlu0 %6046
    %6048 = vset.pattern.permute.xlu0 2
    %6049 = vperm.xlu0 %6048, %v5667
    %v6050 = vpop.permute.xlu0 %6049
    %6051 = vset.pattern.permute.xlu0 2
    %6052 = vperm.xlu0 %6051, %v5668
    %v6053 = vpop.permute.xlu0 %6052
    %vm6054 = vcmp.eq.s32.totalorder %v220, %v6044
    %vm6055 = vcmp.eq.s32.totalorder %v220, %v6047
    %vm6056 = vcmp.eq.s32.totalorder %v220, %v6050
    %vm6057 = vcmp.eq.s32.totalorder %v220, %v6053
    %v6058 = vsel %vm6054, 1.0, 0.0
    %v6059 = vsel %vm6055, 1.0, 0.0
    %v6060 = vsel %vm6056, 1.0, 0.0
    %v6061 = vsel %vm6057, 1.0, 0.0
    %v6062 = vpack.c.bf16 %v6059, %v6058
    %v6063 = vpack.c.bf16 %v6061, %v6060
    %6064 = vmatprep.subr.bf16.mxu0 0
    %6065 = vmatpush1.bf16.msra.mxu0 %v5657
    %6066 = vmatprep.subr.bf16.mxu0 0
    %6067 = vmatpush1.bf16.msra.mxu0 %v5658
    %6068 = vmatprep.subr.bf16.mxu0 0
    %6069 = vmatpush1.bf16.msra.mxu0 %v5659
    %6070 = vmatprep.subr.bf16.mxu0 0
    %6071 = vmatpush1.bf16.msra.mxu0 %v5660
    %6072 = vmatprep.subr.bf16.mxu0 0
    %6073 = vmatpush1.bf16.msra.mxu0 %v5661
    %6074 = vmatprep.subr.bf16.mxu0 0
    %6075 = vmatpush1.bf16.msra.mxu0 %v5662
    %6076 = vmatprep.subr.bf16.mxu0 0
    %6077 = vmatpush1.bf16.msra.mxu0 %v5663
    %6078 = vmatprep.subr.bf16.mxu0 0
    %6079 = vmatpush1.bf16.msra.mxu0 %v5664
    %6080 = vmatprep.subr.bf16.mxu0 0
    %6081 = vmatpush1.bf16.msra.mxu0 0
    %6082 = vmatprep.subr.bf16.mxu0 0
    %6083 = vmatpush1.bf16.msra.mxu0 0
    %6084 = vmatprep.subr.bf16.mxu0 0
    %6085 = vmatpush1.bf16.msra.mxu0 0
    %6086 = vmatprep.subr.bf16.mxu0 0
    %6087 = vmatpush1.bf16.msra.mxu0 0
    %6088 = vmatprep.subr.bf16.mxu0 0
    %6089 = vmatpush1.bf16.msra.mxu0 0
    %6090 = vmatprep.subr.bf16.mxu0 0
    %6091 = vmatpush1.bf16.msra.mxu0 0
    %6092 = vmatprep.subr.bf16.mxu0 0
    %6093 = vmatpush1.bf16.msra.mxu0 0
    %6094 = vmatprep.subr.bf16.mxu0 0
    %6095 = vmatpush1.bf16.msra.mxu0 0
    %6096 = vmatprep.mubr.bf16.mxu0 0
    %6097 = vmatmul.mubr.bf16.gmra.mrb[0].mxu0 %v6062
    %v6098 = vpop.f32.mrb[0].mxu0
    %v6099 = vadd.f32 0.0, %v6098
    %v6100 = vpop.f32.mrb[0].mxu0
    %v6101 = vpop.f32.mrb[0].mxu0
    %v6102 = vadd.f32 0.0, %v6101
    %v6103 = vpop.f32.mrb[0].mxu0
    %6104 = vmatprep.mubr.bf16.mxu0 0
    %6105 = vmatmul.mubr.bf16.gmra.mrb[0].mxu0 %v6063
    %v6106 = vpop.f32.mrb[0].mxu0
    %v6107 = vadd.f32 0.0, %v6106
    %v6108 = vpop.f32.mrb[0].mxu0
    %v6109 = vpop.f32.mrb[0].mxu0
    %v6110 = vadd.f32 0.0, %v6109
    %v6111 = vpop.f32.mrb[0].mxu0
    %6112 = vdwg.mxu0
    %v6113 = vpack.c.bf16 %v6102, %v6099
    %v6114 = vpack.c.bf16 %v6110, %v6107
    %s6115 = scalar_lea.vmem [#allocation7], 128
    %v6116 = vld [vmem:[%s6115] sm:$0xf]
    %v6117 = vld [vmem:[%s6115 + $0x4] sm:$0xf]
    %v6118 = vld [vmem:[%s6115 + $0x8] sm:$0xf]
    %v6119 = vld [vmem:[%s6115 + $0xc] sm:$0xf]
    %v6120 = vld [vmem:[%s6115 + $0x10] sm:$0xf]
    %v6121 = vld [vmem:[%s6115 + $0x14] sm:$0xf]
    %v6122 = vld [vmem:[%s6115 + $0x18] sm:$0xf]
    %v6123 = vld [vmem:[%s6115 + $0x1c] sm:$0xf]
    %v6124 = vld [vmem:[%s6115 + $0x20] sm:$0xf]
    %v6125 = vld [vmem:[%s6115 + $0x24] sm:$0xf]
    %v6126 = vld [vmem:[%s6115 + $0x28] sm:$0xf]
    %v6127 = vld [vmem:[%s6115 + $0x2c] sm:$0xf]
    %v6128 = vld [vmem:[%s6115 + $0x30] sm:$0xf]
    %v6129 = vld [vmem:[%s6115 + $0x34] sm:$0xf]
    %v6130 = vld [vmem:[%s6115 + $0x38] sm:$0xf]
    %v6131 = vld [vmem:[%s6115 + $0x3c] sm:$0xf]
    %v6148 = vunpack.c.l.b16 %v6116
    %v6149 = vunpack.c.l.b16 %v6117
    %v6150 = vunpack.c.l.b16 %v6118
    %v6151 = vunpack.c.l.b16 %v6119
    %v6152 = vunpack.c.l.b16 %v6120
    %v6153 = vunpack.c.l.b16 %v6121
    %v6154 = vunpack.c.l.b16 %v6122
    %v6155 = vunpack.c.l.b16 %v6123
    %v6156 = vunpack.c.l.b16 %v6124
    %v6157 = vunpack.c.l.b16 %v6125
    %v6158 = vunpack.c.l.b16 %v6126
    %v6159 = vunpack.c.l.b16 %v6127
    %v6160 = vunpack.c.l.b16 %v6128
    %v6161 = vunpack.c.l.b16 %v6129
    %v6162 = vunpack.c.l.b16 %v6130
    %v6163 = vunpack.c.l.b16 %v6131
    %v6164 = vpack.c.b16 %v6149, %v6148
    %v6165 = vpack.c.b16 %v6151, %v6150
    %v6166 = vpack.c.b16 %v6153, %v6152
    %v6167 = vpack.c.b16 %v6155, %v6154
    %v6168 = vpack.c.b16 %v6157, %v6156
    %v6169 = vpack.c.b16 %v6159, %v6158
    %v6170 = vpack.c.b16 %v6161, %v6160
    %v6171 = vpack.c.b16 %v6163, %v6162
    %6180 = vmatprep.subr.bf16.mxu0 0
    %6181 = vmatpush1.bf16.msra.mxu0 %v6164
    %6182 = vmatprep.subr.bf16.mxu0 0
    %6183 = vmatpush1.bf16.msra.mxu0 %v6165
    %6184 = vmatprep.subr.bf16.mxu0 0
    %6185 = vmatpush1.bf16.msra.mxu0 %v6166
    %6186 = vmatprep.subr.bf16.mxu0 0
    %6187 = vmatpush1.bf16.msra.mxu0 %v6167
    %6188 = vmatprep.subr.bf16.mxu0 0
    %6189 = vmatpush1.bf16.msra.mxu0 %v6168
    %6190 = vmatprep.subr.bf16.mxu0 0
    %6191 = vmatpush1.bf16.msra.mxu0 %v6169
    %6192 = vmatprep.subr.bf16.mxu0 0
    %6193 = vmatpush1.bf16.msra.mxu0 %v6170
    %6194 = vmatprep.subr.bf16.mxu0 0
    %6195 = vmatpush1.bf16.msra.mxu0 %v6171
    %6196 = vmatprep.subr.bf16.mxu0 0
    %6197 = vmatpush1.bf16.msra.mxu0 0
    %6198 = vmatprep.subr.bf16.mxu0 0
    %6199 = vmatpush1.bf16.msra.mxu0 0
    %6200 = vmatprep.subr.bf16.mxu0 0
    %6201 = vmatpush1.bf16.msra.mxu0 0
    %6202 = vmatprep.subr.bf16.mxu0 0
    %6203 = vmatpush1.bf16.msra.mxu0 0
    %6204 = vmatprep.subr.bf16.mxu0 0
    %6205 = vmatpush1.bf16.msra.mxu0 0
    %6206 = vmatprep.subr.bf16.mxu0 0
    %6207 = vmatpush1.bf16.msra.mxu0 0
    %6208 = vmatprep.subr.bf16.mxu0 0
    %6209 = vmatpush1.bf16.msra.mxu0 0
    %6210 = vmatprep.subr.bf16.mxu0 0
    %6211 = vmatpush1.bf16.msra.mxu0 0
    %6212 = vmatprep.mubr.bf16.mxu0 0
    %6213 = vmatmul.mubr.bf16.gmra.mrb[0].mxu0 %v6113
    %v6214 = vpop.f32.mrb[0].mxu0
    %v6215 = vadd.f32 0.0, %v6214
    %v6216 = vpop.f32.mrb[0].mxu0
    %v6217 = vpop.f32.mrb[0].mxu0
    %v6218 = vadd.f32 0.0, %v6217
    %v6219 = vpop.f32.mrb[0].mxu0
    %6220 = vmatprep.mubr.bf16.mxu0 0
    %6221 = vmatmul.mubr.bf16.gmra.mrb[0].mxu0 %v6114
    %v6222 = vpop.f32.mrb[0].mxu0
    %v6223 = vadd.f32 0.0, %v6222
    %v6224 = vpop.f32.mrb[0].mxu0
    %v6225 = vpop.f32.mrb[0].mxu0
    %v6226 = vadd.f32 0.0, %v6225
    %v6227 = vpop.f32.mrb[0].mxu0
    %6228 = vdwg.mxu0
    %v6229 = vadd.f32 %v6028, %v6215
    %v6230 = vadd.f32 %v6031, %v6218
    %v6231 = vadd.f32 %v6036, %v6223
    %v6232 = vadd.f32 %v6039, %v6226
    %6233 = vset.pattern.permute.xlu0 3
    %6234 = vperm.xlu0 %6233, %v5665
    %v6235 = vpop.permute.xlu0 %6234
    %6236 = vset.pattern.permute.xlu0 3
    %6237 = vperm.xlu0 %6236, %v5666
    %v6238 = vpop.permute.xlu0 %6237
    %6239 = vset.pattern.permute.xlu0 3
    %6240 = vperm.xlu0 %6239, %v5667
    %v6241 = vpop.permute.xlu0 %6240
    %6242 = vset.pattern.permute.xlu0 3
    %6243 = vperm.xlu0 %6242, %v5668
    %v6244 = vpop.permute.xlu0 %6243
    %vm6245 = vcmp.eq.s32.totalorder %v220, %v6235
    %vm6246 = vcmp.eq.s32.totalorder %v220, %v6238
    %vm6247 = vcmp.eq.s32.totalorder %v220, %v6241
    %vm6248 = vcmp.eq.s32.totalorder %v220, %v6244
    %v6249 = vsel %vm6245, 1.0, 0.0
    %v6250 = vsel %vm6246, 1.0, 0.0
    %v6251 = vsel %vm6247, 1.0, 0.0
    %v6252 = vsel %vm6248, 1.0, 0.0
    %v6253 = vpack.c.bf16 %v6250, %v6249
    %v6254 = vpack.c.bf16 %v6252, %v6251
    %6255 = vmatprep.subr.bf16.mxu0 0
    %6256 = vmatpush1.bf16.msra.mxu0 %v5657
    %6257 = vmatprep.subr.bf16.mxu0 0
    %6258 = vmatpush1.bf16.msra.mxu0 %v5658
    %6259 = vmatprep.subr.bf16.mxu0 0
    %6260 = vmatpush1.bf16.msra.mxu0 %v5659
    %6261 = vmatprep.subr.bf16.mxu0 0
    %6262 = vmatpush1.bf16.msra.mxu0 %v5660
    %6263 = vmatprep.subr.bf16.mxu0 0
    %6264 = vmatpush1.bf16.msra.mxu0 %v5661
    %6265 = vmatprep.subr.bf16.mxu0 0
    %6266 = vmatpush1.bf16.msra.mxu0 %v5662
    %6267 = vmatprep.subr.bf16.mxu0 0
    %6268 = vmatpush1.bf16.msra.mxu0 %v5663
    %6269 = vmatprep.subr.bf16.mxu0 0
    %6270 = vmatpush1.bf16.msra.mxu0 %v5664
    %6271 = vmatprep.subr.bf16.mxu0 0
    %6272 = vmatpush1.bf16.msra.mxu0 0
    %6273 = vmatprep.subr.bf16.mxu0 0
    %6274 = vmatpush1.bf16.msra.mxu0 0
    %6275 = vmatprep.subr.bf16.mxu0 0
    %6276 = vmatpush1.bf16.msra.mxu0 0
    %6277 = vmatprep.subr.bf16.mxu0 0
    %6278 = vmatpush1.bf16.msra.mxu0 0
    %6279 = vmatprep.subr.bf16.mxu0 0
    %6280 = vmatpush1.bf16.msra.mxu0 0
    %6281 = vmatprep.subr.bf16.mxu0 0
    %6282 = vmatpush1.bf16.msra.mxu0 0
    %6283 = vmatprep.subr.bf16.mxu0 0
    %6284 = vmatpush1.bf16.msra.mxu0 0
    %6285 = vmatprep.subr.bf16.mxu0 0
    %6286 = vmatpush1.bf16.msra.mxu0 0
    %6287 = vmatprep.mubr.bf16.mxu0 0
    %6288 = vmatmul.mubr.bf16.gmra.mrb[0].mxu0 %v6253
    %v6289 = vpop.f32.mrb[0].mxu0
    %v6290 = vadd.f32 0.0, %v6289
    %v6291 = vpop.f32.mrb[0].mxu0
    %v6292 = vpop.f32.mrb[0].mxu0
    %v6293 = vadd.f32 0.0, %v6292
    %v6294 = vpop.f32.mrb[0].mxu0
    %6295 = vmatprep.mubr.bf16.mxu0 0
    %6296 = vmatmul.mubr.bf16.gmra.mrb[0].mxu0 %v6254
    %v6297 = vpop.f32.mrb[0].mxu0
    %v6298 = vadd.f32 0.0, %v6297
    %v6299 = vpop.f32.mrb[0].mxu0
    %v6300 = vpop.f32.mrb[0].mxu0
    %v6301 = vadd.f32 0.0, %v6300
    %v6302 = vpop.f32.mrb[0].mxu0
    %6303 = vdwg.mxu0
    %v6304 = vpack.c.bf16 %v6293, %v6290
    %v6305 = vpack.c.bf16 %v6301, %v6298
    %s6306 = scalar_lea.vmem [#allocation7], 192
    %v6307 = vld [vmem:[%s6306] sm:$0xf]
    %v6308 = vld [vmem:[%s6306 + $0x4] sm:$0xf]
    %v6309 = vld [vmem:[%s6306 + $0x8] sm:$0xf]
    %v6310 = vld [vmem:[%s6306 + $0xc] sm:$0xf]
    %v6311 = vld [vmem:[%s6306 + $0x10] sm:$0xf]
    %v6312 = vld [vmem:[%s6306 + $0x14] sm:$0xf]
    %v6313 = vld [vmem:[%s6306 + $0x18] sm:$0xf]
    %v6314 = vld [vmem:[%s6306 + $0x1c] sm:$0xf]
    %v6315 = vld [vmem:[%s6306 + $0x20] sm:$0xf]
    %v6316 = vld [vmem:[%s6306 + $0x24] sm:$0xf]
    %v6317 = vld [vmem:[%s6306 + $0x28] sm:$0xf]
    %v6318 = vld [vmem:[%s6306 + $0x2c] sm:$0xf]
    %v6319 = vld [vmem:[%s6306 + $0x30] sm:$0xf]
    %v6320 = vld [vmem:[%s6306 + $0x34] sm:$0xf]
    %v6321 = vld [vmem:[%s6306 + $0x38] sm:$0xf]
    %v6322 = vld [vmem:[%s6306 + $0x3c] sm:$0xf]
    %v6339 = vunpack.c.l.b16 %v6307
    %v6340 = vunpack.c.l.b16 %v6308
    %v6341 = vunpack.c.l.b16 %v6309
    %v6342 = vunpack.c.l.b16 %v6310
    %v6343 = vunpack.c.l.b16 %v6311
    %v6344 = vunpack.c.l.b16 %v6312
    %v6345 = vunpack.c.l.b16 %v6313
    %v6346 = vunpack.c.l.b16 %v6314
    %v6347 = vunpack.c.l.b16 %v6315
    %v6348 = vunpack.c.l.b16 %v6316
    %v6349 = vunpack.c.l.b16 %v6317
    %v6350 = vunpack.c.l.b16 %v6318
    %v6351 = vunpack.c.l.b16 %v6319
    %v6352 = vunpack.c.l.b16 %v6320
    %v6353 = vunpack.c.l.b16 %v6321
    %v6354 = vunpack.c.l.b16 %v6322
    %v6355 = vpack.c.b16 %v6340, %v6339
    %v6356 = vpack.c.b16 %v6342, %v6341
    %v6357 = vpack.c.b16 %v6344, %v6343
    %v6358 = vpack.c.b16 %v6346, %v6345
    %v6359 = vpack.c.b16 %v6348, %v6347
    %v6360 = vpack.c.b16 %v6350, %v6349
    %v6361 = vpack.c.b16 %v6352, %v6351
    %v6362 = vpack.c.b16 %v6354, %v6353
    %6371 = vmatprep.subr.bf16.mxu0 0
    %6372 = vmatpush1.bf16.msra.mxu0 %v6355
    %6373 = vmatprep.subr.bf16.mxu0 0
    %6374 = vmatpush1.bf16.msra.mxu0 %v6356
    %6375 = vmatprep.subr.bf16.mxu0 0
    %6376 = vmatpush1.bf16.msra.mxu0 %v6357
    %6377 = vmatprep.subr.bf16.mxu0 0
    %6378 = vmatpush1.bf16.msra.mxu0 %v6358
    %6379 = vmatprep.subr.bf16.mxu0 0
    %6380 = vmatpush1.bf16.msra.mxu0 %v6359
    %6381 = vmatprep.subr.bf16.mxu0 0
    %6382 = vmatpush1.bf16.msra.mxu0 %v6360
    %6383 = vmatprep.subr.bf16.mxu0 0
    %6384 = vmatpush1.bf16.msra.mxu0 %v6361
    %6385 = vmatprep.subr.bf16.mxu0 0
    %6386 = vmatpush1.bf16.msra.mxu0 %v6362
    %6387 = vmatprep.subr.bf16.mxu0 0
    %6388 = vmatpush1.bf16.msra.mxu0 0
    %6389 = vmatprep.subr.bf16.mxu0 0
    %6390 = vmatpush1.bf16.msra.mxu0 0
    %6391 = vmatprep.subr.bf16.mxu0 0
    %6392 = vmatpush1.bf16.msra.mxu0 0
    %6393 = vmatprep.subr.bf16.mxu0 0
    %6394 = vmatpush1.bf16.msra.mxu0 0
    %6395 = vmatprep.subr.bf16.mxu0 0
    %6396 = vmatpush1.bf16.msra.mxu0 0
    %6397 = vmatprep.subr.bf16.mxu0 0
    %6398 = vmatpush1.bf16.msra.mxu0 0
    %6399 = vmatprep.subr.bf16.mxu0 0
    %6400 = vmatpush1.bf16.msra.mxu0 0
    %6401 = vmatprep.subr.bf16.mxu0 0
    %6402 = vmatpush1.bf16.msra.mxu0 0
    %6403 = vmatprep.mubr.bf16.mxu0 0
    %6404 = vmatmul.mubr.bf16.gmra.mrb[0].mxu0 %v6304
    %v6405 = vpop.f32.mrb[0].mxu0
    %v6406 = vadd.f32 0.0, %v6405
    %v6407 = vpop.f32.mrb[0].mxu0
    %v6408 = vpop.f32.mrb[0].mxu0
    %v6409 = vadd.f32 0.0, %v6408
    %v6410 = vpop.f32.mrb[0].mxu0
    %6411 = vmatprep.mubr.bf16.mxu0 0
    %6412 = vmatmul.mubr.bf16.gmra.mrb[0].mxu0 %v6305
    %v6413 = vpop.f32.mrb[0].mxu0
    %v6414 = vadd.f32 0.0, %v6413
    %v6415 = vpop.f32.mrb[0].mxu0
    %v6416 = vpop.f32.mrb[0].mxu0
    %v6417 = vadd.f32 0.0, %v6416
    %v6418 = vpop.f32.mrb[0].mxu0
    %6419 = vdwg.mxu0
    %v6420 = vadd.f32 %v6229, %v6406
    %v6421 = vadd.f32 %v6230, %v6409
    %v6422 = vadd.f32 %v6231, %v6414
    %v6423 = vadd.f32 %v6232, %v6417
    %6424 = vset.pattern.permute.xlu0 4
    %6425 = vperm.xlu0 %6424, %v5665
    %v6426 = vpop.permute.xlu0 %6425
    %6427 = vset.pattern.permute.xlu0 4
    %6428 = vperm.xlu0 %6427, %v5666
    %v6429 = vpop.permute.xlu0 %6428
    %6430 = vset.pattern.permute.xlu0 4
    %6431 = vperm.xlu0 %6430, %v5667
    %v6432 = vpop.permute.xlu0 %6431
    %6433 = vset.pattern.permute.xlu0 4
    %6434 = vperm.xlu0 %6433, %v5668
    %v6435 = vpop.permute.xlu0 %6434
    %vm6436 = vcmp.eq.s32.totalorder %v220, %v6426
    %vm6437 = vcmp.eq.s32.totalorder %v220, %v6429
    %vm6438 = vcmp.eq.s32.totalorder %v220, %v6432
    %vm6439 = vcmp.eq.s32.totalorder %v220, %v6435
    %v6440 = vsel %vm6436, 1.0, 0.0
    %v6441 = vsel %vm6437, 1.0, 0.0
    %v6442 = vsel %vm6438, 1.0, 0.0
    %v6443 = vsel %vm6439, 1.0, 0.0
    %v6444 = vpack.c.bf16 %v6441, %v6440
    %v6445 = vpack.c.bf16 %v6443, %v6442
    %6446 = vmatprep.subr.bf16.mxu0 0
    %6447 = vmatpush1.bf16.msra.mxu0 %v5657
    %6448 = vmatprep.subr.bf16.mxu0 0
    %6449 = vmatpush1.bf16.msra.mxu0 %v5658
    %6450 = vmatprep.subr.bf16.mxu0 0
    %6451 = vmatpush1.bf16.msra.mxu0 %v5659
    %6452 = vmatprep.subr.bf16.mxu0 0
    %6453 = vmatpush1.bf16.msra.mxu0 %v5660
    %6454 = vmatprep.subr.bf16.mxu0 0
    %6455 = vmatpush1.bf16.msra.mxu0 %v5661
    %6456 = vmatprep.subr.bf16.mxu0 0
    %6457 = vmatpush1.bf16.msra.mxu0 %v5662
    %6458 = vmatprep.subr.bf16.mxu0 0
    %6459 = vmatpush1.bf16.msra.mxu0 %v5663
    %6460 = vmatprep.subr.bf16.mxu0 0
    %6461 = vmatpush1.bf16.msra.mxu0 %v5664
    %6462 = vmatprep.subr.bf16.mxu0 0
    %6463 = vmatpush1.bf16.msra.mxu0 0
    %6464 = vmatprep.subr.bf16.mxu0 0
    %6465 = vmatpush1.bf16.msra.mxu0 0
    %6466 = vmatprep.subr.bf16.mxu0 0
    %6467 = vmatpush1.bf16.msra.mxu0 0
    %6468 = vmatprep.subr.bf16.mxu0 0
    %6469 = vmatpush1.bf16.msra.mxu0 0
    %6470 = vmatprep.subr.bf16.mxu0 0
    %6471 = vmatpush1.bf16.msra.mxu0 0
    %6472 = vmatprep.subr.bf16.mxu0 0
    %6473 = vmatpush1.bf16.msra.mxu0 0
    %6474 = vmatprep.subr.bf16.mxu0 0
    %6475 = vmatpush1.bf16.msra.mxu0 0
    %6476 = vmatprep.subr.bf16.mxu0 0
    %6477 = vmatpush1.bf16.msra.mxu0 0
    %6478 = vmatprep.mubr.bf16.mxu0 0
    %6479 = vmatmul.mubr.bf16.gmra.mrb[0].mxu0 %v6444
    %v6480 = vpop.f32.mrb[0].mxu0
    %v6481 = vadd.f32 0.0, %v6480
    %v6482 = vpop.f32.mrb[0].mxu0
    %v6483 = vpop.f32.mrb[0].mxu0
    %v6484 = vadd.f32 0.0, %v6483
    %v6485 = vpop.f32.mrb[0].mxu0
    %6486 = vmatprep.mubr.bf16.mxu0 0
    %6487 = vmatmul.mubr.bf16.gmra.mrb[0].mxu0 %v6445
    %v6488 = vpop.f32.mrb[0].mxu0
    %v6489 = vadd.f32 0.0, %v6488
    %v6490 = vpop.f32.mrb[0].mxu0
    %v6491 = vpop.f32.mrb[0].mxu0
    %v6492 = vadd.f32 0.0, %v6491
    %v6493 = vpop.f32.mrb[0].mxu0
    %6494 = vdwg.mxu0
    %v6495 = vpack.c.bf16 %v6484, %v6481
    %v6496 = vpack.c.bf16 %v6492, %v6489
    %s6497 = scalar_lea.vmem [#allocation7], 256
    %v6498 = vld [vmem:[%s6497] sm:$0xf]
    %v6499 = vld [vmem:[%s6497 + $0x4] sm:$0xf]
    %v6500 = vld [vmem:[%s6497 + $0x8] sm:$0xf]
    %v6501 = vld [vmem:[%s6497 + $0xc] sm:$0xf]
    %v6502 = vld [vmem:[%s6497 + $0x10] sm:$0xf]
    %v6503 = vld [vmem:[%s6497 + $0x14] sm:$0xf]
    %v6504 = vld [vmem:[%s6497 + $0x18] sm:$0xf]
    %v6505 = vld [vmem:[%s6497 + $0x1c] sm:$0xf]
    %v6506 = vld [vmem:[%s6497 + $0x20] sm:$0xf]
    %v6507 = vld [vmem:[%s6497 + $0x24] sm:$0xf]
    %v6508 = vld [vmem:[%s6497 + $0x28] sm:$0xf]
    %v6509 = vld [vmem:[%s6497 + $0x2c] sm:$0xf]
    %v6510 = vld [vmem:[%s6497 + $0x30] sm:$0xf]
    %v6511 = vld [vmem:[%s6497 + $0x34] sm:$0xf]
    %v6512 = vld [vmem:[%s6497 + $0x38] sm:$0xf]
    %v6513 = vld [vmem:[%s6497 + $0x3c] sm:$0xf]
    %v6530 = vunpack.c.l.b16 %v6498
    %v6531 = vunpack.c.l.b16 %v6499
    %v6532 = vunpack.c.l.b16 %v6500
    %v6533 = vunpack.c.l.b16 %v6501
    %v6534 = vunpack.c.l.b16 %v6502
    %v6535 = vunpack.c.l.b16 %v6503
    %v6536 = vunpack.c.l.b16 %v6504
    %v6537 = vunpack.c.l.b16 %v6505
    %v6538 = vunpack.c.l.b16 %v6506
    %v6539 = vunpack.c.l.b16 %v6507
    %v6540 = vunpack.c.l.b16 %v6508
    %v6541 = vunpack.c.l.b16 %v6509
    %v6542 = vunpack.c.l.b16 %v6510
    %v6543 = vunpack.c.l.b16 %v6511
    %v6544 = vunpack.c.l.b16 %v6512
    %v6545 = vunpack.c.l.b16 %v6513
    %v6546 = vpack.c.b16 %v6531, %v6530
    %v6547 = vpack.c.b16 %v6533, %v6532
    %v6548 = vpack.c.b16 %v6535, %v6534
    %v6549 = vpack.c.b16 %v6537, %v6536
    %v6550 = vpack.c.b16 %v6539, %v6538
    %v6551 = vpack.c.b16 %v6541, %v6540
    %v6552 = vpack.c.b16 %v6543, %v6542
    %v6553 = vpack.c.b16 %v6545, %v6544
    %6562 = vmatprep.subr.bf16.mxu0 0
    %6563 = vmatpush1.bf16.msra.mxu0 %v6546
    %6564 = vmatprep.subr.bf16.mxu0 0
    %6565 = vmatpush1.bf16.msra.mxu0 %v6547
    %6566 = vmatprep.subr.bf16.mxu0 0
    %6567 = vmatpush1.bf16.msra.mxu0 %v6548
    %6568 = vmatprep.subr.bf16.mxu0 0
    %6569 = vmatpush1.bf16.msra.mxu0 %v6549
    %6570 = vmatprep.subr.bf16.mxu0 0
    %6571 = vmatpush1.bf16.msra.mxu0 %v6550
    %6572 = vmatprep.subr.bf16.mxu0 0
    %6573 = vmatpush1.bf16.msra.mxu0 %v6551
    %6574 = vmatprep.subr.bf16.mxu0 0
    %6575 = vmatpush1.bf16.msra.mxu0 %v6552
    %6576 = vmatprep.subr.bf16.mxu0 0
    %6577 = vmatpush1.bf16.msra.mxu0 %v6553
    %6578 = vmatprep.subr.bf16.mxu0 0
    %6579 = vmatpush1.bf16.msra.mxu0 0
    %6580 = vmatprep.subr.bf16.mxu0 0
    %6581 = vmatpush1.bf16.msra.mxu0 0
    %6582 = vmatprep.subr.bf16.mxu0 0
    %6583 = vmatpush1.bf16.msra.mxu0 0
    %6584 = vmatprep.subr.bf16.mxu0 0
    %6585 = vmatpush1.bf16.msra.mxu0 0
    %6586 = vmatprep.subr.bf16.mxu0 0
    %6587 = vmatpush1.bf16.msra.mxu0 0
    %6588 = vmatprep.subr.bf16.mxu0 0
    %6589 = vmatpush1.bf16.msra.mxu0 0
    %6590 = vmatprep.subr.bf16.mxu0 0
    %6591 = vmatpush1.bf16.msra.mxu0 0
    %6592 = vmatprep.subr.bf16.mxu0 0
    %6593 = vmatpush1.bf16.msra.mxu0 0
    %6594 = vmatprep.mubr.bf16.mxu0 0
    %6595 = vmatmul.mubr.bf16.gmra.mrb[0].mxu0 %v6495
    %v6596 = vpop.f32.mrb[0].mxu0
    %v6597 = vadd.f32 0.0, %v6596
    %v6598 = vpop.f32.mrb[0].mxu0
    %v6599 = vpop.f32.mrb[0].mxu0
    %v6600 = vadd.f32 0.0, %v6599
    %v6601 = vpop.f32.mrb[0].mxu0
    %6602 = vmatprep.mubr.bf16.mxu0 0
    %6603 = vmatmul.mubr.bf16.gmra.mrb[0].mxu0 %v6496
    %v6604 = vpop.f32.mrb[0].mxu0
    %v6605 = vadd.f32 0.0, %v6604
    %v6606 = vpop.f32.mrb[0].mxu0
    %v6607 = vpop.f32.mrb[0].mxu0
    %v6608 = vadd.f32 0.0, %v6607
    %v6609 = vpop.f32.mrb[0].mxu0
    %6610 = vdwg.mxu0
    %v6611 = vadd.f32 %v6420, %v6597
    %v6612 = vadd.f32 %v6421, %v6600
    %v6613 = vadd.f32 %v6422, %v6605
    %v6614 = vadd.f32 %v6423, %v6608
    %6615 = vset.pattern.permute.xlu0 5
    %6616 = vperm.xlu0 %6615, %v5665
    %v6617 = vpop.permute.xlu0 %6616
    %6618 = vset.pattern.permute.xlu0 5
    %6619 = vperm.xlu0 %6618, %v5666
    %v6620 = vpop.permute.xlu0 %6619
    %6621 = vset.pattern.permute.xlu0 5
    %6622 = vperm.xlu0 %6621, %v5667
    %v6623 = vpop.permute.xlu0 %6622
    %6624 = vset.pattern.permute.xlu0 5
    %6625 = vperm.xlu0 %6624, %v5668
    %v6626 = vpop.permute.xlu0 %6625
    %vm6627 = vcmp.eq.s32.totalorder %v220, %v6617
    %vm6628 = vcmp.eq.s32.totalorder %v220, %v6620
    %vm6629 = vcmp.eq.s32.totalorder %v220, %v6623
    %vm6630 = vcmp.eq.s32.totalorder %v220, %v6626
    %v6631 = vsel %vm6627, 1.0, 0.0
    %v6632 = vsel %vm6628, 1.0, 0.0
    %v6633 = vsel %vm6629, 1.0, 0.0
    %v6634 = vsel %vm6630, 1.0, 0.0
    %v6635 = vpack.c.bf16 %v6632, %v6631
    %v6636 = vpack.c.bf16 %v6634, %v6633
    %6637 = vmatprep.subr.bf16.mxu0 0
    %6638 = vmatpush1.bf16.msra.mxu0 %v5657
    %6639 = vmatprep.subr.bf16.mxu0 0
    %6640 = vmatpush1.bf16.msra.mxu0 %v5658
    %6641 = vmatprep.subr.bf16.mxu0 0
    %6642 = vmatpush1.bf16.msra.mxu0 %v5659
    %6643 = vmatprep.subr.bf16.mxu0 0
    %6644 = vmatpush1.bf16.msra.mxu0 %v5660
    %6645 = vmatprep.subr.bf16.mxu0 0
    %6646 = vmatpush1.bf16.msra.mxu0 %v5661
    %6647 = vmatprep.subr.bf16.mxu0 0
    %6648 = vmatpush1.bf16.msra.mxu0 %v5662
    %6649 = vmatprep.subr.bf16.mxu0 0
    %6650 = vmatpush1.bf16.msra.mxu0 %v5663
    %6651 = vmatprep.subr.bf16.mxu0 0
    %6652 = vmatpush1.bf16.msra.mxu0 %v5664
    %6653 = vmatprep.subr.bf16.mxu0 0
    %6654 = vmatpush1.bf16.msra.mxu0 0
    %6655 = vmatprep.subr.bf16.mxu0 0
    %6656 = vmatpush1.bf16.msra.mxu0 0
    %6657 = vmatprep.subr.bf16.mxu0 0
    %6658 = vmatpush1.bf16.msra.mxu0 0
    %6659 = vmatprep.subr.bf16.mxu0 0
    %6660 = vmatpush1.bf16.msra.mxu0 0
    %6661 = vmatprep.subr.bf16.mxu0 0
    %6662 = vmatpush1.bf16.msra.mxu0 0
    %6663 = vmatprep.subr.bf16.mxu0 0
    %6664 = vmatpush1.bf16.msra.mxu0 0
    %6665 = vmatprep.subr.bf16.mxu0 0
    %6666 = vmatpush1.bf16.msra.mxu0 0
    %6667 = vmatprep.subr.bf16.mxu0 0
    %6668 = vmatpush1.bf16.msra.mxu0 0
    %6669 = vmatprep.mubr.bf16.mxu0 0
    %6670 = vmatmul.mubr.bf16.gmra.mrb[0].mxu0 %v6635
    %v6671 = vpop.f32.mrb[0].mxu0
    %v6672 = vadd.f32 0.0, %v6671
    %v6673 = vpop.f32.mrb[0].mxu0
    %v6674 = vpop.f32.mrb[0].mxu0
    %v6675 = vadd.f32 0.0, %v6674
    %v6676 = vpop.f32.mrb[0].mxu0
    %6677 = vmatprep.mubr.bf16.mxu0 0
    %6678 = vmatmul.mubr.bf16.gmra.mrb[0].mxu0 %v6636
    %v6679 = vpop.f32.mrb[0].mxu0
    %v6680 = vadd.f32 0.0, %v6679
    %v6681 = vpop.f32.mrb[0].mxu0
    %v6682 = vpop.f32.mrb[0].mxu0
    %v6683 = vadd.f32 0.0, %v6682
    %v6684 = vpop.f32.mrb[0].mxu0
    %6685 = vdwg.mxu0
    %v6686 = vpack.c.bf16 %v6675, %v6672
    %v6687 = vpack.c.bf16 %v6683, %v6680
    %s6688 = scalar_lea.vmem [#allocation7], 320
    %v6689 = vld [vmem:[%s6688] sm:$0xf]
    %v6690 = vld [vmem:[%s6688 + $0x4] sm:$0xf]
    %v6691 = vld [vmem:[%s6688 + $0x8] sm:$0xf]
    %v6692 = vld [vmem:[%s6688 + $0xc] sm:$0xf]
    %v6693 = vld [vmem:[%s6688 + $0x10] sm:$0xf]
    %v6694 = vld [vmem:[%s6688 + $0x14] sm:$0xf]
    %v6695 = vld [vmem:[%s6688 + $0x18] sm:$0xf]
    %v6696 = vld [vmem:[%s6688 + $0x1c] sm:$0xf]
    %v6697 = vld [vmem:[%s6688 + $0x20] sm:$0xf]
    %v6698 = vld [vmem:[%s6688 + $0x24] sm:$0xf]
    %v6699 = vld [vmem:[%s6688 + $0x28] sm:$0xf]
    %v6700 = vld [vmem:[%s6688 + $0x2c] sm:$0xf]
    %v6701 = vld [vmem:[%s6688 + $0x30] sm:$0xf]
    %v6702 = vld [vmem:[%s6688 + $0x34] sm:$0xf]
    %v6703 = vld [vmem:[%s6688 + $0x38] sm:$0xf]
    %v6704 = vld [vmem:[%s6688 + $0x3c] sm:$0xf]
    %v6721 = vunpack.c.l.b16 %v6689
    %v6722 = vunpack.c.l.b16 %v6690
    %v6723 = vunpack.c.l.b16 %v6691
    %v6724 = vunpack.c.l.b16 %v6692
    %v6725 = vunpack.c.l.b16 %v6693
    %v6726 = vunpack.c.l.b16 %v6694
    %v6727 = vunpack.c.l.b16 %v6695
    %v6728 = vunpack.c.l.b16 %v6696
    %v6729 = vunpack.c.l.b16 %v6697
    %v6730 = vunpack.c.l.b16 %v6698
    %v6731 = vunpack.c.l.b16 %v6699
    %v6732 = vunpack.c.l.b16 %v6700
    %v6733 = vunpack.c.l.b16 %v6701
    %v6734 = vunpack.c.l.b16 %v6702
    %v6735 = vunpack.c.l.b16 %v6703
    %v6736 = vunpack.c.l.b16 %v6704
    %v6737 = vpack.c.b16 %v6722, %v6721
    %v6738 = vpack.c.b16 %v6724, %v6723
    %v6739 = vpack.c.b16 %v6726, %v6725
    %v6740 = vpack.c.b16 %v6728, %v6727
    %v6741 = vpack.c.b16 %v6730, %v6729
    %v6742 = vpack.c.b16 %v6732, %v6731
    %v6743 = vpack.c.b16 %v6734, %v6733
    %v6744 = vpack.c.b16 %v6736, %v6735
    %6753 = vmatprep.subr.bf16.mxu0 0
    %6754 = vmatpush1.bf16.msra.mxu0 %v6737
    %6755 = vmatprep.subr.bf16.mxu0 0
    %6756 = vmatpush1.bf16.msra.mxu0 %v6738
    %6757 = vmatprep.subr.bf16.mxu0 0
    %6758 = vmatpush1.bf16.msra.mxu0 %v6739
    %6759 = vmatprep.subr.bf16.mxu0 0
    %6760 = vmatpush1.bf16.msra.mxu0 %v6740
    %6761 = vmatprep.subr.bf16.mxu0 0
    %6762 = vmatpush1.bf16.msra.mxu0 %v6741
    %6763 = vmatprep.subr.bf16.mxu0 0
    %6764 = vmatpush1.bf16.msra.mxu0 %v6742
    %6765 = vmatprep.subr.bf16.mxu0 0
    %6766 = vmatpush1.bf16.msra.mxu0 %v6743
    %6767 = vmatprep.subr.bf16.mxu0 0
    %6768 = vmatpush1.bf16.msra.mxu0 %v6744
    %6769 = vmatprep.subr.bf16.mxu0 0
    %6770 = vmatpush1.bf16.msra.mxu0 0
    %6771 = vmatprep.subr.bf16.mxu0 0
    %6772 = vmatpush1.bf16.msra.mxu0 0
    %6773 = vmatprep.subr.bf16.mxu0 0
    %6774 = vmatpush1.bf16.msra.mxu0 0
    %6775 = vmatprep.subr.bf16.mxu0 0
    %6776 = vmatpush1.bf16.msra.mxu0 0
    %6777 = vmatprep.subr.bf16.mxu0 0
    %6778 = vmatpush1.bf16.msra.mxu0 0
    %6779 = vmatprep.subr.bf16.mxu0 0
    %6780 = vmatpush1.bf16.msra.mxu0 0
    %6781 = vmatprep.subr.bf16.mxu0 0
    %6782 = vmatpush1.bf16.msra.mxu0 0
    %6783 = vmatprep.subr.bf16.mxu0 0
    %6784 = vmatpush1.bf16.msra.mxu0 0
    %6785 = vmatprep.mubr.bf16.mxu0 0
    %6786 = vmatmul.mubr.bf16.gmra.mrb[0].mxu0 %v6686
    %v6787 = vpop.f32.mrb[0].mxu0
    %v6788 = vadd.f32 0.0, %v6787
    %v6789 = vpop.f32.mrb[0].mxu0
    %v6790 = vpop.f32.mrb[0].mxu0
    %v6791 = vadd.f32 0.0, %v6790
    %v6792 = vpop.f32.mrb[0].mxu0
    %6793 = vmatprep.mubr.bf16.mxu0 0
    %6794 = vmatmul.mubr.bf16.gmra.mrb[0].mxu0 %v6687
    %v6795 = vpop.f32.mrb[0].mxu0
    %v6796 = vadd.f32 0.0, %v6795
    %v6797 = vpop.f32.mrb[0].mxu0
    %v6798 = vpop.f32.mrb[0].mxu0
    %v6799 = vadd.f32 0.0, %v6798
    %v6800 = vpop.f32.mrb[0].mxu0
    %6801 = vdwg.mxu0
    %v6802 = vadd.f32 %v6611, %v6788
    %v6803 = vadd.f32 %v6612, %v6791
    %v6804 = vadd.f32 %v6613, %v6796
    %v6805 = vadd.f32 %v6614, %v6799
    %6806 = vset.pattern.permute.xlu0 6
    %6807 = vperm.xlu0 %6806, %v5665
    %v6808 = vpop.permute.xlu0 %6807
    %6809 = vset.pattern.permute.xlu0 6
    %6810 = vperm.xlu0 %6809, %v5666
    %v6811 = vpop.permute.xlu0 %6810
    %6812 = vset.pattern.permute.xlu0 6
    %6813 = vperm.xlu0 %6812, %v5667
    %v6814 = vpop.permute.xlu0 %6813
    %6815 = vset.pattern.permute.xlu0 6
    %6816 = vperm.xlu0 %6815, %v5668
    %v6817 = vpop.permute.xlu0 %6816
    %vm6818 = vcmp.eq.s32.totalorder %v220, %v6808
    %vm6819 = vcmp.eq.s32.totalorder %v220, %v6811
    %vm6820 = vcmp.eq.s32.totalorder %v220, %v6814
    %vm6821 = vcmp.eq.s32.totalorder %v220, %v6817
    %v6822 = vsel %vm6818, 1.0, 0.0
    %v6823 = vsel %vm6819, 1.0, 0.0
    %v6824 = vsel %vm6820, 1.0, 0.0
    %v6825 = vsel %vm6821, 1.0, 0.0
    %v6826 = vpack.c.bf16 %v6823, %v6822
    %v6827 = vpack.c.bf16 %v6825, %v6824
    %6828 = vmatprep.subr.bf16.mxu0 0
    %6829 = vmatpush1.bf16.msra.mxu0 %v5657
    %6830 = vmatprep.subr.bf16.mxu0 0
    %6831 = vmatpush1.bf16.msra.mxu0 %v5658
    %6832 = vmatprep.subr.bf16.mxu0 0
    %6833 = vmatpush1.bf16.msra.mxu0 %v5659
    %6834 = vmatprep.subr.bf16.mxu0 0
    %6835 = vmatpush1.bf16.msra.mxu0 %v5660
    %6836 = vmatprep.subr.bf16.mxu0 0
    %6837 = vmatpush1.bf16.msra.mxu0 %v5661
    %6838 = vmatprep.subr.bf16.mxu0 0
    %6839 = vmatpush1.bf16.msra.mxu0 %v5662
    %6840 = vmatprep.subr.bf16.mxu0 0
    %6841 = vmatpush1.bf16.msra.mxu0 %v5663
    %6842 = vmatprep.subr.bf16.mxu0 0
    %6843 = vmatpush1.bf16.msra.mxu0 %v5664
    %6844 = vmatprep.subr.bf16.mxu0 0
    %6845 = vmatpush1.bf16.msra.mxu0 0
    %6846 = vmatprep.subr.bf16.mxu0 0
    %6847 = vmatpush1.bf16.msra.mxu0 0
    %6848 = vmatprep.subr.bf16.mxu0 0
    %6849 = vmatpush1.bf16.msra.mxu0 0
    %6850 = vmatprep.subr.bf16.mxu0 0
    %6851 = vmatpush1.bf16.msra.mxu0 0
    %6852 = vmatprep.subr.bf16.mxu0 0
    %6853 = vmatpush1.bf16.msra.mxu0 0
    %6854 = vmatprep.subr.bf16.mxu0 0
    %6855 = vmatpush1.bf16.msra.mxu0 0
    %6856 = vmatprep.subr.bf16.mxu0 0
    %6857 = vmatpush1.bf16.msra.mxu0 0
    %6858 = vmatprep.subr.bf16.mxu0 0
    %6859 = vmatpush1.bf16.msra.mxu0 0
    %6860 = vmatprep.mubr.bf16.mxu0 0
    %6861 = vmatmul.mubr.bf16.gmra.mrb[0].mxu0 %v6826
    %v6862 = vpop.f32.mrb[0].mxu0
    %v6863 = vadd.f32 0.0, %v6862
    %v6864 = vpop.f32.mrb[0].mxu0
    %v6865 = vpop.f32.mrb[0].mxu0
    %v6866 = vadd.f32 0.0, %v6865
    %v6867 = vpop.f32.mrb[0].mxu0
    %6868 = vmatprep.mubr.bf16.mxu0 0
    %6869 = vmatmul.mubr.bf16.gmra.mrb[0].mxu0 %v6827
    %v6870 = vpop.f32.mrb[0].mxu0
    %v6871 = vadd.f32 0.0, %v6870
    %v6872 = vpop.f32.mrb[0].mxu0
    %v6873 = vpop.f32.mrb[0].mxu0
    %v6874 = vadd.f32 0.0, %v6873
    %v6875 = vpop.f32.mrb[0].mxu0
    %6876 = vdwg.mxu0
    %v6877 = vpack.c.bf16 %v6866, %v6863
    %v6878 = vpack.c.bf16 %v6874, %v6871
    %s6879 = scalar_lea.vmem [#allocation7], 384
    %v6880 = vld [vmem:[%s6879] sm:$0xf]
    %v6881 = vld [vmem:[%s6879 + $0x4] sm:$0xf]
    %v6882 = vld [vmem:[%s6879 + $0x8] sm:$0xf]
    %v6883 = vld [vmem:[%s6879 + $0xc] sm:$0xf]
    %v6884 = vld [vmem:[%s6879 + $0x10] sm:$0xf]
    %v6885 = vld [vmem:[%s6879 + $0x14] sm:$0xf]
    %v6886 = vld [vmem:[%s6879 + $0x18] sm:$0xf]
    %v6887 = vld [vmem:[%s6879 + $0x1c] sm:$0xf]
    %v6888 = vld [vmem:[%s6879 + $0x20] sm:$0xf]
    %v6889 = vld [vmem:[%s6879 + $0x24] sm:$0xf]
    %v6890 = vld [vmem:[%s6879 + $0x28] sm:$0xf]
    %v6891 = vld [vmem:[%s6879 + $0x2c] sm:$0xf]
    %v6892 = vld [vmem:[%s6879 + $0x30] sm:$0xf]
    %v6893 = vld [vmem:[%s6879 + $0x34] sm:$0xf]
    %v6894 = vld [vmem:[%s6879 + $0x38] sm:$0xf]
    %v6895 = vld [vmem:[%s6879 + $0x3c] sm:$0xf]
    %v6912 = vunpack.c.l.b16 %v6880
    %v6913 = vunpack.c.l.b16 %v6881
    %v6914 = vunpack.c.l.b16 %v6882
    %v6915 = vunpack.c.l.b16 %v6883
    %v6916 = vunpack.c.l.b16 %v6884
    %v6917 = vunpack.c.l.b16 %v6885
    %v6918 = vunpack.c.l.b16 %v6886
    %v6919 = vunpack.c.l.b16 %v6887
    %v6920 = vunpack.c.l.b16 %v6888
    %v6921 = vunpack.c.l.b16 %v6889
    %v6922 = vunpack.c.l.b16 %v6890
    %v6923 = vunpack.c.l.b16 %v6891
    %v6924 = vunpack.c.l.b16 %v6892
    %v6925 = vunpack.c.l.b16 %v6893
    %v6926 = vunpack.c.l.b16 %v6894
    %v6927 = vunpack.c.l.b16 %v6895
    %v6928 = vpack.c.b16 %v6913, %v6912
    %v6929 = vpack.c.b16 %v6915, %v6914
    %v6930 = vpack.c.b16 %v6917, %v6916
    %v6931 = vpack.c.b16 %v6919, %v6918
    %v6932 = vpack.c.b16 %v6921, %v6920
    %v6933 = vpack.c.b16 %v6923, %v6922
    %v6934 = vpack.c.b16 %v6925, %v6924
    %v6935 = vpack.c.b16 %v6927, %v6926
    %6944 = vmatprep.subr.bf16.mxu0 0
    %6945 = vmatpush1.bf16.msra.mxu0 %v6928
    %6946 = vmatprep.subr.bf16.mxu0 0
    %6947 = vmatpush1.bf16.msra.mxu0 %v6929
    %6948 = vmatprep.subr.bf16.mxu0 0
    %6949 = vmatpush1.bf16.msra.mxu0 %v6930
    %6950 = vmatprep.subr.bf16.mxu0 0
    %6951 = vmatpush1.bf16.msra.mxu0 %v6931
    %6952 = vmatprep.subr.bf16.mxu0 0
    %6953 = vmatpush1.bf16.msra.mxu0 %v6932
    %6954 = vmatprep.subr.bf16.mxu0 0
    %6955 = vmatpush1.bf16.msra.mxu0 %v6933
    %6956 = vmatprep.subr.bf16.mxu0 0
    %6957 = vmatpush1.bf16.msra.mxu0 %v6934
    %6958 = vmatprep.subr.bf16.mxu0 0
    %6959 = vmatpush1.bf16.msra.mxu0 %v6935
    %6960 = vmatprep.subr.bf16.mxu0 0
    %6961 = vmatpush1.bf16.msra.mxu0 0
    %6962 = vmatprep.subr.bf16.mxu0 0
    %6963 = vmatpush1.bf16.msra.mxu0 0
    %6964 = vmatprep.subr.bf16.mxu0 0
    %6965 = vmatpush1.bf16.msra.mxu0 0
    %6966 = vmatprep.subr.bf16.mxu0 0
    %6967 = vmatpush1.bf16.msra.mxu0 0
    %6968 = vmatprep.subr.bf16.mxu0 0
    %6969 = vmatpush1.bf16.msra.mxu0 0
    %6970 = vmatprep.subr.bf16.mxu0 0
    %6971 = vmatpush1.bf16.msra.mxu0 0
    %6972 = vmatprep.subr.bf16.mxu0 0
    %6973 = vmatpush1.bf16.msra.mxu0 0
    %6974 = vmatprep.subr.bf16.mxu0 0
    %6975 = vmatpush1.bf16.msra.mxu0 0
    %6976 = vmatprep.mubr.bf16.mxu0 0
    %6977 = vmatmul.mubr.bf16.gmra.mrb[0].mxu0 %v6877
    %v6978 = vpop.f32.mrb[0].mxu0
    %v6979 = vadd.f32 0.0, %v6978
    %v6980 = vpop.f32.mrb[0].mxu0
    %v6981 = vpop.f32.mrb[0].mxu0
    %v6982 = vadd.f32 0.0, %v6981
    %v6983 = vpop.f32.mrb[0].mxu0
    %6984 = vmatprep.mubr.bf16.mxu0 0
    %6985 = vmatmul.mubr.bf16.gmra.mrb[0].mxu0 %v6878
    %v6986 = vpop.f32.mrb[0].mxu0
    %v6987 = vadd.f32 0.0, %v6986
    %v6988 = vpop.f32.mrb[0].mxu0
    %v6989 = vpop.f32.mrb[0].mxu0
    %v6990 = vadd.f32 0.0, %v6989
    %v6991 = vpop.f32.mrb[0].mxu0
    %6992 = vdwg.mxu0
    %v6993 = vadd.f32 %v6802, %v6979
    %v6994 = vadd.f32 %v6803, %v6982
    %v6995 = vadd.f32 %v6804, %v6987
    %v6996 = vadd.f32 %v6805, %v6990
    %6997 = vset.pattern.permute.xlu0 7
    %6998 = vperm.xlu0 %6997, %v5665
    %v6999 = vpop.permute.xlu0 %6998
    %7000 = vset.pattern.permute.xlu0 7
    %7001 = vperm.xlu0 %7000, %v5666
    %v7002 = vpop.permute.xlu0 %7001
    %7003 = vset.pattern.permute.xlu0 7
    %7004 = vperm.xlu0 %7003, %v5667
    %v7005 = vpop.permute.xlu0 %7004
    %7006 = vset.pattern.permute.xlu0 7
    %7007 = vperm.xlu0 %7006, %v5668
    %v7008 = vpop.permute.xlu0 %7007
    %vm7009 = vcmp.eq.s32.totalorder %v220, %v6999
    %vm7010 = vcmp.eq.s32.totalorder %v220, %v7002
    %vm7011 = vcmp.eq.s32.totalorder %v220, %v7005
    %vm7012 = vcmp.eq.s32.totalorder %v220, %v7008
    %v7013 = vsel %vm7009, 1.0, 0.0
    %v7014 = vsel %vm7010, 1.0, 0.0
    %v7015 = vsel %vm7011, 1.0, 0.0
    %v7016 = vsel %vm7012, 1.0, 0.0
    %v7017 = vpack.c.bf16 %v7014, %v7013
    %v7018 = vpack.c.bf16 %v7016, %v7015
    %7019 = vmatprep.subr.bf16.mxu0 0
    %7020 = vmatpush1.bf16.msra.mxu0 %v5657
    %7021 = vmatprep.subr.bf16.mxu0 0
    %7022 = vmatpush1.bf16.msra.mxu0 %v5658
    %7023 = vmatprep.subr.bf16.mxu0 0
    %7024 = vmatpush1.bf16.msra.mxu0 %v5659
    %7025 = vmatprep.subr.bf16.mxu0 0
    %7026 = vmatpush1.bf16.msra.mxu0 %v5660
    %7027 = vmatprep.subr.bf16.mxu0 0
    %7028 = vmatpush1.bf16.msra.mxu0 %v5661
    %7029 = vmatprep.subr.bf16.mxu0 0
    %7030 = vmatpush1.bf16.msra.mxu0 %v5662
    %7031 = vmatprep.subr.bf16.mxu0 0
    %7032 = vmatpush1.bf16.msra.mxu0 %v5663
    %7033 = vmatprep.subr.bf16.mxu0 0
    %7034 = vmatpush1.bf16.msra.mxu0 %v5664
    %7035 = vmatprep.subr.bf16.mxu0 0
    %7036 = vmatpush1.bf16.msra.mxu0 0
    %7037 = vmatprep.subr.bf16.mxu0 0
    %7038 = vmatpush1.bf16.msra.mxu0 0
    %7039 = vmatprep.subr.bf16.mxu0 0
    %7040 = vmatpush1.bf16.msra.mxu0 0
    %7041 = vmatprep.subr.bf16.mxu0 0
    %7042 = vmatpush1.bf16.msra.mxu0 0
    %7043 = vmatprep.subr.bf16.mxu0 0
    %7044 = vmatpush1.bf16.msra.mxu0 0
    %7045 = vmatprep.subr.bf16.mxu0 0
    %7046 = vmatpush1.bf16.msra.mxu0 0
    %7047 = vmatprep.subr.bf16.mxu0 0
    %7048 = vmatpush1.bf16.msra.mxu0 0
    %7049 = vmatprep.subr.bf16.mxu0 0
    %7050 = vmatpush1.bf16.msra.mxu0 0
    %7051 = vmatprep.mubr.bf16.mxu0 0
    %7052 = vmatmul.mubr.bf16.gmra.mrb[0].mxu0 %v7017
    %v7053 = vpop.f32.mrb[0].mxu0
    %v7054 = vadd.f32 0.0, %v7053
    %v7055 = vpop.f32.mrb[0].mxu0
    %v7056 = vpop.f32.mrb[0].mxu0
    %v7057 = vadd.f32 0.0, %v7056
    %v7058 = vpop.f32.mrb[0].mxu0
    %7059 = vmatprep.mubr.bf16.mxu0 0
    %7060 = vmatmul.mubr.bf16.gmra.mrb[0].mxu0 %v7018
    %v7061 = vpop.f32.mrb[0].mxu0
    %v7062 = vadd.f32 0.0, %v7061
    %v7063 = vpop.f32.mrb[0].mxu0
    %v7064 = vpop.f32.mrb[0].mxu0
    %v7065 = vadd.f32 0.0, %v7064
    %v7066 = vpop.f32.mrb[0].mxu0
    %7067 = vdwg.mxu0
    %v7068 = vpack.c.bf16 %v7057, %v7054
    %v7069 = vpack.c.bf16 %v7065, %v7062
    %s7070 = scalar_lea.vmem [#allocation7], 448
    %v7071 = vld [vmem:[%s7070] sm:$0xf]
    %v7072 = vld [vmem:[%s7070 + $0x4] sm:$0xf]
    %v7073 = vld [vmem:[%s7070 + $0x8] sm:$0xf]
    %v7074 = vld [vmem:[%s7070 + $0xc] sm:$0xf]
    %v7075 = vld [vmem:[%s7070 + $0x10] sm:$0xf]
    %v7076 = vld [vmem:[%s7070 + $0x14] sm:$0xf]
    %v7077 = vld [vmem:[%s7070 + $0x18] sm:$0xf]
    %v7078 = vld [vmem:[%s7070 + $0x1c] sm:$0xf]
    %v7079 = vld [vmem:[%s7070 + $0x20] sm:$0xf]
    %v7080 = vld [vmem:[%s7070 + $0x24] sm:$0xf]
    %v7081 = vld [vmem:[%s7070 + $0x28] sm:$0xf]
    %v7082 = vld [vmem:[%s7070 + $0x2c] sm:$0xf]
    %v7083 = vld [vmem:[%s7070 + $0x30] sm:$0xf]
    %v7084 = vld [vmem:[%s7070 + $0x34] sm:$0xf]
    %v7085 = vld [vmem:[%s7070 + $0x38] sm:$0xf]
    %v7086 = vld [vmem:[%s7070 + $0x3c] sm:$0xf]
    %v7103 = vunpack.c.l.b16 %v7071
    %v7104 = vunpack.c.l.b16 %v7072
    %v7105 = vunpack.c.l.b16 %v7073
    %v7106 = vunpack.c.l.b16 %v7074
    %v7107 = vunpack.c.l.b16 %v7075
    %v7108 = vunpack.c.l.b16 %v7076
    %v7109 = vunpack.c.l.b16 %v7077
    %v7110 = vunpack.c.l.b16 %v7078
    %v7111 = vunpack.c.l.b16 %v7079
    %v7112 = vunpack.c.l.b16 %v7080
    %v7113 = vunpack.c.l.b16 %v7081
    %v7114 = vunpack.c.l.b16 %v7082
    %v7115 = vunpack.c.l.b16 %v7083
    %v7116 = vunpack.c.l.b16 %v7084
    %v7117 = vunpack.c.l.b16 %v7085
    %v7118 = vunpack.c.l.b16 %v7086
    %v7119 = vpack.c.b16 %v7104, %v7103
    %v7120 = vpack.c.b16 %v7106, %v7105
    %v7121 = vpack.c.b16 %v7108, %v7107
    %v7122 = vpack.c.b16 %v7110, %v7109
    %v7123 = vpack.c.b16 %v7112, %v7111
    %v7124 = vpack.c.b16 %v7114, %v7113
    %v7125 = vpack.c.b16 %v7116, %v7115
    %v7126 = vpack.c.b16 %v7118, %v7117
    %7135 = vmatprep.subr.bf16.mxu0 0
    %7136 = vmatpush1.bf16.msra.mxu0 %v7119
    %7137 = vmatprep.subr.bf16.mxu0 0
    %7138 = vmatpush1.bf16.msra.mxu0 %v7120
    %7139 = vmatprep.subr.bf16.mxu0 0
    %7140 = vmatpush1.bf16.msra.mxu0 %v7121
    %7141 = vmatprep.subr.bf16.mxu0 0
    %7142 = vmatpush1.bf16.msra.mxu0 %v7122
    %7143 = vmatprep.subr.bf16.mxu0 0
    %7144 = vmatpush1.bf16.msra.mxu0 %v7123
    %7145 = vmatprep.subr.bf16.mxu0 0
    %7146 = vmatpush1.bf16.msra.mxu0 %v7124
    %7147 = vmatprep.subr.bf16.mxu0 0
    %7148 = vmatpush1.bf16.msra.mxu0 %v7125
    %7149 = vmatprep.subr.bf16.mxu0 0
    %7150 = vmatpush1.bf16.msra.mxu0 %v7126
    %7151 = vmatprep.subr.bf16.mxu0 0
    %7152 = vmatpush1.bf16.msra.mxu0 0
    %7153 = vmatprep.subr.bf16.mxu0 0
    %7154 = vmatpush1.bf16.msra.mxu0 0
    %7155 = vmatprep.subr.bf16.mxu0 0
    %7156 = vmatpush1.bf16.msra.mxu0 0
    %7157 = vmatprep.subr.bf16.mxu0 0
    %7158 = vmatpush1.bf16.msra.mxu0 0
    %7159 = vmatprep.subr.bf16.mxu0 0
    %7160 = vmatpush1.bf16.msra.mxu0 0
    %7161 = vmatprep.subr.bf16.mxu0 0
    %7162 = vmatpush1.bf16.msra.mxu0 0
    %7163 = vmatprep.subr.bf16.mxu0 0
    %7164 = vmatpush1.bf16.msra.mxu0 0
    %7165 = vmatprep.subr.bf16.mxu0 0
    %7166 = vmatpush1.bf16.msra.mxu0 0
    %7167 = vmatprep.mubr.bf16.mxu0 0
    %7168 = vmatmul.mubr.bf16.gmra.mrb[0].mxu0 %v7068
    %v7169 = vpop.f32.mrb[0].mxu0
    %v7170 = vadd.f32 0.0, %v7169
    %v7171 = vpop.f32.mrb[0].mxu0
    %v7172 = vpop.f32.mrb[0].mxu0
    %v7173 = vadd.f32 0.0, %v7172
    %v7174 = vpop.f32.mrb[0].mxu0
    %7175 = vmatprep.mubr.bf16.mxu0 0
    %7176 = vmatmul.mubr.bf16.gmra.mrb[0].mxu0 %v7069
    %v7177 = vpop.f32.mrb[0].mxu0
    %v7178 = vadd.f32 0.0, %v7177
    %v7179 = vpop.f32.mrb[0].mxu0
    %v7180 = vpop.f32.mrb[0].mxu0
    %v7181 = vadd.f32 0.0, %v7180
    %v7182 = vpop.f32.mrb[0].mxu0
    %7183 = vdwg.mxu0
    %v7184 = vadd.f32 %v6993, %v7170
    %v7185 = vadd.f32 %v6994, %v7173
    %v7186 = vadd.f32 %v6995, %v7178
    %v7187 = vadd.f32 %v6996, %v7181
    %7188 = vset.pattern.permute.xlu0 8
    %7189 = vperm.xlu0 %7188, %v5665
    %v7190 = vpop.permute.xlu0 %7189
    %7191 = vset.pattern.permute.xlu0 8
    %7192 = vperm.xlu0 %7191, %v5666
    %v7193 = vpop.permute.xlu0 %7192
    %7194 = vset.pattern.permute.xlu0 8
    %7195 = vperm.xlu0 %7194, %v5667
    %v7196 = vpop.permute.xlu0 %7195
    %7197 = vset.pattern.permute.xlu0 8
    %7198 = vperm.xlu0 %7197, %v5668
    %v7199 = vpop.permute.xlu0 %7198
    %vm7200 = vcmp.eq.s32.totalorder %v220, %v7190
    %vm7201 = vcmp.eq.s32.totalorder %v220, %v7193
    %vm7202 = vcmp.eq.s32.totalorder %v220, %v7196
    %vm7203 = vcmp.eq.s32.totalorder %v220, %v7199
    %v7204 = vsel %vm7200, 1.0, 0.0
    %v7205 = vsel %vm7201, 1.0, 0.0
    %v7206 = vsel %vm7202, 1.0, 0.0
    %v7207 = vsel %vm7203, 1.0, 0.0
    %v7208 = vpack.c.bf16 %v7205, %v7204
    %v7209 = vpack.c.bf16 %v7207, %v7206
    %7210 = vmatprep.subr.bf16.mxu0 0
    %7211 = vmatpush1.bf16.msra.mxu0 %v5657
    %7212 = vmatprep.subr.bf16.mxu0 0
    %7213 = vmatpush1.bf16.msra.mxu0 %v5658
    %7214 = vmatprep.subr.bf16.mxu0 0
    %7215 = vmatpush1.bf16.msra.mxu0 %v5659
    %7216 = vmatprep.subr.bf16.mxu0 0
    %7217 = vmatpush1.bf16.msra.mxu0 %v5660
    %7218 = vmatprep.subr.bf16.mxu0 0
    %7219 = vmatpush1.bf16.msra.mxu0 %v5661
    %7220 = vmatprep.subr.bf16.mxu0 0
    %7221 = vmatpush1.bf16.msra.mxu0 %v5662
    %7222 = vmatprep.subr.bf16.mxu0 0
    %7223 = vmatpush1.bf16.msra.mxu0 %v5663
    %7224 = vmatprep.subr.bf16.mxu0 0
    %7225 = vmatpush1.bf16.msra.mxu0 %v5664
    %7226 = vmatprep.subr.bf16.mxu0 0
    %7227 = vmatpush1.bf16.msra.mxu0 0
    %7228 = vmatprep.subr.bf16.mxu0 0
    %7229 = vmatpush1.bf16.msra.mxu0 0
    %7230 = vmatprep.subr.bf16.mxu0 0
    %7231 = vmatpush1.bf16.msra.mxu0 0
    %7232 = vmatprep.subr.bf16.mxu0 0
    %7233 = vmatpush1.bf16.msra.mxu0 0
    %7234 = vmatprep.subr.bf16.mxu0 0
    %7235 = vmatpush1.bf16.msra.mxu0 0
    %7236 = vmatprep.subr.bf16.mxu0 0
    %7237 = vmatpush1.bf16.msra.mxu0 0
    %7238 = vmatprep.subr.bf16.mxu0 0
    %7239 = vmatpush1.bf16.msra.mxu0 0
    %7240 = vmatprep.subr.bf16.mxu0 0
    %7241 = vmatpush1.bf16.msra.mxu0 0
    %7242 = vmatprep.mubr.bf16.mxu0 0
    %7243 = vmatmul.mubr.bf16.gmra.mrb[0].mxu0 %v7208
    %v7244 = vpop.f32.mrb[0].mxu0
    %v7245 = vadd.f32 0.0, %v7244
    %v7246 = vpop.f32.mrb[0].mxu0
    %v7247 = vpop.f32.mrb[0].mxu0
    %v7248 = vadd.f32 0.0, %v7247
    %v7249 = vpop.f32.mrb[0].mxu0
    %7250 = vmatprep.mubr.bf16.mxu0 0
    %7251 = vmatmul.mubr.bf16.gmra.mrb[0].mxu0 %v7209
    %v7252 = vpop.f32.mrb[0].mxu0
    %v7253 = vadd.f32 0.0, %v7252
    %v7254 = vpop.f32.mrb[0].mxu0
    %v7255 = vpop.f32.mrb[0].mxu0
    %v7256 = vadd.f32 0.0, %v7255
    %v7257 = vpop.f32.mrb[0].mxu0
    %7258 = vdwg.mxu0
    %v7259 = vpack.c.bf16 %v7248, %v7245
    %v7260 = vpack.c.bf16 %v7256, %v7253
    %s7261 = scalar_lea.vmem [#allocation7], 512
    %v7262 = vld [vmem:[%s7261] sm:$0xf]
    %v7263 = vld [vmem:[%s7261 + $0x4] sm:$0xf]
    %v7264 = vld [vmem:[%s7261 + $0x8] sm:$0xf]
    %v7265 = vld [vmem:[%s7261 + $0xc] sm:$0xf]
    %v7266 = vld [vmem:[%s7261 + $0x10] sm:$0xf]
    %v7267 = vld [vmem:[%s7261 + $0x14] sm:$0xf]
    %v7268 = vld [vmem:[%s7261 + $0x18] sm:$0xf]
    %v7269 = vld [vmem:[%s7261 + $0x1c] sm:$0xf]
    %v7270 = vld [vmem:[%s7261 + $0x20] sm:$0xf]
    %v7271 = vld [vmem:[%s7261 + $0x24] sm:$0xf]
    %v7272 = vld [vmem:[%s7261 + $0x28] sm:$0xf]
    %v7273 = vld [vmem:[%s7261 + $0x2c] sm:$0xf]
    %v7274 = vld [vmem:[%s7261 + $0x30] sm:$0xf]
    %v7275 = vld [vmem:[%s7261 + $0x34] sm:$0xf]
    %v7276 = vld [vmem:[%s7261 + $0x38] sm:$0xf]
    %v7277 = vld [vmem:[%s7261 + $0x3c] sm:$0xf]
    %v7294 = vunpack.c.l.b16 %v7262
    %v7295 = vunpack.c.l.b16 %v7263
    %v7296 = vunpack.c.l.b16 %v7264
    %v7297 = vunpack.c.l.b16 %v7265
    %v7298 = vunpack.c.l.b16 %v7266
    %v7299 = vunpack.c.l.b16 %v7267
    %v7300 = vunpack.c.l.b16 %v7268
    %v7301 = vunpack.c.l.b16 %v7269
    %v7302 = vunpack.c.l.b16 %v7270
    %v7303 = vunpack.c.l.b16 %v7271
    %v7304 = vunpack.c.l.b16 %v7272
    %v7305 = vunpack.c.l.b16 %v7273
    %v7306 = vunpack.c.l.b16 %v7274
    %v7307 = vunpack.c.l.b16 %v7275
    %v7308 = vunpack.c.l.b16 %v7276
    %v7309 = vunpack.c.l.b16 %v7277
    %v7310 = vpack.c.b16 %v7295, %v7294
    %v7311 = vpack.c.b16 %v7297, %v7296
    %v7312 = vpack.c.b16 %v7299, %v7298
    %v7313 = vpack.c.b16 %v7301, %v7300
    %v7314 = vpack.c.b16 %v7303, %v7302
    %v7315 = vpack.c.b16 %v7305, %v7304
    %v7316 = vpack.c.b16 %v7307, %v7306
    %v7317 = vpack.c.b16 %v7309, %v7308
    %7326 = vmatprep.subr.bf16.mxu0 0
    %7327 = vmatpush1.bf16.msra.mxu0 %v7310
    %7328 = vmatprep.subr.bf16.mxu0 0
    %7329 = vmatpush1.bf16.msra.mxu0 %v7311
    %7330 = vmatprep.subr.bf16.mxu0 0
    %7331 = vmatpush1.bf16.msra.mxu0 %v7312
    %7332 = vmatprep.subr.bf16.mxu0 0
    %7333 = vmatpush1.bf16.msra.mxu0 %v7313
    %7334 = vmatprep.subr.bf16.mxu0 0
    %7335 = vmatpush1.bf16.msra.mxu0 %v7314
    %7336 = vmatprep.subr.bf16.mxu0 0
    %7337 = vmatpush1.bf16.msra.mxu0 %v7315
    %7338 = vmatprep.subr.bf16.mxu0 0
    %7339 = vmatpush1.bf16.msra.mxu0 %v7316
    %7340 = vmatprep.subr.bf16.mxu0 0
    %7341 = vmatpush1.bf16.msra.mxu0 %v7317
    %7342 = vmatprep.subr.bf16.mxu0 0
    %7343 = vmatpush1.bf16.msra.mxu0 0
    %7344 = vmatprep.subr.bf16.mxu0 0
    %7345 = vmatpush1.bf16.msra.mxu0 0
    %7346 = vmatprep.subr.bf16.mxu0 0
    %7347 = vmatpush1.bf16.msra.mxu0 0
    %7348 = vmatprep.subr.bf16.mxu0 0
    %7349 = vmatpush1.bf16.msra.mxu0 0
    %7350 = vmatprep.subr.bf16.mxu0 0
    %7351 = vmatpush1.bf16.msra.mxu0 0
    %7352 = vmatprep.subr.bf16.mxu0 0
    %7353 = vmatpush1.bf16.msra.mxu0 0
    %7354 = vmatprep.subr.bf16.mxu0 0
    %7355 = vmatpush1.bf16.msra.mxu0 0
    %7356 = vmatprep.subr.bf16.mxu0 0
    %7357 = vmatpush1.bf16.msra.mxu0 0
    %7358 = vmatprep.mubr.bf16.mxu0 0
    %7359 = vmatmul.mubr.bf16.gmra.mrb[0].mxu0 %v7259
    %v7360 = vpop.f32.mrb[0].mxu0
    %v7361 = vadd.f32 0.0, %v7360
    %v7362 = vpop.f32.mrb[0].mxu0
    %v7363 = vpop.f32.mrb[0].mxu0
    %v7364 = vadd.f32 0.0, %v7363
    %v7365 = vpop.f32.mrb[0].mxu0
    %7366 = vmatprep.mubr.bf16.mxu0 0
    %7367 = vmatmul.mubr.bf16.gmra.mrb[0].mxu0 %v7260
    %v7368 = vpop.f32.mrb[0].mxu0
    %v7369 = vadd.f32 0.0, %v7368
    %v7370 = vpop.f32.mrb[0].mxu0
    %v7371 = vpop.f32.mrb[0].mxu0
    %v7372 = vadd.f32 0.0, %v7371
    %v7373 = vpop.f32.mrb[0].mxu0
    %7374 = vdwg.mxu0
    %v7375 = vadd.f32 %v7184, %v7361
    %v7376 = vadd.f32 %v7185, %v7364
    %v7377 = vadd.f32 %v7186, %v7369
    %v7378 = vadd.f32 %v7187, %v7372
    %v7379 = vadd.f32 %v7375, %v7376
    %v7380 = vadd.f32 %v7379, %v7377
    %v7381 = vadd.f32 %v7380, %v7378
    %v7382 = vrot.slane %v7381, 4
    %v7383 = vadd.f32 %v7381, %v7382
    %v7384 = vrot.slane %v7383, 2
    %v7385 = vadd.f32 %v7383, %v7384
    %v7386 = vrot.slane %v7385, 1
    %v7387 = vadd.f32 %v7385, %v7386
    %v7388 = vrcp.pop 32.0
    %v7389 = vmul.f32 %v7387, %v7388
    %v7390 = vmul.f32 %v7375, %v7375
    %v7391 = vmul.f32 %v7376, %v7376
    %v7392 = vmul.f32 %v7377, %v7377
    %v7393 = vmul.f32 %v7378, %v7378
    %v7394 = vadd.f32 %v7390, %v7391
    %v7395 = vadd.f32 %v7394, %v7392
    %v7396 = vadd.f32 %v7395, %v7393
    %v7397 = vrot.slane %v7396, 4
    %v7398 = vadd.f32 %v7396, %v7397
    %v7399 = vrot.slane %v7398, 2
    %v7400 = vadd.f32 %v7398, %v7399
    %v7401 = vrot.slane %v7400, 1
    %v7402 = vadd.f32 %v7400, %v7401
    %v7403 = vmul.f32 %v7402, %v7388
    %v7404 = vmul.f32 %v7389, %v7389
    %v7405 = vsub.f32 %v7403, %v7404
    %v7406 = vld [vmem:[%s6] sm:$0x1]
    %v7407 = vadd.f32 %v7405, 1e-05
    %v7408 = vrsqrt.pop %v7407
    %v7409 = vmul.f32 %v7406, %v7408
    %v7410 = vld [vmem:[%s6 + $0x1] sm:$0x1]
    %v7411 = vmul.f32 %v7389, %v7409
    %v7412 = vsub.f32 %v7410, %v7411
    %v7413 = vlaneseq
    %v7414 = vshrl.u32 %v7413, 7
    %v7415 = vsub.s32 0, %v7414
    %v7416 = vrot.slane %v7409, %v7415
    %v7417 = vmul.f32 %v7375, %v7416
    %v7418 = vmul.f32 %v7376, %v7416
    %v7419 = vmul.f32 %v7377, %v7416
    %v7420 = vmul.f32 %v7378, %v7416
    %v7421 = vlaneseq
    %v7422 = vshrl.u32 %v7421, 7
    %v7423 = vsub.s32 0, %v7422
    %v7424 = vrot.slane %v7412, %v7423
    %v7425 = vadd.f32 %v7417, %v7424
    %v7426 = vadd.f32 %v7418, %v7424
    %v7427 = vadd.f32 %v7419, %v7424
    %v7428 = vadd.f32 %v7420, %v7424
    %vm7429 = vcmp.ge.f32.partialorder %v7425, 0.0
    %vm7430 = vcmp.ge.f32.partialorder %v7426, 0.0
    %vm7431 = vcmp.ge.f32.partialorder %v7427, 0.0
    %vm7432 = vcmp.ge.f32.partialorder %v7428, 0.0
    %v7433 = vmul.f32 %v7425, 0.01
    %v7434 = vmul.f32 %v7426, 0.01
    %v7435 = vmul.f32 %v7427, 0.01
    %v7436 = vmul.f32 %v7428, 0.01
    %v7437 = vsel %vm7429, %v7425, %v7433
    %v7438 = vsel %vm7430, %v7426, %v7434
    %v7439 = vsel %vm7431, %v7427, %v7435
    %v7440 = vsel %vm7432, %v7428, %v7436
    %v7441 = vpack.c.bf16 %v7438, %v7437
    %v7442 = vpack.c.bf16 %v7440, %v7439
    %v7443 = vld [vmem:[%s7] sm:$0xff]
    %7444 = vset.pattern.permute.xlu0 0
    %7445 = vperm.xlu0 %7444, %v7443
    %v7446 = vpop.permute.xlu0 %7445
    %vm7447 = vcmp.eq.s32.totalorder %v220, %v7446
    %v7448 = vsel %vm7447, 1.0, 0.0
    %v7449 = vpack.c.bf16 %v7448, %v7448
    %vm7450 = vcmask 261120
    %v7452 = vsel %vm7450, %v7449, 0
    %7454 = vmatprep.subr.bf16.mxu0 0
    %7455 = vmatpush1.bf16.msra.mxu0 %v7441
    %7456 = vmatprep.subr.bf16.mxu0 0
    %7457 = vmatpush1.bf16.msra.mxu0 %v7442
    %7458 = vmatprep.subr.bf16.mxu0 0
    %7459 = vmatpush1.bf16.msra.mxu0 0
    %7460 = vmatprep.subr.bf16.mxu0 0
    %7461 = vmatpush1.bf16.msra.mxu0 0
    %7462 = vmatprep.subr.bf16.mxu0 0
    %7463 = vmatpush1.bf16.msra.mxu0 0
    %7464 = vmatprep.subr.bf16.mxu0 0
    %7465 = vmatpush1.bf16.msra.mxu0 0
    %7466 = vmatprep.subr.bf16.mxu0 0
    %7467 = vmatpush1.bf16.msra.mxu0 0
    %7468 = vmatprep.subr.bf16.mxu0 0
    %7469 = vmatpush1.bf16.msra.mxu0 0
    %7470 = vmatprep.subr.bf16.mxu0 0
    %7471 = vmatpush1.bf16.msra.mxu0 0
    %7472 = vmatprep.subr.bf16.mxu0 0
    %7473 = vmatpush1.bf16.msra.mxu0 0
    %7474 = vmatprep.subr.bf16.mxu0 0
    %7475 = vmatpush1.bf16.msra.mxu0 0
    %7476 = vmatprep.subr.bf16.mxu0 0
    %7477 = vmatpush1.bf16.msra.mxu0 0
    %7478 = vmatprep.subr.bf16.mxu0 0
    %7479 = vmatpush1.bf16.msra.mxu0 0
    %7480 = vmatprep.subr.bf16.mxu0 0
    %7481 = vmatpush1.bf16.msra.mxu0 0
    %7482 = vmatprep.subr.bf16.mxu0 0
    %7483 = vmatpush1.bf16.msra.mxu0 0
    %7484 = vmatprep.subr.bf16.mxu0 0
    %7485 = vmatpush1.bf16.msra.mxu0 0
    %7486 = vmatprep.mubr.bf16.mxu0 0
    %7487 = vmatmul.mubr.bf16.gmra.mrb[0].mxu0 %v7452
    %v7488 = vpop.f32.mrb[0].mxu0
    %v7489 = vadd.f32 0.0, %v7488
    %v7490 = vpop.f32.mrb[0].mxu0
    %v7491 = vpop.f32.mrb[0].mxu0
    %v7492 = vpop.f32.mrb[0].mxu0
    %7493 = vdwg.mxu0
    %v7494 = vpack.c.bf16 %v7489, %v7489
    %v7495 = vld [vmem:[#allocation8] sm:$0xf]
    %v7496 = vld [vmem:[#allocation8 + $0x4] sm:$0xf]
    %v7497 = vld [vmem:[#allocation8 + $0x8] sm:$0xf]
    %v7498 = vld [vmem:[#allocation8 + $0xc] sm:$0xf]
    %v7499 = vld [vmem:[#allocation8 + $0x10] sm:$0xf]
    %v7500 = vld [vmem:[#allocation8 + $0x14] sm:$0xf]
    %v7501 = vld [vmem:[#allocation8 + $0x18] sm:$0xf]
    %v7502 = vld [vmem:[#allocation8 + $0x1c] sm:$0xf]
    %v7503 = vld [vmem:[#allocation8 + $0x20] sm:$0xf]
    %v7504 = vld [vmem:[#allocation8 + $0x24] sm:$0xf]
    %v7505 = vld [vmem:[#allocation8 + $0x28] sm:$0xf]
    %v7506 = vld [vmem:[#allocation8 + $0x2c] sm:$0xf]
    %v7507 = vld [vmem:[#allocation8 + $0x30] sm:$0xf]
    %v7508 = vld [vmem:[#allocation8 + $0x34] sm:$0xf]
    %v7509 = vld [vmem:[#allocation8 + $0x38] sm:$0xf]
    %v7510 = vld [vmem:[#allocation8 + $0x3c] sm:$0xf]
    %7511 = vset.pattern.permute.xlu0 1
    %7512 = vperm.xlu0 %7511, %v7443
    %v7513 = vpop.permute.xlu0 %7512
    %vm7514 = vcmp.eq.s32.totalorder %v220, %v7513
    %v7515 = vsel %vm7514, 1.0, 0.0
    %v7516 = vpack.c.bf16 %v7515, %v7515
    %v7518 = vsel %vm7450, %v7516, 0
    %7520 = vmatprep.subr.bf16.mxu0 0
    %7521 = vmatpush1.bf16.msra.mxu0 %v7441
    %7522 = vmatprep.subr.bf16.mxu0 0
    %7523 = vmatpush1.bf16.msra.mxu0 %v7442
    %7524 = vmatprep.subr.bf16.mxu0 0
    %7525 = vmatpush1.bf16.msra.mxu0 0
    %7526 = vmatprep.subr.bf16.mxu0 0
    %7527 = vmatpush1.bf16.msra.mxu0 0
    %7528 = vmatprep.subr.bf16.mxu0 0
    %7529 = vmatpush1.bf16.msra.mxu0 0
    %7530 = vmatprep.subr.bf16.mxu0 0
    %7531 = vmatpush1.bf16.msra.mxu0 0
    %7532 = vmatprep.subr.bf16.mxu0 0
    %7533 = vmatpush1.bf16.msra.mxu0 0
    %7534 = vmatprep.subr.bf16.mxu0 0
    %7535 = vmatpush1.bf16.msra.mxu0 0
    %7536 = vmatprep.subr.bf16.mxu0 0
    %7537 = vmatpush1.bf16.msra.mxu0 0
    %7538 = vmatprep.subr.bf16.mxu0 0
    %7539 = vmatpush1.bf16.msra.mxu0 0
    %7540 = vmatprep.subr.bf16.mxu0 0
    %7541 = vmatpush1.bf16.msra.mxu0 0
    %7542 = vmatprep.subr.bf16.mxu0 0
    %7543 = vmatpush1.bf16.msra.mxu0 0
    %7544 = vmatprep.subr.bf16.mxu0 0
    %7545 = vmatpush1.bf16.msra.mxu0 0
    %7546 = vmatprep.subr.bf16.mxu0 0
    %7547 = vmatpush1.bf16.msra.mxu0 0
    %7548 = vmatprep.subr.bf16.mxu0 0
    %7549 = vmatpush1.bf16.msra.mxu0 0
    %7550 = vmatprep.subr.bf16.mxu0 0
    %7551 = vmatpush1.bf16.msra.mxu0 0
    %7552 = vmatprep.mubr.bf16.mxu0 0
    %7553 = vmatmul.mubr.bf16.gmra.mrb[0].mxu0 %v7518
    %v7554 = vpop.f32.mrb[0].mxu0
    %v7555 = vadd.f32 0.0, %v7554
    %v7556 = vpop.f32.mrb[0].mxu0
    %v7557 = vpop.f32.mrb[0].mxu0
    %v7558 = vpop.f32.mrb[0].mxu0
    %7559 = vdwg.mxu0
    %v7560 = vpack.c.bf16 %v7555, %v7555
    %s7561 = scalar_lea.vmem [#allocation8], 64
    %v7562 = vld [vmem:[%s7561] sm:$0xf]
    %v7563 = vld [vmem:[%s7561 + $0x4] sm:$0xf]
    %v7564 = vld [vmem:[%s7561 + $0x8] sm:$0xf]
    %v7565 = vld [vmem:[%s7561 + $0xc] sm:$0xf]
    %v7566 = vld [vmem:[%s7561 + $0x10] sm:$0xf]
    %v7567 = vld [vmem:[%s7561 + $0x14] sm:$0xf]
    %v7568 = vld [vmem:[%s7561 + $0x18] sm:$0xf]
    %v7569 = vld [vmem:[%s7561 + $0x1c] sm:$0xf]
    %v7570 = vld [vmem:[%s7561 + $0x20] sm:$0xf]
    %v7571 = vld [vmem:[%s7561 + $0x24] sm:$0xf]
    %v7572 = vld [vmem:[%s7561 + $0x28] sm:$0xf]
    %v7573 = vld [vmem:[%s7561 + $0x2c] sm:$0xf]
    %v7574 = vld [vmem:[%s7561 + $0x30] sm:$0xf]
    %v7575 = vld [vmem:[%s7561 + $0x34] sm:$0xf]
    %v7576 = vld [vmem:[%s7561 + $0x38] sm:$0xf]
    %v7577 = vld [vmem:[%s7561 + $0x3c] sm:$0xf]
    %v7594 = vunpack.c.l.b16 %v7562
    %v7595 = vunpack.c.l.b16 %v7563
    %v7596 = vunpack.c.l.b16 %v7564
    %v7597 = vunpack.c.l.b16 %v7565
    %v7598 = vunpack.c.l.b16 %v7566
    %v7599 = vunpack.c.l.b16 %v7567
    %v7600 = vunpack.c.l.b16 %v7568
    %v7601 = vunpack.c.l.b16 %v7569
    %v7602 = vunpack.c.l.b16 %v7570
    %v7603 = vunpack.c.l.b16 %v7571
    %v7604 = vunpack.c.l.b16 %v7572
    %v7605 = vunpack.c.l.b16 %v7573
    %v7606 = vunpack.c.l.b16 %v7574
    %v7607 = vunpack.c.l.b16 %v7575
    %v7608 = vunpack.c.l.b16 %v7576
    %v7609 = vunpack.c.l.b16 %v7577
    %v7610 = vpack.c.b16 %v7595, %v7594
    %v7611 = vpack.c.b16 %v7597, %v7596
    %v7612 = vpack.c.b16 %v7599, %v7598
    %v7613 = vpack.c.b16 %v7601, %v7600
    %v7614 = vpack.c.b16 %v7603, %v7602
    %v7615 = vpack.c.b16 %v7605, %v7604
    %v7616 = vpack.c.b16 %v7607, %v7606
    %v7617 = vpack.c.b16 %v7609, %v7608
    %7626 = vmatprep.subr.bf16.mxu0 0
    %7627 = vmatpush1.bf16.msra.mxu0 %v7610
    %7628 = vmatprep.subr.bf16.mxu0 0
    %7629 = vmatpush1.bf16.msra.mxu0 %v7611
    %7630 = vmatprep.subr.bf16.mxu0 0
    %7631 = vmatpush1.bf16.msra.mxu0 %v7612
    %7632 = vmatprep.subr.bf16.mxu0 0
    %7633 = vmatpush1.bf16.msra.mxu0 %v7613
    %7634 = vmatprep.subr.bf16.mxu0 0
    %7635 = vmatpush1.bf16.msra.mxu0 %v7614
    %7636 = vmatprep.subr.bf16.mxu0 0
    %7637 = vmatpush1.bf16.msra.mxu0 %v7615
    %7638 = vmatprep.subr.bf16.mxu0 0
    %7639 = vmatpush1.bf16.msra.mxu0 %v7616
    %7640 = vmatprep.subr.bf16.mxu0 0
    %7641 = vmatpush1.bf16.msra.mxu0 %v7617
    %7642 = vmatprep.subr.bf16.mxu0 0
    %7643 = vmatpush1.bf16.msra.mxu0 0
    %7644 = vmatprep.subr.bf16.mxu0 0
    %7645 = vmatpush1.bf16.msra.mxu0 0
    %7646 = vmatprep.subr.bf16.mxu0 0
    %7647 = vmatpush1.bf16.msra.mxu0 0
    %7648 = vmatprep.subr.bf16.mxu0 0
    %7649 = vmatpush1.bf16.msra.mxu0 0
    %7650 = vmatprep.subr.bf16.mxu0 0
    %7651 = vmatpush1.bf16.msra.mxu0 0
    %7652 = vmatprep.subr.bf16.mxu0 0
    %7653 = vmatpush1.bf16.msra.mxu0 0
    %7654 = vmatprep.subr.bf16.mxu0 0
    %7655 = vmatpush1.bf16.msra.mxu0 0
    %7656 = vmatprep.subr.bf16.mxu0 0
    %7657 = vmatpush1.bf16.msra.mxu0 0
    %7658 = vmatprep.mubr.bf16.mxu0 0
    %7659 = vmatmul.mubr.bf16.gmra.mrb[0].mxu0 %v7560
    %v7660 = vpop.f32.mrb[0].mxu0
    %v7661 = vadd.f32 0.0, %v7660
    %v7662 = vpop.f32.mrb[0].mxu0
    %v7663 = vpop.f32.mrb[0].mxu0
    %v7664 = vpop.f32.mrb[0].mxu0
    %7665 = vdwg.mxu0
    %v7682 = vunpack.c.l.b16 %v7495
    %v7683 = vunpack.c.l.b16 %v7496
    %v7684 = vunpack.c.l.b16 %v7497
    %v7685 = vunpack.c.l.b16 %v7498
    %v7686 = vunpack.c.l.b16 %v7499
    %v7687 = vunpack.c.l.b16 %v7500
    %v7688 = vunpack.c.l.b16 %v7501
    %v7689 = vunpack.c.l.b16 %v7502
    %v7690 = vunpack.c.l.b16 %v7503
    %v7691 = vunpack.c.l.b16 %v7504
    %v7692 = vunpack.c.l.b16 %v7505
    %v7693 = vunpack.c.l.b16 %v7506
    %v7694 = vunpack.c.l.b16 %v7507
    %v7695 = vunpack.c.l.b16 %v7508
    %v7696 = vunpack.c.l.b16 %v7509
    %v7697 = vunpack.c.l.b16 %v7510
    %v7698 = vpack.c.b16 %v7683, %v7682
    %v7699 = vpack.c.b16 %v7685, %v7684
    %v7700 = vpack.c.b16 %v7687, %v7686
    %v7701 = vpack.c.b16 %v7689, %v7688
    %v7702 = vpack.c.b16 %v7691, %v7690
    %v7703 = vpack.c.b16 %v7693, %v7692
    %v7704 = vpack.c.b16 %v7695, %v7694
    %v7705 = vpack.c.b16 %v7697, %v7696
    %7714 = vmatprep.subr.bf16.mxu0 0
    %7715 = vmatpush1.bf16.msra.mxu0 %v7698
    %7716 = vmatprep.subr.bf16.mxu0 0
    %7717 = vmatpush1.bf16.msra.mxu0 %v7699
    %7718 = vmatprep.subr.bf16.mxu0 0
    %7719 = vmatpush1.bf16.msra.mxu0 %v7700
    %7720 = vmatprep.subr.bf16.mxu0 0
    %7721 = vmatpush1.bf16.msra.mxu0 %v7701
    %7722 = vmatprep.subr.bf16.mxu0 0
    %7723 = vmatpush1.bf16.msra.mxu0 %v7702
    %7724 = vmatprep.subr.bf16.mxu0 0
    %7725 = vmatpush1.bf16.msra.mxu0 %v7703
    %7726 = vmatprep.subr.bf16.mxu0 0
    %7727 = vmatpush1.bf16.msra.mxu0 %v7704
    %7728 = vmatprep.subr.bf16.mxu0 0
    %7729 = vmatpush1.bf16.msra.mxu0 %v7705
    %7730 = vmatprep.subr.bf16.mxu0 0
    %7731 = vmatpush1.bf16.msra.mxu0 0
    %7732 = vmatprep.subr.bf16.mxu0 0
    %7733 = vmatpush1.bf16.msra.mxu0 0
    %7734 = vmatprep.subr.bf16.mxu0 0
    %7735 = vmatpush1.bf16.msra.mxu0 0
    %7736 = vmatprep.subr.bf16.mxu0 0
    %7737 = vmatpush1.bf16.msra.mxu0 0
    %7738 = vmatprep.subr.bf16.mxu0 0
    %7739 = vmatpush1.bf16.msra.mxu0 0
    %7740 = vmatprep.subr.bf16.mxu0 0
    %7741 = vmatpush1.bf16.msra.mxu0 0
    %7742 = vmatprep.subr.bf16.mxu0 0
    %7743 = vmatpush1.bf16.msra.mxu0 0
    %7744 = vmatprep.subr.bf16.mxu0 0
    %7745 = vmatpush1.bf16.msra.mxu0 0
    %7746 = vmatprep.mubr.bf16.mxu0 0
    %7747 = vmatmul.mubr.bf16.gmra.mrb[0].mxu0 %v7494
    %v7748 = vpop.f32.mrb[0].mxu0
    %v7749 = vadd.f32 %v7661, %v7748
    %v7750 = vpop.f32.mrb[0].mxu0
    %v7751 = vpop.f32.mrb[0].mxu0
    %v7752 = vpop.f32.mrb[0].mxu0
    %7753 = vdwg.mxu0
    %7754 = vset.pattern.permute.xlu0 2
    %7755 = vperm.xlu0 %7754, %v7443
    %v7756 = vpop.permute.xlu0 %7755
    %vm7757 = vcmp.eq.s32.totalorder %v220, %v7756
    %v7758 = vsel %vm7757, 1.0, 0.0
    %v7759 = vpack.c.bf16 %v7758, %v7758
    %v7761 = vsel %vm7450, %v7759, 0
    %7763 = vmatprep.subr.bf16.mxu0 0
    %7764 = vmatpush1.bf16.msra.mxu0 %v7441
    %7765 = vmatprep.subr.bf16.mxu0 0
    %7766 = vmatpush1.bf16.msra.mxu0 %v7442
    %7767 = vmatprep.subr.bf16.mxu0 0
    %7768 = vmatpush1.bf16.msra.mxu0 0
    %7769 = vmatprep.subr.bf16.mxu0 0
    %7770 = vmatpush1.bf16.msra.mxu0 0
    %7771 = vmatprep.subr.bf16.mxu0 0
    %7772 = vmatpush1.bf16.msra.mxu0 0
    %7773 = vmatprep.subr.bf16.mxu0 0
    %7774 = vmatpush1.bf16.msra.mxu0 0
    %7775 = vmatprep.subr.bf16.mxu0 0
    %7776 = vmatpush1.bf16.msra.mxu0 0
    %7777 = vmatprep.subr.bf16.mxu0 0
    %7778 = vmatpush1.bf16.msra.mxu0 0
    %7779 = vmatprep.subr.bf16.mxu0 0
    %7780 = vmatpush1.bf16.msra.mxu0 0
    %7781 = vmatprep.subr.bf16.mxu0 0
    %7782 = vmatpush1.bf16.msra.mxu0 0
    %7783 = vmatprep.subr.bf16.mxu0 0
    %7784 = vmatpush1.bf16.msra.mxu0 0
    %7785 = vmatprep.subr.bf16.mxu0 0
    %7786 = vmatpush1.bf16.msra.mxu0 0
    %7787 = vmatprep.subr.bf16.mxu0 0
    %7788 = vmatpush1.bf16.msra.mxu0 0
    %7789 = vmatprep.subr.bf16.mxu0 0
    %7790 = vmatpush1.bf16.msra.mxu0 0
    %7791 = vmatprep.subr.bf16.mxu0 0
    %7792 = vmatpush1.bf16.msra.mxu0 0
    %7793 = vmatprep.subr.bf16.mxu0 0
    %7794 = vmatpush1.bf16.msra.mxu0 0
    %7795 = vmatprep.mubr.bf16.mxu0 0
    %7796 = vmatmul.mubr.bf16.gmra.mrb[0].mxu0 %v7761
    %v7797 = vpop.f32.mrb[0].mxu0
    %v7798 = vadd.f32 0.0, %v7797
    %v7799 = vpop.f32.mrb[0].mxu0
    %v7800 = vpop.f32.mrb[0].mxu0
    %v7801 = vpop.f32.mrb[0].mxu0
    %7802 = vdwg.mxu0
    %v7803 = vpack.c.bf16 %v7798, %v7798
    %s7804 = scalar_lea.vmem [#allocation8], 128
    %v7805 = vld [vmem:[%s7804] sm:$0xf]
    %v7806 = vld [vmem:[%s7804 + $0x4] sm:$0xf]
    %v7807 = vld [vmem:[%s7804 + $0x8] sm:$0xf]
    %v7808 = vld [vmem:[%s7804 + $0xc] sm:$0xf]
    %v7809 = vld [vmem:[%s7804 + $0x10] sm:$0xf]
    %v7810 = vld [vmem:[%s7804 + $0x14] sm:$0xf]
    %v7811 = vld [vmem:[%s7804 + $0x18] sm:$0xf]
    %v7812 = vld [vmem:[%s7804 + $0x1c] sm:$0xf]
    %v7813 = vld [vmem:[%s7804 + $0x20] sm:$0xf]
    %v7814 = vld [vmem:[%s7804 + $0x24] sm:$0xf]
    %v7815 = vld [vmem:[%s7804 + $0x28] sm:$0xf]
    %v7816 = vld [vmem:[%s7804 + $0x2c] sm:$0xf]
    %v7817 = vld [vmem:[%s7804 + $0x30] sm:$0xf]
    %v7818 = vld [vmem:[%s7804 + $0x34] sm:$0xf]
    %v7819 = vld [vmem:[%s7804 + $0x38] sm:$0xf]
    %v7820 = vld [vmem:[%s7804 + $0x3c] sm:$0xf]
    %v7837 = vunpack.c.l.b16 %v7805
    %v7838 = vunpack.c.l.b16 %v7806
    %v7839 = vunpack.c.l.b16 %v7807
    %v7840 = vunpack.c.l.b16 %v7808
    %v7841 = vunpack.c.l.b16 %v7809
    %v7842 = vunpack.c.l.b16 %v7810
    %v7843 = vunpack.c.l.b16 %v7811
    %v7844 = vunpack.c.l.b16 %v7812
    %v7845 = vunpack.c.l.b16 %v7813
    %v7846 = vunpack.c.l.b16 %v7814
    %v7847 = vunpack.c.l.b16 %v7815
    %v7848 = vunpack.c.l.b16 %v7816
    %v7849 = vunpack.c.l.b16 %v7817
    %v7850 = vunpack.c.l.b16 %v7818
    %v7851 = vunpack.c.l.b16 %v7819
    %v7852 = vunpack.c.l.b16 %v7820
    %v7853 = vpack.c.b16 %v7838, %v7837
    %v7854 = vpack.c.b16 %v7840, %v7839
    %v7855 = vpack.c.b16 %v7842, %v7841
    %v7856 = vpack.c.b16 %v7844, %v7843
    %v7857 = vpack.c.b16 %v7846, %v7845
    %v7858 = vpack.c.b16 %v7848, %v7847
    %v7859 = vpack.c.b16 %v7850, %v7849
    %v7860 = vpack.c.b16 %v7852, %v7851
    %7869 = vmatprep.subr.bf16.mxu0 0
    %7870 = vmatpush1.bf16.msra.mxu0 %v7853
    %7871 = vmatprep.subr.bf16.mxu0 0
    %7872 = vmatpush1.bf16.msra.mxu0 %v7854
    %7873 = vmatprep.subr.bf16.mxu0 0
    %7874 = vmatpush1.bf16.msra.mxu0 %v7855
    %7875 = vmatprep.subr.bf16.mxu0 0
    %7876 = vmatpush1.bf16.msra.mxu0 %v7856
    %7877 = vmatprep.subr.bf16.mxu0 0
    %7878 = vmatpush1.bf16.msra.mxu0 %v7857
    %7879 = vmatprep.subr.bf16.mxu0 0
    %7880 = vmatpush1.bf16.msra.mxu0 %v7858
    %7881 = vmatprep.subr.bf16.mxu0 0
    %7882 = vmatpush1.bf16.msra.mxu0 %v7859
    %7883 = vmatprep.subr.bf16.mxu0 0
    %7884 = vmatpush1.bf16.msra.mxu0 %v7860
    %7885 = vmatprep.subr.bf16.mxu0 0
    %7886 = vmatpush1.bf16.msra.mxu0 0
    %7887 = vmatprep.subr.bf16.mxu0 0
    %7888 = vmatpush1.bf16.msra.mxu0 0
    %7889 = vmatprep.subr.bf16.mxu0 0
    %7890 = vmatpush1.bf16.msra.mxu0 0
    %7891 = vmatprep.subr.bf16.mxu0 0
    %7892 = vmatpush1.bf16.msra.mxu0 0
    %7893 = vmatprep.subr.bf16.mxu0 0
    %7894 = vmatpush1.bf16.msra.mxu0 0
    %7895 = vmatprep.subr.bf16.mxu0 0
    %7896 = vmatpush1.bf16.msra.mxu0 0
    %7897 = vmatprep.subr.bf16.mxu0 0
    %7898 = vmatpush1.bf16.msra.mxu0 0
    %7899 = vmatprep.subr.bf16.mxu0 0
    %7900 = vmatpush1.bf16.msra.mxu0 0
    %7901 = vmatprep.mubr.bf16.mxu0 0
    %7902 = vmatmul.mubr.bf16.gmra.mrb[0].mxu0 %v7803
    %v7903 = vpop.f32.mrb[0].mxu0
    %v7904 = vadd.f32 0.0, %v7903
    %v7905 = vpop.f32.mrb[0].mxu0
    %v7906 = vpop.f32.mrb[0].mxu0
    %v7907 = vpop.f32.mrb[0].mxu0
    %7908 = vdwg.mxu0
    %v7909 = vadd.f32 %v7749, %v7904
    %7910 = vset.pattern.permute.xlu0 3
    %7911 = vperm.xlu0 %7910, %v7443
    %v7912 = vpop.permute.xlu0 %7911
    %vm7913 = vcmp.eq.s32.totalorder %v220, %v7912
    %v7914 = vsel %vm7913, 1.0, 0.0
    %v7915 = vpack.c.bf16 %v7914, %v7914
    %v7917 = vsel %vm7450, %v7915, 0
    %7919 = vmatprep.subr.bf16.mxu0 0
    %7920 = vmatpush1.bf16.msra.mxu0 %v7441
    %7921 = vmatprep.subr.bf16.mxu0 0
    %7922 = vmatpush1.bf16.msra.mxu0 %v7442
    %7923 = vmatprep.subr.bf16.mxu0 0
    %7924 = vmatpush1.bf16.msra.mxu0 0
    %7925 = vmatprep.subr.bf16.mxu0 0
    %7926 = vmatpush1.bf16.msra.mxu0 0
    %7927 = vmatprep.subr.bf16.mxu0 0
    %7928 = vmatpush1.bf16.msra.mxu0 0
    %7929 = vmatprep.subr.bf16.mxu0 0
    %7930 = vmatpush1.bf16.msra.mxu0 0
    %7931 = vmatprep.subr.bf16.mxu0 0
    %7932 = vmatpush1.bf16.msra.mxu0 0
    %7933 = vmatprep.subr.bf16.mxu0 0
    %7934 = vmatpush1.bf16.msra.mxu0 0
    %7935 = vmatprep.subr.bf16.mxu0 0
    %7936 = vmatpush1.bf16.msra.mxu0 0
    %7937 = vmatprep.subr.bf16.mxu0 0
    %7938 = vmatpush1.bf16.msra.mxu0 0
    %7939 = vmatprep.subr.bf16.mxu0 0
    %7940 = vmatpush1.bf16.msra.mxu0 0
    %7941 = vmatprep.subr.bf16.mxu0 0
    %7942 = vmatpush1.bf16.msra.mxu0 0
    %7943 = vmatprep.subr.bf16.mxu0 0
    %7944 = vmatpush1.bf16.msra.mxu0 0
    %7945 = vmatprep.subr.bf16.mxu0 0
    %7946 = vmatpush1.bf16.msra.mxu0 0
    %7947 = vmatprep.subr.bf16.mxu0 0
    %7948 = vmatpush1.bf16.msra.mxu0 0
    %7949 = vmatprep.subr.bf16.mxu0 0
    %7950 = vmatpush1.bf16.msra.mxu0 0
    %7951 = vmatprep.mubr.bf16.mxu0 0
    %7952 = vmatmul.mubr.bf16.gmra.mrb[0].mxu0 %v7917
    %v7953 = vpop.f32.mrb[0].mxu0
    %v7954 = vadd.f32 0.0, %v7953
    %v7955 = vpop.f32.mrb[0].mxu0
    %v7956 = vpop.f32.mrb[0].mxu0
    %v7957 = vpop.f32.mrb[0].mxu0
    %7958 = vdwg.mxu0
    %v7959 = vpack.c.bf16 %v7954, %v7954
    %s7960 = scalar_lea.vmem [#allocation8], 192
    %v7961 = vld [vmem:[%s7960] sm:$0xf]
    %v7962 = vld [vmem:[%s7960 + $0x4] sm:$0xf]
    %v7963 = vld [vmem:[%s7960 + $0x8] sm:$0xf]
    %v7964 = vld [vmem:[%s7960 + $0xc] sm:$0xf]
    %v7965 = vld [vmem:[%s7960 + $0x10] sm:$0xf]
    %v7966 = vld [vmem:[%s7960 + $0x14] sm:$0xf]
    %v7967 = vld [vmem:[%s7960 + $0x18] sm:$0xf]
    %v7968 = vld [vmem:[%s7960 + $0x1c] sm:$0xf]
    %v7969 = vld [vmem:[%s7960 + $0x20] sm:$0xf]
    %v7970 = vld [vmem:[%s7960 + $0x24] sm:$0xf]
    %v7971 = vld [vmem:[%s7960 + $0x28] sm:$0xf]
    %v7972 = vld [vmem:[%s7960 + $0x2c] sm:$0xf]
    %v7973 = vld [vmem:[%s7960 + $0x30] sm:$0xf]
    %v7974 = vld [vmem:[%s7960 + $0x34] sm:$0xf]
    %v7975 = vld [vmem:[%s7960 + $0x38] sm:$0xf]
    %v7976 = vld [vmem:[%s7960 + $0x3c] sm:$0xf]
    %v7993 = vunpack.c.l.b16 %v7961
    %v7994 = vunpack.c.l.b16 %v7962
    %v7995 = vunpack.c.l.b16 %v7963
    %v7996 = vunpack.c.l.b16 %v7964
    %v7997 = vunpack.c.l.b16 %v7965
    %v7998 = vunpack.c.l.b16 %v7966
    %v7999 = vunpack.c.l.b16 %v7967
    %v8000 = vunpack.c.l.b16 %v7968
    %v8001 = vunpack.c.l.b16 %v7969
    %v8002 = vunpack.c.l.b16 %v7970
    %v8003 = vunpack.c.l.b16 %v7971
    %v8004 = vunpack.c.l.b16 %v7972
    %v8005 = vunpack.c.l.b16 %v7973
    %v8006 = vunpack.c.l.b16 %v7974
    %v8007 = vunpack.c.l.b16 %v7975
    %v8008 = vunpack.c.l.b16 %v7976
    %v8009 = vpack.c.b16 %v7994, %v7993
    %v8010 = vpack.c.b16 %v7996, %v7995
    %v8011 = vpack.c.b16 %v7998, %v7997
    %v8012 = vpack.c.b16 %v8000, %v7999
    %v8013 = vpack.c.b16 %v8002, %v8001
    %v8014 = vpack.c.b16 %v8004, %v8003
    %v8015 = vpack.c.b16 %v8006, %v8005
    %v8016 = vpack.c.b16 %v8008, %v8007
    %8025 = vmatprep.subr.bf16.mxu0 0
    %8026 = vmatpush1.bf16.msra.mxu0 %v8009
    %8027 = vmatprep.subr.bf16.mxu0 0
    %8028 = vmatpush1.bf16.msra.mxu0 %v8010
    %8029 = vmatprep.subr.bf16.mxu0 0
    %8030 = vmatpush1.bf16.msra.mxu0 %v8011
    %8031 = vmatprep.subr.bf16.mxu0 0
    %8032 = vmatpush1.bf16.msra.mxu0 %v8012
    %8033 = vmatprep.subr.bf16.mxu0 0
    %8034 = vmatpush1.bf16.msra.mxu0 %v8013
    %8035 = vmatprep.subr.bf16.mxu0 0
    %8036 = vmatpush1.bf16.msra.mxu0 %v8014
    %8037 = vmatprep.subr.bf16.mxu0 0
    %8038 = vmatpush1.bf16.msra.mxu0 %v8015
    %8039 = vmatprep.subr.bf16.mxu0 0
    %8040 = vmatpush1.bf16.msra.mxu0 %v8016
    %8041 = vmatprep.subr.bf16.mxu0 0
    %8042 = vmatpush1.bf16.msra.mxu0 0
    %8043 = vmatprep.subr.bf16.mxu0 0
    %8044 = vmatpush1.bf16.msra.mxu0 0
    %8045 = vmatprep.subr.bf16.mxu0 0
    %8046 = vmatpush1.bf16.msra.mxu0 0
    %8047 = vmatprep.subr.bf16.mxu0 0
    %8048 = vmatpush1.bf16.msra.mxu0 0
    %8049 = vmatprep.subr.bf16.mxu0 0
    %8050 = vmatpush1.bf16.msra.mxu0 0
    %8051 = vmatprep.subr.bf16.mxu0 0
    %8052 = vmatpush1.bf16.msra.mxu0 0
    %8053 = vmatprep.subr.bf16.mxu0 0
    %8054 = vmatpush1.bf16.msra.mxu0 0
    %8055 = vmatprep.subr.bf16.mxu0 0
    %8056 = vmatpush1.bf16.msra.mxu0 0
    %8057 = vmatprep.mubr.bf16.mxu0 0
    %8058 = vmatmul.mubr.bf16.gmra.mrb[0].mxu0 %v7959
    %v8059 = vpop.f32.mrb[0].mxu0
    %v8060 = vadd.f32 0.0, %v8059
    %v8061 = vpop.f32.mrb[0].mxu0
    %v8062 = vpop.f32.mrb[0].mxu0
    %v8063 = vpop.f32.mrb[0].mxu0
    %8064 = vdwg.mxu0
    %v8065 = vadd.f32 %v7909, %v8060
    %8066 = vset.pattern.permute.xlu0 4
    %8067 = vperm.xlu0 %8066, %v7443
    %v8068 = vpop.permute.xlu0 %8067
    %vm8069 = vcmp.eq.s32.totalorder %v220, %v8068
    %v8070 = vsel %vm8069, 1.0, 0.0
    %v8071 = vpack.c.bf16 %v8070, %v8070
    %v8073 = vsel %vm7450, %v8071, 0
    %8075 = vmatprep.subr.bf16.mxu0 0
    %8076 = vmatpush1.bf16.msra.mxu0 %v7441
    %8077 = vmatprep.subr.bf16.mxu0 0
    %8078 = vmatpush1.bf16.msra.mxu0 %v7442
    %8079 = vmatprep.subr.bf16.mxu0 0
    %8080 = vmatpush1.bf16.msra.mxu0 0
    %8081 = vmatprep.subr.bf16.mxu0 0
    %8082 = vmatpush1.bf16.msra.mxu0 0
    %8083 = vmatprep.subr.bf16.mxu0 0
    %8084 = vmatpush1.bf16.msra.mxu0 0
    %8085 = vmatprep.subr.bf16.mxu0 0
    %8086 = vmatpush1.bf16.msra.mxu0 0
    %8087 = vmatprep.subr.bf16.mxu0 0
    %8088 = vmatpush1.bf16.msra.mxu0 0
    %8089 = vmatprep.subr.bf16.mxu0 0
    %8090 = vmatpush1.bf16.msra.mxu0 0
    %8091 = vmatprep.subr.bf16.mxu0 0
    %8092 = vmatpush1.bf16.msra.mxu0 0
    %8093 = vmatprep.subr.bf16.mxu0 0
    %8094 = vmatpush1.bf16.msra.mxu0 0
    %8095 = vmatprep.subr.bf16.mxu0 0
    %8096 = vmatpush1.bf16.msra.mxu0 0
    %8097 = vmatprep.subr.bf16.mxu0 0
    %8098 = vmatpush1.bf16.msra.mxu0 0
    %8099 = vmatprep.subr.bf16.mxu0 0
    %8100 = vmatpush1.bf16.msra.mxu0 0
    %8101 = vmatprep.subr.bf16.mxu0 0
    %8102 = vmatpush1.bf16.msra.mxu0 0
    %8103 = vmatprep.subr.bf16.mxu0 0
    %8104 = vmatpush1.bf16.msra.mxu0 0
    %8105 = vmatprep.subr.bf16.mxu0 0
    %8106 = vmatpush1.bf16.msra.mxu0 0
    %8107 = vmatprep.mubr.bf16.mxu0 0
    %8108 = vmatmul.mubr.bf16.gmra.mrb[0].mxu0 %v8073
    %v8109 = vpop.f32.mrb[0].mxu0
    %v8110 = vadd.f32 0.0, %v8109
    %v8111 = vpop.f32.mrb[0].mxu0
    %v8112 = vpop.f32.mrb[0].mxu0
    %v8113 = vpop.f32.mrb[0].mxu0
    %8114 = vdwg.mxu0
    %v8115 = vpack.c.bf16 %v8110, %v8110
    %s8116 = scalar_lea.vmem [#allocation8], 256
    %v8117 = vld [vmem:[%s8116] sm:$0xf]
    %v8118 = vld [vmem:[%s8116 + $0x4] sm:$0xf]
    %v8119 = vld [vmem:[%s8116 + $0x8] sm:$0xf]
    %v8120 = vld [vmem:[%s8116 + $0xc] sm:$0xf]
    %v8121 = vld [vmem:[%s8116 + $0x10] sm:$0xf]
    %v8122 = vld [vmem:[%s8116 + $0x14] sm:$0xf]
    %v8123 = vld [vmem:[%s8116 + $0x18] sm:$0xf]
    %v8124 = vld [vmem:[%s8116 + $0x1c] sm:$0xf]
    %v8125 = vld [vmem:[%s8116 + $0x20] sm:$0xf]
    %v8126 = vld [vmem:[%s8116 + $0x24] sm:$0xf]
    %v8127 = vld [vmem:[%s8116 + $0x28] sm:$0xf]
    %v8128 = vld [vmem:[%s8116 + $0x2c] sm:$0xf]
    %v8129 = vld [vmem:[%s8116 + $0x30] sm:$0xf]
    %v8130 = vld [vmem:[%s8116 + $0x34] sm:$0xf]
    %v8131 = vld [vmem:[%s8116 + $0x38] sm:$0xf]
    %v8132 = vld [vmem:[%s8116 + $0x3c] sm:$0xf]
    %v8149 = vunpack.c.l.b16 %v8117
    %v8150 = vunpack.c.l.b16 %v8118
    %v8151 = vunpack.c.l.b16 %v8119
    %v8152 = vunpack.c.l.b16 %v8120
    %v8153 = vunpack.c.l.b16 %v8121
    %v8154 = vunpack.c.l.b16 %v8122
    %v8155 = vunpack.c.l.b16 %v8123
    %v8156 = vunpack.c.l.b16 %v8124
    %v8157 = vunpack.c.l.b16 %v8125
    %v8158 = vunpack.c.l.b16 %v8126
    %v8159 = vunpack.c.l.b16 %v8127
    %v8160 = vunpack.c.l.b16 %v8128
    %v8161 = vunpack.c.l.b16 %v8129
    %v8162 = vunpack.c.l.b16 %v8130
    %v8163 = vunpack.c.l.b16 %v8131
    %v8164 = vunpack.c.l.b16 %v8132
    %v8165 = vpack.c.b16 %v8150, %v8149
    %v8166 = vpack.c.b16 %v8152, %v8151
    %v8167 = vpack.c.b16 %v8154, %v8153
    %v8168 = vpack.c.b16 %v8156, %v8155
    %v8169 = vpack.c.b16 %v8158, %v8157
    %v8170 = vpack.c.b16 %v8160, %v8159
    %v8171 = vpack.c.b16 %v8162, %v8161
    %v8172 = vpack.c.b16 %v8164, %v8163
    %8181 = vmatprep.subr.bf16.mxu0 0
    %8182 = vmatpush1.bf16.msra.mxu0 %v8165
    %8183 = vmatprep.subr.bf16.mxu0 0
    %8184 = vmatpush1.bf16.msra.mxu0 %v8166
    %8185 = vmatprep.subr.bf16.mxu0 0
    %8186 = vmatpush1.bf16.msra.mxu0 %v8167
    %8187 = vmatprep.subr.bf16.mxu0 0
    %8188 = vmatpush1.bf16.msra.mxu0 %v8168
    %8189 = vmatprep.subr.bf16.mxu0 0
    %8190 = vmatpush1.bf16.msra.mxu0 %v8169
    %8191 = vmatprep.subr.bf16.mxu0 0
    %8192 = vmatpush1.bf16.msra.mxu0 %v8170
    %8193 = vmatprep.subr.bf16.mxu0 0
    %8194 = vmatpush1.bf16.msra.mxu0 %v8171
    %8195 = vmatprep.subr.bf16.mxu0 0
    %8196 = vmatpush1.bf16.msra.mxu0 %v8172
    %8197 = vmatprep.subr.bf16.mxu0 0
    %8198 = vmatpush1.bf16.msra.mxu0 0
    %8199 = vmatprep.subr.bf16.mxu0 0
    %8200 = vmatpush1.bf16.msra.mxu0 0
    %8201 = vmatprep.subr.bf16.mxu0 0
    %8202 = vmatpush1.bf16.msra.mxu0 0
    %8203 = vmatprep.subr.bf16.mxu0 0
    %8204 = vmatpush1.bf16.msra.mxu0 0
    %8205 = vmatprep.subr.bf16.mxu0 0
    %8206 = vmatpush1.bf16.msra.mxu0 0
    %8207 = vmatprep.subr.bf16.mxu0 0
    %8208 = vmatpush1.bf16.msra.mxu0 0
    %8209 = vmatprep.subr.bf16.mxu0 0
    %8210 = vmatpush1.bf16.msra.mxu0 0
    %8211 = vmatprep.subr.bf16.mxu0 0
    %8212 = vmatpush1.bf16.msra.mxu0 0
    %8213 = vmatprep.mubr.bf16.mxu0 0
    %8214 = vmatmul.mubr.bf16.gmra.mrb[0].mxu0 %v8115
    %v8215 = vpop.f32.mrb[0].mxu0
    %v8216 = vadd.f32 0.0, %v8215
    %v8217 = vpop.f32.mrb[0].mxu0
    %v8218 = vpop.f32.mrb[0].mxu0
    %v8219 = vpop.f32.mrb[0].mxu0
    %8220 = vdwg.mxu0
    %v8221 = vadd.f32 %v8065, %v8216
    %8222 = vset.pattern.permute.xlu0 5
    %8223 = vperm.xlu0 %8222, %v7443
    %v8224 = vpop.permute.xlu0 %8223
    %vm8225 = vcmp.eq.s32.totalorder %v220, %v8224
    %v8226 = vsel %vm8225, 1.0, 0.0
    %v8227 = vpack.c.bf16 %v8226, %v8226
    %v8229 = vsel %vm7450, %v8227, 0
    %8231 = vmatprep.subr.bf16.mxu0 0
    %8232 = vmatpush1.bf16.msra.mxu0 %v7441
    %8233 = vmatprep.subr.bf16.mxu0 0
    %8234 = vmatpush1.bf16.msra.mxu0 %v7442
    %8235 = vmatprep.subr.bf16.mxu0 0
    %8236 = vmatpush1.bf16.msra.mxu0 0
    %8237 = vmatprep.subr.bf16.mxu0 0
    %8238 = vmatpush1.bf16.msra.mxu0 0
    %8239 = vmatprep.subr.bf16.mxu0 0
    %8240 = vmatpush1.bf16.msra.mxu0 0
    %8241 = vmatprep.subr.bf16.mxu0 0
    %8242 = vmatpush1.bf16.msra.mxu0 0
    %8243 = vmatprep.subr.bf16.mxu0 0
    %8244 = vmatpush1.bf16.msra.mxu0 0
    %8245 = vmatprep.subr.bf16.mxu0 0
    %8246 = vmatpush1.bf16.msra.mxu0 0
    %8247 = vmatprep.subr.bf16.mxu0 0
    %8248 = vmatpush1.bf16.msra.mxu0 0
    %8249 = vmatprep.subr.bf16.mxu0 0
    %8250 = vmatpush1.bf16.msra.mxu0 0
    %8251 = vmatprep.subr.bf16.mxu0 0
    %8252 = vmatpush1.bf16.msra.mxu0 0
    %8253 = vmatprep.subr.bf16.mxu0 0
    %8254 = vmatpush1.bf16.msra.mxu0 0
    %8255 = vmatprep.subr.bf16.mxu0 0
    %8256 = vmatpush1.bf16.msra.mxu0 0
    %8257 = vmatprep.subr.bf16.mxu0 0
    %8258 = vmatpush1.bf16.msra.mxu0 0
    %8259 = vmatprep.subr.bf16.mxu0 0
    %8260 = vmatpush1.bf16.msra.mxu0 0
    %8261 = vmatprep.subr.bf16.mxu0 0
    %8262 = vmatpush1.bf16.msra.mxu0 0
    %8263 = vmatprep.mubr.bf16.mxu0 0
    %8264 = vmatmul.mubr.bf16.gmra.mrb[0].mxu0 %v8229
    %v8265 = vpop.f32.mrb[0].mxu0
    %v8266 = vadd.f32 0.0, %v8265
    %v8267 = vpop.f32.mrb[0].mxu0
    %v8268 = vpop.f32.mrb[0].mxu0
    %v8269 = vpop.f32.mrb[0].mxu0
    %8270 = vdwg.mxu0
    %v8271 = vpack.c.bf16 %v8266, %v8266
    %s8272 = scalar_lea.vmem [#allocation8], 320
    %v8273 = vld [vmem:[%s8272] sm:$0xf]
    %v8274 = vld [vmem:[%s8272 + $0x4] sm:$0xf]
    %v8275 = vld [vmem:[%s8272 + $0x8] sm:$0xf]
    %v8276 = vld [vmem:[%s8272 + $0xc] sm:$0xf]
    %v8277 = vld [vmem:[%s8272 + $0x10] sm:$0xf]
    %v8278 = vld [vmem:[%s8272 + $0x14] sm:$0xf]
    %v8279 = vld [vmem:[%s8272 + $0x18] sm:$0xf]
    %v8280 = vld [vmem:[%s8272 + $0x1c] sm:$0xf]
    %v8281 = vld [vmem:[%s8272 + $0x20] sm:$0xf]
    %v8282 = vld [vmem:[%s8272 + $0x24] sm:$0xf]
    %v8283 = vld [vmem:[%s8272 + $0x28] sm:$0xf]
    %v8284 = vld [vmem:[%s8272 + $0x2c] sm:$0xf]
    %v8285 = vld [vmem:[%s8272 + $0x30] sm:$0xf]
    %v8286 = vld [vmem:[%s8272 + $0x34] sm:$0xf]
    %v8287 = vld [vmem:[%s8272 + $0x38] sm:$0xf]
    %v8288 = vld [vmem:[%s8272 + $0x3c] sm:$0xf]
    %v8305 = vunpack.c.l.b16 %v8273
    %v8306 = vunpack.c.l.b16 %v8274
    %v8307 = vunpack.c.l.b16 %v8275
    %v8308 = vunpack.c.l.b16 %v8276
    %v8309 = vunpack.c.l.b16 %v8277
    %v8310 = vunpack.c.l.b16 %v8278
    %v8311 = vunpack.c.l.b16 %v8279
    %v8312 = vunpack.c.l.b16 %v8280
    %v8313 = vunpack.c.l.b16 %v8281
    %v8314 = vunpack.c.l.b16 %v8282
    %v8315 = vunpack.c.l.b16 %v8283
    %v8316 = vunpack.c.l.b16 %v8284
    %v8317 = vunpack.c.l.b16 %v8285
    %v8318 = vunpack.c.l.b16 %v8286
    %v8319 = vunpack.c.l.b16 %v8287
    %v8320 = vunpack.c.l.b16 %v8288
    %v8321 = vpack.c.b16 %v8306, %v8305
    %v8322 = vpack.c.b16 %v8308, %v8307
    %v8323 = vpack.c.b16 %v8310, %v8309
    %v8324 = vpack.c.b16 %v8312, %v8311
    %v8325 = vpack.c.b16 %v8314, %v8313
    %v8326 = vpack.c.b16 %v8316, %v8315
    %v8327 = vpack.c.b16 %v8318, %v8317
    %v8328 = vpack.c.b16 %v8320, %v8319
    %8337 = vmatprep.subr.bf16.mxu0 0
    %8338 = vmatpush1.bf16.msra.mxu0 %v8321
    %8339 = vmatprep.subr.bf16.mxu0 0
    %8340 = vmatpush1.bf16.msra.mxu0 %v8322
    %8341 = vmatprep.subr.bf16.mxu0 0
    %8342 = vmatpush1.bf16.msra.mxu0 %v8323
    %8343 = vmatprep.subr.bf16.mxu0 0
    %8344 = vmatpush1.bf16.msra.mxu0 %v8324
    %8345 = vmatprep.subr.bf16.mxu0 0
    %8346 = vmatpush1.bf16.msra.mxu0 %v8325
    %8347 = vmatprep.subr.bf16.mxu0 0
    %8348 = vmatpush1.bf16.msra.mxu0 %v8326
    %8349 = vmatprep.subr.bf16.mxu0 0
    %8350 = vmatpush1.bf16.msra.mxu0 %v8327
    %8351 = vmatprep.subr.bf16.mxu0 0
    %8352 = vmatpush1.bf16.msra.mxu0 %v8328
    %8353 = vmatprep.subr.bf16.mxu0 0
    %8354 = vmatpush1.bf16.msra.mxu0 0
    %8355 = vmatprep.subr.bf16.mxu0 0
    %8356 = vmatpush1.bf16.msra.mxu0 0
    %8357 = vmatprep.subr.bf16.mxu0 0
    %8358 = vmatpush1.bf16.msra.mxu0 0
    %8359 = vmatprep.subr.bf16.mxu0 0
    %8360 = vmatpush1.bf16.msra.mxu0 0
    %8361 = vmatprep.subr.bf16.mxu0 0
    %8362 = vmatpush1.bf16.msra.mxu0 0
    %8363 = vmatprep.subr.bf16.mxu0 0
    %8364 = vmatpush1.bf16.msra.mxu0 0
    %8365 = vmatprep.subr.bf16.mxu0 0
    %8366 = vmatpush1.bf16.msra.mxu0 0
    %8367 = vmatprep.subr.bf16.mxu0 0
    %8368 = vmatpush1.bf16.msra.mxu0 0
    %8369 = vmatprep.mubr.bf16.mxu0 0
    %8370 = vmatmul.mubr.bf16.gmra.mrb[0].mxu0 %v8271
    %v8371 = vpop.f32.mrb[0].mxu0
    %v8372 = vadd.f32 0.0, %v8371
    %v8373 = vpop.f32.mrb[0].mxu0
    %v8374 = vpop.f32.mrb[0].mxu0
    %v8375 = vpop.f32.mrb[0].mxu0
    %8376 = vdwg.mxu0
    %v8377 = vadd.f32 %v8221, %v8372
    %8378 = vset.pattern.permute.xlu0 6
    %8379 = vperm.xlu0 %8378, %v7443
    %v8380 = vpop.permute.xlu0 %8379
    %vm8381 = vcmp.eq.s32.totalorder %v220, %v8380
    %v8382 = vsel %vm8381, 1.0, 0.0
    %v8383 = vpack.c.bf16 %v8382, %v8382
    %v8385 = vsel %vm7450, %v8383, 0
    %8387 = vmatprep.subr.bf16.mxu0 0
    %8388 = vmatpush1.bf16.msra.mxu0 %v7441
    %8389 = vmatprep.subr.bf16.mxu0 0
    %8390 = vmatpush1.bf16.msra.mxu0 %v7442
    %8391 = vmatprep.subr.bf16.mxu0 0
    %8392 = vmatpush1.bf16.msra.mxu0 0
    %8393 = vmatprep.subr.bf16.mxu0 0
    %8394 = vmatpush1.bf16.msra.mxu0 0
    %8395 = vmatprep.subr.bf16.mxu0 0
    %8396 = vmatpush1.bf16.msra.mxu0 0
    %8397 = vmatprep.subr.bf16.mxu0 0
    %8398 = vmatpush1.bf16.msra.mxu0 0
    %8399 = vmatprep.subr.bf16.mxu0 0
    %8400 = vmatpush1.bf16.msra.mxu0 0
    %8401 = vmatprep.subr.bf16.mxu0 0
    %8402 = vmatpush1.bf16.msra.mxu0 0
    %8403 = vmatprep.subr.bf16.mxu0 0
    %8404 = vmatpush1.bf16.msra.mxu0 0
    %8405 = vmatprep.subr.bf16.mxu0 0
    %8406 = vmatpush1.bf16.msra.mxu0 0
    %8407 = vmatprep.subr.bf16.mxu0 0
    %8408 = vmatpush1.bf16.msra.mxu0 0
    %8409 = vmatprep.subr.bf16.mxu0 0
    %8410 = vmatpush1.bf16.msra.mxu0 0
    %8411 = vmatprep.subr.bf16.mxu0 0
    %8412 = vmatpush1.bf16.msra.mxu0 0
    %8413 = vmatprep.subr.bf16.mxu0 0
    %8414 = vmatpush1.bf16.msra.mxu0 0
    %8415 = vmatprep.subr.bf16.mxu0 0
    %8416 = vmatpush1.bf16.msra.mxu0 0
    %8417 = vmatprep.subr.bf16.mxu0 0
    %8418 = vmatpush1.bf16.msra.mxu0 0
    %8419 = vmatprep.mubr.bf16.mxu0 0
    %8420 = vmatmul.mubr.bf16.gmra.mrb[0].mxu0 %v8385
    %v8421 = vpop.f32.mrb[0].mxu0
    %v8422 = vadd.f32 0.0, %v8421
    %v8423 = vpop.f32.mrb[0].mxu0
    %v8424 = vpop.f32.mrb[0].mxu0
    %v8425 = vpop.f32.mrb[0].mxu0
    %8426 = vdwg.mxu0
    %v8427 = vpack.c.bf16 %v8422, %v8422
    %s8428 = scalar_lea.vmem [#allocation8], 384
    %v8429 = vld [vmem:[%s8428] sm:$0xf]
    %v8430 = vld [vmem:[%s8428 + $0x4] sm:$0xf]
    %v8431 = vld [vmem:[%s8428 + $0x8] sm:$0xf]
    %v8432 = vld [vmem:[%s8428 + $0xc] sm:$0xf]
    %v8433 = vld [vmem:[%s8428 + $0x10] sm:$0xf]
    %v8434 = vld [vmem:[%s8428 + $0x14] sm:$0xf]
    %v8435 = vld [vmem:[%s8428 + $0x18] sm:$0xf]
    %v8436 = vld [vmem:[%s8428 + $0x1c] sm:$0xf]
    %v8437 = vld [vmem:[%s8428 + $0x20] sm:$0xf]
    %v8438 = vld [vmem:[%s8428 + $0x24] sm:$0xf]
    %v8439 = vld [vmem:[%s8428 + $0x28] sm:$0xf]
    %v8440 = vld [vmem:[%s8428 + $0x2c] sm:$0xf]
    %v8441 = vld [vmem:[%s8428 + $0x30] sm:$0xf]
    %v8442 = vld [vmem:[%s8428 + $0x34] sm:$0xf]
    %v8443 = vld [vmem:[%s8428 + $0x38] sm:$0xf]
    %v8444 = vld [vmem:[%s8428 + $0x3c] sm:$0xf]
    %v8461 = vunpack.c.l.b16 %v8429
    %v8462 = vunpack.c.l.b16 %v8430
    %v8463 = vunpack.c.l.b16 %v8431
    %v8464 = vunpack.c.l.b16 %v8432
    %v8465 = vunpack.c.l.b16 %v8433
    %v8466 = vunpack.c.l.b16 %v8434
    %v8467 = vunpack.c.l.b16 %v8435
    %v8468 = vunpack.c.l.b16 %v8436
    %v8469 = vunpack.c.l.b16 %v8437
    %v8470 = vunpack.c.l.b16 %v8438
    %v8471 = vunpack.c.l.b16 %v8439
    %v8472 = vunpack.c.l.b16 %v8440
    %v8473 = vunpack.c.l.b16 %v8441
    %v8474 = vunpack.c.l.b16 %v8442
    %v8475 = vunpack.c.l.b16 %v8443
    %v8476 = vunpack.c.l.b16 %v8444
    %v8477 = vpack.c.b16 %v8462, %v8461
    %v8478 = vpack.c.b16 %v8464, %v8463
    %v8479 = vpack.c.b16 %v8466, %v8465
    %v8480 = vpack.c.b16 %v8468, %v8467
    %v8481 = vpack.c.b16 %v8470, %v8469
    %v8482 = vpack.c.b16 %v8472, %v8471
    %v8483 = vpack.c.b16 %v8474, %v8473
    %v8484 = vpack.c.b16 %v8476, %v8475
    %8493 = vmatprep.subr.bf16.mxu0 0
    %8494 = vmatpush1.bf16.msra.mxu0 %v8477
    %8495 = vmatprep.subr.bf16.mxu0 0
    %8496 = vmatpush1.bf16.msra.mxu0 %v8478
    %8497 = vmatprep.subr.bf16.mxu0 0
    %8498 = vmatpush1.bf16.msra.mxu0 %v8479
    %8499 = vmatprep.subr.bf16.mxu0 0
    %8500 = vmatpush1.bf16.msra.mxu0 %v8480
    %8501 = vmatprep.subr.bf16.mxu0 0
    %8502 = vmatpush1.bf16.msra.mxu0 %v8481
    %8503 = vmatprep.subr.bf16.mxu0 0
    %8504 = vmatpush1.bf16.msra.mxu0 %v8482
    %8505 = vmatprep.subr.bf16.mxu0 0
    %8506 = vmatpush1.bf16.msra.mxu0 %v8483
    %8507 = vmatprep.subr.bf16.mxu0 0
    %8508 = vmatpush1.bf16.msra.mxu0 %v8484
    %8509 = vmatprep.subr.bf16.mxu0 0
    %8510 = vmatpush1.bf16.msra.mxu0 0
    %8511 = vmatprep.subr.bf16.mxu0 0
    %8512 = vmatpush1.bf16.msra.mxu0 0
    %8513 = vmatprep.subr.bf16.mxu0 0
    %8514 = vmatpush1.bf16.msra.mxu0 0
    %8515 = vmatprep.subr.bf16.mxu0 0
    %8516 = vmatpush1.bf16.msra.mxu0 0
    %8517 = vmatprep.subr.bf16.mxu0 0
    %8518 = vmatpush1.bf16.msra.mxu0 0
    %8519 = vmatprep.subr.bf16.mxu0 0
    %8520 = vmatpush1.bf16.msra.mxu0 0
    %8521 = vmatprep.subr.bf16.mxu0 0
    %8522 = vmatpush1.bf16.msra.mxu0 0
    %8523 = vmatprep.subr.bf16.mxu0 0
    %8524 = vmatpush1.bf16.msra.mxu0 0
    %8525 = vmatprep.mubr.bf16.mxu0 0
    %8526 = vmatmul.mubr.bf16.gmra.mrb[0].mxu0 %v8427
    %v8527 = vpop.f32.mrb[0].mxu0
    %v8528 = vadd.f32 0.0, %v8527
    %v8529 = vpop.f32.mrb[0].mxu0
    %v8530 = vpop.f32.mrb[0].mxu0
    %v8531 = vpop.f32.mrb[0].mxu0
    %8532 = vdwg.mxu0
    %v8533 = vadd.f32 %v8377, %v8528
    %8534 = vset.pattern.permute.xlu0 7
    %8535 = vperm.xlu0 %8534, %v7443
    %v8536 = vpop.permute.xlu0 %8535
    %vm8537 = vcmp.eq.s32.totalorder %v220, %v8536
    %v8538 = vsel %vm8537, 1.0, 0.0
    %v8539 = vpack.c.bf16 %v8538, %v8538
    %v8541 = vsel %vm7450, %v8539, 0
    %8543 = vmatprep.subr.bf16.mxu0 0
    %8544 = vmatpush1.bf16.msra.mxu0 %v7441
    %8545 = vmatprep.subr.bf16.mxu0 0
    %8546 = vmatpush1.bf16.msra.mxu0 %v7442
    %8547 = vmatprep.subr.bf16.mxu0 0
    %8548 = vmatpush1.bf16.msra.mxu0 0
    %8549 = vmatprep.subr.bf16.mxu0 0
    %8550 = vmatpush1.bf16.msra.mxu0 0
    %8551 = vmatprep.subr.bf16.mxu0 0
    %8552 = vmatpush1.bf16.msra.mxu0 0
    %8553 = vmatprep.subr.bf16.mxu0 0
    %8554 = vmatpush1.bf16.msra.mxu0 0
    %8555 = vmatprep.subr.bf16.mxu0 0
    %8556 = vmatpush1.bf16.msra.mxu0 0
    %8557 = vmatprep.subr.bf16.mxu0 0
    %8558 = vmatpush1.bf16.msra.mxu0 0
    %8559 = vmatprep.subr.bf16.mxu0 0
    %8560 = vmatpush1.bf16.msra.mxu0 0
    %8561 = vmatprep.subr.bf16.mxu0 0
    %8562 = vmatpush1.bf16.msra.mxu0 0
    %8563 = vmatprep.subr.bf16.mxu0 0
    %8564 = vmatpush1.bf16.msra.mxu0 0
    %8565 = vmatprep.subr.bf16.mxu0 0
    %8566 = vmatpush1.bf16.msra.mxu0 0
    %8567 = vmatprep.subr.bf16.mxu0 0
    %8568 = vmatpush1.bf16.msra.mxu0 0
    %8569 = vmatprep.subr.bf16.mxu0 0
    %8570 = vmatpush1.bf16.msra.mxu0 0
    %8571 = vmatprep.subr.bf16.mxu0 0
    %8572 = vmatpush1.bf16.msra.mxu0 0
    %8573 = vmatprep.subr.bf16.mxu0 0
    %8574 = vmatpush1.bf16.msra.mxu0 0
    %8575 = vmatprep.mubr.bf16.mxu0 0
    %8576 = vmatmul.mubr.bf16.gmra.mrb[0].mxu0 %v8541
    %v8577 = vpop.f32.mrb[0].mxu0
    %v8578 = vadd.f32 0.0, %v8577
    %v8579 = vpop.f32.mrb[0].mxu0
    %v8580 = vpop.f32.mrb[0].mxu0
    %v8581 = vpop.f32.mrb[0].mxu0
    %8582 = vdwg.mxu0
    %v8583 = vpack.c.bf16 %v8578, %v8578
    %s8584 = scalar_lea.vmem [#allocation8], 448
    %v8585 = vld [vmem:[%s8584] sm:$0xf]
    %v8586 = vld [vmem:[%s8584 + $0x4] sm:$0xf]
    %v8587 = vld [vmem:[%s8584 + $0x8] sm:$0xf]
    %v8588 = vld [vmem:[%s8584 + $0xc] sm:$0xf]
    %v8589 = vld [vmem:[%s8584 + $0x10] sm:$0xf]
    %v8590 = vld [vmem:[%s8584 + $0x14] sm:$0xf]
    %v8591 = vld [vmem:[%s8584 + $0x18] sm:$0xf]
    %v8592 = vld [vmem:[%s8584 + $0x1c] sm:$0xf]
    %v8593 = vld [vmem:[%s8584 + $0x20] sm:$0xf]
    %v8594 = vld [vmem:[%s8584 + $0x24] sm:$0xf]
    %v8595 = vld [vmem:[%s8584 + $0x28] sm:$0xf]
    %v8596 = vld [vmem:[%s8584 + $0x2c] sm:$0xf]
    %v8597 = vld [vmem:[%s8584 + $0x30] sm:$0xf]
    %v8598 = vld [vmem:[%s8584 + $0x34] sm:$0xf]
    %v8599 = vld [vmem:[%s8584 + $0x38] sm:$0xf]
    %v8600 = vld [vmem:[%s8584 + $0x3c] sm:$0xf]
    %v8617 = vunpack.c.l.b16 %v8585
    %v8618 = vunpack.c.l.b16 %v8586
    %v8619 = vunpack.c.l.b16 %v8587
    %v8620 = vunpack.c.l.b16 %v8588
    %v8621 = vunpack.c.l.b16 %v8589
    %v8622 = vunpack.c.l.b16 %v8590
    %v8623 = vunpack.c.l.b16 %v8591
    %v8624 = vunpack.c.l.b16 %v8592
    %v8625 = vunpack.c.l.b16 %v8593
    %v8626 = vunpack.c.l.b16 %v8594
    %v8627 = vunpack.c.l.b16 %v8595
    %v8628 = vunpack.c.l.b16 %v8596
    %v8629 = vunpack.c.l.b16 %v8597
    %v8630 = vunpack.c.l.b16 %v8598
    %v8631 = vunpack.c.l.b16 %v8599
    %v8632 = vunpack.c.l.b16 %v8600
    %v8633 = vpack.c.b16 %v8618, %v8617
    %v8634 = vpack.c.b16 %v8620, %v8619
    %v8635 = vpack.c.b16 %v8622, %v8621
    %v8636 = vpack.c.b16 %v8624, %v8623
    %v8637 = vpack.c.b16 %v8626, %v8625
    %v8638 = vpack.c.b16 %v8628, %v8627
    %v8639 = vpack.c.b16 %v8630, %v8629
    %v8640 = vpack.c.b16 %v8632, %v8631
    %8649 = vmatprep.subr.bf16.mxu0 0
    %8650 = vmatpush1.bf16.msra.mxu0 %v8633
    %8651 = vmatprep.subr.bf16.mxu0 0
    %8652 = vmatpush1.bf16.msra.mxu0 %v8634
    %8653 = vmatprep.subr.bf16.mxu0 0
    %8654 = vmatpush1.bf16.msra.mxu0 %v8635
    %8655 = vmatprep.subr.bf16.mxu0 0
    %8656 = vmatpush1.bf16.msra.mxu0 %v8636
    %8657 = vmatprep.subr.bf16.mxu0 0
    %8658 = vmatpush1.bf16.msra.mxu0 %v8637
    %8659 = vmatprep.subr.bf16.mxu0 0
    %8660 = vmatpush1.bf16.msra.mxu0 %v8638
    %8661 = vmatprep.subr.bf16.mxu0 0
    %8662 = vmatpush1.bf16.msra.mxu0 %v8639
    %8663 = vmatprep.subr.bf16.mxu0 0
    %8664 = vmatpush1.bf16.msra.mxu0 %v8640
    %8665 = vmatprep.subr.bf16.mxu0 0
    %8666 = vmatpush1.bf16.msra.mxu0 0
    %8667 = vmatprep.subr.bf16.mxu0 0
    %8668 = vmatpush1.bf16.msra.mxu0 0
    %8669 = vmatprep.subr.bf16.mxu0 0
    %8670 = vmatpush1.bf16.msra.mxu0 0
    %8671 = vmatprep.subr.bf16.mxu0 0
    %8672 = vmatpush1.bf16.msra.mxu0 0
    %8673 = vmatprep.subr.bf16.mxu0 0
    %8674 = vmatpush1.bf16.msra.mxu0 0
    %8675 = vmatprep.subr.bf16.mxu0 0
    %8676 = vmatpush1.bf16.msra.mxu0 0
    %8677 = vmatprep.subr.bf16.mxu0 0
    %8678 = vmatpush1.bf16.msra.mxu0 0
    %8679 = vmatprep.subr.bf16.mxu0 0
    %8680 = vmatpush1.bf16.msra.mxu0 0
    %8681 = vmatprep.mubr.bf16.mxu0 0
    %8682 = vmatmul.mubr.bf16.gmra.mrb[0].mxu0 %v8583
    %v8683 = vpop.f32.mrb[0].mxu0
    %v8684 = vadd.f32 0.0, %v8683
    %v8685 = vpop.f32.mrb[0].mxu0
    %v8686 = vpop.f32.mrb[0].mxu0
    %v8687 = vpop.f32.mrb[0].mxu0
    %8688 = vdwg.mxu0
    %v8689 = vadd.f32 %v8533, %v8684
    %8690 = vset.pattern.permute.xlu0 8
    %8691 = vperm.xlu0 %8690, %v7443
    %v8692 = vpop.permute.xlu0 %8691
    %vm8693 = vcmp.eq.s32.totalorder %v220, %v8692
    %v8694 = vsel %vm8693, 1.0, 0.0
    %v8695 = vpack.c.bf16 %v8694, %v8694
    %v8697 = vsel %vm7450, %v8695, 0
    %8699 = vmatprep.subr.bf16.mxu0 0
    %8700 = vmatpush1.bf16.msra.mxu0 %v7441
    %8701 = vmatprep.subr.bf16.mxu0 0
    %8702 = vmatpush1.bf16.msra.mxu0 %v7442
    %8703 = vmatprep.subr.bf16.mxu0 0
    %8704 = vmatpush1.bf16.msra.mxu0 0
    %8705 = vmatprep.subr.bf16.mxu0 0
    %8706 = vmatpush1.bf16.msra.mxu0 0
    %8707 = vmatprep.subr.bf16.mxu0 0
    %8708 = vmatpush1.bf16.msra.mxu0 0
    %8709 = vmatprep.subr.bf16.mxu0 0
    %8710 = vmatpush1.bf16.msra.mxu0 0
    %8711 = vmatprep.subr.bf16.mxu0 0
    %8712 = vmatpush1.bf16.msra.mxu0 0
    %8713 = vmatprep.subr.bf16.mxu0 0
    %8714 = vmatpush1.bf16.msra.mxu0 0
    %8715 = vmatprep.subr.bf16.mxu0 0
    %8716 = vmatpush1.bf16.msra.mxu0 0
    %8717 = vmatprep.subr.bf16.mxu0 0
    %8718 = vmatpush1.bf16.msra.mxu0 0
    %8719 = vmatprep.subr.bf16.mxu0 0
    %8720 = vmatpush1.bf16.msra.mxu0 0
    %8721 = vmatprep.subr.bf16.mxu0 0
    %8722 = vmatpush1.bf16.msra.mxu0 0
    %8723 = vmatprep.subr.bf16.mxu0 0
    %8724 = vmatpush1.bf16.msra.mxu0 0
    %8725 = vmatprep.subr.bf16.mxu0 0
    %8726 = vmatpush1.bf16.msra.mxu0 0
    %8727 = vmatprep.subr.bf16.mxu0 0
    %8728 = vmatpush1.bf16.msra.mxu0 0
    %8729 = vmatprep.subr.bf16.mxu0 0
    %8730 = vmatpush1.bf16.msra.mxu0 0
    %8731 = vmatprep.mubr.bf16.mxu0 0
    %8732 = vmatmul.mubr.bf16.gmra.mrb[0].mxu0 %v8697
    %v8733 = vpop.f32.mrb[0].mxu0
    %v8734 = vadd.f32 0.0, %v8733
    %v8735 = vpop.f32.mrb[0].mxu0
    %v8736 = vpop.f32.mrb[0].mxu0
    %v8737 = vpop.f32.mrb[0].mxu0
    %8738 = vdwg.mxu0
    %v8739 = vpack.c.bf16 %v8734, %v8734
    %s8740 = scalar_lea.vmem [#allocation8], 512
    %v8741 = vld [vmem:[%s8740] sm:$0xf]
    %v8742 = vld [vmem:[%s8740 + $0x4] sm:$0xf]
    %v8743 = vld [vmem:[%s8740 + $0x8] sm:$0xf]
    %v8744 = vld [vmem:[%s8740 + $0xc] sm:$0xf]
    %v8745 = vld [vmem:[%s8740 + $0x10] sm:$0xf]
    %v8746 = vld [vmem:[%s8740 + $0x14] sm:$0xf]
    %v8747 = vld [vmem:[%s8740 + $0x18] sm:$0xf]
    %v8748 = vld [vmem:[%s8740 + $0x1c] sm:$0xf]
    %v8749 = vld [vmem:[%s8740 + $0x20] sm:$0xf]
    %v8750 = vld [vmem:[%s8740 + $0x24] sm:$0xf]
    %v8751 = vld [vmem:[%s8740 + $0x28] sm:$0xf]
    %v8752 = vld [vmem:[%s8740 + $0x2c] sm:$0xf]
    %v8753 = vld [vmem:[%s8740 + $0x30] sm:$0xf]
    %v8754 = vld [vmem:[%s8740 + $0x34] sm:$0xf]
    %v8755 = vld [vmem:[%s8740 + $0x38] sm:$0xf]
    %v8756 = vld [vmem:[%s8740 + $0x3c] sm:$0xf]
    %v8773 = vunpack.c.l.b16 %v8741
    %v8774 = vunpack.c.l.b16 %v8742
    %v8775 = vunpack.c.l.b16 %v8743
    %v8776 = vunpack.c.l.b16 %v8744
    %v8777 = vunpack.c.l.b16 %v8745
    %v8778 = vunpack.c.l.b16 %v8746
    %v8779 = vunpack.c.l.b16 %v8747
    %v8780 = vunpack.c.l.b16 %v8748
    %v8781 = vunpack.c.l.b16 %v8749
    %v8782 = vunpack.c.l.b16 %v8750
    %v8783 = vunpack.c.l.b16 %v8751
    %v8784 = vunpack.c.l.b16 %v8752
    %v8785 = vunpack.c.l.b16 %v8753
    %v8786 = vunpack.c.l.b16 %v8754
    %v8787 = vunpack.c.l.b16 %v8755
    %v8788 = vunpack.c.l.b16 %v8756
    %v8789 = vpack.c.b16 %v8774, %v8773
    %v8790 = vpack.c.b16 %v8776, %v8775
    %v8791 = vpack.c.b16 %v8778, %v8777
    %v8792 = vpack.c.b16 %v8780, %v8779
    %v8793 = vpack.c.b16 %v8782, %v8781
    %v8794 = vpack.c.b16 %v8784, %v8783
    %v8795 = vpack.c.b16 %v8786, %v8785
    %v8796 = vpack.c.b16 %v8788, %v8787
    %8805 = vmatprep.subr.bf16.mxu0 0
    %8806 = vmatpush1.bf16.msra.mxu0 %v8789
    %8807 = vmatprep.subr.bf16.mxu0 0
    %8808 = vmatpush1.bf16.msra.mxu0 %v8790
    %8809 = vmatprep.subr.bf16.mxu0 0
    %8810 = vmatpush1.bf16.msra.mxu0 %v8791
    %8811 = vmatprep.subr.bf16.mxu0 0
    %8812 = vmatpush1.bf16.msra.mxu0 %v8792
    %8813 = vmatprep.subr.bf16.mxu0 0
    %8814 = vmatpush1.bf16.msra.mxu0 %v8793
    %8815 = vmatprep.subr.bf16.mxu0 0
    %8816 = vmatpush1.bf16.msra.mxu0 %v8794
    %8817 = vmatprep.subr.bf16.mxu0 0
    %8818 = vmatpush1.bf16.msra.mxu0 %v8795
    %8819 = vmatprep.subr.bf16.mxu0 0
    %8820 = vmatpush1.bf16.msra.mxu0 %v8796
    %8821 = vmatprep.subr.bf16.mxu0 0
    %8822 = vmatpush1.bf16.msra.mxu0 0
    %8823 = vmatprep.subr.bf16.mxu0 0
    %8824 = vmatpush1.bf16.msra.mxu0 0
    %8825 = vmatprep.subr.bf16.mxu0 0
    %8826 = vmatpush1.bf16.msra.mxu0 0
    %8827 = vmatprep.subr.bf16.mxu0 0
    %8828 = vmatpush1.bf16.msra.mxu0 0
    %8829 = vmatprep.subr.bf16.mxu0 0
    %8830 = vmatpush1.bf16.msra.mxu0 0
    %8831 = vmatprep.subr.bf16.mxu0 0
    %8832 = vmatpush1.bf16.msra.mxu0 0
    %8833 = vmatprep.subr.bf16.mxu0 0
    %8834 = vmatpush1.bf16.msra.mxu0 0
    %8835 = vmatprep.subr.bf16.mxu0 0
    %8836 = vmatpush1.bf16.msra.mxu0 0
    %8837 = vmatprep.mubr.bf16.mxu0 0
    %8838 = vmatmul.mubr.bf16.gmra.mrb[0].mxu0 %v8739
    %v8839 = vpop.f32.mrb[0].mxu0
    %v8840 = vadd.f32 0.0, %v8839
    %v8841 = vpop.f32.mrb[0].mxu0
    %v8842 = vpop.f32.mrb[0].mxu0
    %v8843 = vpop.f32.mrb[0].mxu0
    %8844 = vdwg.mxu0
    %v8845 = vadd.f32 %v8689, %v8840
    %v8846 = vrot.slane %v8845, 4
    %v8847 = vadd.f32 %v8845, %v8846
    %v8848 = vrot.slane %v8847, 2
    %v8849 = vadd.f32 %v8847, %v8848
    %v8850 = vrot.slane %v8849, 1
    %v8851 = vadd.f32 %v8849, %v8850
    %v8852 = vrcp.pop 8.0
    %v8853 = vmul.f32 %v8851, %v8852
    %v8854 = vmul.f32 %v8845, %v8845
    %v8855 = vrot.slane %v8854, 4
    %v8856 = vadd.f32 %v8854, %v8855
    %v8857 = vrot.slane %v8856, 2
    %v8858 = vadd.f32 %v8856, %v8857
    %v8859 = vrot.slane %v8858, 1
    %v8860 = vadd.f32 %v8858, %v8859
    %v8861 = vmul.f32 %v8860, %v8852
    %v8862 = vmul.f32 %v8853, %v8853
    %v8863 = vsub.f32 %v8861, %v8862
    %v8864 = vld [vmem:[%s9] sm:$0x1]
    %v8865 = vadd.f32 %v8863, 1e-05
    %v8866 = vrsqrt.pop %v8865
    %v8867 = vmul.f32 %v8864, %v8866
    %v8868 = vld [vmem:[%s9 + $0x1] sm:$0x1]
    %v8869 = vmul.f32 %v8853, %v8867
    %v8870 = vsub.f32 %v8868, %v8869
    %v8871 = vlaneseq
    %v8872 = vshrl.u32 %v8871, 7
    %v8873 = vsub.s32 0, %v8872
    %v8874 = vrot.slane %v8867, %v8873
    %v8875 = vmul.f32 %v8845, %v8874
    %v8876 = vlaneseq
    %v8877 = vshrl.u32 %v8876, 7
    %v8878 = vsub.s32 0, %v8877
    %v8879 = vrot.slane %v8870, %v8878
    %v8880 = vadd.f32 %v8875, %v8879
    %vm8881 = vcmp.ge.f32.partialorder %v8880, 0.0
    %v8882 = vmul.f32 %v8880, 0.01
    %v8883 = vsel %vm8881, %v8880, %v8882
    %v8884 = vpack.c.bf16 %v8883, %v8883
    %v8885 = vld [vmem:[%s10] sm:$0x3]
    %8886 = vset.pattern.permute.xlu0 0
    %8887 = vperm.xlu0 %8886, %v8885
    %v8888 = vpop.permute.xlu0 %8887
    %vm8889 = vcmp.eq.s32.totalorder %v220, %v8888
    %v8890 = vsel %vm8889, 1.0, 0.0
    %v8891 = vpack.c.bf16 %v8890, %v8890
    %vm8892 = vcmask 64512
    %v8894 = vsel %vm8892, %v8891, 0
    %vm8896 = vcmask 1043456
    %v8898 = vsel %vm8896, %v8884, 0
    %8900 = vmatprep.subr.bf16.mxu0 0
    %8901 = vmatpush1.bf16.msra.mxu0 %v8898
    %8902 = vmatprep.subr.bf16.mxu0 0
    %8903 = vmatpush1.bf16.msra.mxu0 0
    %8904 = vmatprep.subr.bf16.mxu0 0
    %8905 = vmatpush1.bf16.msra.mxu0 0
    %8906 = vmatprep.subr.bf16.mxu0 0
    %8907 = vmatpush1.bf16.msra.mxu0 0
    %8908 = vmatprep.subr.bf16.mxu0 0
    %8909 = vmatpush1.bf16.msra.mxu0 0
    %8910 = vmatprep.subr.bf16.mxu0 0
    %8911 = vmatpush1.bf16.msra.mxu0 0
    %8912 = vmatprep.subr.bf16.mxu0 0
    %8913 = vmatpush1.bf16.msra.mxu0 0
    %8914 = vmatprep.subr.bf16.mxu0 0
    %8915 = vmatpush1.bf16.msra.mxu0 0
    %8916 = vmatprep.subr.bf16.mxu0 0
    %8917 = vmatpush1.bf16.msra.mxu0 0
    %8918 = vmatprep.subr.bf16.mxu0 0
    %8919 = vmatpush1.bf16.msra.mxu0 0
    %8920 = vmatprep.subr.bf16.mxu0 0
    %8921 = vmatpush1.bf16.msra.mxu0 0
    %8922 = vmatprep.subr.bf16.mxu0 0
    %8923 = vmatpush1.bf16.msra.mxu0 0
    %8924 = vmatprep.subr.bf16.mxu0 0
    %8925 = vmatpush1.bf16.msra.mxu0 0
    %8926 = vmatprep.subr.bf16.mxu0 0
    %8927 = vmatpush1.bf16.msra.mxu0 0
    %8928 = vmatprep.subr.bf16.mxu0 0
    %8929 = vmatpush1.bf16.msra.mxu0 0
    %8930 = vmatprep.subr.bf16.mxu0 0
    %8931 = vmatpush1.bf16.msra.mxu0 0
    %8932 = vmatprep.mubr.bf16.mxu0 0
    %8933 = vmatmul.mubr.bf16.gmra.mrb[0].mxu0 %v8894
    %v8934 = vpop.f32.mrb[0].mxu0
    %v8935 = vadd.f32 0.0, %v8934
    %v8936 = vpop.f32.mrb[0].mxu0
    %v8937 = vpop.f32.mrb[0].mxu0
    %v8938 = vpop.f32.mrb[0].mxu0
    %8939 = vdwg.mxu0
    %v8940 = vpack.c.bf16 %v8935, %v8935
    %v8941 = vld [vmem:[#allocation10] sm:$0xff]
    %v8942 = vld [vmem:[#allocation10 + $0x8] sm:$0xff]
    %v8943 = vld [vmem:[#allocation10 + $0x10] sm:$0xff]
    %v8944 = vld [vmem:[#allocation10 + $0x18] sm:$0xff]
    %v8945 = vld [vmem:[#allocation10 + $0x20] sm:$0xff]
    %v8946 = vld [vmem:[#allocation10 + $0x28] sm:$0xff]
    %v8947 = vld [vmem:[#allocation10 + $0x30] sm:$0xff]
    %v8948 = vld [vmem:[#allocation10 + $0x38] sm:$0xff]
    %v8949 = vld [vmem:[#allocation10 + $0x40] sm:$0xff]
    %v8950 = vld [vmem:[#allocation10 + $0x48] sm:$0xff]
    %v8951 = vld [vmem:[#allocation10 + $0x50] sm:$0xff]
    %v8952 = vld [vmem:[#allocation10 + $0x58] sm:$0xff]
    %v8953 = vld [vmem:[#allocation10 + $0x60] sm:$0xff]
    %v8954 = vld [vmem:[#allocation10 + $0x68] sm:$0xff]
    %v8955 = vld [vmem:[#allocation10 + $0x70] sm:$0xff]
    %v8956 = vld [vmem:[#allocation10 + $0x78] sm:$0xff]
    %8957 = vset.pattern.permute.xlu0 1
    %8958 = vperm.xlu0 %8957, %v8885
    %v8959 = vpop.permute.xlu0 %8958
    %vm8960 = vcmp.eq.s32.totalorder %v220, %v8959
    %v8961 = vsel %vm8960, 1.0, 0.0
    %v8962 = vpack.c.bf16 %v8961, %v8961
    %v8964 = vsel %vm8892, %v8962, 0
    %8966 = vmatprep.subr.bf16.mxu0 0
    %8967 = vmatpush1.bf16.msra.mxu0 %v8898
    %8968 = vmatprep.subr.bf16.mxu0 0
    %8969 = vmatpush1.bf16.msra.mxu0 0
    %8970 = vmatprep.subr.bf16.mxu0 0
    %8971 = vmatpush1.bf16.msra.mxu0 0
    %8972 = vmatprep.subr.bf16.mxu0 0
    %8973 = vmatpush1.bf16.msra.mxu0 0
    %8974 = vmatprep.subr.bf16.mxu0 0
    %8975 = vmatpush1.bf16.msra.mxu0 0
    %8976 = vmatprep.subr.bf16.mxu0 0
    %8977 = vmatpush1.bf16.msra.mxu0 0
    %8978 = vmatprep.subr.bf16.mxu0 0
    %8979 = vmatpush1.bf16.msra.mxu0 0
    %8980 = vmatprep.subr.bf16.mxu0 0
    %8981 = vmatpush1.bf16.msra.mxu0 0
    %8982 = vmatprep.subr.bf16.mxu0 0
    %8983 = vmatpush1.bf16.msra.mxu0 0
    %8984 = vmatprep.subr.bf16.mxu0 0
    %8985 = vmatpush1.bf16.msra.mxu0 0
    %8986 = vmatprep.subr.bf16.mxu0 0
    %8987 = vmatpush1.bf16.msra.mxu0 0
    %8988 = vmatprep.subr.bf16.mxu0 0
    %8989 = vmatpush1.bf16.msra.mxu0 0
    %8990 = vmatprep.subr.bf16.mxu0 0
    %8991 = vmatpush1.bf16.msra.mxu0 0
    %8992 = vmatprep.subr.bf16.mxu0 0
    %8993 = vmatpush1.bf16.msra.mxu0 0
    %8994 = vmatprep.subr.bf16.mxu0 0
    %8995 = vmatpush1.bf16.msra.mxu0 0
    %8996 = vmatprep.subr.bf16.mxu0 0
    %8997 = vmatpush1.bf16.msra.mxu0 0
    %8998 = vmatprep.mubr.bf16.mxu0 0
    %8999 = vmatmul.mubr.bf16.gmra.mrb[0].mxu0 %v8964
    %v9000 = vpop.f32.mrb[0].mxu0
    %v9001 = vadd.f32 0.0, %v9000
    %v9002 = vpop.f32.mrb[0].mxu0
    %v9003 = vpop.f32.mrb[0].mxu0
    %v9004 = vpop.f32.mrb[0].mxu0
    %9005 = vdwg.mxu0
    %v9006 = vpack.c.bf16 %v9001, %v9001
    %s9007 = scalar_lea.vmem [#allocation10], 128
    %v9008 = vld [vmem:[%s9007] sm:$0xff]
    %v9009 = vld [vmem:[%s9007 + $0x8] sm:$0xff]
    %v9010 = vld [vmem:[%s9007 + $0x10] sm:$0xff]
    %v9011 = vld [vmem:[%s9007 + $0x18] sm:$0xff]
    %v9012 = vld [vmem:[%s9007 + $0x20] sm:$0xff]
    %v9013 = vld [vmem:[%s9007 + $0x28] sm:$0xff]
    %v9014 = vld [vmem:[%s9007 + $0x30] sm:$0xff]
    %v9015 = vld [vmem:[%s9007 + $0x38] sm:$0xff]
    %v9016 = vld [vmem:[%s9007 + $0x40] sm:$0xff]
    %v9017 = vld [vmem:[%s9007 + $0x48] sm:$0xff]
    %v9018 = vld [vmem:[%s9007 + $0x50] sm:$0xff]
    %v9019 = vld [vmem:[%s9007 + $0x58] sm:$0xff]
    %v9020 = vld [vmem:[%s9007 + $0x60] sm:$0xff]
    %v9021 = vld [vmem:[%s9007 + $0x68] sm:$0xff]
    %v9022 = vld [vmem:[%s9007 + $0x70] sm:$0xff]
    %v9023 = vld [vmem:[%s9007 + $0x78] sm:$0xff]
    %v9040 = vunpack.c.l.b16 %v9008
    %v9041 = vunpack.c.h.b16 %v9008
    %v9042 = vunpack.c.l.b16 %v9009
    %v9043 = vunpack.c.h.b16 %v9009
    %v9044 = vunpack.c.l.b16 %v9010
    %v9045 = vunpack.c.h.b16 %v9010
    %v9046 = vunpack.c.l.b16 %v9011
    %v9047 = vunpack.c.h.b16 %v9011
    %v9048 = vunpack.c.l.b16 %v9012
    %v9049 = vunpack.c.h.b16 %v9012
    %v9050 = vunpack.c.l.b16 %v9013
    %v9051 = vunpack.c.h.b16 %v9013
    %v9052 = vunpack.c.l.b16 %v9014
    %v9053 = vunpack.c.h.b16 %v9014
    %v9054 = vunpack.c.l.b16 %v9015
    %v9055 = vunpack.c.h.b16 %v9015
    %v9056 = vunpack.c.l.b16 %v9016
    %v9057 = vunpack.c.h.b16 %v9016
    %v9058 = vunpack.c.l.b16 %v9017
    %v9059 = vunpack.c.h.b16 %v9017
    %v9060 = vunpack.c.l.b16 %v9018
    %v9061 = vunpack.c.h.b16 %v9018
    %v9062 = vunpack.c.l.b16 %v9019
    %v9063 = vunpack.c.h.b16 %v9019
    %v9064 = vunpack.c.l.b16 %v9020
    %v9065 = vunpack.c.h.b16 %v9020
    %v9066 = vunpack.c.l.b16 %v9021
    %v9067 = vunpack.c.h.b16 %v9021
    %v9068 = vunpack.c.l.b16 %v9022
    %v9069 = vunpack.c.h.b16 %v9022
    %v9070 = vunpack.c.l.b16 %v9023
    %v9071 = vunpack.c.h.b16 %v9023
    %v9072 = vpack.c.b16 %v9042, %v9040
    %v9073 = vpack.c.b16 %v9043, %v9041
    %v9074 = vpack.c.b16 %v9046, %v9044
    %v9075 = vpack.c.b16 %v9047, %v9045
    %v9076 = vpack.c.b16 %v9050, %v9048
    %v9077 = vpack.c.b16 %v9051, %v9049
    %v9078 = vpack.c.b16 %v9054, %v9052
    %v9079 = vpack.c.b16 %v9055, %v9053
    %v9080 = vpack.c.b16 %v9058, %v9056
    %v9081 = vpack.c.b16 %v9059, %v9057
    %v9082 = vpack.c.b16 %v9062, %v9060
    %v9083 = vpack.c.b16 %v9063, %v9061
    %v9084 = vpack.c.b16 %v9066, %v9064
    %v9085 = vpack.c.b16 %v9067, %v9065
    %v9086 = vpack.c.b16 %v9070, %v9068
    %v9087 = vpack.c.b16 %v9071, %v9069
    %9104 = vmatprep.subr.bf16.mxu0 %v9073
    %9105 = vmatpush1.bf16.msra.mxu0 %v9072
    %9106 = vmatprep.subr.bf16.mxu0 %v9075
    %9107 = vmatpush1.bf16.msra.mxu0 %v9074
    %9108 = vmatprep.subr.bf16.mxu0 %v9077
    %9109 = vmatpush1.bf16.msra.mxu0 %v9076
    %9110 = vmatprep.subr.bf16.mxu0 %v9079
    %9111 = vmatpush1.bf16.msra.mxu0 %v9078
    %9112 = vmatprep.subr.bf16.mxu0 %v9081
    %9113 = vmatpush1.bf16.msra.mxu0 %v9080
    %9114 = vmatprep.subr.bf16.mxu0 %v9083
    %9115 = vmatpush1.bf16.msra.mxu0 %v9082
    %9116 = vmatprep.subr.bf16.mxu0 %v9085
    %9117 = vmatpush1.bf16.msra.mxu0 %v9084
    %9118 = vmatprep.subr.bf16.mxu0 %v9087
    %9119 = vmatpush1.bf16.msra.mxu0 %v9086
    %9120 = vmatprep.subr.bf16.mxu0 0
    %9121 = vmatpush1.bf16.msra.mxu0 0
    %9122 = vmatprep.subr.bf16.mxu0 0
    %9123 = vmatpush1.bf16.msra.mxu0 0
    %9124 = vmatprep.subr.bf16.mxu0 0
    %9125 = vmatpush1.bf16.msra.mxu0 0
    %9126 = vmatprep.subr.bf16.mxu0 0
    %9127 = vmatpush1.bf16.msra.mxu0 0
    %9128 = vmatprep.subr.bf16.mxu0 0
    %9129 = vmatpush1.bf16.msra.mxu0 0
    %9130 = vmatprep.subr.bf16.mxu0 0
    %9131 = vmatpush1.bf16.msra.mxu0 0
    %9132 = vmatprep.subr.bf16.mxu0 0
    %9133 = vmatpush1.bf16.msra.mxu0 0
    %9134 = vmatprep.subr.bf16.mxu0 0
    %9135 = vmatpush1.bf16.msra.mxu0 0
    %9136 = vmatprep.mubr.bf16.mxu0 0
    %9137 = vmatmul.mubr.bf16.gmra.mrb[0].mxu0 %v9006
    %v9138 = vpop.f32.mrb[0].mxu0
    %v9139 = vadd.f32 0.0, %v9138
    %v9140 = vpop.f32.mrb[0].mxu0
    %v9141 = vadd.f32 0.0, %v9140
    %v9142 = vpop.f32.mrb[0].mxu0
    %v9143 = vpop.f32.mrb[0].mxu0
    %9144 = vdwg.mxu0
    %v9161 = vunpack.c.l.b16 %v8941
    %v9162 = vunpack.c.h.b16 %v8941
    %v9163 = vunpack.c.l.b16 %v8942
    %v9164 = vunpack.c.h.b16 %v8942
    %v9165 = vunpack.c.l.b16 %v8943
    %v9166 = vunpack.c.h.b16 %v8943
    %v9167 = vunpack.c.l.b16 %v8944
    %v9168 = vunpack.c.h.b16 %v8944
    %v9169 = vunpack.c.l.b16 %v8945
    %v9170 = vunpack.c.h.b16 %v8945
    %v9171 = vunpack.c.l.b16 %v8946
    %v9172 = vunpack.c.h.b16 %v8946
    %v9173 = vunpack.c.l.b16 %v8947
    %v9174 = vunpack.c.h.b16 %v8947
    %v9175 = vunpack.c.l.b16 %v8948
    %v9176 = vunpack.c.h.b16 %v8948
    %v9177 = vunpack.c.l.b16 %v8949
    %v9178 = vunpack.c.h.b16 %v8949
    %v9179 = vunpack.c.l.b16 %v8950
    %v9180 = vunpack.c.h.b16 %v8950
    %v9181 = vunpack.c.l.b16 %v8951
    %v9182 = vunpack.c.h.b16 %v8951
    %v9183 = vunpack.c.l.b16 %v8952
    %v9184 = vunpack.c.h.b16 %v8952
    %v9185 = vunpack.c.l.b16 %v8953
    %v9186 = vunpack.c.h.b16 %v8953
    %v9187 = vunpack.c.l.b16 %v8954
    %v9188 = vunpack.c.h.b16 %v8954
    %v9189 = vunpack.c.l.b16 %v8955
    %v9190 = vunpack.c.h.b16 %v8955
    %v9191 = vunpack.c.l.b16 %v8956
    %v9192 = vunpack.c.h.b16 %v8956
    %v9193 = vpack.c.b16 %v9163, %v9161
    %v9194 = vpack.c.b16 %v9164, %v9162
    %v9195 = vpack.c.b16 %v9167, %v9165
    %v9196 = vpack.c.b16 %v9168, %v9166
    %v9197 = vpack.c.b16 %v9171, %v9169
    %v9198 = vpack.c.b16 %v9172, %v9170
    %v9199 = vpack.c.b16 %v9175, %v9173
    %v9200 = vpack.c.b16 %v9176, %v9174
    %v9201 = vpack.c.b16 %v9179, %v9177
    %v9202 = vpack.c.b16 %v9180, %v9178
    %v9203 = vpack.c.b16 %v9183, %v9181
    %v9204 = vpack.c.b16 %v9184, %v9182
    %v9205 = vpack.c.b16 %v9187, %v9185
    %v9206 = vpack.c.b16 %v9188, %v9186
    %v9207 = vpack.c.b16 %v9191, %v9189
    %v9208 = vpack.c.b16 %v9192, %v9190
    %9225 = vmatprep.subr.bf16.mxu0 %v9194
    %9226 = vmatpush1.bf16.msra.mxu0 %v9193
    %9227 = vmatprep.subr.bf16.mxu0 %v9196
    %9228 = vmatpush1.bf16.msra.mxu0 %v9195
    %9229 = vmatprep.subr.bf16.mxu0 %v9198
    %9230 = vmatpush1.bf16.msra.mxu0 %v9197
    %9231 = vmatprep.subr.bf16.mxu0 %v9200
    %9232 = vmatpush1.bf16.msra.mxu0 %v9199
    %9233 = vmatprep.subr.bf16.mxu0 %v9202
    %9234 = vmatpush1.bf16.msra.mxu0 %v9201
    %9235 = vmatprep.subr.bf16.mxu0 %v9204
    %9236 = vmatpush1.bf16.msra.mxu0 %v9203
    %9237 = vmatprep.subr.bf16.mxu0 %v9206
    %9238 = vmatpush1.bf16.msra.mxu0 %v9205
    %9239 = vmatprep.subr.bf16.mxu0 %v9208
    %9240 = vmatpush1.bf16.msra.mxu0 %v9207
    %9241 = vmatprep.subr.bf16.mxu0 0
    %9242 = vmatpush1.bf16.msra.mxu0 0
    %9243 = vmatprep.subr.bf16.mxu0 0
    %9244 = vmatpush1.bf16.msra.mxu0 0
    %9245 = vmatprep.subr.bf16.mxu0 0
    %9246 = vmatpush1.bf16.msra.mxu0 0
    %9247 = vmatprep.subr.bf16.mxu0 0
    %9248 = vmatpush1.bf16.msra.mxu0 0
    %9249 = vmatprep.subr.bf16.mxu0 0
    %9250 = vmatpush1.bf16.msra.mxu0 0
    %9251 = vmatprep.subr.bf16.mxu0 0
    %9252 = vmatpush1.bf16.msra.mxu0 0
    %9253 = vmatprep.subr.bf16.mxu0 0
    %9254 = vmatpush1.bf16.msra.mxu0 0
    %9255 = vmatprep.subr.bf16.mxu0 0
    %9256 = vmatpush1.bf16.msra.mxu0 0
    %9257 = vmatprep.mubr.bf16.mxu0 0
    %9258 = vmatmul.mubr.bf16.gmra.mrb[0].mxu0 %v8940
    %v9259 = vpop.f32.mrb[0].mxu0
    %v9260 = vadd.f32 %v9139, %v9259
    %v9261 = vpop.f32.mrb[0].mxu0
    %v9262 = vadd.f32 %v9141, %v9261
    %v9263 = vpop.f32.mrb[0].mxu0
    %v9264 = vpop.f32.mrb[0].mxu0
    %9265 = vdwg.mxu0
    %9266 = vset.pattern.permute.xlu0 2
    %9267 = vperm.xlu0 %9266, %v8885
    %v9268 = vpop.permute.xlu0 %9267
    %vm9269 = vcmp.eq.s32.totalorder %v220, %v9268
    %v9270 = vsel %vm9269, 1.0, 0.0
    %v9271 = vpack.c.bf16 %v9270, %v9270
    %v9273 = vsel %vm8892, %v9271, 0
    %9275 = vmatprep.subr.bf16.mxu0 0
    %9276 = vmatpush1.bf16.msra.mxu0 %v8898
    %9277 = vmatprep.subr.bf16.mxu0 0
    %9278 = vmatpush1.bf16.msra.mxu0 0
    %9279 = vmatprep.subr.bf16.mxu0 0
    %9280 = vmatpush1.bf16.msra.mxu0 0
    %9281 = vmatprep.subr.bf16.mxu0 0
    %9282 = vmatpush1.bf16.msra.mxu0 0
    %9283 = vmatprep.subr.bf16.mxu0 0
    %9284 = vmatpush1.bf16.msra.mxu0 0
    %9285 = vmatprep.subr.bf16.mxu0 0
    %9286 = vmatpush1.bf16.msra.mxu0 0
    %9287 = vmatprep.subr.bf16.mxu0 0
    %9288 = vmatpush1.bf16.msra.mxu0 0
    %9289 = vmatprep.subr.bf16.mxu0 0
    %9290 = vmatpush1.bf16.msra.mxu0 0
    %9291 = vmatprep.subr.bf16.mxu0 0
    %9292 = vmatpush1.bf16.msra.mxu0 0
    %9293 = vmatprep.subr.bf16.mxu0 0
    %9294 = vmatpush1.bf16.msra.mxu0 0
    %9295 = vmatprep.subr.bf16.mxu0 0
    %9296 = vmatpush1.bf16.msra.mxu0 0
    %9297 = vmatprep.subr.bf16.mxu0 0
    %9298 = vmatpush1.bf16.msra.mxu0 0
    %9299 = vmatprep.subr.bf16.mxu0 0
    %9300 = vmatpush1.bf16.msra.mxu0 0
    %9301 = vmatprep.subr.bf16.mxu0 0
    %9302 = vmatpush1.bf16.msra.mxu0 0
    %9303 = vmatprep.subr.bf16.mxu0 0
    %9304 = vmatpush1.bf16.msra.mxu0 0
    %9305 = vmatprep.subr.bf16.mxu0 0
    %9306 = vmatpush1.bf16.msra.mxu0 0
    %9307 = vmatprep.mubr.bf16.mxu0 0
    %9308 = vmatmul.mubr.bf16.gmra.mrb[0].mxu0 %v9273
    %v9309 = vpop.f32.mrb[0].mxu0
    %v9310 = vadd.f32 0.0, %v9309
    %v9311 = vpop.f32.mrb[0].mxu0
    %v9312 = vpop.f32.mrb[0].mxu0
    %v9313 = vpop.f32.mrb[0].mxu0
    %9314 = vdwg.mxu0
    %v9315 = vpack.c.bf16 %v9310, %v9310
    %s9316 = scalar_lea.vmem [#allocation10], 256
    %v9317 = vld [vmem:[%s9316] sm:$0xff]
    %v9318 = vld [vmem:[%s9316 + $0x8] sm:$0xff]
    %v9319 = vld [vmem:[%s9316 + $0x10] sm:$0xff]
    %v9320 = vld [vmem:[%s9316 + $0x18] sm:$0xff]
    %v9321 = vld [vmem:[%s9316 + $0x20] sm:$0xff]
    %v9322 = vld [vmem:[%s9316 + $0x28] sm:$0xff]
    %v9323 = vld [vmem:[%s9316 + $0x30] sm:$0xff]
    %v9324 = vld [vmem:[%s9316 + $0x38] sm:$0xff]
    %v9325 = vld [vmem:[%s9316 + $0x40] sm:$0xff]
    %v9326 = vld [vmem:[%s9316 + $0x48] sm:$0xff]
    %v9327 = vld [vmem:[%s9316 + $0x50] sm:$0xff]
    %v9328 = vld [vmem:[%s9316 + $0x58] sm:$0xff]
    %v9329 = vld [vmem:[%s9316 + $0x60] sm:$0xff]
    %v9330 = vld [vmem:[%s9316 + $0x68] sm:$0xff]
    %v9331 = vld [vmem:[%s9316 + $0x70] sm:$0xff]
    %v9332 = vld [vmem:[%s9316 + $0x78] sm:$0xff]
    %v9349 = vunpack.c.l.b16 %v9317
    %v9350 = vunpack.c.h.b16 %v9317
    %v9351 = vunpack.c.l.b16 %v9318
    %v9352 = vunpack.c.h.b16 %v9318
    %v9353 = vunpack.c.l.b16 %v9319
    %v9354 = vunpack.c.h.b16 %v9319
    %v9355 = vunpack.c.l.b16 %v9320
    %v9356 = vunpack.c.h.b16 %v9320
    %v9357 = vunpack.c.l.b16 %v9321
    %v9358 = vunpack.c.h.b16 %v9321
    %v9359 = vunpack.c.l.b16 %v9322
    %v9360 = vunpack.c.h.b16 %v9322
    %v9361 = vunpack.c.l.b16 %v9323
    %v9362 = vunpack.c.h.b16 %v9323
    %v9363 = vunpack.c.l.b16 %v9324
    %v9364 = vunpack.c.h.b16 %v9324
    %v9365 = vunpack.c.l.b16 %v9325
    %v9366 = vunpack.c.h.b16 %v9325
    %v9367 = vunpack.c.l.b16 %v9326
    %v9368 = vunpack.c.h.b16 %v9326
    %v9369 = vunpack.c.l.b16 %v9327
    %v9370 = vunpack.c.h.b16 %v9327
    %v9371 = vunpack.c.l.b16 %v9328
    %v9372 = vunpack.c.h.b16 %v9328
    %v9373 = vunpack.c.l.b16 %v9329
    %v9374 = vunpack.c.h.b16 %v9329
    %v9375 = vunpack.c.l.b16 %v9330
    %v9376 = vunpack.c.h.b16 %v9330
    %v9377 = vunpack.c.l.b16 %v9331
    %v9378 = vunpack.c.h.b16 %v9331
    %v9379 = vunpack.c.l.b16 %v9332
    %v9380 = vunpack.c.h.b16 %v9332
    %v9381 = vpack.c.b16 %v9351, %v9349
    %v9382 = vpack.c.b16 %v9352, %v9350
    %v9383 = vpack.c.b16 %v9355, %v9353
    %v9384 = vpack.c.b16 %v9356, %v9354
    %v9385 = vpack.c.b16 %v9359, %v9357
    %v9386 = vpack.c.b16 %v9360, %v9358
    %v9387 = vpack.c.b16 %v9363, %v9361
    %v9388 = vpack.c.b16 %v9364, %v9362
    %v9389 = vpack.c.b16 %v9367, %v9365
    %v9390 = vpack.c.b16 %v9368, %v9366
    %v9391 = vpack.c.b16 %v9371, %v9369
    %v9392 = vpack.c.b16 %v9372, %v9370
    %v9393 = vpack.c.b16 %v9375, %v9373
    %v9394 = vpack.c.b16 %v9376, %v9374
    %v9395 = vpack.c.b16 %v9379, %v9377
    %v9396 = vpack.c.b16 %v9380, %v9378
    %9413 = vmatprep.subr.bf16.mxu0 %v9382
    %9414 = vmatpush1.bf16.msra.mxu0 %v9381
    %9415 = vmatprep.subr.bf16.mxu0 %v9384
    %9416 = vmatpush1.bf16.msra.mxu0 %v9383
    %9417 = vmatprep.subr.bf16.mxu0 %v9386
    %9418 = vmatpush1.bf16.msra.mxu0 %v9385
    %9419 = vmatprep.subr.bf16.mxu0 %v9388
    %9420 = vmatpush1.bf16.msra.mxu0 %v9387
    %9421 = vmatprep.subr.bf16.mxu0 %v9390
    %9422 = vmatpush1.bf16.msra.mxu0 %v9389
    %9423 = vmatprep.subr.bf16.mxu0 %v9392
    %9424 = vmatpush1.bf16.msra.mxu0 %v9391
    %9425 = vmatprep.subr.bf16.mxu0 %v9394
    %9426 = vmatpush1.bf16.msra.mxu0 %v9393
    %9427 = vmatprep.subr.bf16.mxu0 %v9396
    %9428 = vmatpush1.bf16.msra.mxu0 %v9395
    %9429 = vmatprep.subr.bf16.mxu0 0
    %9430 = vmatpush1.bf16.msra.mxu0 0
    %9431 = vmatprep.subr.bf16.mxu0 0
    %9432 = vmatpush1.bf16.msra.mxu0 0
    %9433 = vmatprep.subr.bf16.mxu0 0
    %9434 = vmatpush1.bf16.msra.mxu0 0
    %9435 = vmatprep.subr.bf16.mxu0 0
    %9436 = vmatpush1.bf16.msra.mxu0 0
    %9437 = vmatprep.subr.bf16.mxu0 0
    %9438 = vmatpush1.bf16.msra.mxu0 0
    %9439 = vmatprep.subr.bf16.mxu0 0
    %9440 = vmatpush1.bf16.msra.mxu0 0
    %9441 = vmatprep.subr.bf16.mxu0 0
    %9442 = vmatpush1.bf16.msra.mxu0 0
    %9443 = vmatprep.subr.bf16.mxu0 0
    %9444 = vmatpush1.bf16.msra.mxu0 0
    %9445 = vmatprep.mubr.bf16.mxu0 0
    %9446 = vmatmul.mubr.bf16.gmra.mrb[0].mxu0 %v9315
    %v9447 = vpop.f32.mrb[0].mxu0
    %v9448 = vadd.f32 0.0, %v9447
    %v9449 = vpop.f32.mrb[0].mxu0
    %v9450 = vadd.f32 0.0, %v9449
    %v9451 = vpop.f32.mrb[0].mxu0
    %v9452 = vpop.f32.mrb[0].mxu0
    %9453 = vdwg.mxu0
    %v9454 = vadd.f32 %v9260, %v9448
    %v9455 = vadd.f32 %v9262, %v9450
    %9456 = vset.pattern.permute.xlu0 3
    %9457 = vperm.xlu0 %9456, %v8885
    %v9458 = vpop.permute.xlu0 %9457
    %vm9459 = vcmp.eq.s32.totalorder %v220, %v9458
    %v9460 = vsel %vm9459, 1.0, 0.0
    %v9461 = vpack.c.bf16 %v9460, %v9460
    %v9463 = vsel %vm8892, %v9461, 0
    %9465 = vmatprep.subr.bf16.mxu0 0
    %9466 = vmatpush1.bf16.msra.mxu0 %v8898
    %9467 = vmatprep.subr.bf16.mxu0 0
    %9468 = vmatpush1.bf16.msra.mxu0 0
    %9469 = vmatprep.subr.bf16.mxu0 0
    %9470 = vmatpush1.bf16.msra.mxu0 0
    %9471 = vmatprep.subr.bf16.mxu0 0
    %9472 = vmatpush1.bf16.msra.mxu0 0
    %9473 = vmatprep.subr.bf16.mxu0 0
    %9474 = vmatpush1.bf16.msra.mxu0 0
    %9475 = vmatprep.subr.bf16.mxu0 0
    %9476 = vmatpush1.bf16.msra.mxu0 0
    %9477 = vmatprep.subr.bf16.mxu0 0
    %9478 = vmatpush1.bf16.msra.mxu0 0
    %9479 = vmatprep.subr.bf16.mxu0 0
    %9480 = vmatpush1.bf16.msra.mxu0 0
    %9481 = vmatprep.subr.bf16.mxu0 0
    %9482 = vmatpush1.bf16.msra.mxu0 0
    %9483 = vmatprep.subr.bf16.mxu0 0
    %9484 = vmatpush1.bf16.msra.mxu0 0
    %9485 = vmatprep.subr.bf16.mxu0 0
    %9486 = vmatpush1.bf16.msra.mxu0 0
    %9487 = vmatprep.subr.bf16.mxu0 0
    %9488 = vmatpush1.bf16.msra.mxu0 0
    %9489 = vmatprep.subr.bf16.mxu0 0
    %9490 = vmatpush1.bf16.msra.mxu0 0
    %9491 = vmatprep.subr.bf16.mxu0 0
    %9492 = vmatpush1.bf16.msra.mxu0 0
    %9493 = vmatprep.subr.bf16.mxu0 0
    %9494 = vmatpush1.bf16.msra.mxu0 0
    %9495 = vmatprep.subr.bf16.mxu0 0
    %9496 = vmatpush1.bf16.msra.mxu0 0
    %9497 = vmatprep.mubr.bf16.mxu0 0
    %9498 = vmatmul.mubr.bf16.gmra.mrb[0].mxu0 %v9463
    %v9499 = vpop.f32.mrb[0].mxu0
    %v9500 = vadd.f32 0.0, %v9499
    %v9501 = vpop.f32.mrb[0].mxu0
    %v9502 = vpop.f32.mrb[0].mxu0
    %v9503 = vpop.f32.mrb[0].mxu0
    %9504 = vdwg.mxu0
    %v9505 = vpack.c.bf16 %v9500, %v9500
    %s9506 = scalar_lea.vmem [#allocation10], 384
    %v9507 = vld [vmem:[%s9506] sm:$0xff]
    %v9508 = vld [vmem:[%s9506 + $0x8] sm:$0xff]
    %v9509 = vld [vmem:[%s9506 + $0x10] sm:$0xff]
    %v9510 = vld [vmem:[%s9506 + $0x18] sm:$0xff]
    %v9511 = vld [vmem:[%s9506 + $0x20] sm:$0xff]
    %v9512 = vld [vmem:[%s9506 + $0x28] sm:$0xff]
    %v9513 = vld [vmem:[%s9506 + $0x30] sm:$0xff]
    %v9514 = vld [vmem:[%s9506 + $0x38] sm:$0xff]
    %v9515 = vld [vmem:[%s9506 + $0x40] sm:$0xff]
    %v9516 = vld [vmem:[%s9506 + $0x48] sm:$0xff]
    %v9517 = vld [vmem:[%s9506 + $0x50] sm:$0xff]
    %v9518 = vld [vmem:[%s9506 + $0x58] sm:$0xff]
    %v9519 = vld [vmem:[%s9506 + $0x60] sm:$0xff]
    %v9520 = vld [vmem:[%s9506 + $0x68] sm:$0xff]
    %v9521 = vld [vmem:[%s9506 + $0x70] sm:$0xff]
    %v9522 = vld [vmem:[%s9506 + $0x78] sm:$0xff]
    %v9539 = vunpack.c.l.b16 %v9507
    %v9540 = vunpack.c.h.b16 %v9507
    %v9541 = vunpack.c.l.b16 %v9508
    %v9542 = vunpack.c.h.b16 %v9508
    %v9543 = vunpack.c.l.b16 %v9509
    %v9544 = vunpack.c.h.b16 %v9509
    %v9545 = vunpack.c.l.b16 %v9510
    %v9546 = vunpack.c.h.b16 %v9510
    %v9547 = vunpack.c.l.b16 %v9511
    %v9548 = vunpack.c.h.b16 %v9511
    %v9549 = vunpack.c.l.b16 %v9512
    %v9550 = vunpack.c.h.b16 %v9512
    %v9551 = vunpack.c.l.b16 %v9513
    %v9552 = vunpack.c.h.b16 %v9513
    %v9553 = vunpack.c.l.b16 %v9514
    %v9554 = vunpack.c.h.b16 %v9514
    %v9555 = vunpack.c.l.b16 %v9515
    %v9556 = vunpack.c.h.b16 %v9515
    %v9557 = vunpack.c.l.b16 %v9516
    %v9558 = vunpack.c.h.b16 %v9516
    %v9559 = vunpack.c.l.b16 %v9517
    %v9560 = vunpack.c.h.b16 %v9517
    %v9561 = vunpack.c.l.b16 %v9518
    %v9562 = vunpack.c.h.b16 %v9518
    %v9563 = vunpack.c.l.b16 %v9519
    %v9564 = vunpack.c.h.b16 %v9519
    %v9565 = vunpack.c.l.b16 %v9520
    %v9566 = vunpack.c.h.b16 %v9520
    %v9567 = vunpack.c.l.b16 %v9521
    %v9568 = vunpack.c.h.b16 %v9521
    %v9569 = vunpack.c.l.b16 %v9522
    %v9570 = vunpack.c.h.b16 %v9522
    %v9571 = vpack.c.b16 %v9541, %v9539
    %v9572 = vpack.c.b16 %v9542, %v9540
    %v9573 = vpack.c.b16 %v9545, %v9543
    %v9574 = vpack.c.b16 %v9546, %v9544
    %v9575 = vpack.c.b16 %v9549, %v9547
    %v9576 = vpack.c.b16 %v9550, %v9548
    %v9577 = vpack.c.b16 %v9553, %v9551
    %v9578 = vpack.c.b16 %v9554, %v9552
    %v9579 = vpack.c.b16 %v9557, %v9555
    %v9580 = vpack.c.b16 %v9558, %v9556
    %v9581 = vpack.c.b16 %v9561, %v9559
    %v9582 = vpack.c.b16 %v9562, %v9560
    %v9583 = vpack.c.b16 %v9565, %v9563
    %v9584 = vpack.c.b16 %v9566, %v9564
    %v9585 = vpack.c.b16 %v9569, %v9567
    %v9586 = vpack.c.b16 %v9570, %v9568
    %9603 = vmatprep.subr.bf16.mxu0 %v9572
    %9604 = vmatpush1.bf16.msra.mxu0 %v9571
    %9605 = vmatprep.subr.bf16.mxu0 %v9574
    %9606 = vmatpush1.bf16.msra.mxu0 %v9573
    %9607 = vmatprep.subr.bf16.mxu0 %v9576
    %9608 = vmatpush1.bf16.msra.mxu0 %v9575
    %9609 = vmatprep.subr.bf16.mxu0 %v9578
    %9610 = vmatpush1.bf16.msra.mxu0 %v9577
    %9611 = vmatprep.subr.bf16.mxu0 %v9580
    %9612 = vmatpush1.bf16.msra.mxu0 %v9579
    %9613 = vmatprep.subr.bf16.mxu0 %v9582
    %9614 = vmatpush1.bf16.msra.mxu0 %v9581
    %9615 = vmatprep.subr.bf16.mxu0 %v9584
    %9616 = vmatpush1.bf16.msra.mxu0 %v9583
    %9617 = vmatprep.subr.bf16.mxu0 %v9586
    %9618 = vmatpush1.bf16.msra.mxu0 %v9585
    %9619 = vmatprep.subr.bf16.mxu0 0
    %9620 = vmatpush1.bf16.msra.mxu0 0
    %9621 = vmatprep.subr.bf16.mxu0 0
    %9622 = vmatpush1.bf16.msra.mxu0 0
    %9623 = vmatprep.subr.bf16.mxu0 0
    %9624 = vmatpush1.bf16.msra.mxu0 0
    %9625 = vmatprep.subr.bf16.mxu0 0
    %9626 = vmatpush1.bf16.msra.mxu0 0
    %9627 = vmatprep.subr.bf16.mxu0 0
    %9628 = vmatpush1.bf16.msra.mxu0 0
    %9629 = vmatprep.subr.bf16.mxu0 0
    %9630 = vmatpush1.bf16.msra.mxu0 0
    %9631 = vmatprep.subr.bf16.mxu0 0
    %9632 = vmatpush1.bf16.msra.mxu0 0
    %9633 = vmatprep.subr.bf16.mxu0 0
    %9634 = vmatpush1.bf16.msra.mxu0 0
    %9635 = vmatprep.mubr.bf16.mxu0 0
    %9636 = vmatmul.mubr.bf16.gmra.mrb[0].mxu0 %v9505
    %v9637 = vpop.f32.mrb[0].mxu0
    %v9638 = vadd.f32 0.0, %v9637
    %v9639 = vpop.f32.mrb[0].mxu0
    %v9640 = vadd.f32 0.0, %v9639
    %v9641 = vpop.f32.mrb[0].mxu0
    %v9642 = vpop.f32.mrb[0].mxu0
    %9643 = vdwg.mxu0
    %v9644 = vadd.f32 %v9454, %v9638
    %v9645 = vadd.f32 %v9455, %v9640
    %v9646 = vld [vmem:[%s12] sm:$0x3]
    %v9648 = vlaneseq
    %v9649 = vshrl.u32 %v9648, 7
    %v9650 = vsub.s32 0, %v9649
    %v9651 = vrot.slane %v9646, %v9650
    %v9652 = vlaneseq
    %v9653 = vshrl.u32 %v9652, 7
    %v9654 = vsub.s32 1, %v9653
    %v9655 = vrot.slane %v9646, %v9654
    %v9658 = vadd.f32 %v9644, %v9651
    %v9659 = vadd.f32 %v9645, %v9655
    %v9660 = vmul.f32 %v9659, 1.442695
    %v9661 = vpow.pop %v9660
    %v9662 = vld [vmem:[%s13] sm:$0x3]
    %v9663 = vrsqrt.pop %v9661
    %v9664 = vmul.f32 %v9661, %v9663
    %vm9665 = vcmp.eq.f32.partialorder %v9661, inf
    %v9666 = vsel %vm9665, %v9661, %v9664
    %vm9667 = vcmp.eq.f32.partialorder %v9661, 0.0
    %v9668 = vand.u32 %v9661, 2147483648
    %v9669 = vsel %vm9667, %v9668, %v9666
    %v9670 = vmul.f32 %v9662, %v9669
    %v9671 = vadd.f32 %v9670, %v9658
    %9672 = vst [vmem:[#allocation11] sm:$0x3] %v9671
    %9673 = vst [vmem:[#allocation12] sm:$0x3] %v9658
    %9674 = vst [vmem:[#allocation14] sm:$0x3] %v9659
    %v9675 = vadd.f32 %v9659, 1.0
    %v9676 = vmul.f32 %v9658, %v9658
    %v9677 = vsub.f32 %v9675, %v9676
    %v9678 = vsub.f32 %v9677, %v9661
    %9679 = vst [vmem:[#allocation15] sm:$0x3] %v9678
    // Predicated region
    $region78: #{tpu_custom_call.1} parent=1 // pred_check
      _
    $region79: #{tpu_custom_call.1} parent=1 // pred_check_branch
      %9681 = sbr.rel (0) target = $region81
    $region80: #{tpu_custom_call.1} parent=1 // pred_region
      %s9683 = ssub.s32 32, 32
      %9684 = vsyncadd [#allocation4], %s9683
      %s9686 = sshll.u32 [#allocation11], 4
      %s9687 = int_to_ptr.vmem [resolvable:$true] %s9686
      %9689 = dma.vmem_to_hbm [thread:$0]  %s9687, 32, %s14, [#allocation4]
    $region81: #{tpu_custom_call.1} parent=1 // pred_fallthru
      _
    // Predicated region
    $region82: #{tpu_custom_call.1} parent=1 // pred_check
      _
    $region83: #{tpu_custom_call.1} parent=1 // pred_check_branch
      %9691 = sbr.rel (0) target = $region85
    $region84: #{tpu_custom_call.1} parent=1 // pred_region
      %s9693 = ssub.s32 32, 32
      %9694 = vsyncadd [#allocation13], %s9693
      %s9696 = sshll.u32 [#allocation12], 4
      %s9697 = int_to_ptr.vmem [resolvable:$true] %s9696
      %9699 = dma.vmem_to_hbm [thread:$0]  %s9697, 32, %s15, [#allocation13]
    $region85: #{tpu_custom_call.1} parent=1 // pred_fallthru
      _
    // Predicated region
    $region86: #{tpu_custom_call.1} parent=1 // pred_check
      _
    $region87: #{tpu_custom_call.1} parent=1 // pred_check_branch
      %9701 = sbr.rel (0) target = $region89
    $region88: #{tpu_custom_call.1} parent=1 // pred_region
      %s9703 = ssub.s32 32, 32
      %9704 = vsyncadd [#allocation13], %s9703
      %s9706 = sshll.u32 [#allocation14], 4
      %s9707 = int_to_ptr.vmem [resolvable:$true] %s9706
      %9709 = dma.vmem_to_hbm [thread:$0]  %s9707, 32, %s16, [#allocation13]
    $region89: #{tpu_custom_call.1} parent=1 // pred_fallthru
      _
    // Predicated region
    $region90: #{tpu_custom_call.1} parent=1 // pred_check
      _
    $region91: #{tpu_custom_call.1} parent=1 // pred_check_branch
      %9711 = sbr.rel (0) target = $region93
    $region92: #{tpu_custom_call.1} parent=1 // pred_region
      %s9713 = ssub.s32 32, 32
      %9714 = vsyncadd [#allocation16], %s9713
      %s9716 = sshll.u32 [#allocation15], 4
      %s9717 = int_to_ptr.vmem [resolvable:$true] %s9716
      %9719 = dma.vmem_to_hbm [thread:$0]  %s9717, 32, %s17, [#allocation16]
    $region93: #{tpu_custom_call.1} parent=1 // pred_fallthru
      _
    // Predicated region
    $region94: #{tpu_custom_call.1} parent=1 // pred_check
      _
    $region95: #{tpu_custom_call.1} parent=1 // pred_check_branch
      %9721 = sbr.rel (0) target = $region97
    $region96: #{tpu_custom_call.1} parent=1 // pred_region
      %9722 = dma.done [#allocation4], 32
    $region97: #{tpu_custom_call.1} parent=1 // pred_fallthru
      _
    // Predicated region
    $region98: #{tpu_custom_call.1} parent=1 // pred_check
      _
    $region99: #{tpu_custom_call.1} parent=1 // pred_check_branch
      %9724 = sbr.rel (0) target = $region101
    $region100: #{tpu_custom_call.1} parent=1 // pred_region
      %9725 = dma.done [#allocation13], 32
    $region101: #{tpu_custom_call.1} parent=1 // pred_fallthru
      _
    // Predicated region
    $region102: #{tpu_custom_call.1} parent=1 // pred_check
      _
    $region103: #{tpu_custom_call.1} parent=1 // pred_check_branch
      %9727 = sbr.rel (0) target = $region105
    $region104: #{tpu_custom_call.1} parent=1 // pred_region
      %9728 = dma.done [#allocation13], 32
    $region105: #{tpu_custom_call.1} parent=1 // pred_fallthru
      _
    // Predicated region
    $region106: #{tpu_custom_call.1} parent=1 // pred_check
      _
    $region107: #{tpu_custom_call.1} parent=1 // pred_check_branch
      %9730 = sbr.rel (0) target = $region109
    $region108: #{tpu_custom_call.1} parent=1 // pred_region
      %9731 = dma.done [#allocation16], 32
    $region109: #{tpu_custom_call.1} parent=1 // pred_fallthru
      _
    %9732 = vsyncpa [#allocation3], 1
    %9733 = vsyncpa [#allocation6], 1
    %9734 = vsyncpa [#allocation9], 1
    %9735 = vsyncpa [#allocation4], 1
    %9736 = vsyncpa [#allocation13], 1
    %9737 = vsyncpa [#allocation16], 1

</llo_original>
